<compile_context>
chip_gen: v7x
topology: tpu7x:2x2x1
jax: 0.10.0
libtpu: 0.0.40
codegen_flags: <defaults>
</compile_context>

<pallas_src>
import numpy as np
import jax
import jax.numpy as jnp
from jax.experimental import pallas as pl
from jax.experimental.pallas import tpu as pltpu


_SUBLANE = 8
_LANE = 128


def _round_up(n, m):
    return ((n + m - 1) // m) * m


def _is_v5e():
    try:
        kind = jax.devices()[0].device_kind.lower()
    except Exception:
        return False
    return ("v5e" in kind) or ("v5 lite" in kind) or ("v5lite" in kind)


def _pad_granularity():
    # v5e MXU is 4x128^2 -> 256 alignment buys nothing there; v6e/v7x is 2x256^2.
    return 128 if _is_v5e() else 256


def _vmem_capacity_bytes():
    try:
        return int(pltpu.get_tpu_info().vmem_capacity_bytes)
    except Exception:
        return 64 << 20   # conservative: v7x per-TC physical VMEM


# ---------------- fused Pallas kernel: whole Linear chain --------------------
def _make_fused_kernel(n_layers):
    def kernel(*refs):
        # refs = (x_ref, w0_ref, b0_ref, w1_ref, b1_ref, ..., o_ref)
        x_ref = refs[0]
        o_ref = refs[-1]
        h = x_ref[...]
        if h.dtype != jnp.bfloat16:
            h = h.astype(jnp.bfloat16)                    # VPU cast, hides under MXU
        for i in range(n_layers):                         # unrolled at trace time
            w_ref = refs[1 + 2 * i]
            b_ref = refs[2 + 2 * i]
            acc = jnp.dot(h, w_ref[...],                  # bf16 x bf16 -> f32 on MXU
                          preferred_element_type=jnp.float32)
            acc = acc + b_ref[...]                        # f32 epilogue (bias)
            if i + 1 < n_layers:
                h = acc.astype(jnp.bfloat16)              # stays in VMEM/vregs
            else:
                o_ref[...] = acc.astype(o_ref.dtype)
    return kernel


def fused_fc_pallas(x2, padded_params, sizes_p, block_b, grid_b):
    """Run the whole padded Linear chain in one pallas_call.

    x2:             (B, K0) f32 flattened input (unpadded)
    padded_params:  list of (w_bf16 (Kp_i, Np_i), b_f32 (1, Np_i)) zero-padded
    sizes_p:        padded layer widths [K0p, N1p, ..., NLp]
    Returns (Bp, NLp) f32 (padded); caller slices to the true shape.
    """
    B, K0 = x2.shape
    Bp = block_b * grid_b
    K0p = sizes_p[0]
    NLp = sizes_p[-1]
    n_layers = len(padded_params)

    # Input path: pass f32 straight through when no padding is needed (4 B/elem
    # of HBM traffic instead of 8); only ragged shapes take the pad+bf16 path.
    if Bp == B and K0p == K0:
        xp = x2
    else:
        xp = jnp.zeros((Bp, K0p), jnp.bfloat16)
        xp = xp.at[:B, :K0].set(x2.astype(jnp.bfloat16))

    vmem = pltpu.MemorySpace.VMEM

    weight_bytes = sum(int(w.size) * 2 + int(b.size) * 4 for w, b in padded_params)
    max_np = max(int(w.shape[1]) for w, _ in padded_params)
    x_tile_bytes = 2 * block_b * K0p * xp.dtype.itemsize      # double-buffered input tile
    out_tile_bytes = 2 * block_b * NLp * 4                    # double-buffered output tile
    act_bytes = block_b * max_np * 6                          # widest f32 acc + bf16 copy

    flops = 2 * Bp * sum(int(w.shape[0]) * int(w.shape[1]) for w, _ in padded_params)
    bytes_accessed = Bp * K0p * xp.dtype.itemsize + Bp * NLp * 4 + weight_bytes

    # TODO(synk): for weight chains exceeding ~40-48 MiB post-buffering (v7x),
    # stream the largest layer over an extra "arbitrary" grid axis instead of
    # insisting on full VMEM residency.

    def build_and_call(single_buffer_weights):
        wb_kwargs = {"pipeline_mode": pl.Buffered(1)} if single_buffer_weights else {}
        in_specs = [pl.BlockSpec((block_b, K0p), lambda i: (i, 0), memory_space=vmem)]
        flat_wb = []
        for (w_p, b_p) in padded_params:
            kp, np_ = w_p.shape
            # Constant block index -> fetched once, resident across all batch tiles.
            in_specs.append(pl.BlockSpec((kp, np_), lambda i: (0, 0),
                                         memory_space=vmem, **wb_kwargs))
            in_specs.append(pl.BlockSpec((1, np_), lambda i: (0, 0),
                                         memory_space=vmem, **wb_kwargs))
            flat_wb += [w_p, b_p]

        wb_factor = 1 if single_buffer_weights else 2
        needed = int(1.25 * (weight_bytes * wb_factor + x_tile_bytes
                             + out_tile_bytes + act_bytes))
        vmem_limit = max(needed, 32 << 20)
        vmem_limit = int(min(vmem_limit, _vmem_capacity_bytes() - (2 << 20)))

        return pl.pallas_call(
            _make_fused_kernel(n_layers),
            out_shape=jax.ShapeDtypeStruct((Bp, NLp), jnp.float32),
            grid=(grid_b,),
            in_specs=in_specs,
            out_specs=pl.BlockSpec((block_b, NLp), lambda i: (i, 0),
                                   memory_space=vmem),
            compiler_params=pltpu.CompilerParams(
                dimension_semantics=("parallel",),        # dual-TC shard on v7x
                vmem_limit_bytes=vmem_limit),
            cost_estimate=pl.CostEstimate(flops=flops, transcendentals=0,
                                          bytes_accessed=bytes_accessed),
        )(xp, *flat_wb)

    try:
        return build_and_call(True)
    except Exception:
        # Fallback if pipeline_mode=pl.Buffered(1) is unsupported on this jax build.
        return build_and_call(False)


# ---------------- FC module (JAX/Pallas port of the PyTorch FC) --------------
class FC:
    def __init__(self, out_norun, linear_len, key):
        self._out_norun = out_norun
        self._linear_len = linear_len
        self._key = key
        self._params = None            # true-size f32 params (reference semantics)
        self._params_padded = None     # zero-padded bf16 weights / f32 biases
        self._sizes = None
        self._sizes_p = None

    def _linear_create(self, in_features):
        if self._params is not None:   # mirrors the lru_cache'd create
            return len(self._sizes) - 1
        # Mirror: _data = list(np.round(np.linspace(out_norun, x, Linear_len))); reverse
        data = list(np.round(np.linspace(self._out_norun, int(in_features),
                                         self._linear_len)))
        data.reverse()
        sizes = [int(d) for d in data]

        pad_to = _pad_granularity()
        sizes_p = []
        for idx, s in enumerate(sizes):
            if idx == len(sizes) - 1:
                sizes_p.append(_round_up(s, _LANE))   # last layer: minimal lane-dense pad
            else:
                sizes_p.append(_round_up(s, pad_to))

        params, params_p = [], []
        key = self._key
        for i in range(len(sizes) - 1):
            fan_in, fan_out = sizes[i], sizes[i + 1]
            kp_in, kp_out = sizes_p[i], sizes_p[i + 1]
            key, kw, kb = jax.random.split(key, 3)
            bound = 1.0 / np.sqrt(fan_in)
            # store W transposed: (in, out), like torch Linear weight.T
            w_t = jax.random.uniform(kw, (fan_in, fan_out), jnp.float32,
                                     minval=-bound, maxval=bound)
            b = jax.random.uniform(kb, (fan_out,), jnp.float32,
                                   minval=-bound, maxval=bound)
            params.append((w_t, b))
            # zero-pad to lane-dense widths; bf16 weights, f32 biases (shaped (1, N))
            w_p = jnp.zeros((kp_in, kp_out), jnp.bfloat16)
            w_p = w_p.at[:fan_in, :fan_out].set(w_t.astype(jnp.bfloat16))
            b_p = jnp.zeros((1, kp_out), jnp.float32)
            b_p = b_p.at[0, :fan_out].set(b)
            params_p.append((w_p, b_p))

        self._params, self._params_padded = params, params_p
        self._sizes, self._sizes_p = sizes, sizes_p
        return len(sizes) - 1

    @staticmethod
    def _select_batch_tiling(B):
        bp8 = _round_up(max(B, 1), _SUBLANE)
        if bp8 <= 128:
            # Small batch: single grid step; this regime is weight-DMA / launch
            # bound -- the real lever is caller-side batching of more rows.
            return bp8, 1
        # Large batch: bigger tiles amortize the ~0.35us/step overhead, but keep
        # grid_b >= 2 so the "parallel" axis can shard across v7x's two TCs.
        if B >= 1024:
            block_b = 512
        elif B >= 512:
            block_b = 256
        else:
            block_b = 128
        grid_b = -(-B // block_b)   # cdiv
        return block_b, grid_b

    def forward(self, x):
        B = x.shape[0]
        x2 = x.reshape(B, -1)                      # flatten NCHW -> (B, C*H*W)
        n_layers = self._linear_create(x2.shape[1])
        assert n_layers == len(self._params_padded)

        block_b, grid_b = self._select_batch_tiling(B)
        out_p = fused_fc_pallas(x2, self._params_padded, self._sizes_p,
                                block_b, grid_b)
        return out_p[:B, :self._sizes[-1]]         # slice padding away


# ---------------- pure-JAX reference (mirrors the kernel's bf16 math) --------
def _reference_bf16(x, params):
    h = x.reshape(x.shape[0], -1).astype(jnp.bfloat16)
    acc = None
    for i, (w_t, b) in enumerate(params):
        acc = jnp.dot(h, w_t.astype(jnp.bfloat16),
                      preferred_element_type=jnp.float32) + b
        if i + 1 < len(params):
            h = acc.astype(jnp.bfloat16)
    return acc


if __name__ == "__main__":
    key = jax.random.PRNGKey(0)
    k_in, k_params = jax.random.split(key)

    # small CIFAR-like input: batch=2, channels=4, 16x16 spatial -> 1024 features
    x = jax.random.normal(k_in, (2, 4, 16, 16), jnp.float32)

    # out_norun=10 (classes), Linear_len=4 -> layer sizes 1024 -> 686 -> 348 -> 10
    model = FC(out_norun=10, linear_len=4, key=k_params)

    out = model.forward(x)
    out = jax.block_until_ready(out)
    assert out.shape == (2, 10), out.shape

    ref = _reference_bf16(x, model._params)
    np.testing.assert_allclose(np.asarray(out), np.asarray(ref),
                               rtol=2e-2, atol=2e-2)
    print("KERNEL_OK")
</pallas_src>

<mosaic_0001>
module attributes {stable_mosaic.version = 11 : i64} {
  func.func @kernel(%arg0: i32, %arg1: memref<8x1024xbf16, #tpu.memory_space<vmem>>, %arg2: memref<1024x768xbf16, #tpu.memory_space<vmem>>, %arg3: memref<1x768xf32, #tpu.memory_space<vmem>>, %arg4: memref<768x512xbf16, #tpu.memory_space<vmem>>, %arg5: memref<1x512xf32, #tpu.memory_space<vmem>>, %arg6: memref<512x128xbf16, #tpu.memory_space<vmem>>, %arg7: memref<1x128xf32, #tpu.memory_space<vmem>>, %arg8: memref<8x128xf32, #tpu.memory_space<vmem>>) attributes {dimension_semantics = [#tpu.dimension_semantics<parallel>], iteration_bounds = array<i64: 1>, scalar_prefetch = 0 : i64, scratch_operands = 0 : i64, tpu.core_type = #tpu.core_type<tc>, window_params = [{transform_indices = @transform_0, window_bounds = array<i64: 8, 1024>}, {pipeline_mode = #tpu.pipeline_mode<synchronous>, transform_indices = @transform_1, window_bounds = array<i64: 1024, 768>}, {pipeline_mode = #tpu.pipeline_mode<synchronous>, transform_indices = @transform_2, window_bounds = array<i64: 1, 768>}, {pipeline_mode = #tpu.pipeline_mode<synchronous>, transform_indices = @transform_3, window_bounds = array<i64: 768, 512>}, {pipeline_mode = #tpu.pipeline_mode<synchronous>, transform_indices = @transform_4, window_bounds = array<i64: 1, 512>}, {pipeline_mode = #tpu.pipeline_mode<synchronous>, transform_indices = @transform_5, window_bounds = array<i64: 512, 128>}, {pipeline_mode = #tpu.pipeline_mode<synchronous>, transform_indices = @transform_6, window_bounds = array<i64: 1, 128>}, {transform_indices = @transform_7, window_bounds = array<i64: 8, 128>}]} {
    %c0 = arith.constant 0 : index
    %c0_0 = arith.constant 0 : index
    %0 = vector.load %arg1[%c0, %c0_0] : memref<8x1024xbf16, #tpu.memory_space<vmem>>, vector<8x1024xbf16>
    %c0_1 = arith.constant 0 : index
    %c0_2 = arith.constant 0 : index
    %1 = vector.load %arg2[%c0_1, %c0_2] : memref<1024x768xbf16, #tpu.memory_space<vmem>>, vector<1024x768xbf16>
    %cst = arith.constant dense<0.000000e+00> : vector<8x768xf32>
    %2 = tpu.matmul %0, %1, %cst {dimension_numbers = #tpu.dot_dimension_numbers<[1], [0], [0], [1], [0, 0, 1, 1], [], []>} : vector<8x1024xbf16>, vector<1024x768xbf16>, vector<8x768xf32> -> vector<8x768xf32>
    %c0_3 = arith.constant 0 : index
    %c0_4 = arith.constant 0 : index
    %3 = vector.load %arg3[%c0_3, %c0_4] : memref<1x768xf32, #tpu.memory_space<vmem>>, vector<1x768xf32>
    %4 = vector.broadcast %3 : vector<1x768xf32> to vector<8x768xf32>
    %5 = arith.addf %2, %4 : vector<8x768xf32>
    %6 = arith.truncf %5 : vector<8x768xf32> to vector<8x768xbf16>
    %c0_5 = arith.constant 0 : index
    %c0_6 = arith.constant 0 : index
    %7 = vector.load %arg4[%c0_5, %c0_6] : memref<768x512xbf16, #tpu.memory_space<vmem>>, vector<768x512xbf16>
    %cst_7 = arith.constant dense<0.000000e+00> : vector<8x512xf32>
    %8 = tpu.matmul %6, %7, %cst_7 {dimension_numbers = #tpu.dot_dimension_numbers<[1], [0], [0], [1], [0, 0, 1, 1], [], []>} : vector<8x768xbf16>, vector<768x512xbf16>, vector<8x512xf32> -> vector<8x512xf32>
    %c0_8 = arith.constant 0 : index
    %c0_9 = arith.constant 0 : index
    %9 = vector.load %arg5[%c0_8, %c0_9] : memref<1x512xf32, #tpu.memory_space<vmem>>, vector<1x512xf32>
    %10 = vector.broadcast %9 : vector<1x512xf32> to vector<8x512xf32>
    %11 = arith.addf %8, %10 : vector<8x512xf32>
    %12 = arith.truncf %11 : vector<8x512xf32> to vector<8x512xbf16>
    %c0_10 = arith.constant 0 : index
    %c0_11 = arith.constant 0 : index
    %13 = vector.load %arg6[%c0_10, %c0_11] : memref<512x128xbf16, #tpu.memory_space<vmem>>, vector<512x128xbf16>
    %cst_12 = arith.constant dense<0.000000e+00> : vector<8x128xf32>
    %14 = tpu.matmul %12, %13, %cst_12 {dimension_numbers = #tpu.dot_dimension_numbers<[1], [0], [0], [1], [0, 0, 1, 1], [], []>} : vector<8x512xbf16>, vector<512x128xbf16>, vector<8x128xf32> -> vector<8x128xf32>
    %c0_13 = arith.constant 0 : index
    %c0_14 = arith.constant 0 : index
    %15 = vector.load %arg7[%c0_13, %c0_14] : memref<1x128xf32, #tpu.memory_space<vmem>>, vector<1x128xf32>
    %16 = vector.broadcast %15 : vector<1x128xf32> to vector<8x128xf32>
    %17 = arith.addf %14, %16 : vector<8x128xf32>
    %c0_15 = arith.constant 0 : index
    %c0_16 = arith.constant 0 : index
    %18 = vector.load %arg8[%c0_15, %c0_16] : memref<8x128xf32, #tpu.memory_space<vmem>>, vector<8x128xf32>
    tpu.vector_store %arg8[%c0_15, %c0_16], %17 {strides = array<i32>} : memref<8x128xf32, #tpu.memory_space<vmem>>, vector<8x128xf32>,
    return
  }
  func.func @transform_0(%arg0: i32) -> (i32, i32) {
    %c0_i32 = arith.constant 0 : i32
    %c0_i32_0 = arith.constant 0 : i32
    return %arg0, %c0_i32 : i32, i32
  }
  func.func @transform_1(%arg0: i32) -> (i32, i32) {
    %c0_i32 = arith.constant 0 : i32
    %c0_i32_0 = arith.constant 0 : i32
    %c0_i32_1 = arith.constant 0 : i32
    return %c0_i32, %c0_i32_0 : i32, i32
  }
  func.func @transform_2(%arg0: i32) -> (i32, i32) {
    %c0_i32 = arith.constant 0 : i32
    %c0_i32_0 = arith.constant 0 : i32
    %c0_i32_1 = arith.constant 0 : i32
    return %c0_i32, %c0_i32_0 : i32, i32
  }
  func.func @transform_3(%arg0: i32) -> (i32, i32) {
    %c0_i32 = arith.constant 0 : i32
    %c0_i32_0 = arith.constant 0 : i32
    %c0_i32_1 = arith.constant 0 : i32
    return %c0_i32, %c0_i32_0 : i32, i32
  }
  func.func @transform_4(%arg0: i32) -> (i32, i32) {
    %c0_i32 = arith.constant 0 : i32
    %c0_i32_0 = arith.constant 0 : i32
    %c0_i32_1 = arith.constant 0 : i32
    return %c0_i32, %c0_i32_0 : i32, i32
  }
  func.func @transform_5(%arg0: i32) -> (i32, i32) {
    %c0_i32 = arith.constant 0 : i32
    %c0_i32_0 = arith.constant 0 : i32
    %c0_i32_1 = arith.constant 0 : i32
    return %c0_i32, %c0_i32_0 : i32, i32
  }
  func.func @transform_6(%arg0: i32) -> (i32, i32) {
    %c0_i32 = arith.constant 0 : i32
    %c0_i32_0 = arith.constant 0 : i32
    %c0_i32_1 = arith.constant 0 : i32
    return %c0_i32, %c0_i32_0 : i32, i32
  }
  func.func @transform_7(%arg0: i32) -> (i32, i32) {
    %c0_i32 = arith.constant 0 : i32
    %c0_i32_0 = arith.constant 0 : i32
    return %arg0, %c0_i32 : i32, i32
  }
}

module attributes {stable_mosaic.version = 11 : i64} {
  func.func @kernel(%arg0: i32, %arg1: memref<8x1024xbf16, #tpu.memory_space<vmem>>, %arg2: memref<1024x768xbf16, #tpu.memory_space<vmem>>, %arg3: memref<1x768xf32, #tpu.memory_space<vmem>>, %arg4: memref<768x512xbf16, #tpu.memory_space<vmem>>, %arg5: memref<1x512xf32, #tpu.memory_space<vmem>>, %arg6: memref<512x128xbf16, #tpu.memory_space<vmem>>, %arg7: memref<1x128xf32, #tpu.memory_space<vmem>>, %arg8: memref<8x128xf32, #tpu.memory_space<vmem>>) attributes {dimension_semantics = [#tpu.dimension_semantics<parallel>], iteration_bounds = array<i64: 1>, scalar_prefetch = 0 : i64, scratch_operands = 0 : i64, tpu.core_type = #tpu.core_type<tc>, window_params = [{transform_indices = @transform_0, window_bounds = array<i64: 8, 1024>}, {pipeline_mode = #tpu.pipeline_mode<synchronous>, transform_indices = @transform_1, window_bounds = array<i64: 1024, 768>}, {pipeline_mode = #tpu.pipeline_mode<synchronous>, transform_indices = @transform_2, window_bounds = array<i64: 1, 768>}, {pipeline_mode = #tpu.pipeline_mode<synchronous>, transform_indices = @transform_3, window_bounds = array<i64: 768, 512>}, {pipeline_mode = #tpu.pipeline_mode<synchronous>, transform_indices = @transform_4, window_bounds = array<i64: 1, 512>}, {pipeline_mode = #tpu.pipeline_mode<synchronous>, transform_indices = @transform_5, window_bounds = array<i64: 512, 128>}, {pipeline_mode = #tpu.pipeline_mode<synchronous>, transform_indices = @transform_6, window_bounds = array<i64: 1, 128>}, {transform_indices = @transform_7, window_bounds = array<i64: 8, 128>}]} {
    %c0 = arith.constant 0 : index
    %c0_0 = arith.constant 0 : index
    %0 = vector.load %arg1[%c0, %c0_0] : memref<8x1024xbf16, #tpu.memory_space<vmem>>, vector<8x1024xbf16>
    %c0_1 = arith.constant 0 : index
    %c0_2 = arith.constant 0 : index
    %1 = vector.load %arg2[%c0_1, %c0_2] : memref<1024x768xbf16, #tpu.memory_space<vmem>>, vector<1024x768xbf16>
    %cst = arith.constant dense<0.000000e+00> : vector<8x768xf32>
    %2 = tpu.matmul %0, %1, %cst {dimension_numbers = #tpu.dot_dimension_numbers<[1], [0], [0], [1], [0, 0, 1, 1], [], []>} : vector<8x1024xbf16>, vector<1024x768xbf16>, vector<8x768xf32> -> vector<8x768xf32>
    %c0_3 = arith.constant 0 : index
    %c0_4 = arith.constant 0 : index
    %3 = vector.load %arg3[%c0_3, %c0_4] : memref<1x768xf32, #tpu.memory_space<vmem>>, vector<1x768xf32>
    %4 = vector.broadcast %3 : vector<1x768xf32> to vector<8x768xf32>
    %5 = arith.addf %2, %4 : vector<8x768xf32>
    %6 = arith.truncf %5 : vector<8x768xf32> to vector<8x768xbf16>
    %c0_5 = arith.constant 0 : index
    %c0_6 = arith.constant 0 : index
    %7 = vector.load %arg4[%c0_5, %c0_6] : memref<768x512xbf16, #tpu.memory_space<vmem>>, vector<768x512xbf16>
    %cst_7 = arith.constant dense<0.000000e+00> : vector<8x512xf32>
    %8 = tpu.matmul %6, %7, %cst_7 {dimension_numbers = #tpu.dot_dimension_numbers<[1], [0], [0], [1], [0, 0, 1, 1], [], []>} : vector<8x768xbf16>, vector<768x512xbf16>, vector<8x512xf32> -> vector<8x512xf32>
    %c0_8 = arith.constant 0 : index
    %c0_9 = arith.constant 0 : index
    %9 = vector.load %arg5[%c0_8, %c0_9] : memref<1x512xf32, #tpu.memory_space<vmem>>, vector<1x512xf32>
    %10 = vector.broadcast %9 : vector<1x512xf32> to vector<8x512xf32>
    %11 = arith.addf %8, %10 : vector<8x512xf32>
    %12 = arith.truncf %11 : vector<8x512xf32> to vector<8x512xbf16>
    %c0_10 = arith.constant 0 : index
    %c0_11 = arith.constant 0 : index
    %13 = vector.load %arg6[%c0_10, %c0_11] : memref<512x128xbf16, #tpu.memory_space<vmem>>, vector<512x128xbf16>
    %cst_12 = arith.constant dense<0.000000e+00> : vector<8x128xf32>
    %14 = tpu.matmul %12, %13, %cst_12 {dimension_numbers = #tpu.dot_dimension_numbers<[1], [0], [0], [1], [0, 0, 1, 1], [], []>} : vector<8x512xbf16>, vector<512x128xbf16>, vector<8x128xf32> -> vector<8x128xf32>
    %c0_13 = arith.constant 0 : index
    %c0_14 = arith.constant 0 : index
    %15 = vector.load %arg7[%c0_13, %c0_14] : memref<1x128xf32, #tpu.memory_space<vmem>>, vector<1x128xf32>
    %16 = vector.broadcast %15 : vector<1x128xf32> to vector<8x128xf32>
    %17 = arith.addf %14, %16 : vector<8x128xf32>
    %c0_15 = arith.constant 0 : index
    %c0_16 = arith.constant 0 : index
    %18 = vector.load %arg8[%c0_15, %c0_16] : memref<8x128xf32, #tpu.memory_space<vmem>>, vector<8x128xf32>
    tpu.vector_store %arg8[%c0_15, %c0_16], %17 {strides = array<i32>} : memref<8x128xf32, #tpu.memory_space<vmem>>, vector<8x128xf32>,
    return
  }
  func.func @transform_0(%arg0: i32) -> (i32, i32) {
    %c0_i32 = arith.constant 0 : i32
    %c0_i32_0 = arith.constant 0 : i32
    return %arg0, %c0_i32 : i32, i32
  }
  func.func @transform_1(%arg0: i32) -> (i32, i32) {
    %c0_i32 = arith.constant 0 : i32
    %c0_i32_0 = arith.constant 0 : i32
    %c0_i32_1 = arith.constant 0 : i32
    return %c0_i32, %c0_i32_0 : i32, i32
  }
  func.func @transform_2(%arg0: i32) -> (i32, i32) {
    %c0_i32 = arith.constant 0 : i32
    %c0_i32_0 = arith.constant 0 : i32
    %c0_i32_1 = arith.constant 0 : i32
    return %c0_i32, %c0_i32_0 : i32, i32
  }
  func.func @transform_3(%arg0: i32) -> (i32, i32) {
    %c0_i32 = arith.constant 0 : i32
    %c0_i32_0 = arith.constant 0 : i32
    %c0_i32_1 = arith.constant 0 : i32
    return %c0_i32, %c0_i32_0 : i32, i32
  }
  func.func @transform_4(%arg0: i32) -> (i32, i32) {
    %c0_i32 = arith.constant 0 : i32
    %c0_i32_0 = arith.constant 0 : i32
    %c0_i32_1 = arith.constant 0 : i32
    return %c0_i32, %c0_i32_0 : i32, i32
  }
  func.func @transform_5(%arg0: i32) -> (i32, i32) {
    %c0_i32 = arith.constant 0 : i32
    %c0_i32_0 = arith.constant 0 : i32
    %c0_i32_1 = arith.constant 0 : i32
    return %c0_i32, %c0_i32_0 : i32, i32
  }
  func.func @transform_6(%arg0: i32) -> (i32, i32) {
    %c0_i32 = arith.constant 0 : i32
    %c0_i32_0 = arith.constant 0 : i32
    %c0_i32_1 = arith.constant 0 : i32
    return %c0_i32, %c0_i32_0 : i32, i32
  }
  func.func @transform_7(%arg0: i32) -> (i32, i32) {
    %c0_i32 = arith.constant 0 : i32
    %c0_i32_0 = arith.constant 0 : i32
    return %arg0, %c0_i32 : i32, i32
  }
}

</mosaic_0001>

<llo_original>
// kernel: tpu_custom_call.1
$region0: #{tpu_custom_call.1}
  #allocation0 [shape = 'u32[]', space=smem, size = 0x4, offset = 0x4, fixed_abs, tag = 'smem constant byte address 0x4 - core index']
  #allocation1 [shape = 'u32[144,128]{1,0:T(1,128)}', space=vmem, size = 0x12000, scoped, tag = 'internal scratch']
  %s0 = inlined_call_operand.hbm [shape: bf16[8,1024], index: 0, kind: input, shape index: {}]
  %s1 = inlined_call_operand.hbm [shape: bf16[1024,768], index: 1, kind: input, shape index: {}]
  %s2 = inlined_call_operand.hbm [shape: f32[1,768], index: 2, kind: input, shape index: {}]
  %s3 = inlined_call_operand.hbm [shape: bf16[768,512], index: 3, kind: input, shape index: {}]
  %s4 = inlined_call_operand.hbm [shape: f32[1,512], index: 4, kind: input, shape index: {}]
  %s5 = inlined_call_operand.hbm [shape: bf16[512,128], index: 5, kind: input, shape index: {}]
  %s6 = inlined_call_operand.hbm [shape: f32[1,128], index: 6, kind: input, shape index: {}]
  %s7 = inlined_call_operand.hbm [shape: f32[8,128], index: 7, kind: output, shape index: {}]
  %s8 = sld [smem:[#allocation0]]
  $region66: #{tpu_custom_call.1} parent=0
    _
  %s10 = ssub.s32 1, %s8
  %s11 = scalar_select 0, %s10, %s8
  $region1: #{tpu_custom_call.1} parent=0
    #allocation2 [shape = 'u8[16384]{0}', space=vmem, size = 0x4000, scoped, tag = 'input window, operand 0, single buffered']
    #allocation3 [shape = 's32[1]{0}', space=sflag, size = 0x4, scoped, tag = 'scoped memory for tpu_custom_call.1']
    #allocation4 [shape = 's32[1]{0}', space=sflag, size = 0x4, scoped, tag = 'scoped memory for tpu_custom_call.1']
    #allocation5 [shape = 'u8[1572864]{0}', space=vmem, size = 0x180000, scoped, tag = 'input window, operand 1, single buffered']
    #allocation6 [shape = 's32[1]{0}', space=sflag, size = 0x4, scoped, tag = 'scoped memory for tpu_custom_call.1']
    #allocation7 [shape = 'u8[3072]{0}', space=vmem, size = 0xc00, scoped, tag = 'input window, operand 2, single buffered']
    #allocation8 [shape = 'u8[786432]{0}', space=vmem, size = 0xc0000, scoped, tag = 'input window, operand 3, single buffered']
    #allocation9 [shape = 's32[1]{0}', space=sflag, size = 0x4, scoped, tag = 'scoped memory for tpu_custom_call.1']
    #allocation10 [shape = 'u8[2048]{0}', space=vmem, size = 0x800, scoped, tag = 'input window, operand 4, single buffered']
    #allocation11 [shape = 'u8[131072]{0}', space=vmem, size = 0x20000, scoped, tag = 'input window, operand 5, single buffered']
    #allocation12 [shape = 's32[1]{0}', space=sflag, size = 0x4, scoped, tag = 'scoped memory for tpu_custom_call.1']
    #allocation13 [shape = 'u8[512]{0}', space=vmem, size = 0x400, scoped, tag = 'input window, operand 6, single buffered']
    #allocation14 [shape = 'u8[4096]{0}', space=vmem, size = 0x1000, scoped, tag = 'output window, operand 0, single buffered']
    %12 = vsyncpa [#allocation3], 0
    %13 = vsyncpa [#allocation6], 0
    %14 = vsyncpa [#allocation9], 0
    %15 = vsyncpa [#allocation12], 0
    %16 = vsyncpa [#allocation4], 0
    // Predicated region
    $region2: #{tpu_custom_call.1} parent=1 // pred_check
      _
    $region3: #{tpu_custom_call.1} parent=1 // pred_check_branch
      %18 = sbr.rel (0) target = $region5
    $region4: #{tpu_custom_call.1} parent=1 // pred_region
      %s20 = ssub.s32 512, 512
      %21 = vsyncadd [#allocation3], %s20
      %s23 = sshll.u32 [#allocation2], 4
      %s24 = int_to_ptr.vmem [resolvable:$true] %s23
      %26 = dma.hbm_to_vmem [thread:$0]  %s0, 512, %s24, [#allocation3]
    $region5: #{tpu_custom_call.1} parent=1 // pred_fallthru
      _
    // Predicated region
    $region6: #{tpu_custom_call.1} parent=1 // pred_check
      _
    $region7: #{tpu_custom_call.1} parent=1 // pred_check_branch
      %28 = sbr.rel (0) target = $region9
    $region8: #{tpu_custom_call.1} parent=1 // pred_region
      %s30 = ssub.s32 49152, 49152
      %31 = vsyncadd [#allocation6], %s30
      %s32 = sshll.u32 [#allocation5], 4
      %s33 = int_to_ptr.vmem [resolvable:$true] %s32
      %38 = dma.hbm_to_vmem [thread:$0]  %s1, 49152, %s33, [#allocation6], 384, 384, 24
    $region9: #{tpu_custom_call.1} parent=1 // pred_fallthru
      _
    // Predicated region
    $region10: #{tpu_custom_call.1} parent=1 // pred_check
      _
    $region11: #{tpu_custom_call.1} parent=1 // pred_check_branch
      %40 = sbr.rel (0) target = $region13
    $region12: #{tpu_custom_call.1} parent=1 // pred_region
      %s42 = ssub.s32 96, 96
      %43 = vsyncadd [#allocation6], %s42
      %s45 = sshll.u32 [#allocation7], 4
      %s46 = int_to_ptr.vmem [resolvable:$true] %s45
      %48 = dma.hbm_to_vmem [thread:$0]  %s2, 96, %s46, [#allocation6]
    $region13: #{tpu_custom_call.1} parent=1 // pred_fallthru
      _
    // Predicated region
    $region14: #{tpu_custom_call.1} parent=1 // pred_check
      _
    $region15: #{tpu_custom_call.1} parent=1 // pred_check_branch
      %50 = sbr.rel (0) target = $region17
    $region16: #{tpu_custom_call.1} parent=1 // pred_region
      %s52 = ssub.s32 24576, 24576
      %53 = vsyncadd [#allocation9], %s52
      %s54 = sshll.u32 [#allocation8], 4
      %s55 = int_to_ptr.vmem [resolvable:$true] %s54
      %60 = dma.hbm_to_vmem [thread:$0]  %s3, 24576, %s55, [#allocation9], 256, 256, 16
    $region17: #{tpu_custom_call.1} parent=1 // pred_fallthru
      _
    // Predicated region
    $region18: #{tpu_custom_call.1} parent=1 // pred_check
      _
    $region19: #{tpu_custom_call.1} parent=1 // pred_check_branch
      %62 = sbr.rel (0) target = $region21
    $region20: #{tpu_custom_call.1} parent=1 // pred_region
      %s64 = ssub.s32 64, 64
      %65 = vsyncadd [#allocation9], %s64
      %s67 = sshll.u32 [#allocation10], 4
      %s68 = int_to_ptr.vmem [resolvable:$true] %s67
      %70 = dma.hbm_to_vmem [thread:$0]  %s4, 64, %s68, [#allocation9]
    $region21: #{tpu_custom_call.1} parent=1 // pred_fallthru
      _
    // Predicated region
    $region22: #{tpu_custom_call.1} parent=1 // pred_check
      _
    $region23: #{tpu_custom_call.1} parent=1 // pred_check_branch
      %72 = sbr.rel (0) target = $region25
    $region24: #{tpu_custom_call.1} parent=1 // pred_region
      %s74 = ssub.s32 4096, 4096
      %75 = vsyncadd [#allocation12], %s74
      %s76 = sshll.u32 [#allocation11], 4
      %s77 = int_to_ptr.vmem [resolvable:$true] %s76
      %82 = dma.hbm_to_vmem [thread:$0]  %s5, 4096, %s77, [#allocation12], 64, 64, 4
    $region25: #{tpu_custom_call.1} parent=1 // pred_fallthru
      _
    // Predicated region
    $region26: #{tpu_custom_call.1} parent=1 // pred_check
      _
    $region27: #{tpu_custom_call.1} parent=1 // pred_check_branch
      %84 = sbr.rel (0) target = $region29
    $region28: #{tpu_custom_call.1} parent=1 // pred_region
      %s86 = ssub.s32 16, 16
      %87 = vsyncadd [#allocation12], %s86
      %s89 = sshll.u32 [#allocation13], 4
      %s90 = int_to_ptr.vmem [resolvable:$true] %s89
      %92 = dma.hbm_to_vmem [thread:$0]  %s6, 16, %s90, [#allocation12]
    $region29: #{tpu_custom_call.1} parent=1 // pred_fallthru
      _
    // Predicated region
    $region30: #{tpu_custom_call.1} parent=1 // pred_check
      _
    $region31: #{tpu_custom_call.1} parent=1 // pred_check_branch
      %94 = sbr.rel (0) target = $region33
    $region32: #{tpu_custom_call.1} parent=1 // pred_region
      %95 = dma.done [#allocation3], 512
    $region33: #{tpu_custom_call.1} parent=1 // pred_fallthru
      _
    // Predicated region
    $region34: #{tpu_custom_call.1} parent=1 // pred_check
      _
    $region35: #{tpu_custom_call.1} parent=1 // pred_check_branch
      %97 = sbr.rel (0) target = $region37
    $region36: #{tpu_custom_call.1} parent=1 // pred_region
      %98 = dma.done [#allocation6], 49152
    $region37: #{tpu_custom_call.1} parent=1 // pred_fallthru
      _
    // Predicated region
    $region38: #{tpu_custom_call.1} parent=1 // pred_check
      _
    $region39: #{tpu_custom_call.1} parent=1 // pred_check_branch
      %100 = sbr.rel (0) target = $region41
    $region40: #{tpu_custom_call.1} parent=1 // pred_region
      %101 = dma.done [#allocation6], 96
    $region41: #{tpu_custom_call.1} parent=1 // pred_fallthru
      _
    // Predicated region
    $region42: #{tpu_custom_call.1} parent=1 // pred_check
      _
    $region43: #{tpu_custom_call.1} parent=1 // pred_check_branch
      %103 = sbr.rel (0) target = $region45
    $region44: #{tpu_custom_call.1} parent=1 // pred_region
      %104 = dma.done [#allocation9], 24576
    $region45: #{tpu_custom_call.1} parent=1 // pred_fallthru
      _
    // Predicated region
    $region46: #{tpu_custom_call.1} parent=1 // pred_check
      _
    $region47: #{tpu_custom_call.1} parent=1 // pred_check_branch
      %106 = sbr.rel (0) target = $region49
    $region48: #{tpu_custom_call.1} parent=1 // pred_region
      %107 = dma.done [#allocation9], 64
    $region49: #{tpu_custom_call.1} parent=1 // pred_fallthru
      _
    // Predicated region
    $region50: #{tpu_custom_call.1} parent=1 // pred_check
      _
    $region51: #{tpu_custom_call.1} parent=1 // pred_check_branch
      %109 = sbr.rel (0) target = $region53
    $region52: #{tpu_custom_call.1} parent=1 // pred_region
      %110 = dma.done [#allocation12], 4096
    $region53: #{tpu_custom_call.1} parent=1 // pred_fallthru
      _
    // Predicated region
    $region54: #{tpu_custom_call.1} parent=1 // pred_check
      _
    $region55: #{tpu_custom_call.1} parent=1 // pred_check_branch
      %112 = sbr.rel (0) target = $region57
    $region56: #{tpu_custom_call.1} parent=1 // pred_region
      %113 = dma.done [#allocation12], 16
    $region57: #{tpu_custom_call.1} parent=1 // pred_fallthru
      _
    %v115 = vld [vmem:[#allocation2] sm:$0xff]
    %v116 = vld [vmem:[#allocation2 + $0x8] sm:$0xff]
    %v117 = vld [vmem:[#allocation2 + $0x10] sm:$0xff]
    %v118 = vld [vmem:[#allocation2 + $0x18] sm:$0xff]
    %v119 = vld [vmem:[#allocation5] sm:$0xff]
    %v120 = vld [vmem:[#allocation5 + $0x8] sm:$0xff]
    %v121 = vld [vmem:[#allocation5 + $0x10] sm:$0xff]
    %v122 = vld [vmem:[#allocation5 + $0x18] sm:$0xff]
    %v123 = vld [vmem:[#allocation5 + $0x20] sm:$0xff]
    %v124 = vld [vmem:[#allocation5 + $0x28] sm:$0xff]
    %v125 = vld [vmem:[#allocation5 + $0x30] sm:$0xff]
    %v126 = vld [vmem:[#allocation5 + $0x38] sm:$0xff]
    %v127 = vld [vmem:[#allocation5 + $0x40] sm:$0xff]
    %v128 = vld [vmem:[#allocation5 + $0x48] sm:$0xff]
    %v129 = vld [vmem:[#allocation5 + $0x50] sm:$0xff]
    %v130 = vld [vmem:[#allocation5 + $0x58] sm:$0xff]
    %v131 = vld [vmem:[#allocation5 + $0x60] sm:$0xff]
    %v132 = vld [vmem:[#allocation5 + $0x68] sm:$0xff]
    %v133 = vld [vmem:[#allocation5 + $0x70] sm:$0xff]
    %v134 = vld [vmem:[#allocation5 + $0x78] sm:$0xff]
    %v135 = vld [vmem:[#allocation5 + $0x80] sm:$0xff]
    %v136 = vld [vmem:[#allocation5 + $0x88] sm:$0xff]
    %v137 = vld [vmem:[#allocation5 + $0x90] sm:$0xff]
    %v138 = vld [vmem:[#allocation5 + $0x98] sm:$0xff]
    %v139 = vld [vmem:[#allocation5 + $0xa0] sm:$0xff]
    %v140 = vld [vmem:[#allocation5 + $0xa8] sm:$0xff]
    %v141 = vld [vmem:[#allocation5 + $0xb0] sm:$0xff]
    %v142 = vld [vmem:[#allocation5 + $0xb8] sm:$0xff]
    %v143 = vld [vmem:[#allocation5 + $0xc0] sm:$0xff]
    %v144 = vld [vmem:[#allocation5 + $0xc8] sm:$0xff]
    %v145 = vld [vmem:[#allocation5 + $0xd0] sm:$0xff]
    %v146 = vld [vmem:[#allocation5 + $0xd8] sm:$0xff]
    %v147 = vld [vmem:[#allocation5 + $0xe0] sm:$0xff]
    %v148 = vld [vmem:[#allocation5 + $0xe8] sm:$0xff]
    %v149 = vld [vmem:[#allocation5 + $0xf0] sm:$0xff]
    %v150 = vld [vmem:[#allocation5 + $0xf8] sm:$0xff]
    %v151 = vld [vmem:[#allocation5 + $0x100] sm:$0xff]
    %v152 = vld [vmem:[#allocation5 + $0x108] sm:$0xff]
    %v153 = vld [vmem:[#allocation5 + $0x110] sm:$0xff]
    %v154 = vld [vmem:[#allocation5 + $0x118] sm:$0xff]
    %v155 = vld [vmem:[#allocation5 + $0x120] sm:$0xff]
    %v156 = vld [vmem:[#allocation5 + $0x128] sm:$0xff]
    %v157 = vld [vmem:[#allocation5 + $0x130] sm:$0xff]
    %v158 = vld [vmem:[#allocation5 + $0x138] sm:$0xff]
    %v159 = vld [vmem:[#allocation5 + $0x140] sm:$0xff]
    %v160 = vld [vmem:[#allocation5 + $0x148] sm:$0xff]
    %v161 = vld [vmem:[#allocation5 + $0x150] sm:$0xff]
    %v162 = vld [vmem:[#allocation5 + $0x158] sm:$0xff]
    %v163 = vld [vmem:[#allocation5 + $0x160] sm:$0xff]
    %v164 = vld [vmem:[#allocation5 + $0x168] sm:$0xff]
    %v165 = vld [vmem:[#allocation5 + $0x170] sm:$0xff]
    %v166 = vld [vmem:[#allocation5 + $0x178] sm:$0xff]
    %v167 = vld [vmem:[#allocation5 + $0x180] sm:$0xff]
    %v168 = vld [vmem:[#allocation5 + $0x188] sm:$0xff]
    %v169 = vld [vmem:[#allocation5 + $0x190] sm:$0xff]
    %v170 = vld [vmem:[#allocation5 + $0x198] sm:$0xff]
    %v171 = vld [vmem:[#allocation5 + $0x1a0] sm:$0xff]
    %v172 = vld [vmem:[#allocation5 + $0x1a8] sm:$0xff]
    %v173 = vld [vmem:[#allocation5 + $0x1b0] sm:$0xff]
    %v174 = vld [vmem:[#allocation5 + $0x1b8] sm:$0xff]
    %v175 = vld [vmem:[#allocation5 + $0x1c0] sm:$0xff]
    %v176 = vld [vmem:[#allocation5 + $0x1c8] sm:$0xff]
    %v177 = vld [vmem:[#allocation5 + $0x1d0] sm:$0xff]
    %v178 = vld [vmem:[#allocation5 + $0x1d8] sm:$0xff]
    %v179 = vld [vmem:[#allocation5 + $0x1e0] sm:$0xff]
    %v180 = vld [vmem:[#allocation5 + $0x1e8] sm:$0xff]
    %v181 = vld [vmem:[#allocation5 + $0x1f0] sm:$0xff]
    %v182 = vld [vmem:[#allocation5 + $0x1f8] sm:$0xff]
    %v183 = vld [vmem:[#allocation5 + $0x200] sm:$0xff]
    %v184 = vld [vmem:[#allocation5 + $0x208] sm:$0xff]
    %v185 = vld [vmem:[#allocation5 + $0x210] sm:$0xff]
    %v186 = vld [vmem:[#allocation5 + $0x218] sm:$0xff]
    %v187 = vld [vmem:[#allocation5 + $0x220] sm:$0xff]
    %v188 = vld [vmem:[#allocation5 + $0x228] sm:$0xff]
    %v189 = vld [vmem:[#allocation5 + $0x230] sm:$0xff]
    %v190 = vld [vmem:[#allocation5 + $0x238] sm:$0xff]
    %v191 = vld [vmem:[#allocation5 + $0x240] sm:$0xff]
    %v192 = vld [vmem:[#allocation5 + $0x248] sm:$0xff]
    %v193 = vld [vmem:[#allocation5 + $0x250] sm:$0xff]
    %v194 = vld [vmem:[#allocation5 + $0x258] sm:$0xff]
    %v195 = vld [vmem:[#allocation5 + $0x260] sm:$0xff]
    %v196 = vld [vmem:[#allocation5 + $0x268] sm:$0xff]
    %v197 = vld [vmem:[#allocation5 + $0x270] sm:$0xff]
    %v198 = vld [vmem:[#allocation5 + $0x278] sm:$0xff]
    %v199 = vld [vmem:[#allocation5 + $0x280] sm:$0xff]
    %v200 = vld [vmem:[#allocation5 + $0x288] sm:$0xff]
    %v201 = vld [vmem:[#allocation5 + $0x290] sm:$0xff]
    %v202 = vld [vmem:[#allocation5 + $0x298] sm:$0xff]
    %v203 = vld [vmem:[#allocation5 + $0x2a0] sm:$0xff]
    %v204 = vld [vmem:[#allocation5 + $0x2a8] sm:$0xff]
    %v205 = vld [vmem:[#allocation5 + $0x2b0] sm:$0xff]
    %v206 = vld [vmem:[#allocation5 + $0x2b8] sm:$0xff]
    %v207 = vld [vmem:[#allocation5 + $0x2c0] sm:$0xff]
    %v208 = vld [vmem:[#allocation5 + $0x2c8] sm:$0xff]
    %v209 = vld [vmem:[#allocation5 + $0x2d0] sm:$0xff]
    %v210 = vld [vmem:[#allocation5 + $0x2d8] sm:$0xff]
    %v211 = vld [vmem:[#allocation5 + $0x2e0] sm:$0xff]
    %v212 = vld [vmem:[#allocation5 + $0x2e8] sm:$0xff]
    %v213 = vld [vmem:[#allocation5 + $0x2f0] sm:$0xff]
    %v214 = vld [vmem:[#allocation5 + $0x2f8] sm:$0xff]
    %v215 = vld [vmem:[#allocation5 + $0x300] sm:$0xff]
    %v216 = vld [vmem:[#allocation5 + $0x308] sm:$0xff]
    %v217 = vld [vmem:[#allocation5 + $0x310] sm:$0xff]
    %v218 = vld [vmem:[#allocation5 + $0x318] sm:$0xff]
    %v219 = vld [vmem:[#allocation5 + $0x320] sm:$0xff]
    %v220 = vld [vmem:[#allocation5 + $0x328] sm:$0xff]
    %v221 = vld [vmem:[#allocation5 + $0x330] sm:$0xff]
    %v222 = vld [vmem:[#allocation5 + $0x338] sm:$0xff]
    %v223 = vld [vmem:[#allocation5 + $0x340] sm:$0xff]
    %v224 = vld [vmem:[#allocation5 + $0x348] sm:$0xff]
    %v225 = vld [vmem:[#allocation5 + $0x350] sm:$0xff]
    %v226 = vld [vmem:[#allocation5 + $0x358] sm:$0xff]
    %v227 = vld [vmem:[#allocation5 + $0x360] sm:$0xff]
    %v228 = vld [vmem:[#allocation5 + $0x368] sm:$0xff]
    %v229 = vld [vmem:[#allocation5 + $0x370] sm:$0xff]
    %v230 = vld [vmem:[#allocation5 + $0x378] sm:$0xff]
    %v231 = vld [vmem:[#allocation5 + $0x380] sm:$0xff]
    %v232 = vld [vmem:[#allocation5 + $0x388] sm:$0xff]
    %v233 = vld [vmem:[#allocation5 + $0x390] sm:$0xff]
    %v234 = vld [vmem:[#allocation5 + $0x398] sm:$0xff]
    %v235 = vld [vmem:[#allocation5 + $0x3a0] sm:$0xff]
    %v236 = vld [vmem:[#allocation5 + $0x3a8] sm:$0xff]
    %v237 = vld [vmem:[#allocation5 + $0x3b0] sm:$0xff]
    %v238 = vld [vmem:[#allocation5 + $0x3b8] sm:$0xff]
    %v239 = vld [vmem:[#allocation5 + $0x3c0] sm:$0xff]
    %v240 = vld [vmem:[#allocation5 + $0x3c8] sm:$0xff]
    %v241 = vld [vmem:[#allocation5 + $0x3d0] sm:$0xff]
    %v242 = vld [vmem:[#allocation5 + $0x3d8] sm:$0xff]
    %v243 = vld [vmem:[#allocation5 + $0x3e0] sm:$0xff]
    %v244 = vld [vmem:[#allocation5 + $0x3e8] sm:$0xff]
    %v245 = vld [vmem:[#allocation5 + $0x3f0] sm:$0xff]
    %v246 = vld [vmem:[#allocation5 + $0x3f8] sm:$0xff]
    %v247 = vld [vmem:[#allocation5 + $0x400] sm:$0xff]
    %v248 = vld [vmem:[#allocation5 + $0x408] sm:$0xff]
    %v249 = vld [vmem:[#allocation5 + $0x410] sm:$0xff]
    %v250 = vld [vmem:[#allocation5 + $0x418] sm:$0xff]
    %v251 = vld [vmem:[#allocation5 + $0x420] sm:$0xff]
    %v252 = vld [vmem:[#allocation5 + $0x428] sm:$0xff]
    %v253 = vld [vmem:[#allocation5 + $0x430] sm:$0xff]
    %v254 = vld [vmem:[#allocation5 + $0x438] sm:$0xff]
    %v255 = vld [vmem:[#allocation5 + $0x440] sm:$0xff]
    %v256 = vld [vmem:[#allocation5 + $0x448] sm:$0xff]
    %v257 = vld [vmem:[#allocation5 + $0x450] sm:$0xff]
    %v258 = vld [vmem:[#allocation5 + $0x458] sm:$0xff]
    %v259 = vld [vmem:[#allocation5 + $0x460] sm:$0xff]
    %v260 = vld [vmem:[#allocation5 + $0x468] sm:$0xff]
    %v261 = vld [vmem:[#allocation5 + $0x470] sm:$0xff]
    %v262 = vld [vmem:[#allocation5 + $0x478] sm:$0xff]
    %v263 = vld [vmem:[#allocation5 + $0x480] sm:$0xff]
    %v264 = vld [vmem:[#allocation5 + $0x488] sm:$0xff]
    %v265 = vld [vmem:[#allocation5 + $0x490] sm:$0xff]
    %v266 = vld [vmem:[#allocation5 + $0x498] sm:$0xff]
    %v267 = vld [vmem:[#allocation5 + $0x4a0] sm:$0xff]
    %v268 = vld [vmem:[#allocation5 + $0x4a8] sm:$0xff]
    %v269 = vld [vmem:[#allocation5 + $0x4b0] sm:$0xff]
    %v270 = vld [vmem:[#allocation5 + $0x4b8] sm:$0xff]
    %v271 = vld [vmem:[#allocation5 + $0x4c0] sm:$0xff]
    %v272 = vld [vmem:[#allocation5 + $0x4c8] sm:$0xff]
    %v273 = vld [vmem:[#allocation5 + $0x4d0] sm:$0xff]
    %v274 = vld [vmem:[#allocation5 + $0x4d8] sm:$0xff]
    %v275 = vld [vmem:[#allocation5 + $0x4e0] sm:$0xff]
    %v276 = vld [vmem:[#allocation5 + $0x4e8] sm:$0xff]
    %v277 = vld [vmem:[#allocation5 + $0x4f0] sm:$0xff]
    %v278 = vld [vmem:[#allocation5 + $0x4f8] sm:$0xff]
    %v279 = vld [vmem:[#allocation5 + $0x500] sm:$0xff]
    %v280 = vld [vmem:[#allocation5 + $0x508] sm:$0xff]
    %v281 = vld [vmem:[#allocation5 + $0x510] sm:$0xff]
    %v282 = vld [vmem:[#allocation5 + $0x518] sm:$0xff]
    %v283 = vld [vmem:[#allocation5 + $0x520] sm:$0xff]
    %v284 = vld [vmem:[#allocation5 + $0x528] sm:$0xff]
    %v285 = vld [vmem:[#allocation5 + $0x530] sm:$0xff]
    %v286 = vld [vmem:[#allocation5 + $0x538] sm:$0xff]
    %v287 = vld [vmem:[#allocation5 + $0x540] sm:$0xff]
    %v288 = vld [vmem:[#allocation5 + $0x548] sm:$0xff]
    %v289 = vld [vmem:[#allocation5 + $0x550] sm:$0xff]
    %v290 = vld [vmem:[#allocation5 + $0x558] sm:$0xff]
    %v291 = vld [vmem:[#allocation5 + $0x560] sm:$0xff]
    %v292 = vld [vmem:[#allocation5 + $0x568] sm:$0xff]
    %v293 = vld [vmem:[#allocation5 + $0x570] sm:$0xff]
    %v294 = vld [vmem:[#allocation5 + $0x578] sm:$0xff]
    %v295 = vld [vmem:[#allocation5 + $0x580] sm:$0xff]
    %v296 = vld [vmem:[#allocation5 + $0x588] sm:$0xff]
    %v297 = vld [vmem:[#allocation5 + $0x590] sm:$0xff]
    %v298 = vld [vmem:[#allocation5 + $0x598] sm:$0xff]
    %v299 = vld [vmem:[#allocation5 + $0x5a0] sm:$0xff]
    %v300 = vld [vmem:[#allocation5 + $0x5a8] sm:$0xff]
    %v301 = vld [vmem:[#allocation5 + $0x5b0] sm:$0xff]
    %v302 = vld [vmem:[#allocation5 + $0x5b8] sm:$0xff]
    %v303 = vld [vmem:[#allocation5 + $0x5c0] sm:$0xff]
    %v304 = vld [vmem:[#allocation5 + $0x5c8] sm:$0xff]
    %v305 = vld [vmem:[#allocation5 + $0x5d0] sm:$0xff]
    %v306 = vld [vmem:[#allocation5 + $0x5d8] sm:$0xff]
    %v307 = vld [vmem:[#allocation5 + $0x5e0] sm:$0xff]
    %v308 = vld [vmem:[#allocation5 + $0x5e8] sm:$0xff]
    %v309 = vld [vmem:[#allocation5 + $0x5f0] sm:$0xff]
    %v310 = vld [vmem:[#allocation5 + $0x5f8] sm:$0xff]
    %v311 = vld [vmem:[#allocation5 + $0x600] sm:$0xff]
    %v312 = vld [vmem:[#allocation5 + $0x608] sm:$0xff]
    %v313 = vld [vmem:[#allocation5 + $0x610] sm:$0xff]
    %v314 = vld [vmem:[#allocation5 + $0x618] sm:$0xff]
    %v315 = vld [vmem:[#allocation5 + $0x620] sm:$0xff]
    %v316 = vld [vmem:[#allocation5 + $0x628] sm:$0xff]
    %v317 = vld [vmem:[#allocation5 + $0x630] sm:$0xff]
    %v318 = vld [vmem:[#allocation5 + $0x638] sm:$0xff]
    %v319 = vld [vmem:[#allocation5 + $0x640] sm:$0xff]
    %v320 = vld [vmem:[#allocation5 + $0x648] sm:$0xff]
    %v321 = vld [vmem:[#allocation5 + $0x650] sm:$0xff]
    %v322 = vld [vmem:[#allocation5 + $0x658] sm:$0xff]
    %v323 = vld [vmem:[#allocation5 + $0x660] sm:$0xff]
    %v324 = vld [vmem:[#allocation5 + $0x668] sm:$0xff]
    %v325 = vld [vmem:[#allocation5 + $0x670] sm:$0xff]
    %v326 = vld [vmem:[#allocation5 + $0x678] sm:$0xff]
    %v327 = vld [vmem:[#allocation5 + $0x680] sm:$0xff]
    %v328 = vld [vmem:[#allocation5 + $0x688] sm:$0xff]
    %v329 = vld [vmem:[#allocation5 + $0x690] sm:$0xff]
    %v330 = vld [vmem:[#allocation5 + $0x698] sm:$0xff]
    %v331 = vld [vmem:[#allocation5 + $0x6a0] sm:$0xff]
    %v332 = vld [vmem:[#allocation5 + $0x6a8] sm:$0xff]
    %v333 = vld [vmem:[#allocation5 + $0x6b0] sm:$0xff]
    %v334 = vld [vmem:[#allocation5 + $0x6b8] sm:$0xff]
    %v335 = vld [vmem:[#allocation5 + $0x6c0] sm:$0xff]
    %v336 = vld [vmem:[#allocation5 + $0x6c8] sm:$0xff]
    %v337 = vld [vmem:[#allocation5 + $0x6d0] sm:$0xff]
    %v338 = vld [vmem:[#allocation5 + $0x6d8] sm:$0xff]
    %v339 = vld [vmem:[#allocation5 + $0x6e0] sm:$0xff]
    %v340 = vld [vmem:[#allocation5 + $0x6e8] sm:$0xff]
    %v341 = vld [vmem:[#allocation5 + $0x6f0] sm:$0xff]
    %v342 = vld [vmem:[#allocation5 + $0x6f8] sm:$0xff]
    %v343 = vld [vmem:[#allocation5 + $0x700] sm:$0xff]
    %v344 = vld [vmem:[#allocation5 + $0x708] sm:$0xff]
    %v345 = vld [vmem:[#allocation5 + $0x710] sm:$0xff]
    %v346 = vld [vmem:[#allocation5 + $0x718] sm:$0xff]
    %v347 = vld [vmem:[#allocation5 + $0x720] sm:$0xff]
    %v348 = vld [vmem:[#allocation5 + $0x728] sm:$0xff]
    %v349 = vld [vmem:[#allocation5 + $0x730] sm:$0xff]
    %v350 = vld [vmem:[#allocation5 + $0x738] sm:$0xff]
    %v351 = vld [vmem:[#allocation5 + $0x740] sm:$0xff]
    %v352 = vld [vmem:[#allocation5 + $0x748] sm:$0xff]
    %v353 = vld [vmem:[#allocation5 + $0x750] sm:$0xff]
    %v354 = vld [vmem:[#allocation5 + $0x758] sm:$0xff]
    %v355 = vld [vmem:[#allocation5 + $0x760] sm:$0xff]
    %v356 = vld [vmem:[#allocation5 + $0x768] sm:$0xff]
    %v357 = vld [vmem:[#allocation5 + $0x770] sm:$0xff]
    %v358 = vld [vmem:[#allocation5 + $0x778] sm:$0xff]
    %v359 = vld [vmem:[#allocation5 + $0x780] sm:$0xff]
    %v360 = vld [vmem:[#allocation5 + $0x788] sm:$0xff]
    %v361 = vld [vmem:[#allocation5 + $0x790] sm:$0xff]
    %v362 = vld [vmem:[#allocation5 + $0x798] sm:$0xff]
    %v363 = vld [vmem:[#allocation5 + $0x7a0] sm:$0xff]
    %v364 = vld [vmem:[#allocation5 + $0x7a8] sm:$0xff]
    %v365 = vld [vmem:[#allocation5 + $0x7b0] sm:$0xff]
    %v366 = vld [vmem:[#allocation5 + $0x7b8] sm:$0xff]
    %v367 = vld [vmem:[#allocation5 + $0x7c0] sm:$0xff]
    %v368 = vld [vmem:[#allocation5 + $0x7c8] sm:$0xff]
    %v369 = vld [vmem:[#allocation5 + $0x7d0] sm:$0xff]
    %v370 = vld [vmem:[#allocation5 + $0x7d8] sm:$0xff]
    %v371 = vld [vmem:[#allocation5 + $0x7e0] sm:$0xff]
    %v372 = vld [vmem:[#allocation5 + $0x7e8] sm:$0xff]
    %v373 = vld [vmem:[#allocation5 + $0x7f0] sm:$0xff]
    %v374 = vld [vmem:[#allocation5 + $0x7f8] sm:$0xff]
    %v375 = vld [vmem:[#allocation5 + $0x800] sm:$0xff]
    %v376 = vld [vmem:[#allocation5 + $0x808] sm:$0xff]
    %v377 = vld [vmem:[#allocation5 + $0x810] sm:$0xff]
    %v378 = vld [vmem:[#allocation5 + $0x818] sm:$0xff]
    %v379 = vld [vmem:[#allocation5 + $0x820] sm:$0xff]
    %v380 = vld [vmem:[#allocation5 + $0x828] sm:$0xff]
    %v381 = vld [vmem:[#allocation5 + $0x830] sm:$0xff]
    %v382 = vld [vmem:[#allocation5 + $0x838] sm:$0xff]
    %v383 = vld [vmem:[#allocation5 + $0x840] sm:$0xff]
    %v384 = vld [vmem:[#allocation5 + $0x848] sm:$0xff]
    %v385 = vld [vmem:[#allocation5 + $0x850] sm:$0xff]
    %v386 = vld [vmem:[#allocation5 + $0x858] sm:$0xff]
    %v387 = vld [vmem:[#allocation5 + $0x860] sm:$0xff]
    %v388 = vld [vmem:[#allocation5 + $0x868] sm:$0xff]
    %v389 = vld [vmem:[#allocation5 + $0x870] sm:$0xff]
    %v390 = vld [vmem:[#allocation5 + $0x878] sm:$0xff]
    %v391 = vld [vmem:[#allocation5 + $0x880] sm:$0xff]
    %v392 = vld [vmem:[#allocation5 + $0x888] sm:$0xff]
    %v393 = vld [vmem:[#allocation5 + $0x890] sm:$0xff]
    %v394 = vld [vmem:[#allocation5 + $0x898] sm:$0xff]
    %v395 = vld [vmem:[#allocation5 + $0x8a0] sm:$0xff]
    %v396 = vld [vmem:[#allocation5 + $0x8a8] sm:$0xff]
    %v397 = vld [vmem:[#allocation5 + $0x8b0] sm:$0xff]
    %v398 = vld [vmem:[#allocation5 + $0x8b8] sm:$0xff]
    %v399 = vld [vmem:[#allocation5 + $0x8c0] sm:$0xff]
    %v400 = vld [vmem:[#allocation5 + $0x8c8] sm:$0xff]
    %v401 = vld [vmem:[#allocation5 + $0x8d0] sm:$0xff]
    %v402 = vld [vmem:[#allocation5 + $0x8d8] sm:$0xff]
    %v403 = vld [vmem:[#allocation5 + $0x8e0] sm:$0xff]
    %v404 = vld [vmem:[#allocation5 + $0x8e8] sm:$0xff]
    %v405 = vld [vmem:[#allocation5 + $0x8f0] sm:$0xff]
    %v406 = vld [vmem:[#allocation5 + $0x8f8] sm:$0xff]
    %v407 = vld [vmem:[#allocation5 + $0x900] sm:$0xff]
    %v408 = vld [vmem:[#allocation5 + $0x908] sm:$0xff]
    %v409 = vld [vmem:[#allocation5 + $0x910] sm:$0xff]
    %v410 = vld [vmem:[#allocation5 + $0x918] sm:$0xff]
    %v411 = vld [vmem:[#allocation5 + $0x920] sm:$0xff]
    %v412 = vld [vmem:[#allocation5 + $0x928] sm:$0xff]
    %v413 = vld [vmem:[#allocation5 + $0x930] sm:$0xff]
    %v414 = vld [vmem:[#allocation5 + $0x938] sm:$0xff]
    %v415 = vld [vmem:[#allocation5 + $0x940] sm:$0xff]
    %v416 = vld [vmem:[#allocation5 + $0x948] sm:$0xff]
    %v417 = vld [vmem:[#allocation5 + $0x950] sm:$0xff]
    %v418 = vld [vmem:[#allocation5 + $0x958] sm:$0xff]
    %v419 = vld [vmem:[#allocation5 + $0x960] sm:$0xff]
    %v420 = vld [vmem:[#allocation5 + $0x968] sm:$0xff]
    %v421 = vld [vmem:[#allocation5 + $0x970] sm:$0xff]
    %v422 = vld [vmem:[#allocation5 + $0x978] sm:$0xff]
    %v423 = vld [vmem:[#allocation5 + $0x980] sm:$0xff]
    %v424 = vld [vmem:[#allocation5 + $0x988] sm:$0xff]
    %v425 = vld [vmem:[#allocation5 + $0x990] sm:$0xff]
    %v426 = vld [vmem:[#allocation5 + $0x998] sm:$0xff]
    %v427 = vld [vmem:[#allocation5 + $0x9a0] sm:$0xff]
    %v428 = vld [vmem:[#allocation5 + $0x9a8] sm:$0xff]
    %v429 = vld [vmem:[#allocation5 + $0x9b0] sm:$0xff]
    %v430 = vld [vmem:[#allocation5 + $0x9b8] sm:$0xff]
    %v431 = vld [vmem:[#allocation5 + $0x9c0] sm:$0xff]
    %v432 = vld [vmem:[#allocation5 + $0x9c8] sm:$0xff]
    %v433 = vld [vmem:[#allocation5 + $0x9d0] sm:$0xff]
    %v434 = vld [vmem:[#allocation5 + $0x9d8] sm:$0xff]
    %v435 = vld [vmem:[#allocation5 + $0x9e0] sm:$0xff]
    %v436 = vld [vmem:[#allocation5 + $0x9e8] sm:$0xff]
    %v437 = vld [vmem:[#allocation5 + $0x9f0] sm:$0xff]
    %v438 = vld [vmem:[#allocation5 + $0x9f8] sm:$0xff]
    %v439 = vld [vmem:[#allocation5 + $0xa00] sm:$0xff]
    %v440 = vld [vmem:[#allocation5 + $0xa08] sm:$0xff]
    %v441 = vld [vmem:[#allocation5 + $0xa10] sm:$0xff]
    %v442 = vld [vmem:[#allocation5 + $0xa18] sm:$0xff]
    %v443 = vld [vmem:[#allocation5 + $0xa20] sm:$0xff]
    %v444 = vld [vmem:[#allocation5 + $0xa28] sm:$0xff]
    %v445 = vld [vmem:[#allocation5 + $0xa30] sm:$0xff]
    %v446 = vld [vmem:[#allocation5 + $0xa38] sm:$0xff]
    %v447 = vld [vmem:[#allocation5 + $0xa40] sm:$0xff]
    %v448 = vld [vmem:[#allocation5 + $0xa48] sm:$0xff]
    %v449 = vld [vmem:[#allocation5 + $0xa50] sm:$0xff]
    %v450 = vld [vmem:[#allocation5 + $0xa58] sm:$0xff]
    %v451 = vld [vmem:[#allocation5 + $0xa60] sm:$0xff]
    %v452 = vld [vmem:[#allocation5 + $0xa68] sm:$0xff]
    %v453 = vld [vmem:[#allocation5 + $0xa70] sm:$0xff]
    %v454 = vld [vmem:[#allocation5 + $0xa78] sm:$0xff]
    %v455 = vld [vmem:[#allocation5 + $0xa80] sm:$0xff]
    %v456 = vld [vmem:[#allocation5 + $0xa88] sm:$0xff]
    %v457 = vld [vmem:[#allocation5 + $0xa90] sm:$0xff]
    %v458 = vld [vmem:[#allocation5 + $0xa98] sm:$0xff]
    %v459 = vld [vmem:[#allocation5 + $0xaa0] sm:$0xff]
    %v460 = vld [vmem:[#allocation5 + $0xaa8] sm:$0xff]
    %v461 = vld [vmem:[#allocation5 + $0xab0] sm:$0xff]
    %v462 = vld [vmem:[#allocation5 + $0xab8] sm:$0xff]
    %v463 = vld [vmem:[#allocation5 + $0xac0] sm:$0xff]
    %v464 = vld [vmem:[#allocation5 + $0xac8] sm:$0xff]
    %v465 = vld [vmem:[#allocation5 + $0xad0] sm:$0xff]
    %v466 = vld [vmem:[#allocation5 + $0xad8] sm:$0xff]
    %v467 = vld [vmem:[#allocation5 + $0xae0] sm:$0xff]
    %v468 = vld [vmem:[#allocation5 + $0xae8] sm:$0xff]
    %v469 = vld [vmem:[#allocation5 + $0xaf0] sm:$0xff]
    %v470 = vld [vmem:[#allocation5 + $0xaf8] sm:$0xff]
    %v471 = vld [vmem:[#allocation5 + $0xb00] sm:$0xff]
    %v472 = vld [vmem:[#allocation5 + $0xb08] sm:$0xff]
    %v473 = vld [vmem:[#allocation5 + $0xb10] sm:$0xff]
    %v474 = vld [vmem:[#allocation5 + $0xb18] sm:$0xff]
    %v475 = vld [vmem:[#allocation5 + $0xb20] sm:$0xff]
    %v476 = vld [vmem:[#allocation5 + $0xb28] sm:$0xff]
    %v477 = vld [vmem:[#allocation5 + $0xb30] sm:$0xff]
    %v478 = vld [vmem:[#allocation5 + $0xb38] sm:$0xff]
    %v479 = vld [vmem:[#allocation5 + $0xb40] sm:$0xff]
    %v480 = vld [vmem:[#allocation5 + $0xb48] sm:$0xff]
    %v481 = vld [vmem:[#allocation5 + $0xb50] sm:$0xff]
    %v482 = vld [vmem:[#allocation5 + $0xb58] sm:$0xff]
    %v483 = vld [vmem:[#allocation5 + $0xb60] sm:$0xff]
    %v484 = vld [vmem:[#allocation5 + $0xb68] sm:$0xff]
    %v485 = vld [vmem:[#allocation5 + $0xb70] sm:$0xff]
    %v486 = vld [vmem:[#allocation5 + $0xb78] sm:$0xff]
    %v487 = vld [vmem:[#allocation5 + $0xb80] sm:$0xff]
    %v488 = vld [vmem:[#allocation5 + $0xb88] sm:$0xff]
    %v489 = vld [vmem:[#allocation5 + $0xb90] sm:$0xff]
    %v490 = vld [vmem:[#allocation5 + $0xb98] sm:$0xff]
    %v491 = vld [vmem:[#allocation5 + $0xba0] sm:$0xff]
    %v492 = vld [vmem:[#allocation5 + $0xba8] sm:$0xff]
    %v493 = vld [vmem:[#allocation5 + $0xbb0] sm:$0xff]
    %v494 = vld [vmem:[#allocation5 + $0xbb8] sm:$0xff]
    %v495 = vld [vmem:[#allocation5 + $0xbc0] sm:$0xff]
    %v496 = vld [vmem:[#allocation5 + $0xbc8] sm:$0xff]
    %v497 = vld [vmem:[#allocation5 + $0xbd0] sm:$0xff]
    %v498 = vld [vmem:[#allocation5 + $0xbd8] sm:$0xff]
    %v499 = vld [vmem:[#allocation5 + $0xbe0] sm:$0xff]
    %v500 = vld [vmem:[#allocation5 + $0xbe8] sm:$0xff]
    %v501 = vld [vmem:[#allocation5 + $0xbf0] sm:$0xff]
    %v502 = vld [vmem:[#allocation5 + $0xbf8] sm:$0xff]
    %v503 = vld [vmem:[#allocation7] sm:$0x3f]
    %v505 = vlaneseq
    %v506 = vshrl.u32 %v505, 7
    %v507 = vsub.s32 0, %v506
    %v508 = vrot.slane %v503, %v507
    %v509 = vlaneseq
    %v510 = vshrl.u32 %v509, 7
    %v511 = vsub.s32 1, %v510
    %v512 = vrot.slane %v503, %v511
    %v513 = vlaneseq
    %v514 = vshrl.u32 %v513, 7
    %v515 = vsub.s32 2, %v514
    %v516 = vrot.slane %v503, %v515
    %v517 = vlaneseq
    %v518 = vshrl.u32 %v517, 7
    %v519 = vsub.s32 3, %v518
    %v520 = vrot.slane %v503, %v519
    %v521 = vlaneseq
    %v522 = vshrl.u32 %v521, 7
    %v523 = vsub.s32 4, %v522
    %v524 = vrot.slane %v503, %v523
    %v525 = vlaneseq
    %v526 = vshrl.u32 %v525, 7
    %v527 = vsub.s32 5, %v526
    %v528 = vrot.slane %v503, %v527
    %v539 = vunpack.c.l.b16 %v115
    %v540 = vunpack.c.h.b16 %v115
    %v541 = vunpack.c.l.b16 %v116
    %v542 = vunpack.c.h.b16 %v116
    %v543 = vunpack.c.l.b16 %v117
    %v544 = vunpack.c.h.b16 %v117
    %v545 = vunpack.c.l.b16 %v118
    %v546 = vunpack.c.h.b16 %v118
    %v547 = vpack.c.b16 %v539, %v539
    %v548 = vpack.c.b16 %v540, %v540
    %v549 = vpack.c.b16 %v541, %v541
    %v550 = vpack.c.b16 %v542, %v542
    %v551 = vpack.c.b16 %v543, %v543
    %v552 = vpack.c.b16 %v544, %v544
    %v553 = vpack.c.b16 %v545, %v545
    %v554 = vpack.c.b16 %v546, %v546
    %v947 = vunpack.c.l.b16 %v119
    %v948 = vunpack.c.h.b16 %v119
    %v949 = vunpack.c.l.b16 %v120
    %v950 = vunpack.c.h.b16 %v120
    %v951 = vunpack.c.l.b16 %v121
    %v952 = vunpack.c.h.b16 %v121
    %v953 = vunpack.c.l.b16 %v122
    %v954 = vunpack.c.h.b16 %v122
    %v955 = vunpack.c.l.b16 %v123
    %v956 = vunpack.c.h.b16 %v123
    %v957 = vunpack.c.l.b16 %v124
    %v958 = vunpack.c.h.b16 %v124
    %v959 = vunpack.c.l.b16 %v125
    %v960 = vunpack.c.h.b16 %v125
    %v961 = vunpack.c.l.b16 %v126
    %v962 = vunpack.c.h.b16 %v126
    %v963 = vunpack.c.l.b16 %v127
    %v964 = vunpack.c.h.b16 %v127
    %v965 = vunpack.c.l.b16 %v128
    %v966 = vunpack.c.h.b16 %v128
    %v967 = vunpack.c.l.b16 %v129
    %v968 = vunpack.c.h.b16 %v129
    %v969 = vunpack.c.l.b16 %v130
    %v970 = vunpack.c.h.b16 %v130
    %v971 = vunpack.c.l.b16 %v131
    %v972 = vunpack.c.h.b16 %v131
    %v973 = vunpack.c.l.b16 %v132
    %v974 = vunpack.c.h.b16 %v132
    %v975 = vunpack.c.l.b16 %v133
    %v976 = vunpack.c.h.b16 %v133
    %v977 = vunpack.c.l.b16 %v134
    %v978 = vunpack.c.h.b16 %v134
    %v979 = vunpack.c.l.b16 %v135
    %v980 = vunpack.c.h.b16 %v135
    %v981 = vunpack.c.l.b16 %v136
    %v982 = vunpack.c.h.b16 %v136
    %v983 = vunpack.c.l.b16 %v137
    %v984 = vunpack.c.h.b16 %v137
    %v985 = vunpack.c.l.b16 %v138
    %v986 = vunpack.c.h.b16 %v138
    %v987 = vunpack.c.l.b16 %v139
    %v988 = vunpack.c.h.b16 %v139
    %v989 = vunpack.c.l.b16 %v140
    %v990 = vunpack.c.h.b16 %v140
    %v991 = vunpack.c.l.b16 %v141
    %v992 = vunpack.c.h.b16 %v141
    %v993 = vunpack.c.l.b16 %v142
    %v994 = vunpack.c.h.b16 %v142
    %v995 = vunpack.c.l.b16 %v143
    %v996 = vunpack.c.h.b16 %v143
    %v997 = vunpack.c.l.b16 %v144
    %v998 = vunpack.c.h.b16 %v144
    %v999 = vunpack.c.l.b16 %v145
    %v1000 = vunpack.c.h.b16 %v145
    %v1001 = vunpack.c.l.b16 %v146
    %v1002 = vunpack.c.h.b16 %v146
    %v1003 = vunpack.c.l.b16 %v147
    %v1004 = vunpack.c.h.b16 %v147
    %v1005 = vunpack.c.l.b16 %v148
    %v1006 = vunpack.c.h.b16 %v148
    %v1007 = vunpack.c.l.b16 %v149
    %v1008 = vunpack.c.h.b16 %v149
    %v1009 = vunpack.c.l.b16 %v150
    %v1010 = vunpack.c.h.b16 %v150
    %v1011 = vunpack.c.l.b16 %v151
    %v1012 = vunpack.c.h.b16 %v151
    %v1013 = vunpack.c.l.b16 %v152
    %v1014 = vunpack.c.h.b16 %v152
    %v1015 = vunpack.c.l.b16 %v153
    %v1016 = vunpack.c.h.b16 %v153
    %v1017 = vunpack.c.l.b16 %v154
    %v1018 = vunpack.c.h.b16 %v154
    %v1019 = vunpack.c.l.b16 %v155
    %v1020 = vunpack.c.h.b16 %v155
    %v1021 = vunpack.c.l.b16 %v156
    %v1022 = vunpack.c.h.b16 %v156
    %v1023 = vunpack.c.l.b16 %v157
    %v1024 = vunpack.c.h.b16 %v157
    %v1025 = vunpack.c.l.b16 %v158
    %v1026 = vunpack.c.h.b16 %v158
    %v1027 = vunpack.c.l.b16 %v159
    %v1028 = vunpack.c.h.b16 %v159
    %v1029 = vunpack.c.l.b16 %v160
    %v1030 = vunpack.c.h.b16 %v160
    %v1031 = vunpack.c.l.b16 %v161
    %v1032 = vunpack.c.h.b16 %v161
    %v1033 = vunpack.c.l.b16 %v162
    %v1034 = vunpack.c.h.b16 %v162
    %v1035 = vunpack.c.l.b16 %v163
    %v1036 = vunpack.c.h.b16 %v163
    %v1037 = vunpack.c.l.b16 %v164
    %v1038 = vunpack.c.h.b16 %v164
    %v1039 = vunpack.c.l.b16 %v165
    %v1040 = vunpack.c.h.b16 %v165
    %v1041 = vunpack.c.l.b16 %v166
    %v1042 = vunpack.c.h.b16 %v166
    %v1043 = vunpack.c.l.b16 %v167
    %v1044 = vunpack.c.h.b16 %v167
    %v1045 = vunpack.c.l.b16 %v168
    %v1046 = vunpack.c.h.b16 %v168
    %v1047 = vunpack.c.l.b16 %v169
    %v1048 = vunpack.c.h.b16 %v169
    %v1049 = vunpack.c.l.b16 %v170
    %v1050 = vunpack.c.h.b16 %v170
    %v1051 = vunpack.c.l.b16 %v171
    %v1052 = vunpack.c.h.b16 %v171
    %v1053 = vunpack.c.l.b16 %v172
    %v1054 = vunpack.c.h.b16 %v172
    %v1055 = vunpack.c.l.b16 %v173
    %v1056 = vunpack.c.h.b16 %v173
    %v1057 = vunpack.c.l.b16 %v174
    %v1058 = vunpack.c.h.b16 %v174
    %v1059 = vunpack.c.l.b16 %v175
    %v1060 = vunpack.c.h.b16 %v175
    %v1061 = vunpack.c.l.b16 %v176
    %v1062 = vunpack.c.h.b16 %v176
    %v1063 = vunpack.c.l.b16 %v177
    %v1064 = vunpack.c.h.b16 %v177
    %v1065 = vunpack.c.l.b16 %v178
    %v1066 = vunpack.c.h.b16 %v178
    %v1067 = vunpack.c.l.b16 %v179
    %v1068 = vunpack.c.h.b16 %v179
    %v1069 = vunpack.c.l.b16 %v180
    %v1070 = vunpack.c.h.b16 %v180
    %v1071 = vunpack.c.l.b16 %v181
    %v1072 = vunpack.c.h.b16 %v181
    %v1073 = vunpack.c.l.b16 %v182
    %v1074 = vunpack.c.h.b16 %v182
    %v1075 = vunpack.c.l.b16 %v183
    %v1076 = vunpack.c.h.b16 %v183
    %v1077 = vunpack.c.l.b16 %v184
    %v1078 = vunpack.c.h.b16 %v184
    %v1079 = vunpack.c.l.b16 %v185
    %v1080 = vunpack.c.h.b16 %v185
    %v1081 = vunpack.c.l.b16 %v186
    %v1082 = vunpack.c.h.b16 %v186
    %v1083 = vunpack.c.l.b16 %v187
    %v1084 = vunpack.c.h.b16 %v187
    %v1085 = vunpack.c.l.b16 %v188
    %v1086 = vunpack.c.h.b16 %v188
    %v1087 = vunpack.c.l.b16 %v189
    %v1088 = vunpack.c.h.b16 %v189
    %v1089 = vunpack.c.l.b16 %v190
    %v1090 = vunpack.c.h.b16 %v190
    %v1091 = vunpack.c.l.b16 %v191
    %v1092 = vunpack.c.h.b16 %v191
    %v1093 = vunpack.c.l.b16 %v192
    %v1094 = vunpack.c.h.b16 %v192
    %v1095 = vunpack.c.l.b16 %v193
    %v1096 = vunpack.c.h.b16 %v193
    %v1097 = vunpack.c.l.b16 %v194
    %v1098 = vunpack.c.h.b16 %v194
    %v1099 = vunpack.c.l.b16 %v195
    %v1100 = vunpack.c.h.b16 %v195
    %v1101 = vunpack.c.l.b16 %v196
    %v1102 = vunpack.c.h.b16 %v196
    %v1103 = vunpack.c.l.b16 %v197
    %v1104 = vunpack.c.h.b16 %v197
    %v1105 = vunpack.c.l.b16 %v198
    %v1106 = vunpack.c.h.b16 %v198
    %v1107 = vunpack.c.l.b16 %v199
    %v1108 = vunpack.c.h.b16 %v199
    %v1109 = vunpack.c.l.b16 %v200
    %v1110 = vunpack.c.h.b16 %v200
    %v1111 = vunpack.c.l.b16 %v201
    %v1112 = vunpack.c.h.b16 %v201
    %v1113 = vunpack.c.l.b16 %v202
    %v1114 = vunpack.c.h.b16 %v202
    %v1115 = vunpack.c.l.b16 %v203
    %v1116 = vunpack.c.h.b16 %v203
    %v1117 = vunpack.c.l.b16 %v204
    %v1118 = vunpack.c.h.b16 %v204
    %v1119 = vunpack.c.l.b16 %v205
    %v1120 = vunpack.c.h.b16 %v205
    %v1121 = vunpack.c.l.b16 %v206
    %v1122 = vunpack.c.h.b16 %v206
    %v1123 = vunpack.c.l.b16 %v207
    %v1124 = vunpack.c.h.b16 %v207
    %v1125 = vunpack.c.l.b16 %v208
    %v1126 = vunpack.c.h.b16 %v208
    %v1127 = vunpack.c.l.b16 %v209
    %v1128 = vunpack.c.h.b16 %v209
    %v1129 = vunpack.c.l.b16 %v210
    %v1130 = vunpack.c.h.b16 %v210
    %v1131 = vunpack.c.l.b16 %v211
    %v1132 = vunpack.c.h.b16 %v211
    %v1133 = vunpack.c.l.b16 %v212
    %v1134 = vunpack.c.h.b16 %v212
    %v1135 = vunpack.c.l.b16 %v213
    %v1136 = vunpack.c.h.b16 %v213
    %v1137 = vunpack.c.l.b16 %v214
    %v1138 = vunpack.c.h.b16 %v214
    %v1139 = vunpack.c.l.b16 %v215
    %v1140 = vunpack.c.h.b16 %v215
    %v1141 = vunpack.c.l.b16 %v216
    %v1142 = vunpack.c.h.b16 %v216
    %v1143 = vunpack.c.l.b16 %v217
    %v1144 = vunpack.c.h.b16 %v217
    %v1145 = vunpack.c.l.b16 %v218
    %v1146 = vunpack.c.h.b16 %v218
    %v1147 = vunpack.c.l.b16 %v219
    %v1148 = vunpack.c.h.b16 %v219
    %v1149 = vunpack.c.l.b16 %v220
    %v1150 = vunpack.c.h.b16 %v220
    %v1151 = vunpack.c.l.b16 %v221
    %v1152 = vunpack.c.h.b16 %v221
    %v1153 = vunpack.c.l.b16 %v222
    %v1154 = vunpack.c.h.b16 %v222
    %v1155 = vunpack.c.l.b16 %v223
    %v1156 = vunpack.c.h.b16 %v223
    %v1157 = vunpack.c.l.b16 %v224
    %v1158 = vunpack.c.h.b16 %v224
    %v1159 = vunpack.c.l.b16 %v225
    %v1160 = vunpack.c.h.b16 %v225
    %v1161 = vunpack.c.l.b16 %v226
    %v1162 = vunpack.c.h.b16 %v226
    %v1163 = vunpack.c.l.b16 %v227
    %v1164 = vunpack.c.h.b16 %v227
    %v1165 = vunpack.c.l.b16 %v228
    %v1166 = vunpack.c.h.b16 %v228
    %v1167 = vunpack.c.l.b16 %v229
    %v1168 = vunpack.c.h.b16 %v229
    %v1169 = vunpack.c.l.b16 %v230
    %v1170 = vunpack.c.h.b16 %v230
    %v1171 = vunpack.c.l.b16 %v231
    %v1172 = vunpack.c.h.b16 %v231
    %v1173 = vunpack.c.l.b16 %v232
    %v1174 = vunpack.c.h.b16 %v232
    %v1175 = vunpack.c.l.b16 %v233
    %v1176 = vunpack.c.h.b16 %v233
    %v1177 = vunpack.c.l.b16 %v234
    %v1178 = vunpack.c.h.b16 %v234
    %v1179 = vunpack.c.l.b16 %v235
    %v1180 = vunpack.c.h.b16 %v235
    %v1181 = vunpack.c.l.b16 %v236
    %v1182 = vunpack.c.h.b16 %v236
    %v1183 = vunpack.c.l.b16 %v237
    %v1184 = vunpack.c.h.b16 %v237
    %v1185 = vunpack.c.l.b16 %v238
    %v1186 = vunpack.c.h.b16 %v238
    %v1187 = vunpack.c.l.b16 %v239
    %v1188 = vunpack.c.h.b16 %v239
    %v1189 = vunpack.c.l.b16 %v240
    %v1190 = vunpack.c.h.b16 %v240
    %v1191 = vunpack.c.l.b16 %v241
    %v1192 = vunpack.c.h.b16 %v241
    %v1193 = vunpack.c.l.b16 %v242
    %v1194 = vunpack.c.h.b16 %v242
    %v1195 = vunpack.c.l.b16 %v243
    %v1196 = vunpack.c.h.b16 %v243
    %v1197 = vunpack.c.l.b16 %v244
    %v1198 = vunpack.c.h.b16 %v244
    %v1199 = vunpack.c.l.b16 %v245
    %v1200 = vunpack.c.h.b16 %v245
    %v1201 = vunpack.c.l.b16 %v246
    %v1202 = vunpack.c.h.b16 %v246
    %v1203 = vunpack.c.l.b16 %v247
    %v1204 = vunpack.c.h.b16 %v247
    %v1205 = vunpack.c.l.b16 %v248
    %v1206 = vunpack.c.h.b16 %v248
    %v1207 = vunpack.c.l.b16 %v249
    %v1208 = vunpack.c.h.b16 %v249
    %v1209 = vunpack.c.l.b16 %v250
    %v1210 = vunpack.c.h.b16 %v250
    %v1211 = vunpack.c.l.b16 %v251
    %v1212 = vunpack.c.h.b16 %v251
    %v1213 = vunpack.c.l.b16 %v252
    %v1214 = vunpack.c.h.b16 %v252
    %v1215 = vunpack.c.l.b16 %v253
    %v1216 = vunpack.c.h.b16 %v253
    %v1217 = vunpack.c.l.b16 %v254
    %v1218 = vunpack.c.h.b16 %v254
    %v1219 = vunpack.c.l.b16 %v255
    %v1220 = vunpack.c.h.b16 %v255
    %v1221 = vunpack.c.l.b16 %v256
    %v1222 = vunpack.c.h.b16 %v256
    %v1223 = vunpack.c.l.b16 %v257
    %v1224 = vunpack.c.h.b16 %v257
    %v1225 = vunpack.c.l.b16 %v258
    %v1226 = vunpack.c.h.b16 %v258
    %v1227 = vunpack.c.l.b16 %v259
    %v1228 = vunpack.c.h.b16 %v259
    %v1229 = vunpack.c.l.b16 %v260
    %v1230 = vunpack.c.h.b16 %v260
    %v1231 = vunpack.c.l.b16 %v261
    %v1232 = vunpack.c.h.b16 %v261
    %v1233 = vunpack.c.l.b16 %v262
    %v1234 = vunpack.c.h.b16 %v262
    %v1235 = vunpack.c.l.b16 %v263
    %v1236 = vunpack.c.h.b16 %v263
    %v1237 = vunpack.c.l.b16 %v264
    %v1238 = vunpack.c.h.b16 %v264
    %v1239 = vunpack.c.l.b16 %v265
    %v1240 = vunpack.c.h.b16 %v265
    %v1241 = vunpack.c.l.b16 %v266
    %v1242 = vunpack.c.h.b16 %v266
    %v1243 = vunpack.c.l.b16 %v267
    %v1244 = vunpack.c.h.b16 %v267
    %v1245 = vunpack.c.l.b16 %v268
    %v1246 = vunpack.c.h.b16 %v268
    %v1247 = vunpack.c.l.b16 %v269
    %v1248 = vunpack.c.h.b16 %v269
    %v1249 = vunpack.c.l.b16 %v270
    %v1250 = vunpack.c.h.b16 %v270
    %v1251 = vunpack.c.l.b16 %v271
    %v1252 = vunpack.c.h.b16 %v271
    %v1253 = vunpack.c.l.b16 %v272
    %v1254 = vunpack.c.h.b16 %v272
    %v1255 = vunpack.c.l.b16 %v273
    %v1256 = vunpack.c.h.b16 %v273
    %v1257 = vunpack.c.l.b16 %v274
    %v1258 = vunpack.c.h.b16 %v274
    %v1259 = vunpack.c.l.b16 %v275
    %v1260 = vunpack.c.h.b16 %v275
    %v1261 = vunpack.c.l.b16 %v276
    %v1262 = vunpack.c.h.b16 %v276
    %v1263 = vunpack.c.l.b16 %v277
    %v1264 = vunpack.c.h.b16 %v277
    %v1265 = vunpack.c.l.b16 %v278
    %v1266 = vunpack.c.h.b16 %v278
    %v1267 = vunpack.c.l.b16 %v279
    %v1268 = vunpack.c.h.b16 %v279
    %v1269 = vunpack.c.l.b16 %v280
    %v1270 = vunpack.c.h.b16 %v280
    %v1271 = vunpack.c.l.b16 %v281
    %v1272 = vunpack.c.h.b16 %v281
    %v1273 = vunpack.c.l.b16 %v282
    %v1274 = vunpack.c.h.b16 %v282
    %v1275 = vunpack.c.l.b16 %v283
    %v1276 = vunpack.c.h.b16 %v283
    %v1277 = vunpack.c.l.b16 %v284
    %v1278 = vunpack.c.h.b16 %v284
    %v1279 = vunpack.c.l.b16 %v285
    %v1280 = vunpack.c.h.b16 %v285
    %v1281 = vunpack.c.l.b16 %v286
    %v1282 = vunpack.c.h.b16 %v286
    %v1283 = vunpack.c.l.b16 %v287
    %v1284 = vunpack.c.h.b16 %v287
    %v1285 = vunpack.c.l.b16 %v288
    %v1286 = vunpack.c.h.b16 %v288
    %v1287 = vunpack.c.l.b16 %v289
    %v1288 = vunpack.c.h.b16 %v289
    %v1289 = vunpack.c.l.b16 %v290
    %v1290 = vunpack.c.h.b16 %v290
    %v1291 = vunpack.c.l.b16 %v291
    %v1292 = vunpack.c.h.b16 %v291
    %v1293 = vunpack.c.l.b16 %v292
    %v1294 = vunpack.c.h.b16 %v292
    %v1295 = vunpack.c.l.b16 %v293
    %v1296 = vunpack.c.h.b16 %v293
    %v1297 = vunpack.c.l.b16 %v294
    %v1298 = vunpack.c.h.b16 %v294
    %v1299 = vunpack.c.l.b16 %v295
    %v1300 = vunpack.c.h.b16 %v295
    %v1301 = vunpack.c.l.b16 %v296
    %v1302 = vunpack.c.h.b16 %v296
    %v1303 = vunpack.c.l.b16 %v297
    %v1304 = vunpack.c.h.b16 %v297
    %v1305 = vunpack.c.l.b16 %v298
    %v1306 = vunpack.c.h.b16 %v298
    %v1307 = vunpack.c.l.b16 %v299
    %v1308 = vunpack.c.h.b16 %v299
    %v1309 = vunpack.c.l.b16 %v300
    %v1310 = vunpack.c.h.b16 %v300
    %v1311 = vunpack.c.l.b16 %v301
    %v1312 = vunpack.c.h.b16 %v301
    %v1313 = vunpack.c.l.b16 %v302
    %v1314 = vunpack.c.h.b16 %v302
    %v1315 = vunpack.c.l.b16 %v303
    %v1316 = vunpack.c.h.b16 %v303
    %v1317 = vunpack.c.l.b16 %v304
    %v1318 = vunpack.c.h.b16 %v304
    %v1319 = vunpack.c.l.b16 %v305
    %v1320 = vunpack.c.h.b16 %v305
    %v1321 = vunpack.c.l.b16 %v306
    %v1322 = vunpack.c.h.b16 %v306
    %v1323 = vunpack.c.l.b16 %v307
    %v1324 = vunpack.c.h.b16 %v307
    %v1325 = vunpack.c.l.b16 %v308
    %v1326 = vunpack.c.h.b16 %v308
    %v1327 = vunpack.c.l.b16 %v309
    %v1328 = vunpack.c.h.b16 %v309
    %v1329 = vunpack.c.l.b16 %v310
    %v1330 = vunpack.c.h.b16 %v310
    %v1331 = vunpack.c.l.b16 %v311
    %v1332 = vunpack.c.h.b16 %v311
    %v1333 = vunpack.c.l.b16 %v312
    %v1334 = vunpack.c.h.b16 %v312
    %v1335 = vunpack.c.l.b16 %v313
    %v1336 = vunpack.c.h.b16 %v313
    %v1337 = vunpack.c.l.b16 %v314
    %v1338 = vunpack.c.h.b16 %v314
    %v1339 = vunpack.c.l.b16 %v315
    %v1340 = vunpack.c.h.b16 %v315
    %v1341 = vunpack.c.l.b16 %v316
    %v1342 = vunpack.c.h.b16 %v316
    %v1343 = vunpack.c.l.b16 %v317
    %v1344 = vunpack.c.h.b16 %v317
    %v1345 = vunpack.c.l.b16 %v318
    %v1346 = vunpack.c.h.b16 %v318
    %v1347 = vunpack.c.l.b16 %v319
    %v1348 = vunpack.c.h.b16 %v319
    %v1349 = vunpack.c.l.b16 %v320
    %v1350 = vunpack.c.h.b16 %v320
    %v1351 = vunpack.c.l.b16 %v321
    %v1352 = vunpack.c.h.b16 %v321
    %v1353 = vunpack.c.l.b16 %v322
    %v1354 = vunpack.c.h.b16 %v322
    %v1355 = vunpack.c.l.b16 %v323
    %v1356 = vunpack.c.h.b16 %v323
    %v1357 = vunpack.c.l.b16 %v324
    %v1358 = vunpack.c.h.b16 %v324
    %v1359 = vunpack.c.l.b16 %v325
    %v1360 = vunpack.c.h.b16 %v325
    %v1361 = vunpack.c.l.b16 %v326
    %v1362 = vunpack.c.h.b16 %v326
    %v1363 = vunpack.c.l.b16 %v327
    %v1364 = vunpack.c.h.b16 %v327
    %v1365 = vunpack.c.l.b16 %v328
    %v1366 = vunpack.c.h.b16 %v328
    %v1367 = vunpack.c.l.b16 %v329
    %v1368 = vunpack.c.h.b16 %v329
    %v1369 = vunpack.c.l.b16 %v330
    %v1370 = vunpack.c.h.b16 %v330
    %v1371 = vunpack.c.l.b16 %v331
    %v1372 = vunpack.c.h.b16 %v331
    %v1373 = vunpack.c.l.b16 %v332
    %v1374 = vunpack.c.h.b16 %v332
    %v1375 = vunpack.c.l.b16 %v333
    %v1376 = vunpack.c.h.b16 %v333
    %v1377 = vunpack.c.l.b16 %v334
    %v1378 = vunpack.c.h.b16 %v334
    %v1379 = vunpack.c.l.b16 %v335
    %v1380 = vunpack.c.h.b16 %v335
    %v1381 = vunpack.c.l.b16 %v336
    %v1382 = vunpack.c.h.b16 %v336
    %v1383 = vunpack.c.l.b16 %v337
    %v1384 = vunpack.c.h.b16 %v337
    %v1385 = vunpack.c.l.b16 %v338
    %v1386 = vunpack.c.h.b16 %v338
    %v1387 = vunpack.c.l.b16 %v339
    %v1388 = vunpack.c.h.b16 %v339
    %v1389 = vunpack.c.l.b16 %v340
    %v1390 = vunpack.c.h.b16 %v340
    %v1391 = vunpack.c.l.b16 %v341
    %v1392 = vunpack.c.h.b16 %v341
    %v1393 = vunpack.c.l.b16 %v342
    %v1394 = vunpack.c.h.b16 %v342
    %v1395 = vunpack.c.l.b16 %v343
    %v1396 = vunpack.c.h.b16 %v343
    %v1397 = vunpack.c.l.b16 %v344
    %v1398 = vunpack.c.h.b16 %v344
    %v1399 = vunpack.c.l.b16 %v345
    %v1400 = vunpack.c.h.b16 %v345
    %v1401 = vunpack.c.l.b16 %v346
    %v1402 = vunpack.c.h.b16 %v346
    %v1403 = vunpack.c.l.b16 %v347
    %v1404 = vunpack.c.h.b16 %v347
    %v1405 = vunpack.c.l.b16 %v348
    %v1406 = vunpack.c.h.b16 %v348
    %v1407 = vunpack.c.l.b16 %v349
    %v1408 = vunpack.c.h.b16 %v349
    %v1409 = vunpack.c.l.b16 %v350
    %v1410 = vunpack.c.h.b16 %v350
    %v1411 = vunpack.c.l.b16 %v351
    %v1412 = vunpack.c.h.b16 %v351
    %v1413 = vunpack.c.l.b16 %v352
    %v1414 = vunpack.c.h.b16 %v352
    %v1415 = vunpack.c.l.b16 %v353
    %v1416 = vunpack.c.h.b16 %v353
    %v1417 = vunpack.c.l.b16 %v354
    %v1418 = vunpack.c.h.b16 %v354
    %v1419 = vunpack.c.l.b16 %v355
    %v1420 = vunpack.c.h.b16 %v355
    %v1421 = vunpack.c.l.b16 %v356
    %v1422 = vunpack.c.h.b16 %v356
    %v1423 = vunpack.c.l.b16 %v357
    %v1424 = vunpack.c.h.b16 %v357
    %v1425 = vunpack.c.l.b16 %v358
    %v1426 = vunpack.c.h.b16 %v358
    %v1427 = vunpack.c.l.b16 %v359
    %v1428 = vunpack.c.h.b16 %v359
    %v1429 = vunpack.c.l.b16 %v360
    %v1430 = vunpack.c.h.b16 %v360
    %v1431 = vunpack.c.l.b16 %v361
    %v1432 = vunpack.c.h.b16 %v361
    %v1433 = vunpack.c.l.b16 %v362
    %v1434 = vunpack.c.h.b16 %v362
    %v1435 = vunpack.c.l.b16 %v363
    %v1436 = vunpack.c.h.b16 %v363
    %v1437 = vunpack.c.l.b16 %v364
    %v1438 = vunpack.c.h.b16 %v364
    %v1439 = vunpack.c.l.b16 %v365
    %v1440 = vunpack.c.h.b16 %v365
    %v1441 = vunpack.c.l.b16 %v366
    %v1442 = vunpack.c.h.b16 %v366
    %v1443 = vunpack.c.l.b16 %v367
    %v1444 = vunpack.c.h.b16 %v367
    %v1445 = vunpack.c.l.b16 %v368
    %v1446 = vunpack.c.h.b16 %v368
    %v1447 = vunpack.c.l.b16 %v369
    %v1448 = vunpack.c.h.b16 %v369
    %v1449 = vunpack.c.l.b16 %v370
    %v1450 = vunpack.c.h.b16 %v370
    %v1451 = vunpack.c.l.b16 %v371
    %v1452 = vunpack.c.h.b16 %v371
    %v1453 = vunpack.c.l.b16 %v372
    %v1454 = vunpack.c.h.b16 %v372
    %v1455 = vunpack.c.l.b16 %v373
    %v1456 = vunpack.c.h.b16 %v373
    %v1457 = vunpack.c.l.b16 %v374
    %v1458 = vunpack.c.h.b16 %v374
    %v1459 = vunpack.c.l.b16 %v375
    %v1460 = vunpack.c.h.b16 %v375
    %v1461 = vunpack.c.l.b16 %v376
    %v1462 = vunpack.c.h.b16 %v376
    %v1463 = vunpack.c.l.b16 %v377
    %v1464 = vunpack.c.h.b16 %v377
    %v1465 = vunpack.c.l.b16 %v378
    %v1466 = vunpack.c.h.b16 %v378
    %v1467 = vunpack.c.l.b16 %v379
    %v1468 = vunpack.c.h.b16 %v379
    %v1469 = vunpack.c.l.b16 %v380
    %v1470 = vunpack.c.h.b16 %v380
    %v1471 = vunpack.c.l.b16 %v381
    %v1472 = vunpack.c.h.b16 %v381
    %v1473 = vunpack.c.l.b16 %v382
    %v1474 = vunpack.c.h.b16 %v382
    %v1475 = vunpack.c.l.b16 %v383
    %v1476 = vunpack.c.h.b16 %v383
    %v1477 = vunpack.c.l.b16 %v384
    %v1478 = vunpack.c.h.b16 %v384
    %v1479 = vunpack.c.l.b16 %v385
    %v1480 = vunpack.c.h.b16 %v385
    %v1481 = vunpack.c.l.b16 %v386
    %v1482 = vunpack.c.h.b16 %v386
    %v1483 = vunpack.c.l.b16 %v387
    %v1484 = vunpack.c.h.b16 %v387
    %v1485 = vunpack.c.l.b16 %v388
    %v1486 = vunpack.c.h.b16 %v388
    %v1487 = vunpack.c.l.b16 %v389
    %v1488 = vunpack.c.h.b16 %v389
    %v1489 = vunpack.c.l.b16 %v390
    %v1490 = vunpack.c.h.b16 %v390
    %v1491 = vunpack.c.l.b16 %v391
    %v1492 = vunpack.c.h.b16 %v391
    %v1493 = vunpack.c.l.b16 %v392
    %v1494 = vunpack.c.h.b16 %v392
    %v1495 = vunpack.c.l.b16 %v393
    %v1496 = vunpack.c.h.b16 %v393
    %v1497 = vunpack.c.l.b16 %v394
    %v1498 = vunpack.c.h.b16 %v394
    %v1499 = vunpack.c.l.b16 %v395
    %v1500 = vunpack.c.h.b16 %v395
    %v1501 = vunpack.c.l.b16 %v396
    %v1502 = vunpack.c.h.b16 %v396
    %v1503 = vunpack.c.l.b16 %v397
    %v1504 = vunpack.c.h.b16 %v397
    %v1505 = vunpack.c.l.b16 %v398
    %v1506 = vunpack.c.h.b16 %v398
    %v1507 = vunpack.c.l.b16 %v399
    %v1508 = vunpack.c.h.b16 %v399
    %v1509 = vunpack.c.l.b16 %v400
    %v1510 = vunpack.c.h.b16 %v400
    %v1511 = vunpack.c.l.b16 %v401
    %v1512 = vunpack.c.h.b16 %v401
    %v1513 = vunpack.c.l.b16 %v402
    %v1514 = vunpack.c.h.b16 %v402
    %v1515 = vunpack.c.l.b16 %v403
    %v1516 = vunpack.c.h.b16 %v403
    %v1517 = vunpack.c.l.b16 %v404
    %v1518 = vunpack.c.h.b16 %v404
    %v1519 = vunpack.c.l.b16 %v405
    %v1520 = vunpack.c.h.b16 %v405
    %v1521 = vunpack.c.l.b16 %v406
    %v1522 = vunpack.c.h.b16 %v406
    %v1523 = vunpack.c.l.b16 %v407
    %v1524 = vunpack.c.h.b16 %v407
    %v1525 = vunpack.c.l.b16 %v408
    %v1526 = vunpack.c.h.b16 %v408
    %v1527 = vunpack.c.l.b16 %v409
    %v1528 = vunpack.c.h.b16 %v409
    %v1529 = vunpack.c.l.b16 %v410
    %v1530 = vunpack.c.h.b16 %v410
    %v1531 = vunpack.c.l.b16 %v411
    %v1532 = vunpack.c.h.b16 %v411
    %v1533 = vunpack.c.l.b16 %v412
    %v1534 = vunpack.c.h.b16 %v412
    %v1535 = vunpack.c.l.b16 %v413
    %v1536 = vunpack.c.h.b16 %v413
    %v1537 = vunpack.c.l.b16 %v414
    %v1538 = vunpack.c.h.b16 %v414
    %v1539 = vunpack.c.l.b16 %v415
    %v1540 = vunpack.c.h.b16 %v415
    %v1541 = vunpack.c.l.b16 %v416
    %v1542 = vunpack.c.h.b16 %v416
    %v1543 = vunpack.c.l.b16 %v417
    %v1544 = vunpack.c.h.b16 %v417
    %v1545 = vunpack.c.l.b16 %v418
    %v1546 = vunpack.c.h.b16 %v418
    %v1547 = vunpack.c.l.b16 %v419
    %v1548 = vunpack.c.h.b16 %v419
    %v1549 = vunpack.c.l.b16 %v420
    %v1550 = vunpack.c.h.b16 %v420
    %v1551 = vunpack.c.l.b16 %v421
    %v1552 = vunpack.c.h.b16 %v421
    %v1553 = vunpack.c.l.b16 %v422
    %v1554 = vunpack.c.h.b16 %v422
    %v1555 = vunpack.c.l.b16 %v423
    %v1556 = vunpack.c.h.b16 %v423
    %v1557 = vunpack.c.l.b16 %v424
    %v1558 = vunpack.c.h.b16 %v424
    %v1559 = vunpack.c.l.b16 %v425
    %v1560 = vunpack.c.h.b16 %v425
    %v1561 = vunpack.c.l.b16 %v426
    %v1562 = vunpack.c.h.b16 %v426
    %v1563 = vunpack.c.l.b16 %v427
    %v1564 = vunpack.c.h.b16 %v427
    %v1565 = vunpack.c.l.b16 %v428
    %v1566 = vunpack.c.h.b16 %v428
    %v1567 = vunpack.c.l.b16 %v429
    %v1568 = vunpack.c.h.b16 %v429
    %v1569 = vunpack.c.l.b16 %v430
    %v1570 = vunpack.c.h.b16 %v430
    %v1571 = vunpack.c.l.b16 %v431
    %v1572 = vunpack.c.h.b16 %v431
    %v1573 = vunpack.c.l.b16 %v432
    %v1574 = vunpack.c.h.b16 %v432
    %v1575 = vunpack.c.l.b16 %v433
    %v1576 = vunpack.c.h.b16 %v433
    %v1577 = vunpack.c.l.b16 %v434
    %v1578 = vunpack.c.h.b16 %v434
    %v1579 = vunpack.c.l.b16 %v435
    %v1580 = vunpack.c.h.b16 %v435
    %v1581 = vunpack.c.l.b16 %v436
    %v1582 = vunpack.c.h.b16 %v436
    %v1583 = vunpack.c.l.b16 %v437
    %v1584 = vunpack.c.h.b16 %v437
    %v1585 = vunpack.c.l.b16 %v438
    %v1586 = vunpack.c.h.b16 %v438
    %v1587 = vunpack.c.l.b16 %v439
    %v1588 = vunpack.c.h.b16 %v439
    %v1589 = vunpack.c.l.b16 %v440
    %v1590 = vunpack.c.h.b16 %v440
    %v1591 = vunpack.c.l.b16 %v441
    %v1592 = vunpack.c.h.b16 %v441
    %v1593 = vunpack.c.l.b16 %v442
    %v1594 = vunpack.c.h.b16 %v442
    %v1595 = vunpack.c.l.b16 %v443
    %v1596 = vunpack.c.h.b16 %v443
    %v1597 = vunpack.c.l.b16 %v444
    %v1598 = vunpack.c.h.b16 %v444
    %v1599 = vunpack.c.l.b16 %v445
    %v1600 = vunpack.c.h.b16 %v445
    %v1601 = vunpack.c.l.b16 %v446
    %v1602 = vunpack.c.h.b16 %v446
    %v1603 = vunpack.c.l.b16 %v447
    %v1604 = vunpack.c.h.b16 %v447
    %v1605 = vunpack.c.l.b16 %v448
    %v1606 = vunpack.c.h.b16 %v448
    %v1607 = vunpack.c.l.b16 %v449
    %v1608 = vunpack.c.h.b16 %v449
    %v1609 = vunpack.c.l.b16 %v450
    %v1610 = vunpack.c.h.b16 %v450
    %v1611 = vunpack.c.l.b16 %v451
    %v1612 = vunpack.c.h.b16 %v451
    %v1613 = vunpack.c.l.b16 %v452
    %v1614 = vunpack.c.h.b16 %v452
    %v1615 = vunpack.c.l.b16 %v453
    %v1616 = vunpack.c.h.b16 %v453
    %v1617 = vunpack.c.l.b16 %v454
    %v1618 = vunpack.c.h.b16 %v454
    %v1619 = vunpack.c.l.b16 %v455
    %v1620 = vunpack.c.h.b16 %v455
    %v1621 = vunpack.c.l.b16 %v456
    %v1622 = vunpack.c.h.b16 %v456
    %v1623 = vunpack.c.l.b16 %v457
    %v1624 = vunpack.c.h.b16 %v457
    %v1625 = vunpack.c.l.b16 %v458
    %v1626 = vunpack.c.h.b16 %v458
    %v1627 = vunpack.c.l.b16 %v459
    %v1628 = vunpack.c.h.b16 %v459
    %v1629 = vunpack.c.l.b16 %v460
    %v1630 = vunpack.c.h.b16 %v460
    %v1631 = vunpack.c.l.b16 %v461
    %v1632 = vunpack.c.h.b16 %v461
    %v1633 = vunpack.c.l.b16 %v462
    %v1634 = vunpack.c.h.b16 %v462
    %v1635 = vunpack.c.l.b16 %v463
    %v1636 = vunpack.c.h.b16 %v463
    %v1637 = vunpack.c.l.b16 %v464
    %v1638 = vunpack.c.h.b16 %v464
    %v1639 = vunpack.c.l.b16 %v465
    %v1640 = vunpack.c.h.b16 %v465
    %v1641 = vunpack.c.l.b16 %v466
    %v1642 = vunpack.c.h.b16 %v466
    %v1643 = vunpack.c.l.b16 %v467
    %v1644 = vunpack.c.h.b16 %v467
    %v1645 = vunpack.c.l.b16 %v468
    %v1646 = vunpack.c.h.b16 %v468
    %v1647 = vunpack.c.l.b16 %v469
    %v1648 = vunpack.c.h.b16 %v469
    %v1649 = vunpack.c.l.b16 %v470
    %v1650 = vunpack.c.h.b16 %v470
    %v1651 = vunpack.c.l.b16 %v471
    %v1652 = vunpack.c.h.b16 %v471
    %v1653 = vunpack.c.l.b16 %v472
    %v1654 = vunpack.c.h.b16 %v472
    %v1655 = vunpack.c.l.b16 %v473
    %v1656 = vunpack.c.h.b16 %v473
    %v1657 = vunpack.c.l.b16 %v474
    %v1658 = vunpack.c.h.b16 %v474
    %v1659 = vunpack.c.l.b16 %v475
    %v1660 = vunpack.c.h.b16 %v475
    %v1661 = vunpack.c.l.b16 %v476
    %v1662 = vunpack.c.h.b16 %v476
    %v1663 = vunpack.c.l.b16 %v477
    %v1664 = vunpack.c.h.b16 %v477
    %v1665 = vunpack.c.l.b16 %v478
    %v1666 = vunpack.c.h.b16 %v478
    %v1667 = vunpack.c.l.b16 %v479
    %v1668 = vunpack.c.h.b16 %v479
    %v1669 = vunpack.c.l.b16 %v480
    %v1670 = vunpack.c.h.b16 %v480
    %v1671 = vunpack.c.l.b16 %v481
    %v1672 = vunpack.c.h.b16 %v481
    %v1673 = vunpack.c.l.b16 %v482
    %v1674 = vunpack.c.h.b16 %v482
    %v1675 = vunpack.c.l.b16 %v483
    %v1676 = vunpack.c.h.b16 %v483
    %v1677 = vunpack.c.l.b16 %v484
    %v1678 = vunpack.c.h.b16 %v484
    %v1679 = vunpack.c.l.b16 %v485
    %v1680 = vunpack.c.h.b16 %v485
    %v1681 = vunpack.c.l.b16 %v486
    %v1682 = vunpack.c.h.b16 %v486
    %v1683 = vunpack.c.l.b16 %v487
    %v1684 = vunpack.c.h.b16 %v487
    %v1685 = vunpack.c.l.b16 %v488
    %v1686 = vunpack.c.h.b16 %v488
    %v1687 = vunpack.c.l.b16 %v489
    %v1688 = vunpack.c.h.b16 %v489
    %v1689 = vunpack.c.l.b16 %v490
    %v1690 = vunpack.c.h.b16 %v490
    %v1691 = vunpack.c.l.b16 %v491
    %v1692 = vunpack.c.h.b16 %v491
    %v1693 = vunpack.c.l.b16 %v492
    %v1694 = vunpack.c.h.b16 %v492
    %v1695 = vunpack.c.l.b16 %v493
    %v1696 = vunpack.c.h.b16 %v493
    %v1697 = vunpack.c.l.b16 %v494
    %v1698 = vunpack.c.h.b16 %v494
    %v1699 = vunpack.c.l.b16 %v495
    %v1700 = vunpack.c.h.b16 %v495
    %v1701 = vunpack.c.l.b16 %v496
    %v1702 = vunpack.c.h.b16 %v496
    %v1703 = vunpack.c.l.b16 %v497
    %v1704 = vunpack.c.h.b16 %v497
    %v1705 = vunpack.c.l.b16 %v498
    %v1706 = vunpack.c.h.b16 %v498
    %v1707 = vunpack.c.l.b16 %v499
    %v1708 = vunpack.c.h.b16 %v499
    %v1709 = vunpack.c.l.b16 %v500
    %v1710 = vunpack.c.h.b16 %v500
    %v1711 = vunpack.c.l.b16 %v501
    %v1712 = vunpack.c.h.b16 %v501
    %v1713 = vunpack.c.l.b16 %v502
    %v1714 = vunpack.c.h.b16 %v502
    %v1715 = vpack.c.b16 %v953, %v947
    %v1716 = vpack.c.b16 %v954, %v948
    %v1717 = vpack.c.b16 %v955, %v949
    %v1718 = vpack.c.b16 %v956, %v950
    %v1719 = vpack.c.b16 %v957, %v951
    %v1720 = vpack.c.b16 %v958, %v952
    %v1721 = vpack.c.b16 %v965, %v959
    %v1722 = vpack.c.b16 %v966, %v960
    %v1723 = vpack.c.b16 %v967, %v961
    %v1724 = vpack.c.b16 %v968, %v962
    %v1725 = vpack.c.b16 %v969, %v963
    %v1726 = vpack.c.b16 %v970, %v964
    %v1727 = vpack.c.b16 %v977, %v971
    %v1728 = vpack.c.b16 %v978, %v972
    %v1729 = vpack.c.b16 %v979, %v973
    %v1730 = vpack.c.b16 %v980, %v974
    %v1731 = vpack.c.b16 %v981, %v975
    %v1732 = vpack.c.b16 %v982, %v976
    %v1733 = vpack.c.b16 %v989, %v983
    %v1734 = vpack.c.b16 %v990, %v984
    %v1735 = vpack.c.b16 %v991, %v985
    %v1736 = vpack.c.b16 %v992, %v986
    %v1737 = vpack.c.b16 %v993, %v987
    %v1738 = vpack.c.b16 %v994, %v988
    %v1739 = vpack.c.b16 %v1001, %v995
    %v1740 = vpack.c.b16 %v1002, %v996
    %v1741 = vpack.c.b16 %v1003, %v997
    %v1742 = vpack.c.b16 %v1004, %v998
    %v1743 = vpack.c.b16 %v1005, %v999
    %v1744 = vpack.c.b16 %v1006, %v1000
    %v1745 = vpack.c.b16 %v1013, %v1007
    %v1746 = vpack.c.b16 %v1014, %v1008
    %v1747 = vpack.c.b16 %v1015, %v1009
    %v1748 = vpack.c.b16 %v1016, %v1010
    %v1749 = vpack.c.b16 %v1017, %v1011
    %v1750 = vpack.c.b16 %v1018, %v1012
    %v1751 = vpack.c.b16 %v1025, %v1019
    %v1752 = vpack.c.b16 %v1026, %v1020
    %v1753 = vpack.c.b16 %v1027, %v1021
    %v1754 = vpack.c.b16 %v1028, %v1022
    %v1755 = vpack.c.b16 %v1029, %v1023
    %v1756 = vpack.c.b16 %v1030, %v1024
    %v1757 = vpack.c.b16 %v1037, %v1031
    %v1758 = vpack.c.b16 %v1038, %v1032
    %v1759 = vpack.c.b16 %v1039, %v1033
    %v1760 = vpack.c.b16 %v1040, %v1034
    %v1761 = vpack.c.b16 %v1041, %v1035
    %v1762 = vpack.c.b16 %v1042, %v1036
    %v1763 = vpack.c.b16 %v1049, %v1043
    %v1764 = vpack.c.b16 %v1050, %v1044
    %v1765 = vpack.c.b16 %v1051, %v1045
    %v1766 = vpack.c.b16 %v1052, %v1046
    %v1767 = vpack.c.b16 %v1053, %v1047
    %v1768 = vpack.c.b16 %v1054, %v1048
    %v1769 = vpack.c.b16 %v1061, %v1055
    %v1770 = vpack.c.b16 %v1062, %v1056
    %v1771 = vpack.c.b16 %v1063, %v1057
    %v1772 = vpack.c.b16 %v1064, %v1058
    %v1773 = vpack.c.b16 %v1065, %v1059
    %v1774 = vpack.c.b16 %v1066, %v1060
    %v1775 = vpack.c.b16 %v1073, %v1067
    %v1776 = vpack.c.b16 %v1074, %v1068
    %v1777 = vpack.c.b16 %v1075, %v1069
    %v1778 = vpack.c.b16 %v1076, %v1070
    %v1779 = vpack.c.b16 %v1077, %v1071
    %v1780 = vpack.c.b16 %v1078, %v1072
    %v1781 = vpack.c.b16 %v1085, %v1079
    %v1782 = vpack.c.b16 %v1086, %v1080
    %v1783 = vpack.c.b16 %v1087, %v1081
    %v1784 = vpack.c.b16 %v1088, %v1082
    %v1785 = vpack.c.b16 %v1089, %v1083
    %v1786 = vpack.c.b16 %v1090, %v1084
    %v1787 = vpack.c.b16 %v1097, %v1091
    %v1788 = vpack.c.b16 %v1098, %v1092
    %v1789 = vpack.c.b16 %v1099, %v1093
    %v1790 = vpack.c.b16 %v1100, %v1094
    %v1791 = vpack.c.b16 %v1101, %v1095
    %v1792 = vpack.c.b16 %v1102, %v1096
    %v1793 = vpack.c.b16 %v1109, %v1103
    %v1794 = vpack.c.b16 %v1110, %v1104
    %v1795 = vpack.c.b16 %v1111, %v1105
    %v1796 = vpack.c.b16 %v1112, %v1106
    %v1797 = vpack.c.b16 %v1113, %v1107
    %v1798 = vpack.c.b16 %v1114, %v1108
    %v1799 = vpack.c.b16 %v1121, %v1115
    %v1800 = vpack.c.b16 %v1122, %v1116
    %v1801 = vpack.c.b16 %v1123, %v1117
    %v1802 = vpack.c.b16 %v1124, %v1118
    %v1803 = vpack.c.b16 %v1125, %v1119
    %v1804 = vpack.c.b16 %v1126, %v1120
    %v1805 = vpack.c.b16 %v1133, %v1127
    %v1806 = vpack.c.b16 %v1134, %v1128
    %v1807 = vpack.c.b16 %v1135, %v1129
    %v1808 = vpack.c.b16 %v1136, %v1130
    %v1809 = vpack.c.b16 %v1137, %v1131
    %v1810 = vpack.c.b16 %v1138, %v1132
    %v1811 = vpack.c.b16 %v1145, %v1139
    %v1812 = vpack.c.b16 %v1146, %v1140
    %v1813 = vpack.c.b16 %v1147, %v1141
    %v1814 = vpack.c.b16 %v1148, %v1142
    %v1815 = vpack.c.b16 %v1149, %v1143
    %v1816 = vpack.c.b16 %v1150, %v1144
    %v1817 = vpack.c.b16 %v1157, %v1151
    %v1818 = vpack.c.b16 %v1158, %v1152
    %v1819 = vpack.c.b16 %v1159, %v1153
    %v1820 = vpack.c.b16 %v1160, %v1154
    %v1821 = vpack.c.b16 %v1161, %v1155
    %v1822 = vpack.c.b16 %v1162, %v1156
    %v1823 = vpack.c.b16 %v1169, %v1163
    %v1824 = vpack.c.b16 %v1170, %v1164
    %v1825 = vpack.c.b16 %v1171, %v1165
    %v1826 = vpack.c.b16 %v1172, %v1166
    %v1827 = vpack.c.b16 %v1173, %v1167
    %v1828 = vpack.c.b16 %v1174, %v1168
    %v1829 = vpack.c.b16 %v1181, %v1175
    %v1830 = vpack.c.b16 %v1182, %v1176
    %v1831 = vpack.c.b16 %v1183, %v1177
    %v1832 = vpack.c.b16 %v1184, %v1178
    %v1833 = vpack.c.b16 %v1185, %v1179
    %v1834 = vpack.c.b16 %v1186, %v1180
    %v1835 = vpack.c.b16 %v1193, %v1187
    %v1836 = vpack.c.b16 %v1194, %v1188
    %v1837 = vpack.c.b16 %v1195, %v1189
    %v1838 = vpack.c.b16 %v1196, %v1190
    %v1839 = vpack.c.b16 %v1197, %v1191
    %v1840 = vpack.c.b16 %v1198, %v1192
    %v1841 = vpack.c.b16 %v1205, %v1199
    %v1842 = vpack.c.b16 %v1206, %v1200
    %v1843 = vpack.c.b16 %v1207, %v1201
    %v1844 = vpack.c.b16 %v1208, %v1202
    %v1845 = vpack.c.b16 %v1209, %v1203
    %v1846 = vpack.c.b16 %v1210, %v1204
    %v1847 = vpack.c.b16 %v1217, %v1211
    %v1848 = vpack.c.b16 %v1218, %v1212
    %v1849 = vpack.c.b16 %v1219, %v1213
    %v1850 = vpack.c.b16 %v1220, %v1214
    %v1851 = vpack.c.b16 %v1221, %v1215
    %v1852 = vpack.c.b16 %v1222, %v1216
    %v1853 = vpack.c.b16 %v1229, %v1223
    %v1854 = vpack.c.b16 %v1230, %v1224
    %v1855 = vpack.c.b16 %v1231, %v1225
    %v1856 = vpack.c.b16 %v1232, %v1226
    %v1857 = vpack.c.b16 %v1233, %v1227
    %v1858 = vpack.c.b16 %v1234, %v1228
    %v1859 = vpack.c.b16 %v1241, %v1235
    %v1860 = vpack.c.b16 %v1242, %v1236
    %v1861 = vpack.c.b16 %v1243, %v1237
    %v1862 = vpack.c.b16 %v1244, %v1238
    %v1863 = vpack.c.b16 %v1245, %v1239
    %v1864 = vpack.c.b16 %v1246, %v1240
    %v1865 = vpack.c.b16 %v1253, %v1247
    %v1866 = vpack.c.b16 %v1254, %v1248
    %v1867 = vpack.c.b16 %v1255, %v1249
    %v1868 = vpack.c.b16 %v1256, %v1250
    %v1869 = vpack.c.b16 %v1257, %v1251
    %v1870 = vpack.c.b16 %v1258, %v1252
    %v1871 = vpack.c.b16 %v1265, %v1259
    %v1872 = vpack.c.b16 %v1266, %v1260
    %v1873 = vpack.c.b16 %v1267, %v1261
    %v1874 = vpack.c.b16 %v1268, %v1262
    %v1875 = vpack.c.b16 %v1269, %v1263
    %v1876 = vpack.c.b16 %v1270, %v1264
    %v1877 = vpack.c.b16 %v1277, %v1271
    %v1878 = vpack.c.b16 %v1278, %v1272
    %v1879 = vpack.c.b16 %v1279, %v1273
    %v1880 = vpack.c.b16 %v1280, %v1274
    %v1881 = vpack.c.b16 %v1281, %v1275
    %v1882 = vpack.c.b16 %v1282, %v1276
    %v1883 = vpack.c.b16 %v1289, %v1283
    %v1884 = vpack.c.b16 %v1290, %v1284
    %v1885 = vpack.c.b16 %v1291, %v1285
    %v1886 = vpack.c.b16 %v1292, %v1286
    %v1887 = vpack.c.b16 %v1293, %v1287
    %v1888 = vpack.c.b16 %v1294, %v1288
    %v1889 = vpack.c.b16 %v1301, %v1295
    %v1890 = vpack.c.b16 %v1302, %v1296
    %v1891 = vpack.c.b16 %v1303, %v1297
    %v1892 = vpack.c.b16 %v1304, %v1298
    %v1893 = vpack.c.b16 %v1305, %v1299
    %v1894 = vpack.c.b16 %v1306, %v1300
    %v1895 = vpack.c.b16 %v1313, %v1307
    %v1896 = vpack.c.b16 %v1314, %v1308
    %v1897 = vpack.c.b16 %v1315, %v1309
    %v1898 = vpack.c.b16 %v1316, %v1310
    %v1899 = vpack.c.b16 %v1317, %v1311
    %v1900 = vpack.c.b16 %v1318, %v1312
    %v1901 = vpack.c.b16 %v1325, %v1319
    %v1902 = vpack.c.b16 %v1326, %v1320
    %v1903 = vpack.c.b16 %v1327, %v1321
    %v1904 = vpack.c.b16 %v1328, %v1322
    %v1905 = vpack.c.b16 %v1329, %v1323
    %v1906 = vpack.c.b16 %v1330, %v1324
    %v1907 = vpack.c.b16 %v1337, %v1331
    %v1908 = vpack.c.b16 %v1338, %v1332
    %v1909 = vpack.c.b16 %v1339, %v1333
    %v1910 = vpack.c.b16 %v1340, %v1334
    %v1911 = vpack.c.b16 %v1341, %v1335
    %v1912 = vpack.c.b16 %v1342, %v1336
    %v1913 = vpack.c.b16 %v1349, %v1343
    %v1914 = vpack.c.b16 %v1350, %v1344
    %v1915 = vpack.c.b16 %v1351, %v1345
    %v1916 = vpack.c.b16 %v1352, %v1346
    %v1917 = vpack.c.b16 %v1353, %v1347
    %v1918 = vpack.c.b16 %v1354, %v1348
    %v1919 = vpack.c.b16 %v1361, %v1355
    %v1920 = vpack.c.b16 %v1362, %v1356
    %v1921 = vpack.c.b16 %v1363, %v1357
    %v1922 = vpack.c.b16 %v1364, %v1358
    %v1923 = vpack.c.b16 %v1365, %v1359
    %v1924 = vpack.c.b16 %v1366, %v1360
    %v1925 = vpack.c.b16 %v1373, %v1367
    %v1926 = vpack.c.b16 %v1374, %v1368
    %v1927 = vpack.c.b16 %v1375, %v1369
    %v1928 = vpack.c.b16 %v1376, %v1370
    %v1929 = vpack.c.b16 %v1377, %v1371
    %v1930 = vpack.c.b16 %v1378, %v1372
    %v1931 = vpack.c.b16 %v1385, %v1379
    %v1932 = vpack.c.b16 %v1386, %v1380
    %v1933 = vpack.c.b16 %v1387, %v1381
    %v1934 = vpack.c.b16 %v1388, %v1382
    %v1935 = vpack.c.b16 %v1389, %v1383
    %v1936 = vpack.c.b16 %v1390, %v1384
    %v1937 = vpack.c.b16 %v1397, %v1391
    %v1938 = vpack.c.b16 %v1398, %v1392
    %v1939 = vpack.c.b16 %v1399, %v1393
    %v1940 = vpack.c.b16 %v1400, %v1394
    %v1941 = vpack.c.b16 %v1401, %v1395
    %v1942 = vpack.c.b16 %v1402, %v1396
    %v1943 = vpack.c.b16 %v1409, %v1403
    %v1944 = vpack.c.b16 %v1410, %v1404
    %v1945 = vpack.c.b16 %v1411, %v1405
    %v1946 = vpack.c.b16 %v1412, %v1406
    %v1947 = vpack.c.b16 %v1413, %v1407
    %v1948 = vpack.c.b16 %v1414, %v1408
    %v1949 = vpack.c.b16 %v1421, %v1415
    %v1950 = vpack.c.b16 %v1422, %v1416
    %v1951 = vpack.c.b16 %v1423, %v1417
    %v1952 = vpack.c.b16 %v1424, %v1418
    %v1953 = vpack.c.b16 %v1425, %v1419
    %v1954 = vpack.c.b16 %v1426, %v1420
    %v1955 = vpack.c.b16 %v1433, %v1427
    %v1956 = vpack.c.b16 %v1434, %v1428
    %v1957 = vpack.c.b16 %v1435, %v1429
    %v1958 = vpack.c.b16 %v1436, %v1430
    %v1959 = vpack.c.b16 %v1437, %v1431
    %v1960 = vpack.c.b16 %v1438, %v1432
    %v1961 = vpack.c.b16 %v1445, %v1439
    %v1962 = vpack.c.b16 %v1446, %v1440
    %v1963 = vpack.c.b16 %v1447, %v1441
    %v1964 = vpack.c.b16 %v1448, %v1442
    %v1965 = vpack.c.b16 %v1449, %v1443
    %v1966 = vpack.c.b16 %v1450, %v1444
    %v1967 = vpack.c.b16 %v1457, %v1451
    %v1968 = vpack.c.b16 %v1458, %v1452
    %v1969 = vpack.c.b16 %v1459, %v1453
    %v1970 = vpack.c.b16 %v1460, %v1454
    %v1971 = vpack.c.b16 %v1461, %v1455
    %v1972 = vpack.c.b16 %v1462, %v1456
    %v1973 = vpack.c.b16 %v1469, %v1463
    %v1974 = vpack.c.b16 %v1470, %v1464
    %v1975 = vpack.c.b16 %v1471, %v1465
    %v1976 = vpack.c.b16 %v1472, %v1466
    %v1977 = vpack.c.b16 %v1473, %v1467
    %v1978 = vpack.c.b16 %v1474, %v1468
    %v1979 = vpack.c.b16 %v1481, %v1475
    %v1980 = vpack.c.b16 %v1482, %v1476
    %v1981 = vpack.c.b16 %v1483, %v1477
    %v1982 = vpack.c.b16 %v1484, %v1478
    %v1983 = vpack.c.b16 %v1485, %v1479
    %v1984 = vpack.c.b16 %v1486, %v1480
    %v1985 = vpack.c.b16 %v1493, %v1487
    %v1986 = vpack.c.b16 %v1494, %v1488
    %v1987 = vpack.c.b16 %v1495, %v1489
    %v1988 = vpack.c.b16 %v1496, %v1490
    %v1989 = vpack.c.b16 %v1497, %v1491
    %v1990 = vpack.c.b16 %v1498, %v1492
    %v1991 = vpack.c.b16 %v1505, %v1499
    %v1992 = vpack.c.b16 %v1506, %v1500
    %v1993 = vpack.c.b16 %v1507, %v1501
    %v1994 = vpack.c.b16 %v1508, %v1502
    %v1995 = vpack.c.b16 %v1509, %v1503
    %v1996 = vpack.c.b16 %v1510, %v1504
    %v1997 = vpack.c.b16 %v1517, %v1511
    %v1998 = vpack.c.b16 %v1518, %v1512
    %v1999 = vpack.c.b16 %v1519, %v1513
    %v2000 = vpack.c.b16 %v1520, %v1514
    %v2001 = vpack.c.b16 %v1521, %v1515
    %v2002 = vpack.c.b16 %v1522, %v1516
    %v2003 = vpack.c.b16 %v1529, %v1523
    %v2004 = vpack.c.b16 %v1530, %v1524
    %v2005 = vpack.c.b16 %v1531, %v1525
    %v2006 = vpack.c.b16 %v1532, %v1526
    %v2007 = vpack.c.b16 %v1533, %v1527
    %v2008 = vpack.c.b16 %v1534, %v1528
    %v2009 = vpack.c.b16 %v1541, %v1535
    %v2010 = vpack.c.b16 %v1542, %v1536
    %v2011 = vpack.c.b16 %v1543, %v1537
    %v2012 = vpack.c.b16 %v1544, %v1538
    %v2013 = vpack.c.b16 %v1545, %v1539
    %v2014 = vpack.c.b16 %v1546, %v1540
    %v2015 = vpack.c.b16 %v1553, %v1547
    %v2016 = vpack.c.b16 %v1554, %v1548
    %v2017 = vpack.c.b16 %v1555, %v1549
    %v2018 = vpack.c.b16 %v1556, %v1550
    %v2019 = vpack.c.b16 %v1557, %v1551
    %v2020 = vpack.c.b16 %v1558, %v1552
    %v2021 = vpack.c.b16 %v1565, %v1559
    %v2022 = vpack.c.b16 %v1566, %v1560
    %v2023 = vpack.c.b16 %v1567, %v1561
    %v2024 = vpack.c.b16 %v1568, %v1562
    %v2025 = vpack.c.b16 %v1569, %v1563
    %v2026 = vpack.c.b16 %v1570, %v1564
    %v2027 = vpack.c.b16 %v1577, %v1571
    %v2028 = vpack.c.b16 %v1578, %v1572
    %v2029 = vpack.c.b16 %v1579, %v1573
    %v2030 = vpack.c.b16 %v1580, %v1574
    %v2031 = vpack.c.b16 %v1581, %v1575
    %v2032 = vpack.c.b16 %v1582, %v1576
    %v2033 = vpack.c.b16 %v1589, %v1583
    %v2034 = vpack.c.b16 %v1590, %v1584
    %v2035 = vpack.c.b16 %v1591, %v1585
    %v2036 = vpack.c.b16 %v1592, %v1586
    %v2037 = vpack.c.b16 %v1593, %v1587
    %v2038 = vpack.c.b16 %v1594, %v1588
    %v2039 = vpack.c.b16 %v1601, %v1595
    %v2040 = vpack.c.b16 %v1602, %v1596
    %v2041 = vpack.c.b16 %v1603, %v1597
    %v2042 = vpack.c.b16 %v1604, %v1598
    %v2043 = vpack.c.b16 %v1605, %v1599
    %v2044 = vpack.c.b16 %v1606, %v1600
    %v2045 = vpack.c.b16 %v1613, %v1607
    %v2046 = vpack.c.b16 %v1614, %v1608
    %v2047 = vpack.c.b16 %v1615, %v1609
    %v2048 = vpack.c.b16 %v1616, %v1610
    %v2049 = vpack.c.b16 %v1617, %v1611
    %v2050 = vpack.c.b16 %v1618, %v1612
    %v2051 = vpack.c.b16 %v1625, %v1619
    %v2052 = vpack.c.b16 %v1626, %v1620
    %v2053 = vpack.c.b16 %v1627, %v1621
    %v2054 = vpack.c.b16 %v1628, %v1622
    %v2055 = vpack.c.b16 %v1629, %v1623
    %v2056 = vpack.c.b16 %v1630, %v1624
    %v2057 = vpack.c.b16 %v1637, %v1631
    %v2058 = vpack.c.b16 %v1638, %v1632
    %v2059 = vpack.c.b16 %v1639, %v1633
    %v2060 = vpack.c.b16 %v1640, %v1634
    %v2061 = vpack.c.b16 %v1641, %v1635
    %v2062 = vpack.c.b16 %v1642, %v1636
    %v2063 = vpack.c.b16 %v1649, %v1643
    %v2064 = vpack.c.b16 %v1650, %v1644
    %v2065 = vpack.c.b16 %v1651, %v1645
    %v2066 = vpack.c.b16 %v1652, %v1646
    %v2067 = vpack.c.b16 %v1653, %v1647
    %v2068 = vpack.c.b16 %v1654, %v1648
    %v2069 = vpack.c.b16 %v1661, %v1655
    %v2070 = vpack.c.b16 %v1662, %v1656
    %v2071 = vpack.c.b16 %v1663, %v1657
    %v2072 = vpack.c.b16 %v1664, %v1658
    %v2073 = vpack.c.b16 %v1665, %v1659
    %v2074 = vpack.c.b16 %v1666, %v1660
    %v2075 = vpack.c.b16 %v1673, %v1667
    %v2076 = vpack.c.b16 %v1674, %v1668
    %v2077 = vpack.c.b16 %v1675, %v1669
    %v2078 = vpack.c.b16 %v1676, %v1670
    %v2079 = vpack.c.b16 %v1677, %v1671
    %v2080 = vpack.c.b16 %v1678, %v1672
    %v2081 = vpack.c.b16 %v1685, %v1679
    %v2082 = vpack.c.b16 %v1686, %v1680
    %v2083 = vpack.c.b16 %v1687, %v1681
    %v2084 = vpack.c.b16 %v1688, %v1682
    %v2085 = vpack.c.b16 %v1689, %v1683
    %v2086 = vpack.c.b16 %v1690, %v1684
    %v2087 = vpack.c.b16 %v1697, %v1691
    %v2088 = vpack.c.b16 %v1698, %v1692
    %v2089 = vpack.c.b16 %v1699, %v1693
    %v2090 = vpack.c.b16 %v1700, %v1694
    %v2091 = vpack.c.b16 %v1701, %v1695
    %v2092 = vpack.c.b16 %v1702, %v1696
    %v2093 = vpack.c.b16 %v1709, %v1703
    %v2094 = vpack.c.b16 %v1710, %v1704
    %v2095 = vpack.c.b16 %v1711, %v1705
    %v2096 = vpack.c.b16 %v1712, %v1706
    %v2097 = vpack.c.b16 %v1713, %v1707
    %v2098 = vpack.c.b16 %v1714, %v1708
    %2483 = vmatprep.subr.bf16.mxu0 %v1716
    %2484 = vmatpush1.bf16.msra.mxu0 %v1715
    %2485 = vmatprep.subr.bf16.mxu0 %v1722
    %2486 = vmatpush1.bf16.msra.mxu0 %v1721
    %2487 = vmatprep.subr.bf16.mxu0 %v1728
    %2488 = vmatpush1.bf16.msra.mxu0 %v1727
    %2489 = vmatprep.subr.bf16.mxu0 %v1734
    %2490 = vmatpush1.bf16.msra.mxu0 %v1733
    %2491 = vmatprep.subr.bf16.mxu0 %v1740
    %2492 = vmatpush1.bf16.msra.mxu0 %v1739
    %2493 = vmatprep.subr.bf16.mxu0 %v1746
    %2494 = vmatpush1.bf16.msra.mxu0 %v1745
    %2495 = vmatprep.subr.bf16.mxu0 %v1752
    %2496 = vmatpush1.bf16.msra.mxu0 %v1751
    %2497 = vmatprep.subr.bf16.mxu0 %v1758
    %2498 = vmatpush1.bf16.msra.mxu0 %v1757
    %2499 = vmatprep.subr.bf16.mxu0 %v1764
    %2500 = vmatpush1.bf16.msra.mxu0 %v1763
    %2501 = vmatprep.subr.bf16.mxu0 %v1770
    %2502 = vmatpush1.bf16.msra.mxu0 %v1769
    %2503 = vmatprep.subr.bf16.mxu0 %v1776
    %2504 = vmatpush1.bf16.msra.mxu0 %v1775
    %2505 = vmatprep.subr.bf16.mxu0 %v1782
    %2506 = vmatpush1.bf16.msra.mxu0 %v1781
    %2507 = vmatprep.subr.bf16.mxu0 %v1788
    %2508 = vmatpush1.bf16.msra.mxu0 %v1787
    %2509 = vmatprep.subr.bf16.mxu0 %v1794
    %2510 = vmatpush1.bf16.msra.mxu0 %v1793
    %2511 = vmatprep.subr.bf16.mxu0 %v1800
    %2512 = vmatpush1.bf16.msra.mxu0 %v1799
    %2513 = vmatprep.subr.bf16.mxu0 %v1806
    %2514 = vmatpush1.bf16.msra.mxu0 %v1805
    %2515 = vmatprep.mubr.bf16.mxu0 %v548
    %2516 = vmatmul.mubr.bf16.gmra.mrb[0].mxu0 %v547
    %v2517 = vpop.f32.mrb[0].mxu0
    %v2518 = vadd.f32 %v508, %v2517
    %v2519 = vpop.f32.mrb[0].mxu0
    %v2520 = vadd.f32 %v512, %v2519
    %v2521 = vpop.f32.mrb[0].mxu0
    %v2522 = vpop.f32.mrb[0].mxu0
    %2523 = vdwg.mxu0
    %2524 = vmatprep.subr.bf16.mxu0 %v1812
    %2525 = vmatpush1.bf16.msra.mxu0 %v1811
    %2526 = vmatprep.subr.bf16.mxu0 %v1818
    %2527 = vmatpush1.bf16.msra.mxu0 %v1817
    %2528 = vmatprep.subr.bf16.mxu0 %v1824
    %2529 = vmatpush1.bf16.msra.mxu0 %v1823
    %2530 = vmatprep.subr.bf16.mxu0 %v1830
    %2531 = vmatpush1.bf16.msra.mxu0 %v1829
    %2532 = vmatprep.subr.bf16.mxu0 %v1836
    %2533 = vmatpush1.bf16.msra.mxu0 %v1835
    %2534 = vmatprep.subr.bf16.mxu0 %v1842
    %2535 = vmatpush1.bf16.msra.mxu0 %v1841
    %2536 = vmatprep.subr.bf16.mxu0 %v1848
    %2537 = vmatpush1.bf16.msra.mxu0 %v1847
    %2538 = vmatprep.subr.bf16.mxu0 %v1854
    %2539 = vmatpush1.bf16.msra.mxu0 %v1853
    %2540 = vmatprep.subr.bf16.mxu0 %v1860
    %2541 = vmatpush1.bf16.msra.mxu0 %v1859
    %2542 = vmatprep.subr.bf16.mxu0 %v1866
    %2543 = vmatpush1.bf16.msra.mxu0 %v1865
    %2544 = vmatprep.subr.bf16.mxu0 %v1872
    %2545 = vmatpush1.bf16.msra.mxu0 %v1871
    %2546 = vmatprep.subr.bf16.mxu0 %v1878
    %2547 = vmatpush1.bf16.msra.mxu0 %v1877
    %2548 = vmatprep.subr.bf16.mxu0 %v1884
    %2549 = vmatpush1.bf16.msra.mxu0 %v1883
    %2550 = vmatprep.subr.bf16.mxu0 %v1890
    %2551 = vmatpush1.bf16.msra.mxu0 %v1889
    %2552 = vmatprep.subr.bf16.mxu0 %v1896
    %2553 = vmatpush1.bf16.msra.mxu0 %v1895
    %2554 = vmatprep.subr.bf16.mxu0 %v1902
    %2555 = vmatpush1.bf16.msra.mxu0 %v1901
    %2556 = vmatprep.mubr.bf16.mxu0 %v550
    %2557 = vmatmul.mubr.bf16.gmra.mrb[0].mxu0 %v549
    %v2558 = vpop.f32.mrb[0].mxu0
    %v2559 = vadd.f32 %v2518, %v2558
    %v2560 = vpop.f32.mrb[0].mxu0
    %v2561 = vadd.f32 %v2520, %v2560
    %v2562 = vpop.f32.mrb[0].mxu0
    %v2563 = vpop.f32.mrb[0].mxu0
    %2564 = vdwg.mxu0
    %2565 = vmatprep.subr.bf16.mxu0 %v1908
    %2566 = vmatpush1.bf16.msra.mxu0 %v1907
    %2567 = vmatprep.subr.bf16.mxu0 %v1914
    %2568 = vmatpush1.bf16.msra.mxu0 %v1913
    %2569 = vmatprep.subr.bf16.mxu0 %v1920
    %2570 = vmatpush1.bf16.msra.mxu0 %v1919
    %2571 = vmatprep.subr.bf16.mxu0 %v1926
    %2572 = vmatpush1.bf16.msra.mxu0 %v1925
    %2573 = vmatprep.subr.bf16.mxu0 %v1932
    %2574 = vmatpush1.bf16.msra.mxu0 %v1931
    %2575 = vmatprep.subr.bf16.mxu0 %v1938
    %2576 = vmatpush1.bf16.msra.mxu0 %v1937
    %2577 = vmatprep.subr.bf16.mxu0 %v1944
    %2578 = vmatpush1.bf16.msra.mxu0 %v1943
    %2579 = vmatprep.subr.bf16.mxu0 %v1950
    %2580 = vmatpush1.bf16.msra.mxu0 %v1949
    %2581 = vmatprep.subr.bf16.mxu0 %v1956
    %2582 = vmatpush1.bf16.msra.mxu0 %v1955
    %2583 = vmatprep.subr.bf16.mxu0 %v1962
    %2584 = vmatpush1.bf16.msra.mxu0 %v1961
    %2585 = vmatprep.subr.bf16.mxu0 %v1968
    %2586 = vmatpush1.bf16.msra.mxu0 %v1967
    %2587 = vmatprep.subr.bf16.mxu0 %v1974
    %2588 = vmatpush1.bf16.msra.mxu0 %v1973
    %2589 = vmatprep.subr.bf16.mxu0 %v1980
    %2590 = vmatpush1.bf16.msra.mxu0 %v1979
    %2591 = vmatprep.subr.bf16.mxu0 %v1986
    %2592 = vmatpush1.bf16.msra.mxu0 %v1985
    %2593 = vmatprep.subr.bf16.mxu0 %v1992
    %2594 = vmatpush1.bf16.msra.mxu0 %v1991
    %2595 = vmatprep.subr.bf16.mxu0 %v1998
    %2596 = vmatpush1.bf16.msra.mxu0 %v1997
    %2597 = vmatprep.mubr.bf16.mxu0 %v552
    %2598 = vmatmul.mubr.bf16.gmra.mrb[0].mxu0 %v551
    %v2599 = vpop.f32.mrb[0].mxu0
    %v2600 = vadd.f32 %v2559, %v2599
    %v2601 = vpop.f32.mrb[0].mxu0
    %v2602 = vadd.f32 %v2561, %v2601
    %v2603 = vpop.f32.mrb[0].mxu0
    %v2604 = vpop.f32.mrb[0].mxu0
    %2605 = vdwg.mxu0
    %2606 = vmatprep.subr.bf16.mxu0 %v2004
    %2607 = vmatpush1.bf16.msra.mxu0 %v2003
    %2608 = vmatprep.subr.bf16.mxu0 %v2010
    %2609 = vmatpush1.bf16.msra.mxu0 %v2009
    %2610 = vmatprep.subr.bf16.mxu0 %v2016
    %2611 = vmatpush1.bf16.msra.mxu0 %v2015
    %2612 = vmatprep.subr.bf16.mxu0 %v2022
    %2613 = vmatpush1.bf16.msra.mxu0 %v2021
    %2614 = vmatprep.subr.bf16.mxu0 %v2028
    %2615 = vmatpush1.bf16.msra.mxu0 %v2027
    %2616 = vmatprep.subr.bf16.mxu0 %v2034
    %2617 = vmatpush1.bf16.msra.mxu0 %v2033
    %2618 = vmatprep.subr.bf16.mxu0 %v2040
    %2619 = vmatpush1.bf16.msra.mxu0 %v2039
    %2620 = vmatprep.subr.bf16.mxu0 %v2046
    %2621 = vmatpush1.bf16.msra.mxu0 %v2045
    %2622 = vmatprep.subr.bf16.mxu0 %v2052
    %2623 = vmatpush1.bf16.msra.mxu0 %v2051
    %2624 = vmatprep.subr.bf16.mxu0 %v2058
    %2625 = vmatpush1.bf16.msra.mxu0 %v2057
    %2626 = vmatprep.subr.bf16.mxu0 %v2064
    %2627 = vmatpush1.bf16.msra.mxu0 %v2063
    %2628 = vmatprep.subr.bf16.mxu0 %v2070
    %2629 = vmatpush1.bf16.msra.mxu0 %v2069
    %2630 = vmatprep.subr.bf16.mxu0 %v2076
    %2631 = vmatpush1.bf16.msra.mxu0 %v2075
    %2632 = vmatprep.subr.bf16.mxu0 %v2082
    %2633 = vmatpush1.bf16.msra.mxu0 %v2081
    %2634 = vmatprep.subr.bf16.mxu0 %v2088
    %2635 = vmatpush1.bf16.msra.mxu0 %v2087
    %2636 = vmatprep.subr.bf16.mxu0 %v2094
    %2637 = vmatpush1.bf16.msra.mxu0 %v2093
    %2638 = vmatprep.mubr.bf16.mxu0 %v554
    %2639 = vmatmul.mubr.bf16.gmra.mrb[0].mxu0 %v553
    %v2640 = vpop.f32.mrb[0].mxu0
    %v2641 = vadd.f32 %v2600, %v2640
    %v2642 = vpop.f32.mrb[0].mxu0
    %v2643 = vadd.f32 %v2602, %v2642
    %v2644 = vpop.f32.mrb[0].mxu0
    %v2645 = vpop.f32.mrb[0].mxu0
    %2646 = vdwg.mxu0
    %2647 = vmatprep.subr.bf16.mxu0 %v1718
    %2648 = vmatpush1.bf16.msra.mxu0 %v1717
    %2649 = vmatprep.subr.bf16.mxu0 %v1724
    %2650 = vmatpush1.bf16.msra.mxu0 %v1723
    %2651 = vmatprep.subr.bf16.mxu0 %v1730
    %2652 = vmatpush1.bf16.msra.mxu0 %v1729
    %2653 = vmatprep.subr.bf16.mxu0 %v1736
    %2654 = vmatpush1.bf16.msra.mxu0 %v1735
    %2655 = vmatprep.subr.bf16.mxu0 %v1742
    %2656 = vmatpush1.bf16.msra.mxu0 %v1741
    %2657 = vmatprep.subr.bf16.mxu0 %v1748
    %2658 = vmatpush1.bf16.msra.mxu0 %v1747
    %2659 = vmatprep.subr.bf16.mxu0 %v1754
    %2660 = vmatpush1.bf16.msra.mxu0 %v1753
    %2661 = vmatprep.subr.bf16.mxu0 %v1760
    %2662 = vmatpush1.bf16.msra.mxu0 %v1759
    %2663 = vmatprep.subr.bf16.mxu0 %v1766
    %2664 = vmatpush1.bf16.msra.mxu0 %v1765
    %2665 = vmatprep.subr.bf16.mxu0 %v1772
    %2666 = vmatpush1.bf16.msra.mxu0 %v1771
    %2667 = vmatprep.subr.bf16.mxu0 %v1778
    %2668 = vmatpush1.bf16.msra.mxu0 %v1777
    %2669 = vmatprep.subr.bf16.mxu0 %v1784
    %2670 = vmatpush1.bf16.msra.mxu0 %v1783
    %2671 = vmatprep.subr.bf16.mxu0 %v1790
    %2672 = vmatpush1.bf16.msra.mxu0 %v1789
    %2673 = vmatprep.subr.bf16.mxu0 %v1796
    %2674 = vmatpush1.bf16.msra.mxu0 %v1795
    %2675 = vmatprep.subr.bf16.mxu0 %v1802
    %2676 = vmatpush1.bf16.msra.mxu0 %v1801
    %2677 = vmatprep.subr.bf16.mxu0 %v1808
    %2678 = vmatpush1.bf16.msra.mxu0 %v1807
    %2679 = vmatprep.mubr.bf16.mxu0 %v548
    %2680 = vmatmul.mubr.bf16.gmra.mrb[0].mxu0 %v547
    %v2681 = vpop.f32.mrb[0].mxu0
    %v2682 = vadd.f32 %v516, %v2681
    %v2683 = vpop.f32.mrb[0].mxu0
    %v2684 = vadd.f32 %v520, %v2683
    %v2685 = vpop.f32.mrb[0].mxu0
    %v2686 = vpop.f32.mrb[0].mxu0
    %2687 = vdwg.mxu0
    %2688 = vmatprep.subr.bf16.mxu0 %v1814
    %2689 = vmatpush1.bf16.msra.mxu0 %v1813
    %2690 = vmatprep.subr.bf16.mxu0 %v1820
    %2691 = vmatpush1.bf16.msra.mxu0 %v1819
    %2692 = vmatprep.subr.bf16.mxu0 %v1826
    %2693 = vmatpush1.bf16.msra.mxu0 %v1825
    %2694 = vmatprep.subr.bf16.mxu0 %v1832
    %2695 = vmatpush1.bf16.msra.mxu0 %v1831
    %2696 = vmatprep.subr.bf16.mxu0 %v1838
    %2697 = vmatpush1.bf16.msra.mxu0 %v1837
    %2698 = vmatprep.subr.bf16.mxu0 %v1844
    %2699 = vmatpush1.bf16.msra.mxu0 %v1843
    %2700 = vmatprep.subr.bf16.mxu0 %v1850
    %2701 = vmatpush1.bf16.msra.mxu0 %v1849
    %2702 = vmatprep.subr.bf16.mxu0 %v1856
    %2703 = vmatpush1.bf16.msra.mxu0 %v1855
    %2704 = vmatprep.subr.bf16.mxu0 %v1862
    %2705 = vmatpush1.bf16.msra.mxu0 %v1861
    %2706 = vmatprep.subr.bf16.mxu0 %v1868
    %2707 = vmatpush1.bf16.msra.mxu0 %v1867
    %2708 = vmatprep.subr.bf16.mxu0 %v1874
    %2709 = vmatpush1.bf16.msra.mxu0 %v1873
    %2710 = vmatprep.subr.bf16.mxu0 %v1880
    %2711 = vmatpush1.bf16.msra.mxu0 %v1879
    %2712 = vmatprep.subr.bf16.mxu0 %v1886
    %2713 = vmatpush1.bf16.msra.mxu0 %v1885
    %2714 = vmatprep.subr.bf16.mxu0 %v1892
    %2715 = vmatpush1.bf16.msra.mxu0 %v1891
    %2716 = vmatprep.subr.bf16.mxu0 %v1898
    %2717 = vmatpush1.bf16.msra.mxu0 %v1897
    %2718 = vmatprep.subr.bf16.mxu0 %v1904
    %2719 = vmatpush1.bf16.msra.mxu0 %v1903
    %2720 = vmatprep.mubr.bf16.mxu0 %v550
    %2721 = vmatmul.mubr.bf16.gmra.mrb[0].mxu0 %v549
    %v2722 = vpop.f32.mrb[0].mxu0
    %v2723 = vadd.f32 %v2682, %v2722
    %v2724 = vpop.f32.mrb[0].mxu0
    %v2725 = vadd.f32 %v2684, %v2724
    %v2726 = vpop.f32.mrb[0].mxu0
    %v2727 = vpop.f32.mrb[0].mxu0
    %2728 = vdwg.mxu0
    %2729 = vmatprep.subr.bf16.mxu0 %v1910
    %2730 = vmatpush1.bf16.msra.mxu0 %v1909
    %2731 = vmatprep.subr.bf16.mxu0 %v1916
    %2732 = vmatpush1.bf16.msra.mxu0 %v1915
    %2733 = vmatprep.subr.bf16.mxu0 %v1922
    %2734 = vmatpush1.bf16.msra.mxu0 %v1921
    %2735 = vmatprep.subr.bf16.mxu0 %v1928
    %2736 = vmatpush1.bf16.msra.mxu0 %v1927
    %2737 = vmatprep.subr.bf16.mxu0 %v1934
    %2738 = vmatpush1.bf16.msra.mxu0 %v1933
    %2739 = vmatprep.subr.bf16.mxu0 %v1940
    %2740 = vmatpush1.bf16.msra.mxu0 %v1939
    %2741 = vmatprep.subr.bf16.mxu0 %v1946
    %2742 = vmatpush1.bf16.msra.mxu0 %v1945
    %2743 = vmatprep.subr.bf16.mxu0 %v1952
    %2744 = vmatpush1.bf16.msra.mxu0 %v1951
    %2745 = vmatprep.subr.bf16.mxu0 %v1958
    %2746 = vmatpush1.bf16.msra.mxu0 %v1957
    %2747 = vmatprep.subr.bf16.mxu0 %v1964
    %2748 = vmatpush1.bf16.msra.mxu0 %v1963
    %2749 = vmatprep.subr.bf16.mxu0 %v1970
    %2750 = vmatpush1.bf16.msra.mxu0 %v1969
    %2751 = vmatprep.subr.bf16.mxu0 %v1976
    %2752 = vmatpush1.bf16.msra.mxu0 %v1975
    %2753 = vmatprep.subr.bf16.mxu0 %v1982
    %2754 = vmatpush1.bf16.msra.mxu0 %v1981
    %2755 = vmatprep.subr.bf16.mxu0 %v1988
    %2756 = vmatpush1.bf16.msra.mxu0 %v1987
    %2757 = vmatprep.subr.bf16.mxu0 %v1994
    %2758 = vmatpush1.bf16.msra.mxu0 %v1993
    %2759 = vmatprep.subr.bf16.mxu0 %v2000
    %2760 = vmatpush1.bf16.msra.mxu0 %v1999
    %2761 = vmatprep.mubr.bf16.mxu0 %v552
    %2762 = vmatmul.mubr.bf16.gmra.mrb[0].mxu0 %v551
    %v2763 = vpop.f32.mrb[0].mxu0
    %v2764 = vadd.f32 %v2723, %v2763
    %v2765 = vpop.f32.mrb[0].mxu0
    %v2766 = vadd.f32 %v2725, %v2765
    %v2767 = vpop.f32.mrb[0].mxu0
    %v2768 = vpop.f32.mrb[0].mxu0
    %2769 = vdwg.mxu0
    %2770 = vmatprep.subr.bf16.mxu0 %v2006
    %2771 = vmatpush1.bf16.msra.mxu0 %v2005
    %2772 = vmatprep.subr.bf16.mxu0 %v2012
    %2773 = vmatpush1.bf16.msra.mxu0 %v2011
    %2774 = vmatprep.subr.bf16.mxu0 %v2018
    %2775 = vmatpush1.bf16.msra.mxu0 %v2017
    %2776 = vmatprep.subr.bf16.mxu0 %v2024
    %2777 = vmatpush1.bf16.msra.mxu0 %v2023
    %2778 = vmatprep.subr.bf16.mxu0 %v2030
    %2779 = vmatpush1.bf16.msra.mxu0 %v2029
    %2780 = vmatprep.subr.bf16.mxu0 %v2036
    %2781 = vmatpush1.bf16.msra.mxu0 %v2035
    %2782 = vmatprep.subr.bf16.mxu0 %v2042
    %2783 = vmatpush1.bf16.msra.mxu0 %v2041
    %2784 = vmatprep.subr.bf16.mxu0 %v2048
    %2785 = vmatpush1.bf16.msra.mxu0 %v2047
    %2786 = vmatprep.subr.bf16.mxu0 %v2054
    %2787 = vmatpush1.bf16.msra.mxu0 %v2053
    %2788 = vmatprep.subr.bf16.mxu0 %v2060
    %2789 = vmatpush1.bf16.msra.mxu0 %v2059
    %2790 = vmatprep.subr.bf16.mxu0 %v2066
    %2791 = vmatpush1.bf16.msra.mxu0 %v2065
    %2792 = vmatprep.subr.bf16.mxu0 %v2072
    %2793 = vmatpush1.bf16.msra.mxu0 %v2071
    %2794 = vmatprep.subr.bf16.mxu0 %v2078
    %2795 = vmatpush1.bf16.msra.mxu0 %v2077
    %2796 = vmatprep.subr.bf16.mxu0 %v2084
    %2797 = vmatpush1.bf16.msra.mxu0 %v2083
    %2798 = vmatprep.subr.bf16.mxu0 %v2090
    %2799 = vmatpush1.bf16.msra.mxu0 %v2089
    %2800 = vmatprep.subr.bf16.mxu0 %v2096
    %2801 = vmatpush1.bf16.msra.mxu0 %v2095
    %2802 = vmatprep.mubr.bf16.mxu0 %v554
    %2803 = vmatmul.mubr.bf16.gmra.mrb[0].mxu0 %v553
    %v2804 = vpop.f32.mrb[0].mxu0
    %v2805 = vadd.f32 %v2764, %v2804
    %v2806 = vpop.f32.mrb[0].mxu0
    %v2807 = vadd.f32 %v2766, %v2806
    %v2808 = vpop.f32.mrb[0].mxu0
    %v2809 = vpop.f32.mrb[0].mxu0
    %2810 = vdwg.mxu0
    %2811 = vmatprep.subr.bf16.mxu0 %v1720
    %2812 = vmatpush1.bf16.msra.mxu0 %v1719
    %2813 = vmatprep.subr.bf16.mxu0 %v1726
    %2814 = vmatpush1.bf16.msra.mxu0 %v1725
    %2815 = vmatprep.subr.bf16.mxu0 %v1732
    %2816 = vmatpush1.bf16.msra.mxu0 %v1731
    %2817 = vmatprep.subr.bf16.mxu0 %v1738
    %2818 = vmatpush1.bf16.msra.mxu0 %v1737
    %2819 = vmatprep.subr.bf16.mxu0 %v1744
    %2820 = vmatpush1.bf16.msra.mxu0 %v1743
    %2821 = vmatprep.subr.bf16.mxu0 %v1750
    %2822 = vmatpush1.bf16.msra.mxu0 %v1749
    %2823 = vmatprep.subr.bf16.mxu0 %v1756
    %2824 = vmatpush1.bf16.msra.mxu0 %v1755
    %2825 = vmatprep.subr.bf16.mxu0 %v1762
    %2826 = vmatpush1.bf16.msra.mxu0 %v1761
    %2827 = vmatprep.subr.bf16.mxu0 %v1768
    %2828 = vmatpush1.bf16.msra.mxu0 %v1767
    %2829 = vmatprep.subr.bf16.mxu0 %v1774
    %2830 = vmatpush1.bf16.msra.mxu0 %v1773
    %2831 = vmatprep.subr.bf16.mxu0 %v1780
    %2832 = vmatpush1.bf16.msra.mxu0 %v1779
    %2833 = vmatprep.subr.bf16.mxu0 %v1786
    %2834 = vmatpush1.bf16.msra.mxu0 %v1785
    %2835 = vmatprep.subr.bf16.mxu0 %v1792
    %2836 = vmatpush1.bf16.msra.mxu0 %v1791
    %2837 = vmatprep.subr.bf16.mxu0 %v1798
    %2838 = vmatpush1.bf16.msra.mxu0 %v1797
    %2839 = vmatprep.subr.bf16.mxu0 %v1804
    %2840 = vmatpush1.bf16.msra.mxu0 %v1803
    %2841 = vmatprep.subr.bf16.mxu0 %v1810
    %2842 = vmatpush1.bf16.msra.mxu0 %v1809
    %2843 = vmatprep.mubr.bf16.mxu0 %v548
    %2844 = vmatmul.mubr.bf16.gmra.mrb[0].mxu0 %v547
    %v2845 = vpop.f32.mrb[0].mxu0
    %v2846 = vadd.f32 %v524, %v2845
    %v2847 = vpop.f32.mrb[0].mxu0
    %v2848 = vadd.f32 %v528, %v2847
    %v2849 = vpop.f32.mrb[0].mxu0
    %v2850 = vpop.f32.mrb[0].mxu0
    %2851 = vdwg.mxu0
    %2852 = vmatprep.subr.bf16.mxu0 %v1816
    %2853 = vmatpush1.bf16.msra.mxu0 %v1815
    %2854 = vmatprep.subr.bf16.mxu0 %v1822
    %2855 = vmatpush1.bf16.msra.mxu0 %v1821
    %2856 = vmatprep.subr.bf16.mxu0 %v1828
    %2857 = vmatpush1.bf16.msra.mxu0 %v1827
    %2858 = vmatprep.subr.bf16.mxu0 %v1834
    %2859 = vmatpush1.bf16.msra.mxu0 %v1833
    %2860 = vmatprep.subr.bf16.mxu0 %v1840
    %2861 = vmatpush1.bf16.msra.mxu0 %v1839
    %2862 = vmatprep.subr.bf16.mxu0 %v1846
    %2863 = vmatpush1.bf16.msra.mxu0 %v1845
    %2864 = vmatprep.subr.bf16.mxu0 %v1852
    %2865 = vmatpush1.bf16.msra.mxu0 %v1851
    %2866 = vmatprep.subr.bf16.mxu0 %v1858
    %2867 = vmatpush1.bf16.msra.mxu0 %v1857
    %2868 = vmatprep.subr.bf16.mxu0 %v1864
    %2869 = vmatpush1.bf16.msra.mxu0 %v1863
    %2870 = vmatprep.subr.bf16.mxu0 %v1870
    %2871 = vmatpush1.bf16.msra.mxu0 %v1869
    %2872 = vmatprep.subr.bf16.mxu0 %v1876
    %2873 = vmatpush1.bf16.msra.mxu0 %v1875
    %2874 = vmatprep.subr.bf16.mxu0 %v1882
    %2875 = vmatpush1.bf16.msra.mxu0 %v1881
    %2876 = vmatprep.subr.bf16.mxu0 %v1888
    %2877 = vmatpush1.bf16.msra.mxu0 %v1887
    %2878 = vmatprep.subr.bf16.mxu0 %v1894
    %2879 = vmatpush1.bf16.msra.mxu0 %v1893
    %2880 = vmatprep.subr.bf16.mxu0 %v1900
    %2881 = vmatpush1.bf16.msra.mxu0 %v1899
    %2882 = vmatprep.subr.bf16.mxu0 %v1906
    %2883 = vmatpush1.bf16.msra.mxu0 %v1905
    %2884 = vmatprep.mubr.bf16.mxu0 %v550
    %2885 = vmatmul.mubr.bf16.gmra.mrb[0].mxu0 %v549
    %v2886 = vpop.f32.mrb[0].mxu0
    %v2887 = vadd.f32 %v2846, %v2886
    %v2888 = vpop.f32.mrb[0].mxu0
    %v2889 = vadd.f32 %v2848, %v2888
    %v2890 = vpop.f32.mrb[0].mxu0
    %v2891 = vpop.f32.mrb[0].mxu0
    %2892 = vdwg.mxu0
    %2893 = vmatprep.subr.bf16.mxu0 %v1912
    %2894 = vmatpush1.bf16.msra.mxu0 %v1911
    %2895 = vmatprep.subr.bf16.mxu0 %v1918
    %2896 = vmatpush1.bf16.msra.mxu0 %v1917
    %2897 = vmatprep.subr.bf16.mxu0 %v1924
    %2898 = vmatpush1.bf16.msra.mxu0 %v1923
    %2899 = vmatprep.subr.bf16.mxu0 %v1930
    %2900 = vmatpush1.bf16.msra.mxu0 %v1929
    %2901 = vmatprep.subr.bf16.mxu0 %v1936
    %2902 = vmatpush1.bf16.msra.mxu0 %v1935
    %2903 = vmatprep.subr.bf16.mxu0 %v1942
    %2904 = vmatpush1.bf16.msra.mxu0 %v1941
    %2905 = vmatprep.subr.bf16.mxu0 %v1948
    %2906 = vmatpush1.bf16.msra.mxu0 %v1947
    %2907 = vmatprep.subr.bf16.mxu0 %v1954
    %2908 = vmatpush1.bf16.msra.mxu0 %v1953
    %2909 = vmatprep.subr.bf16.mxu0 %v1960
    %2910 = vmatpush1.bf16.msra.mxu0 %v1959
    %2911 = vmatprep.subr.bf16.mxu0 %v1966
    %2912 = vmatpush1.bf16.msra.mxu0 %v1965
    %2913 = vmatprep.subr.bf16.mxu0 %v1972
    %2914 = vmatpush1.bf16.msra.mxu0 %v1971
    %2915 = vmatprep.subr.bf16.mxu0 %v1978
    %2916 = vmatpush1.bf16.msra.mxu0 %v1977
    %2917 = vmatprep.subr.bf16.mxu0 %v1984
    %2918 = vmatpush1.bf16.msra.mxu0 %v1983
    %2919 = vmatprep.subr.bf16.mxu0 %v1990
    %2920 = vmatpush1.bf16.msra.mxu0 %v1989
    %2921 = vmatprep.subr.bf16.mxu0 %v1996
    %2922 = vmatpush1.bf16.msra.mxu0 %v1995
    %2923 = vmatprep.subr.bf16.mxu0 %v2002
    %2924 = vmatpush1.bf16.msra.mxu0 %v2001
    %2925 = vmatprep.mubr.bf16.mxu0 %v552
    %2926 = vmatmul.mubr.bf16.gmra.mrb[0].mxu0 %v551
    %v2927 = vpop.f32.mrb[0].mxu0
    %v2928 = vadd.f32 %v2887, %v2927
    %v2929 = vpop.f32.mrb[0].mxu0
    %v2930 = vadd.f32 %v2889, %v2929
    %v2931 = vpop.f32.mrb[0].mxu0
    %v2932 = vpop.f32.mrb[0].mxu0
    %2933 = vdwg.mxu0
    %2934 = vmatprep.subr.bf16.mxu0 %v2008
    %2935 = vmatpush1.bf16.msra.mxu0 %v2007
    %2936 = vmatprep.subr.bf16.mxu0 %v2014
    %2937 = vmatpush1.bf16.msra.mxu0 %v2013
    %2938 = vmatprep.subr.bf16.mxu0 %v2020
    %2939 = vmatpush1.bf16.msra.mxu0 %v2019
    %2940 = vmatprep.subr.bf16.mxu0 %v2026
    %2941 = vmatpush1.bf16.msra.mxu0 %v2025
    %2942 = vmatprep.subr.bf16.mxu0 %v2032
    %2943 = vmatpush1.bf16.msra.mxu0 %v2031
    %2944 = vmatprep.subr.bf16.mxu0 %v2038
    %2945 = vmatpush1.bf16.msra.mxu0 %v2037
    %2946 = vmatprep.subr.bf16.mxu0 %v2044
    %2947 = vmatpush1.bf16.msra.mxu0 %v2043
    %2948 = vmatprep.subr.bf16.mxu0 %v2050
    %2949 = vmatpush1.bf16.msra.mxu0 %v2049
    %2950 = vmatprep.subr.bf16.mxu0 %v2056
    %2951 = vmatpush1.bf16.msra.mxu0 %v2055
    %2952 = vmatprep.subr.bf16.mxu0 %v2062
    %2953 = vmatpush1.bf16.msra.mxu0 %v2061
    %2954 = vmatprep.subr.bf16.mxu0 %v2068
    %2955 = vmatpush1.bf16.msra.mxu0 %v2067
    %2956 = vmatprep.subr.bf16.mxu0 %v2074
    %2957 = vmatpush1.bf16.msra.mxu0 %v2073
    %2958 = vmatprep.subr.bf16.mxu0 %v2080
    %2959 = vmatpush1.bf16.msra.mxu0 %v2079
    %2960 = vmatprep.subr.bf16.mxu0 %v2086
    %2961 = vmatpush1.bf16.msra.mxu0 %v2085
    %2962 = vmatprep.subr.bf16.mxu0 %v2092
    %2963 = vmatpush1.bf16.msra.mxu0 %v2091
    %2964 = vmatprep.subr.bf16.mxu0 %v2098
    %2965 = vmatpush1.bf16.msra.mxu0 %v2097
    %2966 = vmatprep.mubr.bf16.mxu0 %v554
    %2967 = vmatmul.mubr.bf16.gmra.mrb[0].mxu0 %v553
    %v2968 = vpop.f32.mrb[0].mxu0
    %v2969 = vadd.f32 %v2928, %v2968
    %v2970 = vpop.f32.mrb[0].mxu0
    %v2971 = vadd.f32 %v2930, %v2970
    %v2972 = vpop.f32.mrb[0].mxu0
    %v2973 = vpop.f32.mrb[0].mxu0
    %2974 = vdwg.mxu0
    %v2975 = vpack.c.bf16 %v2641, %v2641
    %v2976 = vpack.c.bf16 %v2643, %v2643
    %v2977 = vpack.c.bf16 %v2805, %v2805
    %v2978 = vpack.c.bf16 %v2807, %v2807
    %v2979 = vpack.c.bf16 %v2969, %v2969
    %v2980 = vpack.c.bf16 %v2971, %v2971
    %v2981 = vld [vmem:[#allocation8] sm:$0xff]
    %v2982 = vld [vmem:[#allocation8 + $0x8] sm:$0xff]
    %v2983 = vld [vmem:[#allocation8 + $0x10] sm:$0xff]
    %v2984 = vld [vmem:[#allocation8 + $0x18] sm:$0xff]
    %v2985 = vld [vmem:[#allocation8 + $0x20] sm:$0xff]
    %v2986 = vld [vmem:[#allocation8 + $0x28] sm:$0xff]
    %v2987 = vld [vmem:[#allocation8 + $0x30] sm:$0xff]
    %v2988 = vld [vmem:[#allocation8 + $0x38] sm:$0xff]
    %v2989 = vld [vmem:[#allocation8 + $0x40] sm:$0xff]
    %v2990 = vld [vmem:[#allocation8 + $0x48] sm:$0xff]
    %v2991 = vld [vmem:[#allocation8 + $0x50] sm:$0xff]
    %v2992 = vld [vmem:[#allocation8 + $0x58] sm:$0xff]
    %v2993 = vld [vmem:[#allocation8 + $0x60] sm:$0xff]
    %v2994 = vld [vmem:[#allocation8 + $0x68] sm:$0xff]
    %v2995 = vld [vmem:[#allocation8 + $0x70] sm:$0xff]
    %v2996 = vld [vmem:[#allocation8 + $0x78] sm:$0xff]
    %v2997 = vld [vmem:[#allocation8 + $0x80] sm:$0xff]
    %v2998 = vld [vmem:[#allocation8 + $0x88] sm:$0xff]
    %v2999 = vld [vmem:[#allocation8 + $0x90] sm:$0xff]
    %v3000 = vld [vmem:[#allocation8 + $0x98] sm:$0xff]
    %v3001 = vld [vmem:[#allocation8 + $0xa0] sm:$0xff]
    %v3002 = vld [vmem:[#allocation8 + $0xa8] sm:$0xff]
    %v3003 = vld [vmem:[#allocation8 + $0xb0] sm:$0xff]
    %v3004 = vld [vmem:[#allocation8 + $0xb8] sm:$0xff]
    %v3005 = vld [vmem:[#allocation8 + $0xc0] sm:$0xff]
    %v3006 = vld [vmem:[#allocation8 + $0xc8] sm:$0xff]
    %v3007 = vld [vmem:[#allocation8 + $0xd0] sm:$0xff]
    %v3008 = vld [vmem:[#allocation8 + $0xd8] sm:$0xff]
    %v3009 = vld [vmem:[#allocation8 + $0xe0] sm:$0xff]
    %v3010 = vld [vmem:[#allocation8 + $0xe8] sm:$0xff]
    %v3011 = vld [vmem:[#allocation8 + $0xf0] sm:$0xff]
    %v3012 = vld [vmem:[#allocation8 + $0xf8] sm:$0xff]
    %v3013 = vld [vmem:[#allocation8 + $0x100] sm:$0xff]
    %v3014 = vld [vmem:[#allocation8 + $0x108] sm:$0xff]
    %v3015 = vld [vmem:[#allocation8 + $0x110] sm:$0xff]
    %v3016 = vld [vmem:[#allocation8 + $0x118] sm:$0xff]
    %v3017 = vld [vmem:[#allocation8 + $0x120] sm:$0xff]
    %v3018 = vld [vmem:[#allocation8 + $0x128] sm:$0xff]
    %v3019 = vld [vmem:[#allocation8 + $0x130] sm:$0xff]
    %v3020 = vld [vmem:[#allocation8 + $0x138] sm:$0xff]
    %v3021 = vld [vmem:[#allocation8 + $0x140] sm:$0xff]
    %v3022 = vld [vmem:[#allocation8 + $0x148] sm:$0xff]
    %v3023 = vld [vmem:[#allocation8 + $0x150] sm:$0xff]
    %v3024 = vld [vmem:[#allocation8 + $0x158] sm:$0xff]
    %v3025 = vld [vmem:[#allocation8 + $0x160] sm:$0xff]
    %v3026 = vld [vmem:[#allocation8 + $0x168] sm:$0xff]
    %v3027 = vld [vmem:[#allocation8 + $0x170] sm:$0xff]
    %v3028 = vld [vmem:[#allocation8 + $0x178] sm:$0xff]
    %v3029 = vld [vmem:[#allocation8 + $0x180] sm:$0xff]
    %v3030 = vld [vmem:[#allocation8 + $0x188] sm:$0xff]
    %v3031 = vld [vmem:[#allocation8 + $0x190] sm:$0xff]
    %v3032 = vld [vmem:[#allocation8 + $0x198] sm:$0xff]
    %v3033 = vld [vmem:[#allocation8 + $0x1a0] sm:$0xff]
    %v3034 = vld [vmem:[#allocation8 + $0x1a8] sm:$0xff]
    %v3035 = vld [vmem:[#allocation8 + $0x1b0] sm:$0xff]
    %v3036 = vld [vmem:[#allocation8 + $0x1b8] sm:$0xff]
    %v3037 = vld [vmem:[#allocation8 + $0x1c0] sm:$0xff]
    %v3038 = vld [vmem:[#allocation8 + $0x1c8] sm:$0xff]
    %v3039 = vld [vmem:[#allocation8 + $0x1d0] sm:$0xff]
    %v3040 = vld [vmem:[#allocation8 + $0x1d8] sm:$0xff]
    %v3041 = vld [vmem:[#allocation8 + $0x1e0] sm:$0xff]
    %v3042 = vld [vmem:[#allocation8 + $0x1e8] sm:$0xff]
    %v3043 = vld [vmem:[#allocation8 + $0x1f0] sm:$0xff]
    %v3044 = vld [vmem:[#allocation8 + $0x1f8] sm:$0xff]
    %v3045 = vld [vmem:[#allocation8 + $0x200] sm:$0xff]
    %v3046 = vld [vmem:[#allocation8 + $0x208] sm:$0xff]
    %v3047 = vld [vmem:[#allocation8 + $0x210] sm:$0xff]
    %v3048 = vld [vmem:[#allocation8 + $0x218] sm:$0xff]
    %v3049 = vld [vmem:[#allocation8 + $0x220] sm:$0xff]
    %v3050 = vld [vmem:[#allocation8 + $0x228] sm:$0xff]
    %v3051 = vld [vmem:[#allocation8 + $0x230] sm:$0xff]
    %v3052 = vld [vmem:[#allocation8 + $0x238] sm:$0xff]
    %v3053 = vld [vmem:[#allocation8 + $0x240] sm:$0xff]
    %v3054 = vld [vmem:[#allocation8 + $0x248] sm:$0xff]
    %v3055 = vld [vmem:[#allocation8 + $0x250] sm:$0xff]
    %v3056 = vld [vmem:[#allocation8 + $0x258] sm:$0xff]
    %v3057 = vld [vmem:[#allocation8 + $0x260] sm:$0xff]
    %v3058 = vld [vmem:[#allocation8 + $0x268] sm:$0xff]
    %v3059 = vld [vmem:[#allocation8 + $0x270] sm:$0xff]
    %v3060 = vld [vmem:[#allocation8 + $0x278] sm:$0xff]
    %v3061 = vld [vmem:[#allocation8 + $0x280] sm:$0xff]
    %v3062 = vld [vmem:[#allocation8 + $0x288] sm:$0xff]
    %v3063 = vld [vmem:[#allocation8 + $0x290] sm:$0xff]
    %v3064 = vld [vmem:[#allocation8 + $0x298] sm:$0xff]
    %v3065 = vld [vmem:[#allocation8 + $0x2a0] sm:$0xff]
    %v3066 = vld [vmem:[#allocation8 + $0x2a8] sm:$0xff]
    %v3067 = vld [vmem:[#allocation8 + $0x2b0] sm:$0xff]
    %v3068 = vld [vmem:[#allocation8 + $0x2b8] sm:$0xff]
    %v3069 = vld [vmem:[#allocation8 + $0x2c0] sm:$0xff]
    %v3070 = vld [vmem:[#allocation8 + $0x2c8] sm:$0xff]
    %v3071 = vld [vmem:[#allocation8 + $0x2d0] sm:$0xff]
    %v3072 = vld [vmem:[#allocation8 + $0x2d8] sm:$0xff]
    %v3073 = vld [vmem:[#allocation8 + $0x2e0] sm:$0xff]
    %v3074 = vld [vmem:[#allocation8 + $0x2e8] sm:$0xff]
    %v3075 = vld [vmem:[#allocation8 + $0x2f0] sm:$0xff]
    %v3076 = vld [vmem:[#allocation8 + $0x2f8] sm:$0xff]
    %v3077 = vld [vmem:[#allocation8 + $0x300] sm:$0xff]
    %v3078 = vld [vmem:[#allocation8 + $0x308] sm:$0xff]
    %v3079 = vld [vmem:[#allocation8 + $0x310] sm:$0xff]
    %v3080 = vld [vmem:[#allocation8 + $0x318] sm:$0xff]
    %v3081 = vld [vmem:[#allocation8 + $0x320] sm:$0xff]
    %v3082 = vld [vmem:[#allocation8 + $0x328] sm:$0xff]
    %v3083 = vld [vmem:[#allocation8 + $0x330] sm:$0xff]
    %v3084 = vld [vmem:[#allocation8 + $0x338] sm:$0xff]
    %v3085 = vld [vmem:[#allocation8 + $0x340] sm:$0xff]
    %v3086 = vld [vmem:[#allocation8 + $0x348] sm:$0xff]
    %v3087 = vld [vmem:[#allocation8 + $0x350] sm:$0xff]
    %v3088 = vld [vmem:[#allocation8 + $0x358] sm:$0xff]
    %v3089 = vld [vmem:[#allocation8 + $0x360] sm:$0xff]
    %v3090 = vld [vmem:[#allocation8 + $0x368] sm:$0xff]
    %v3091 = vld [vmem:[#allocation8 + $0x370] sm:$0xff]
    %v3092 = vld [vmem:[#allocation8 + $0x378] sm:$0xff]
    %v3093 = vld [vmem:[#allocation8 + $0x380] sm:$0xff]
    %v3094 = vld [vmem:[#allocation8 + $0x388] sm:$0xff]
    %v3095 = vld [vmem:[#allocation8 + $0x390] sm:$0xff]
    %v3096 = vld [vmem:[#allocation8 + $0x398] sm:$0xff]
    %v3097 = vld [vmem:[#allocation8 + $0x3a0] sm:$0xff]
    %v3098 = vld [vmem:[#allocation8 + $0x3a8] sm:$0xff]
    %v3099 = vld [vmem:[#allocation8 + $0x3b0] sm:$0xff]
    %v3100 = vld [vmem:[#allocation8 + $0x3b8] sm:$0xff]
    %v3101 = vld [vmem:[#allocation8 + $0x3c0] sm:$0xff]
    %v3102 = vld [vmem:[#allocation8 + $0x3c8] sm:$0xff]
    %v3103 = vld [vmem:[#allocation8 + $0x3d0] sm:$0xff]
    %v3104 = vld [vmem:[#allocation8 + $0x3d8] sm:$0xff]
    %v3105 = vld [vmem:[#allocation8 + $0x3e0] sm:$0xff]
    %v3106 = vld [vmem:[#allocation8 + $0x3e8] sm:$0xff]
    %v3107 = vld [vmem:[#allocation8 + $0x3f0] sm:$0xff]
    %v3108 = vld [vmem:[#allocation8 + $0x3f8] sm:$0xff]
    %v3109 = vld [vmem:[#allocation8 + $0x400] sm:$0xff]
    %v3110 = vld [vmem:[#allocation8 + $0x408] sm:$0xff]
    %v3111 = vld [vmem:[#allocation8 + $0x410] sm:$0xff]
    %v3112 = vld [vmem:[#allocation8 + $0x418] sm:$0xff]
    %v3113 = vld [vmem:[#allocation8 + $0x420] sm:$0xff]
    %v3114 = vld [vmem:[#allocation8 + $0x428] sm:$0xff]
    %v3115 = vld [vmem:[#allocation8 + $0x430] sm:$0xff]
    %v3116 = vld [vmem:[#allocation8 + $0x438] sm:$0xff]
    %v3117 = vld [vmem:[#allocation8 + $0x440] sm:$0xff]
    %v3118 = vld [vmem:[#allocation8 + $0x448] sm:$0xff]
    %v3119 = vld [vmem:[#allocation8 + $0x450] sm:$0xff]
    %v3120 = vld [vmem:[#allocation8 + $0x458] sm:$0xff]
    %v3121 = vld [vmem:[#allocation8 + $0x460] sm:$0xff]
    %v3122 = vld [vmem:[#allocation8 + $0x468] sm:$0xff]
    %v3123 = vld [vmem:[#allocation8 + $0x470] sm:$0xff]
    %v3124 = vld [vmem:[#allocation8 + $0x478] sm:$0xff]
    %v3125 = vld [vmem:[#allocation8 + $0x480] sm:$0xff]
    %v3126 = vld [vmem:[#allocation8 + $0x488] sm:$0xff]
    %v3127 = vld [vmem:[#allocation8 + $0x490] sm:$0xff]
    %v3128 = vld [vmem:[#allocation8 + $0x498] sm:$0xff]
    %v3129 = vld [vmem:[#allocation8 + $0x4a0] sm:$0xff]
    %v3130 = vld [vmem:[#allocation8 + $0x4a8] sm:$0xff]
    %v3131 = vld [vmem:[#allocation8 + $0x4b0] sm:$0xff]
    %v3132 = vld [vmem:[#allocation8 + $0x4b8] sm:$0xff]
    %v3133 = vld [vmem:[#allocation8 + $0x4c0] sm:$0xff]
    %v3134 = vld [vmem:[#allocation8 + $0x4c8] sm:$0xff]
    %v3135 = vld [vmem:[#allocation8 + $0x4d0] sm:$0xff]
    %v3136 = vld [vmem:[#allocation8 + $0x4d8] sm:$0xff]
    %v3137 = vld [vmem:[#allocation8 + $0x4e0] sm:$0xff]
    %v3138 = vld [vmem:[#allocation8 + $0x4e8] sm:$0xff]
    %v3139 = vld [vmem:[#allocation8 + $0x4f0] sm:$0xff]
    %v3140 = vld [vmem:[#allocation8 + $0x4f8] sm:$0xff]
    %v3141 = vld [vmem:[#allocation8 + $0x500] sm:$0xff]
    %v3142 = vld [vmem:[#allocation8 + $0x508] sm:$0xff]
    %v3143 = vld [vmem:[#allocation8 + $0x510] sm:$0xff]
    %v3144 = vld [vmem:[#allocation8 + $0x518] sm:$0xff]
    %v3145 = vld [vmem:[#allocation8 + $0x520] sm:$0xff]
    %v3146 = vld [vmem:[#allocation8 + $0x528] sm:$0xff]
    %v3147 = vld [vmem:[#allocation8 + $0x530] sm:$0xff]
    %v3148 = vld [vmem:[#allocation8 + $0x538] sm:$0xff]
    %v3149 = vld [vmem:[#allocation8 + $0x540] sm:$0xff]
    %v3150 = vld [vmem:[#allocation8 + $0x548] sm:$0xff]
    %v3151 = vld [vmem:[#allocation8 + $0x550] sm:$0xff]
    %v3152 = vld [vmem:[#allocation8 + $0x558] sm:$0xff]
    %v3153 = vld [vmem:[#allocation8 + $0x560] sm:$0xff]
    %v3154 = vld [vmem:[#allocation8 + $0x568] sm:$0xff]
    %v3155 = vld [vmem:[#allocation8 + $0x570] sm:$0xff]
    %v3156 = vld [vmem:[#allocation8 + $0x578] sm:$0xff]
    %v3157 = vld [vmem:[#allocation8 + $0x580] sm:$0xff]
    %v3158 = vld [vmem:[#allocation8 + $0x588] sm:$0xff]
    %v3159 = vld [vmem:[#allocation8 + $0x590] sm:$0xff]
    %v3160 = vld [vmem:[#allocation8 + $0x598] sm:$0xff]
    %v3161 = vld [vmem:[#allocation8 + $0x5a0] sm:$0xff]
    %v3162 = vld [vmem:[#allocation8 + $0x5a8] sm:$0xff]
    %v3163 = vld [vmem:[#allocation8 + $0x5b0] sm:$0xff]
    %v3164 = vld [vmem:[#allocation8 + $0x5b8] sm:$0xff]
    %v3165 = vld [vmem:[#allocation8 + $0x5c0] sm:$0xff]
    %v3166 = vld [vmem:[#allocation8 + $0x5c8] sm:$0xff]
    %v3167 = vld [vmem:[#allocation8 + $0x5d0] sm:$0xff]
    %v3168 = vld [vmem:[#allocation8 + $0x5d8] sm:$0xff]
    %v3169 = vld [vmem:[#allocation8 + $0x5e0] sm:$0xff]
    %v3170 = vld [vmem:[#allocation8 + $0x5e8] sm:$0xff]
    %v3171 = vld [vmem:[#allocation8 + $0x5f0] sm:$0xff]
    %v3172 = vld [vmem:[#allocation8 + $0x5f8] sm:$0xff]
    %v3173 = vld [vmem:[#allocation10] sm:$0xf]
    %v3175 = vlaneseq
    %v3176 = vshrl.u32 %v3175, 7
    %v3177 = vsub.s32 0, %v3176
    %v3178 = vrot.slane %v3173, %v3177
    %v3179 = vlaneseq
    %v3180 = vshrl.u32 %v3179, 7
    %v3181 = vsub.s32 1, %v3180
    %v3182 = vrot.slane %v3173, %v3181
    %v3183 = vlaneseq
    %v3184 = vshrl.u32 %v3183, 7
    %v3185 = vsub.s32 2, %v3184
    %v3186 = vrot.slane %v3173, %v3185
    %v3187 = vlaneseq
    %v3188 = vshrl.u32 %v3187, 7
    %v3189 = vsub.s32 3, %v3188
    %v3190 = vrot.slane %v3173, %v3189
    %v3387 = vunpack.c.l.b16 %v2981
    %v3388 = vunpack.c.h.b16 %v2981
    %v3389 = vunpack.c.l.b16 %v2982
    %v3390 = vunpack.c.h.b16 %v2982
    %v3391 = vunpack.c.l.b16 %v2983
    %v3392 = vunpack.c.h.b16 %v2983
    %v3393 = vunpack.c.l.b16 %v2984
    %v3394 = vunpack.c.h.b16 %v2984
    %v3395 = vunpack.c.l.b16 %v2985
    %v3396 = vunpack.c.h.b16 %v2985
    %v3397 = vunpack.c.l.b16 %v2986
    %v3398 = vunpack.c.h.b16 %v2986
    %v3399 = vunpack.c.l.b16 %v2987
    %v3400 = vunpack.c.h.b16 %v2987
    %v3401 = vunpack.c.l.b16 %v2988
    %v3402 = vunpack.c.h.b16 %v2988
    %v3403 = vunpack.c.l.b16 %v2989
    %v3404 = vunpack.c.h.b16 %v2989
    %v3405 = vunpack.c.l.b16 %v2990
    %v3406 = vunpack.c.h.b16 %v2990
    %v3407 = vunpack.c.l.b16 %v2991
    %v3408 = vunpack.c.h.b16 %v2991
    %v3409 = vunpack.c.l.b16 %v2992
    %v3410 = vunpack.c.h.b16 %v2992
    %v3411 = vunpack.c.l.b16 %v2993
    %v3412 = vunpack.c.h.b16 %v2993
    %v3413 = vunpack.c.l.b16 %v2994
    %v3414 = vunpack.c.h.b16 %v2994
    %v3415 = vunpack.c.l.b16 %v2995
    %v3416 = vunpack.c.h.b16 %v2995
    %v3417 = vunpack.c.l.b16 %v2996
    %v3418 = vunpack.c.h.b16 %v2996
    %v3419 = vunpack.c.l.b16 %v2997
    %v3420 = vunpack.c.h.b16 %v2997
    %v3421 = vunpack.c.l.b16 %v2998
    %v3422 = vunpack.c.h.b16 %v2998
    %v3423 = vunpack.c.l.b16 %v2999
    %v3424 = vunpack.c.h.b16 %v2999
    %v3425 = vunpack.c.l.b16 %v3000
    %v3426 = vunpack.c.h.b16 %v3000
    %v3427 = vunpack.c.l.b16 %v3001
    %v3428 = vunpack.c.h.b16 %v3001
    %v3429 = vunpack.c.l.b16 %v3002
    %v3430 = vunpack.c.h.b16 %v3002
    %v3431 = vunpack.c.l.b16 %v3003
    %v3432 = vunpack.c.h.b16 %v3003
    %v3433 = vunpack.c.l.b16 %v3004
    %v3434 = vunpack.c.h.b16 %v3004
    %v3435 = vunpack.c.l.b16 %v3005
    %v3436 = vunpack.c.h.b16 %v3005
    %v3437 = vunpack.c.l.b16 %v3006
    %v3438 = vunpack.c.h.b16 %v3006
    %v3439 = vunpack.c.l.b16 %v3007
    %v3440 = vunpack.c.h.b16 %v3007
    %v3441 = vunpack.c.l.b16 %v3008
    %v3442 = vunpack.c.h.b16 %v3008
    %v3443 = vunpack.c.l.b16 %v3009
    %v3444 = vunpack.c.h.b16 %v3009
    %v3445 = vunpack.c.l.b16 %v3010
    %v3446 = vunpack.c.h.b16 %v3010
    %v3447 = vunpack.c.l.b16 %v3011
    %v3448 = vunpack.c.h.b16 %v3011
    %v3449 = vunpack.c.l.b16 %v3012
    %v3450 = vunpack.c.h.b16 %v3012
    %v3451 = vunpack.c.l.b16 %v3013
    %v3452 = vunpack.c.h.b16 %v3013
    %v3453 = vunpack.c.l.b16 %v3014
    %v3454 = vunpack.c.h.b16 %v3014
    %v3455 = vunpack.c.l.b16 %v3015
    %v3456 = vunpack.c.h.b16 %v3015
    %v3457 = vunpack.c.l.b16 %v3016
    %v3458 = vunpack.c.h.b16 %v3016
    %v3459 = vunpack.c.l.b16 %v3017
    %v3460 = vunpack.c.h.b16 %v3017
    %v3461 = vunpack.c.l.b16 %v3018
    %v3462 = vunpack.c.h.b16 %v3018
    %v3463 = vunpack.c.l.b16 %v3019
    %v3464 = vunpack.c.h.b16 %v3019
    %v3465 = vunpack.c.l.b16 %v3020
    %v3466 = vunpack.c.h.b16 %v3020
    %v3467 = vunpack.c.l.b16 %v3021
    %v3468 = vunpack.c.h.b16 %v3021
    %v3469 = vunpack.c.l.b16 %v3022
    %v3470 = vunpack.c.h.b16 %v3022
    %v3471 = vunpack.c.l.b16 %v3023
    %v3472 = vunpack.c.h.b16 %v3023
    %v3473 = vunpack.c.l.b16 %v3024
    %v3474 = vunpack.c.h.b16 %v3024
    %v3475 = vunpack.c.l.b16 %v3025
    %v3476 = vunpack.c.h.b16 %v3025
    %v3477 = vunpack.c.l.b16 %v3026
    %v3478 = vunpack.c.h.b16 %v3026
    %v3479 = vunpack.c.l.b16 %v3027
    %v3480 = vunpack.c.h.b16 %v3027
    %v3481 = vunpack.c.l.b16 %v3028
    %v3482 = vunpack.c.h.b16 %v3028
    %v3483 = vunpack.c.l.b16 %v3029
    %v3484 = vunpack.c.h.b16 %v3029
    %v3485 = vunpack.c.l.b16 %v3030
    %v3486 = vunpack.c.h.b16 %v3030
    %v3487 = vunpack.c.l.b16 %v3031
    %v3488 = vunpack.c.h.b16 %v3031
    %v3489 = vunpack.c.l.b16 %v3032
    %v3490 = vunpack.c.h.b16 %v3032
    %v3491 = vunpack.c.l.b16 %v3033
    %v3492 = vunpack.c.h.b16 %v3033
    %v3493 = vunpack.c.l.b16 %v3034
    %v3494 = vunpack.c.h.b16 %v3034
    %v3495 = vunpack.c.l.b16 %v3035
    %v3496 = vunpack.c.h.b16 %v3035
    %v3497 = vunpack.c.l.b16 %v3036
    %v3498 = vunpack.c.h.b16 %v3036
    %v3499 = vunpack.c.l.b16 %v3037
    %v3500 = vunpack.c.h.b16 %v3037
    %v3501 = vunpack.c.l.b16 %v3038
    %v3502 = vunpack.c.h.b16 %v3038
    %v3503 = vunpack.c.l.b16 %v3039
    %v3504 = vunpack.c.h.b16 %v3039
    %v3505 = vunpack.c.l.b16 %v3040
    %v3506 = vunpack.c.h.b16 %v3040
    %v3507 = vunpack.c.l.b16 %v3041
    %v3508 = vunpack.c.h.b16 %v3041
    %v3509 = vunpack.c.l.b16 %v3042
    %v3510 = vunpack.c.h.b16 %v3042
    %v3511 = vunpack.c.l.b16 %v3043
    %v3512 = vunpack.c.h.b16 %v3043
    %v3513 = vunpack.c.l.b16 %v3044
    %v3514 = vunpack.c.h.b16 %v3044
    %v3515 = vunpack.c.l.b16 %v3045
    %v3516 = vunpack.c.h.b16 %v3045
    %v3517 = vunpack.c.l.b16 %v3046
    %v3518 = vunpack.c.h.b16 %v3046
    %v3519 = vunpack.c.l.b16 %v3047
    %v3520 = vunpack.c.h.b16 %v3047
    %v3521 = vunpack.c.l.b16 %v3048
    %v3522 = vunpack.c.h.b16 %v3048
    %v3523 = vunpack.c.l.b16 %v3049
    %v3524 = vunpack.c.h.b16 %v3049
    %v3525 = vunpack.c.l.b16 %v3050
    %v3526 = vunpack.c.h.b16 %v3050
    %v3527 = vunpack.c.l.b16 %v3051
    %v3528 = vunpack.c.h.b16 %v3051
    %v3529 = vunpack.c.l.b16 %v3052
    %v3530 = vunpack.c.h.b16 %v3052
    %v3531 = vunpack.c.l.b16 %v3053
    %v3532 = vunpack.c.h.b16 %v3053
    %v3533 = vunpack.c.l.b16 %v3054
    %v3534 = vunpack.c.h.b16 %v3054
    %v3535 = vunpack.c.l.b16 %v3055
    %v3536 = vunpack.c.h.b16 %v3055
    %v3537 = vunpack.c.l.b16 %v3056
    %v3538 = vunpack.c.h.b16 %v3056
    %v3539 = vunpack.c.l.b16 %v3057
    %v3540 = vunpack.c.h.b16 %v3057
    %v3541 = vunpack.c.l.b16 %v3058
    %v3542 = vunpack.c.h.b16 %v3058
    %v3543 = vunpack.c.l.b16 %v3059
    %v3544 = vunpack.c.h.b16 %v3059
    %v3545 = vunpack.c.l.b16 %v3060
    %v3546 = vunpack.c.h.b16 %v3060
    %v3547 = vunpack.c.l.b16 %v3061
    %v3548 = vunpack.c.h.b16 %v3061
    %v3549 = vunpack.c.l.b16 %v3062
    %v3550 = vunpack.c.h.b16 %v3062
    %v3551 = vunpack.c.l.b16 %v3063
    %v3552 = vunpack.c.h.b16 %v3063
    %v3553 = vunpack.c.l.b16 %v3064
    %v3554 = vunpack.c.h.b16 %v3064
    %v3555 = vunpack.c.l.b16 %v3065
    %v3556 = vunpack.c.h.b16 %v3065
    %v3557 = vunpack.c.l.b16 %v3066
    %v3558 = vunpack.c.h.b16 %v3066
    %v3559 = vunpack.c.l.b16 %v3067
    %v3560 = vunpack.c.h.b16 %v3067
    %v3561 = vunpack.c.l.b16 %v3068
    %v3562 = vunpack.c.h.b16 %v3068
    %v3563 = vunpack.c.l.b16 %v3069
    %v3564 = vunpack.c.h.b16 %v3069
    %v3565 = vunpack.c.l.b16 %v3070
    %v3566 = vunpack.c.h.b16 %v3070
    %v3567 = vunpack.c.l.b16 %v3071
    %v3568 = vunpack.c.h.b16 %v3071
    %v3569 = vunpack.c.l.b16 %v3072
    %v3570 = vunpack.c.h.b16 %v3072
    %v3571 = vunpack.c.l.b16 %v3073
    %v3572 = vunpack.c.h.b16 %v3073
    %v3573 = vunpack.c.l.b16 %v3074
    %v3574 = vunpack.c.h.b16 %v3074
    %v3575 = vunpack.c.l.b16 %v3075
    %v3576 = vunpack.c.h.b16 %v3075
    %v3577 = vunpack.c.l.b16 %v3076
    %v3578 = vunpack.c.h.b16 %v3076
    %v3579 = vunpack.c.l.b16 %v3077
    %v3580 = vunpack.c.h.b16 %v3077
    %v3581 = vunpack.c.l.b16 %v3078
    %v3582 = vunpack.c.h.b16 %v3078
    %v3583 = vunpack.c.l.b16 %v3079
    %v3584 = vunpack.c.h.b16 %v3079
    %v3585 = vunpack.c.l.b16 %v3080
    %v3586 = vunpack.c.h.b16 %v3080
    %v3587 = vunpack.c.l.b16 %v3081
    %v3588 = vunpack.c.h.b16 %v3081
    %v3589 = vunpack.c.l.b16 %v3082
    %v3590 = vunpack.c.h.b16 %v3082
    %v3591 = vunpack.c.l.b16 %v3083
    %v3592 = vunpack.c.h.b16 %v3083
    %v3593 = vunpack.c.l.b16 %v3084
    %v3594 = vunpack.c.h.b16 %v3084
    %v3595 = vunpack.c.l.b16 %v3085
    %v3596 = vunpack.c.h.b16 %v3085
    %v3597 = vunpack.c.l.b16 %v3086
    %v3598 = vunpack.c.h.b16 %v3086
    %v3599 = vunpack.c.l.b16 %v3087
    %v3600 = vunpack.c.h.b16 %v3087
    %v3601 = vunpack.c.l.b16 %v3088
    %v3602 = vunpack.c.h.b16 %v3088
    %v3603 = vunpack.c.l.b16 %v3089
    %v3604 = vunpack.c.h.b16 %v3089
    %v3605 = vunpack.c.l.b16 %v3090
    %v3606 = vunpack.c.h.b16 %v3090
    %v3607 = vunpack.c.l.b16 %v3091
    %v3608 = vunpack.c.h.b16 %v3091
    %v3609 = vunpack.c.l.b16 %v3092
    %v3610 = vunpack.c.h.b16 %v3092
    %v3611 = vunpack.c.l.b16 %v3093
    %v3612 = vunpack.c.h.b16 %v3093
    %v3613 = vunpack.c.l.b16 %v3094
    %v3614 = vunpack.c.h.b16 %v3094
    %v3615 = vunpack.c.l.b16 %v3095
    %v3616 = vunpack.c.h.b16 %v3095
    %v3617 = vunpack.c.l.b16 %v3096
    %v3618 = vunpack.c.h.b16 %v3096
    %v3619 = vunpack.c.l.b16 %v3097
    %v3620 = vunpack.c.h.b16 %v3097
    %v3621 = vunpack.c.l.b16 %v3098
    %v3622 = vunpack.c.h.b16 %v3098
    %v3623 = vunpack.c.l.b16 %v3099
    %v3624 = vunpack.c.h.b16 %v3099
    %v3625 = vunpack.c.l.b16 %v3100
    %v3626 = vunpack.c.h.b16 %v3100
    %v3627 = vunpack.c.l.b16 %v3101
    %v3628 = vunpack.c.h.b16 %v3101
    %v3629 = vunpack.c.l.b16 %v3102
    %v3630 = vunpack.c.h.b16 %v3102
    %v3631 = vunpack.c.l.b16 %v3103
    %v3632 = vunpack.c.h.b16 %v3103
    %v3633 = vunpack.c.l.b16 %v3104
    %v3634 = vunpack.c.h.b16 %v3104
    %v3635 = vunpack.c.l.b16 %v3105
    %v3636 = vunpack.c.h.b16 %v3105
    %v3637 = vunpack.c.l.b16 %v3106
    %v3638 = vunpack.c.h.b16 %v3106
    %v3639 = vunpack.c.l.b16 %v3107
    %v3640 = vunpack.c.h.b16 %v3107
    %v3641 = vunpack.c.l.b16 %v3108
    %v3642 = vunpack.c.h.b16 %v3108
    %v3643 = vunpack.c.l.b16 %v3109
    %v3644 = vunpack.c.h.b16 %v3109
    %v3645 = vunpack.c.l.b16 %v3110
    %v3646 = vunpack.c.h.b16 %v3110
    %v3647 = vunpack.c.l.b16 %v3111
    %v3648 = vunpack.c.h.b16 %v3111
    %v3649 = vunpack.c.l.b16 %v3112
    %v3650 = vunpack.c.h.b16 %v3112
    %v3651 = vunpack.c.l.b16 %v3113
    %v3652 = vunpack.c.h.b16 %v3113
    %v3653 = vunpack.c.l.b16 %v3114
    %v3654 = vunpack.c.h.b16 %v3114
    %v3655 = vunpack.c.l.b16 %v3115
    %v3656 = vunpack.c.h.b16 %v3115
    %v3657 = vunpack.c.l.b16 %v3116
    %v3658 = vunpack.c.h.b16 %v3116
    %v3659 = vunpack.c.l.b16 %v3117
    %v3660 = vunpack.c.h.b16 %v3117
    %v3661 = vunpack.c.l.b16 %v3118
    %v3662 = vunpack.c.h.b16 %v3118
    %v3663 = vunpack.c.l.b16 %v3119
    %v3664 = vunpack.c.h.b16 %v3119
    %v3665 = vunpack.c.l.b16 %v3120
    %v3666 = vunpack.c.h.b16 %v3120
    %v3667 = vunpack.c.l.b16 %v3121
    %v3668 = vunpack.c.h.b16 %v3121
    %v3669 = vunpack.c.l.b16 %v3122
    %v3670 = vunpack.c.h.b16 %v3122
    %v3671 = vunpack.c.l.b16 %v3123
    %v3672 = vunpack.c.h.b16 %v3123
    %v3673 = vunpack.c.l.b16 %v3124
    %v3674 = vunpack.c.h.b16 %v3124
    %v3675 = vunpack.c.l.b16 %v3125
    %v3676 = vunpack.c.h.b16 %v3125
    %v3677 = vunpack.c.l.b16 %v3126
    %v3678 = vunpack.c.h.b16 %v3126
    %v3679 = vunpack.c.l.b16 %v3127
    %v3680 = vunpack.c.h.b16 %v3127
    %v3681 = vunpack.c.l.b16 %v3128
    %v3682 = vunpack.c.h.b16 %v3128
    %v3683 = vunpack.c.l.b16 %v3129
    %v3684 = vunpack.c.h.b16 %v3129
    %v3685 = vunpack.c.l.b16 %v3130
    %v3686 = vunpack.c.h.b16 %v3130
    %v3687 = vunpack.c.l.b16 %v3131
    %v3688 = vunpack.c.h.b16 %v3131
    %v3689 = vunpack.c.l.b16 %v3132
    %v3690 = vunpack.c.h.b16 %v3132
    %v3691 = vunpack.c.l.b16 %v3133
    %v3692 = vunpack.c.h.b16 %v3133
    %v3693 = vunpack.c.l.b16 %v3134
    %v3694 = vunpack.c.h.b16 %v3134
    %v3695 = vunpack.c.l.b16 %v3135
    %v3696 = vunpack.c.h.b16 %v3135
    %v3697 = vunpack.c.l.b16 %v3136
    %v3698 = vunpack.c.h.b16 %v3136
    %v3699 = vunpack.c.l.b16 %v3137
    %v3700 = vunpack.c.h.b16 %v3137
    %v3701 = vunpack.c.l.b16 %v3138
    %v3702 = vunpack.c.h.b16 %v3138
    %v3703 = vunpack.c.l.b16 %v3139
    %v3704 = vunpack.c.h.b16 %v3139
    %v3705 = vunpack.c.l.b16 %v3140
    %v3706 = vunpack.c.h.b16 %v3140
    %v3707 = vunpack.c.l.b16 %v3141
    %v3708 = vunpack.c.h.b16 %v3141
    %v3709 = vunpack.c.l.b16 %v3142
    %v3710 = vunpack.c.h.b16 %v3142
    %v3711 = vunpack.c.l.b16 %v3143
    %v3712 = vunpack.c.h.b16 %v3143
    %v3713 = vunpack.c.l.b16 %v3144
    %v3714 = vunpack.c.h.b16 %v3144
    %v3715 = vunpack.c.l.b16 %v3145
    %v3716 = vunpack.c.h.b16 %v3145
    %v3717 = vunpack.c.l.b16 %v3146
    %v3718 = vunpack.c.h.b16 %v3146
    %v3719 = vunpack.c.l.b16 %v3147
    %v3720 = vunpack.c.h.b16 %v3147
    %v3721 = vunpack.c.l.b16 %v3148
    %v3722 = vunpack.c.h.b16 %v3148
    %v3723 = vunpack.c.l.b16 %v3149
    %v3724 = vunpack.c.h.b16 %v3149
    %v3725 = vunpack.c.l.b16 %v3150
    %v3726 = vunpack.c.h.b16 %v3150
    %v3727 = vunpack.c.l.b16 %v3151
    %v3728 = vunpack.c.h.b16 %v3151
    %v3729 = vunpack.c.l.b16 %v3152
    %v3730 = vunpack.c.h.b16 %v3152
    %v3731 = vunpack.c.l.b16 %v3153
    %v3732 = vunpack.c.h.b16 %v3153
    %v3733 = vunpack.c.l.b16 %v3154
    %v3734 = vunpack.c.h.b16 %v3154
    %v3735 = vunpack.c.l.b16 %v3155
    %v3736 = vunpack.c.h.b16 %v3155
    %v3737 = vunpack.c.l.b16 %v3156
    %v3738 = vunpack.c.h.b16 %v3156
    %v3739 = vunpack.c.l.b16 %v3157
    %v3740 = vunpack.c.h.b16 %v3157
    %v3741 = vunpack.c.l.b16 %v3158
    %v3742 = vunpack.c.h.b16 %v3158
    %v3743 = vunpack.c.l.b16 %v3159
    %v3744 = vunpack.c.h.b16 %v3159
    %v3745 = vunpack.c.l.b16 %v3160
    %v3746 = vunpack.c.h.b16 %v3160
    %v3747 = vunpack.c.l.b16 %v3161
    %v3748 = vunpack.c.h.b16 %v3161
    %v3749 = vunpack.c.l.b16 %v3162
    %v3750 = vunpack.c.h.b16 %v3162
    %v3751 = vunpack.c.l.b16 %v3163
    %v3752 = vunpack.c.h.b16 %v3163
    %v3753 = vunpack.c.l.b16 %v3164
    %v3754 = vunpack.c.h.b16 %v3164
    %v3755 = vunpack.c.l.b16 %v3165
    %v3756 = vunpack.c.h.b16 %v3165
    %v3757 = vunpack.c.l.b16 %v3166
    %v3758 = vunpack.c.h.b16 %v3166
    %v3759 = vunpack.c.l.b16 %v3167
    %v3760 = vunpack.c.h.b16 %v3167
    %v3761 = vunpack.c.l.b16 %v3168
    %v3762 = vunpack.c.h.b16 %v3168
    %v3763 = vunpack.c.l.b16 %v3169
    %v3764 = vunpack.c.h.b16 %v3169
    %v3765 = vunpack.c.l.b16 %v3170
    %v3766 = vunpack.c.h.b16 %v3170
    %v3767 = vunpack.c.l.b16 %v3171
    %v3768 = vunpack.c.h.b16 %v3171
    %v3769 = vunpack.c.l.b16 %v3172
    %v3770 = vunpack.c.h.b16 %v3172
    %v3771 = vpack.c.b16 %v3391, %v3387
    %v3772 = vpack.c.b16 %v3392, %v3388
    %v3773 = vpack.c.b16 %v3393, %v3389
    %v3774 = vpack.c.b16 %v3394, %v3390
    %v3775 = vpack.c.b16 %v3399, %v3395
    %v3776 = vpack.c.b16 %v3400, %v3396
    %v3777 = vpack.c.b16 %v3401, %v3397
    %v3778 = vpack.c.b16 %v3402, %v3398
    %v3779 = vpack.c.b16 %v3407, %v3403
    %v3780 = vpack.c.b16 %v3408, %v3404
    %v3781 = vpack.c.b16 %v3409, %v3405
    %v3782 = vpack.c.b16 %v3410, %v3406
    %v3783 = vpack.c.b16 %v3415, %v3411
    %v3784 = vpack.c.b16 %v3416, %v3412
    %v3785 = vpack.c.b16 %v3417, %v3413
    %v3786 = vpack.c.b16 %v3418, %v3414
    %v3787 = vpack.c.b16 %v3423, %v3419
    %v3788 = vpack.c.b16 %v3424, %v3420
    %v3789 = vpack.c.b16 %v3425, %v3421
    %v3790 = vpack.c.b16 %v3426, %v3422
    %v3791 = vpack.c.b16 %v3431, %v3427
    %v3792 = vpack.c.b16 %v3432, %v3428
    %v3793 = vpack.c.b16 %v3433, %v3429
    %v3794 = vpack.c.b16 %v3434, %v3430
    %v3795 = vpack.c.b16 %v3439, %v3435
    %v3796 = vpack.c.b16 %v3440, %v3436
    %v3797 = vpack.c.b16 %v3441, %v3437
    %v3798 = vpack.c.b16 %v3442, %v3438
    %v3799 = vpack.c.b16 %v3447, %v3443
    %v3800 = vpack.c.b16 %v3448, %v3444
    %v3801 = vpack.c.b16 %v3449, %v3445
    %v3802 = vpack.c.b16 %v3450, %v3446
    %v3803 = vpack.c.b16 %v3455, %v3451
    %v3804 = vpack.c.b16 %v3456, %v3452
    %v3805 = vpack.c.b16 %v3457, %v3453
    %v3806 = vpack.c.b16 %v3458, %v3454
    %v3807 = vpack.c.b16 %v3463, %v3459
    %v3808 = vpack.c.b16 %v3464, %v3460
    %v3809 = vpack.c.b16 %v3465, %v3461
    %v3810 = vpack.c.b16 %v3466, %v3462
    %v3811 = vpack.c.b16 %v3471, %v3467
    %v3812 = vpack.c.b16 %v3472, %v3468
    %v3813 = vpack.c.b16 %v3473, %v3469
    %v3814 = vpack.c.b16 %v3474, %v3470
    %v3815 = vpack.c.b16 %v3479, %v3475
    %v3816 = vpack.c.b16 %v3480, %v3476
    %v3817 = vpack.c.b16 %v3481, %v3477
    %v3818 = vpack.c.b16 %v3482, %v3478
    %v3819 = vpack.c.b16 %v3487, %v3483
    %v3820 = vpack.c.b16 %v3488, %v3484
    %v3821 = vpack.c.b16 %v3489, %v3485
    %v3822 = vpack.c.b16 %v3490, %v3486
    %v3823 = vpack.c.b16 %v3495, %v3491
    %v3824 = vpack.c.b16 %v3496, %v3492
    %v3825 = vpack.c.b16 %v3497, %v3493
    %v3826 = vpack.c.b16 %v3498, %v3494
    %v3827 = vpack.c.b16 %v3503, %v3499
    %v3828 = vpack.c.b16 %v3504, %v3500
    %v3829 = vpack.c.b16 %v3505, %v3501
    %v3830 = vpack.c.b16 %v3506, %v3502
    %v3831 = vpack.c.b16 %v3511, %v3507
    %v3832 = vpack.c.b16 %v3512, %v3508
    %v3833 = vpack.c.b16 %v3513, %v3509
    %v3834 = vpack.c.b16 %v3514, %v3510
    %v3835 = vpack.c.b16 %v3519, %v3515
    %v3836 = vpack.c.b16 %v3520, %v3516
    %v3837 = vpack.c.b16 %v3521, %v3517
    %v3838 = vpack.c.b16 %v3522, %v3518
    %v3839 = vpack.c.b16 %v3527, %v3523
    %v3840 = vpack.c.b16 %v3528, %v3524
    %v3841 = vpack.c.b16 %v3529, %v3525
    %v3842 = vpack.c.b16 %v3530, %v3526
    %v3843 = vpack.c.b16 %v3535, %v3531
    %v3844 = vpack.c.b16 %v3536, %v3532
    %v3845 = vpack.c.b16 %v3537, %v3533
    %v3846 = vpack.c.b16 %v3538, %v3534
    %v3847 = vpack.c.b16 %v3543, %v3539
    %v3848 = vpack.c.b16 %v3544, %v3540
    %v3849 = vpack.c.b16 %v3545, %v3541
    %v3850 = vpack.c.b16 %v3546, %v3542
    %v3851 = vpack.c.b16 %v3551, %v3547
    %v3852 = vpack.c.b16 %v3552, %v3548
    %v3853 = vpack.c.b16 %v3553, %v3549
    %v3854 = vpack.c.b16 %v3554, %v3550
    %v3855 = vpack.c.b16 %v3559, %v3555
    %v3856 = vpack.c.b16 %v3560, %v3556
    %v3857 = vpack.c.b16 %v3561, %v3557
    %v3858 = vpack.c.b16 %v3562, %v3558
    %v3859 = vpack.c.b16 %v3567, %v3563
    %v3860 = vpack.c.b16 %v3568, %v3564
    %v3861 = vpack.c.b16 %v3569, %v3565
    %v3862 = vpack.c.b16 %v3570, %v3566
    %v3863 = vpack.c.b16 %v3575, %v3571
    %v3864 = vpack.c.b16 %v3576, %v3572
    %v3865 = vpack.c.b16 %v3577, %v3573
    %v3866 = vpack.c.b16 %v3578, %v3574
    %v3867 = vpack.c.b16 %v3583, %v3579
    %v3868 = vpack.c.b16 %v3584, %v3580
    %v3869 = vpack.c.b16 %v3585, %v3581
    %v3870 = vpack.c.b16 %v3586, %v3582
    %v3871 = vpack.c.b16 %v3591, %v3587
    %v3872 = vpack.c.b16 %v3592, %v3588
    %v3873 = vpack.c.b16 %v3593, %v3589
    %v3874 = vpack.c.b16 %v3594, %v3590
    %v3875 = vpack.c.b16 %v3599, %v3595
    %v3876 = vpack.c.b16 %v3600, %v3596
    %v3877 = vpack.c.b16 %v3601, %v3597
    %v3878 = vpack.c.b16 %v3602, %v3598
    %v3879 = vpack.c.b16 %v3607, %v3603
    %v3880 = vpack.c.b16 %v3608, %v3604
    %v3881 = vpack.c.b16 %v3609, %v3605
    %v3882 = vpack.c.b16 %v3610, %v3606
    %v3883 = vpack.c.b16 %v3615, %v3611
    %v3884 = vpack.c.b16 %v3616, %v3612
    %v3885 = vpack.c.b16 %v3617, %v3613
    %v3886 = vpack.c.b16 %v3618, %v3614
    %v3887 = vpack.c.b16 %v3623, %v3619
    %v3888 = vpack.c.b16 %v3624, %v3620
    %v3889 = vpack.c.b16 %v3625, %v3621
    %v3890 = vpack.c.b16 %v3626, %v3622
    %v3891 = vpack.c.b16 %v3631, %v3627
    %v3892 = vpack.c.b16 %v3632, %v3628
    %v3893 = vpack.c.b16 %v3633, %v3629
    %v3894 = vpack.c.b16 %v3634, %v3630
    %v3895 = vpack.c.b16 %v3639, %v3635
    %v3896 = vpack.c.b16 %v3640, %v3636
    %v3897 = vpack.c.b16 %v3641, %v3637
    %v3898 = vpack.c.b16 %v3642, %v3638
    %v3899 = vpack.c.b16 %v3647, %v3643
    %v3900 = vpack.c.b16 %v3648, %v3644
    %v3901 = vpack.c.b16 %v3649, %v3645
    %v3902 = vpack.c.b16 %v3650, %v3646
    %v3903 = vpack.c.b16 %v3655, %v3651
    %v3904 = vpack.c.b16 %v3656, %v3652
    %v3905 = vpack.c.b16 %v3657, %v3653
    %v3906 = vpack.c.b16 %v3658, %v3654
    %v3907 = vpack.c.b16 %v3663, %v3659
    %v3908 = vpack.c.b16 %v3664, %v3660
    %v3909 = vpack.c.b16 %v3665, %v3661
    %v3910 = vpack.c.b16 %v3666, %v3662
    %v3911 = vpack.c.b16 %v3671, %v3667
    %v3912 = vpack.c.b16 %v3672, %v3668
    %v3913 = vpack.c.b16 %v3673, %v3669
    %v3914 = vpack.c.b16 %v3674, %v3670
    %v3915 = vpack.c.b16 %v3679, %v3675
    %v3916 = vpack.c.b16 %v3680, %v3676
    %v3917 = vpack.c.b16 %v3681, %v3677
    %v3918 = vpack.c.b16 %v3682, %v3678
    %v3919 = vpack.c.b16 %v3687, %v3683
    %v3920 = vpack.c.b16 %v3688, %v3684
    %v3921 = vpack.c.b16 %v3689, %v3685
    %v3922 = vpack.c.b16 %v3690, %v3686
    %v3923 = vpack.c.b16 %v3695, %v3691
    %v3924 = vpack.c.b16 %v3696, %v3692
    %v3925 = vpack.c.b16 %v3697, %v3693
    %v3926 = vpack.c.b16 %v3698, %v3694
    %v3927 = vpack.c.b16 %v3703, %v3699
    %v3928 = vpack.c.b16 %v3704, %v3700
    %v3929 = vpack.c.b16 %v3705, %v3701
    %v3930 = vpack.c.b16 %v3706, %v3702
    %v3931 = vpack.c.b16 %v3711, %v3707
    %v3932 = vpack.c.b16 %v3712, %v3708
    %v3933 = vpack.c.b16 %v3713, %v3709
    %v3934 = vpack.c.b16 %v3714, %v3710
    %v3935 = vpack.c.b16 %v3719, %v3715
    %v3936 = vpack.c.b16 %v3720, %v3716
    %v3937 = vpack.c.b16 %v3721, %v3717
    %v3938 = vpack.c.b16 %v3722, %v3718
    %v3939 = vpack.c.b16 %v3727, %v3723
    %v3940 = vpack.c.b16 %v3728, %v3724
    %v3941 = vpack.c.b16 %v3729, %v3725
    %v3942 = vpack.c.b16 %v3730, %v3726
    %v3943 = vpack.c.b16 %v3735, %v3731
    %v3944 = vpack.c.b16 %v3736, %v3732
    %v3945 = vpack.c.b16 %v3737, %v3733
    %v3946 = vpack.c.b16 %v3738, %v3734
    %v3947 = vpack.c.b16 %v3743, %v3739
    %v3948 = vpack.c.b16 %v3744, %v3740
    %v3949 = vpack.c.b16 %v3745, %v3741
    %v3950 = vpack.c.b16 %v3746, %v3742
    %v3951 = vpack.c.b16 %v3751, %v3747
    %v3952 = vpack.c.b16 %v3752, %v3748
    %v3953 = vpack.c.b16 %v3753, %v3749
    %v3954 = vpack.c.b16 %v3754, %v3750
    %v3955 = vpack.c.b16 %v3759, %v3755
    %v3956 = vpack.c.b16 %v3760, %v3756
    %v3957 = vpack.c.b16 %v3761, %v3757
    %v3958 = vpack.c.b16 %v3762, %v3758
    %v3959 = vpack.c.b16 %v3767, %v3763
    %v3960 = vpack.c.b16 %v3768, %v3764
    %v3961 = vpack.c.b16 %v3769, %v3765
    %v3962 = vpack.c.b16 %v3770, %v3766
    %4155 = vmatprep.subr.bf16.mxu0 %v3772
    %4156 = vmatpush1.bf16.msra.mxu0 %v3771
    %4157 = vmatprep.subr.bf16.mxu0 %v3776
    %4158 = vmatpush1.bf16.msra.mxu0 %v3775
    %4159 = vmatprep.subr.bf16.mxu0 %v3780
    %4160 = vmatpush1.bf16.msra.mxu0 %v3779
    %4161 = vmatprep.subr.bf16.mxu0 %v3784
    %4162 = vmatpush1.bf16.msra.mxu0 %v3783
    %4163 = vmatprep.subr.bf16.mxu0 %v3788
    %4164 = vmatpush1.bf16.msra.mxu0 %v3787
    %4165 = vmatprep.subr.bf16.mxu0 %v3792
    %4166 = vmatpush1.bf16.msra.mxu0 %v3791
    %4167 = vmatprep.subr.bf16.mxu0 %v3796
    %4168 = vmatpush1.bf16.msra.mxu0 %v3795
    %4169 = vmatprep.subr.bf16.mxu0 %v3800
    %4170 = vmatpush1.bf16.msra.mxu0 %v3799
    %4171 = vmatprep.subr.bf16.mxu0 %v3804
    %4172 = vmatpush1.bf16.msra.mxu0 %v3803
    %4173 = vmatprep.subr.bf16.mxu0 %v3808
    %4174 = vmatpush1.bf16.msra.mxu0 %v3807
    %4175 = vmatprep.subr.bf16.mxu0 %v3812
    %4176 = vmatpush1.bf16.msra.mxu0 %v3811
    %4177 = vmatprep.subr.bf16.mxu0 %v3816
    %4178 = vmatpush1.bf16.msra.mxu0 %v3815
    %4179 = vmatprep.subr.bf16.mxu0 %v3820
    %4180 = vmatpush1.bf16.msra.mxu0 %v3819
    %4181 = vmatprep.subr.bf16.mxu0 %v3824
    %4182 = vmatpush1.bf16.msra.mxu0 %v3823
    %4183 = vmatprep.subr.bf16.mxu0 %v3828
    %4184 = vmatpush1.bf16.msra.mxu0 %v3827
    %4185 = vmatprep.subr.bf16.mxu0 %v3832
    %4186 = vmatpush1.bf16.msra.mxu0 %v3831
    %4187 = vmatprep.mubr.bf16.mxu0 %v2976
    %4188 = vmatmul.mubr.bf16.gmra.mrb[0].mxu0 %v2975
    %v4189 = vpop.f32.mrb[0].mxu0
    %v4190 = vadd.f32 %v3178, %v4189
    %v4191 = vpop.f32.mrb[0].mxu0
    %v4192 = vadd.f32 %v3182, %v4191
    %v4193 = vpop.f32.mrb[0].mxu0
    %v4194 = vpop.f32.mrb[0].mxu0
    %4195 = vdwg.mxu0
    %4196 = vmatprep.subr.bf16.mxu0 %v3836
    %4197 = vmatpush1.bf16.msra.mxu0 %v3835
    %4198 = vmatprep.subr.bf16.mxu0 %v3840
    %4199 = vmatpush1.bf16.msra.mxu0 %v3839
    %4200 = vmatprep.subr.bf16.mxu0 %v3844
    %4201 = vmatpush1.bf16.msra.mxu0 %v3843
    %4202 = vmatprep.subr.bf16.mxu0 %v3848
    %4203 = vmatpush1.bf16.msra.mxu0 %v3847
    %4204 = vmatprep.subr.bf16.mxu0 %v3852
    %4205 = vmatpush1.bf16.msra.mxu0 %v3851
    %4206 = vmatprep.subr.bf16.mxu0 %v3856
    %4207 = vmatpush1.bf16.msra.mxu0 %v3855
    %4208 = vmatprep.subr.bf16.mxu0 %v3860
    %4209 = vmatpush1.bf16.msra.mxu0 %v3859
    %4210 = vmatprep.subr.bf16.mxu0 %v3864
    %4211 = vmatpush1.bf16.msra.mxu0 %v3863
    %4212 = vmatprep.subr.bf16.mxu0 %v3868
    %4213 = vmatpush1.bf16.msra.mxu0 %v3867
    %4214 = vmatprep.subr.bf16.mxu0 %v3872
    %4215 = vmatpush1.bf16.msra.mxu0 %v3871
    %4216 = vmatprep.subr.bf16.mxu0 %v3876
    %4217 = vmatpush1.bf16.msra.mxu0 %v3875
    %4218 = vmatprep.subr.bf16.mxu0 %v3880
    %4219 = vmatpush1.bf16.msra.mxu0 %v3879
    %4220 = vmatprep.subr.bf16.mxu0 %v3884
    %4221 = vmatpush1.bf16.msra.mxu0 %v3883
    %4222 = vmatprep.subr.bf16.mxu0 %v3888
    %4223 = vmatpush1.bf16.msra.mxu0 %v3887
    %4224 = vmatprep.subr.bf16.mxu0 %v3892
    %4225 = vmatpush1.bf16.msra.mxu0 %v3891
    %4226 = vmatprep.subr.bf16.mxu0 %v3896
    %4227 = vmatpush1.bf16.msra.mxu0 %v3895
    %4228 = vmatprep.mubr.bf16.mxu0 %v2978
    %4229 = vmatmul.mubr.bf16.gmra.mrb[0].mxu0 %v2977
    %v4230 = vpop.f32.mrb[0].mxu0
    %v4231 = vadd.f32 %v4190, %v4230
    %v4232 = vpop.f32.mrb[0].mxu0
    %v4233 = vadd.f32 %v4192, %v4232
    %v4234 = vpop.f32.mrb[0].mxu0
    %v4235 = vpop.f32.mrb[0].mxu0
    %4236 = vdwg.mxu0
    %4237 = vmatprep.subr.bf16.mxu0 %v3900
    %4238 = vmatpush1.bf16.msra.mxu0 %v3899
    %4239 = vmatprep.subr.bf16.mxu0 %v3904
    %4240 = vmatpush1.bf16.msra.mxu0 %v3903
    %4241 = vmatprep.subr.bf16.mxu0 %v3908
    %4242 = vmatpush1.bf16.msra.mxu0 %v3907
    %4243 = vmatprep.subr.bf16.mxu0 %v3912
    %4244 = vmatpush1.bf16.msra.mxu0 %v3911
    %4245 = vmatprep.subr.bf16.mxu0 %v3916
    %4246 = vmatpush1.bf16.msra.mxu0 %v3915
    %4247 = vmatprep.subr.bf16.mxu0 %v3920
    %4248 = vmatpush1.bf16.msra.mxu0 %v3919
    %4249 = vmatprep.subr.bf16.mxu0 %v3924
    %4250 = vmatpush1.bf16.msra.mxu0 %v3923
    %4251 = vmatprep.subr.bf16.mxu0 %v3928
    %4252 = vmatpush1.bf16.msra.mxu0 %v3927
    %4253 = vmatprep.subr.bf16.mxu0 %v3932
    %4254 = vmatpush1.bf16.msra.mxu0 %v3931
    %4255 = vmatprep.subr.bf16.mxu0 %v3936
    %4256 = vmatpush1.bf16.msra.mxu0 %v3935
    %4257 = vmatprep.subr.bf16.mxu0 %v3940
    %4258 = vmatpush1.bf16.msra.mxu0 %v3939
    %4259 = vmatprep.subr.bf16.mxu0 %v3944
    %4260 = vmatpush1.bf16.msra.mxu0 %v3943
    %4261 = vmatprep.subr.bf16.mxu0 %v3948
    %4262 = vmatpush1.bf16.msra.mxu0 %v3947
    %4263 = vmatprep.subr.bf16.mxu0 %v3952
    %4264 = vmatpush1.bf16.msra.mxu0 %v3951
    %4265 = vmatprep.subr.bf16.mxu0 %v3956
    %4266 = vmatpush1.bf16.msra.mxu0 %v3955
    %4267 = vmatprep.subr.bf16.mxu0 %v3960
    %4268 = vmatpush1.bf16.msra.mxu0 %v3959
    %4269 = vmatprep.mubr.bf16.mxu0 %v2980
    %4270 = vmatmul.mubr.bf16.gmra.mrb[0].mxu0 %v2979
    %v4271 = vpop.f32.mrb[0].mxu0
    %v4272 = vadd.f32 %v4231, %v4271
    %v4273 = vpop.f32.mrb[0].mxu0
    %v4274 = vadd.f32 %v4233, %v4273
    %v4275 = vpop.f32.mrb[0].mxu0
    %v4276 = vpop.f32.mrb[0].mxu0
    %4277 = vdwg.mxu0
    %4278 = vmatprep.subr.bf16.mxu0 %v3774
    %4279 = vmatpush1.bf16.msra.mxu0 %v3773
    %4280 = vmatprep.subr.bf16.mxu0 %v3778
    %4281 = vmatpush1.bf16.msra.mxu0 %v3777
    %4282 = vmatprep.subr.bf16.mxu0 %v3782
    %4283 = vmatpush1.bf16.msra.mxu0 %v3781
    %4284 = vmatprep.subr.bf16.mxu0 %v3786
    %4285 = vmatpush1.bf16.msra.mxu0 %v3785
    %4286 = vmatprep.subr.bf16.mxu0 %v3790
    %4287 = vmatpush1.bf16.msra.mxu0 %v3789
    %4288 = vmatprep.subr.bf16.mxu0 %v3794
    %4289 = vmatpush1.bf16.msra.mxu0 %v3793
    %4290 = vmatprep.subr.bf16.mxu0 %v3798
    %4291 = vmatpush1.bf16.msra.mxu0 %v3797
    %4292 = vmatprep.subr.bf16.mxu0 %v3802
    %4293 = vmatpush1.bf16.msra.mxu0 %v3801
    %4294 = vmatprep.subr.bf16.mxu0 %v3806
    %4295 = vmatpush1.bf16.msra.mxu0 %v3805
    %4296 = vmatprep.subr.bf16.mxu0 %v3810
    %4297 = vmatpush1.bf16.msra.mxu0 %v3809
    %4298 = vmatprep.subr.bf16.mxu0 %v3814
    %4299 = vmatpush1.bf16.msra.mxu0 %v3813
    %4300 = vmatprep.subr.bf16.mxu0 %v3818
    %4301 = vmatpush1.bf16.msra.mxu0 %v3817
    %4302 = vmatprep.subr.bf16.mxu0 %v3822
    %4303 = vmatpush1.bf16.msra.mxu0 %v3821
    %4304 = vmatprep.subr.bf16.mxu0 %v3826
    %4305 = vmatpush1.bf16.msra.mxu0 %v3825
    %4306 = vmatprep.subr.bf16.mxu0 %v3830
    %4307 = vmatpush1.bf16.msra.mxu0 %v3829
    %4308 = vmatprep.subr.bf16.mxu0 %v3834
    %4309 = vmatpush1.bf16.msra.mxu0 %v3833
    %4310 = vmatprep.mubr.bf16.mxu0 %v2976
    %4311 = vmatmul.mubr.bf16.gmra.mrb[0].mxu0 %v2975
    %v4312 = vpop.f32.mrb[0].mxu0
    %v4313 = vadd.f32 %v3186, %v4312
    %v4314 = vpop.f32.mrb[0].mxu0
    %v4315 = vadd.f32 %v3190, %v4314
    %v4316 = vpop.f32.mrb[0].mxu0
    %v4317 = vpop.f32.mrb[0].mxu0
    %4318 = vdwg.mxu0
    %4319 = vmatprep.subr.bf16.mxu0 %v3838
    %4320 = vmatpush1.bf16.msra.mxu0 %v3837
    %4321 = vmatprep.subr.bf16.mxu0 %v3842
    %4322 = vmatpush1.bf16.msra.mxu0 %v3841
    %4323 = vmatprep.subr.bf16.mxu0 %v3846
    %4324 = vmatpush1.bf16.msra.mxu0 %v3845
    %4325 = vmatprep.subr.bf16.mxu0 %v3850
    %4326 = vmatpush1.bf16.msra.mxu0 %v3849
    %4327 = vmatprep.subr.bf16.mxu0 %v3854
    %4328 = vmatpush1.bf16.msra.mxu0 %v3853
    %4329 = vmatprep.subr.bf16.mxu0 %v3858
    %4330 = vmatpush1.bf16.msra.mxu0 %v3857
    %4331 = vmatprep.subr.bf16.mxu0 %v3862
    %4332 = vmatpush1.bf16.msra.mxu0 %v3861
    %4333 = vmatprep.subr.bf16.mxu0 %v3866
    %4334 = vmatpush1.bf16.msra.mxu0 %v3865
    %4335 = vmatprep.subr.bf16.mxu0 %v3870
    %4336 = vmatpush1.bf16.msra.mxu0 %v3869
    %4337 = vmatprep.subr.bf16.mxu0 %v3874
    %4338 = vmatpush1.bf16.msra.mxu0 %v3873
    %4339 = vmatprep.subr.bf16.mxu0 %v3878
    %4340 = vmatpush1.bf16.msra.mxu0 %v3877
    %4341 = vmatprep.subr.bf16.mxu0 %v3882
    %4342 = vmatpush1.bf16.msra.mxu0 %v3881
    %4343 = vmatprep.subr.bf16.mxu0 %v3886
    %4344 = vmatpush1.bf16.msra.mxu0 %v3885
    %4345 = vmatprep.subr.bf16.mxu0 %v3890
    %4346 = vmatpush1.bf16.msra.mxu0 %v3889
    %4347 = vmatprep.subr.bf16.mxu0 %v3894
    %4348 = vmatpush1.bf16.msra.mxu0 %v3893
    %4349 = vmatprep.subr.bf16.mxu0 %v3898
    %4350 = vmatpush1.bf16.msra.mxu0 %v3897
    %4351 = vmatprep.mubr.bf16.mxu0 %v2978
    %4352 = vmatmul.mubr.bf16.gmra.mrb[0].mxu0 %v2977
    %v4353 = vpop.f32.mrb[0].mxu0
    %v4354 = vadd.f32 %v4313, %v4353
    %v4355 = vpop.f32.mrb[0].mxu0
    %v4356 = vadd.f32 %v4315, %v4355
    %v4357 = vpop.f32.mrb[0].mxu0
    %v4358 = vpop.f32.mrb[0].mxu0
    %4359 = vdwg.mxu0
    %4360 = vmatprep.subr.bf16.mxu0 %v3902
    %4361 = vmatpush1.bf16.msra.mxu0 %v3901
    %4362 = vmatprep.subr.bf16.mxu0 %v3906
    %4363 = vmatpush1.bf16.msra.mxu0 %v3905
    %4364 = vmatprep.subr.bf16.mxu0 %v3910
    %4365 = vmatpush1.bf16.msra.mxu0 %v3909
    %4366 = vmatprep.subr.bf16.mxu0 %v3914
    %4367 = vmatpush1.bf16.msra.mxu0 %v3913
    %4368 = vmatprep.subr.bf16.mxu0 %v3918
    %4369 = vmatpush1.bf16.msra.mxu0 %v3917
    %4370 = vmatprep.subr.bf16.mxu0 %v3922
    %4371 = vmatpush1.bf16.msra.mxu0 %v3921
    %4372 = vmatprep.subr.bf16.mxu0 %v3926
    %4373 = vmatpush1.bf16.msra.mxu0 %v3925
    %4374 = vmatprep.subr.bf16.mxu0 %v3930
    %4375 = vmatpush1.bf16.msra.mxu0 %v3929
    %4376 = vmatprep.subr.bf16.mxu0 %v3934
    %4377 = vmatpush1.bf16.msra.mxu0 %v3933
    %4378 = vmatprep.subr.bf16.mxu0 %v3938
    %4379 = vmatpush1.bf16.msra.mxu0 %v3937
    %4380 = vmatprep.subr.bf16.mxu0 %v3942
    %4381 = vmatpush1.bf16.msra.mxu0 %v3941
    %4382 = vmatprep.subr.bf16.mxu0 %v3946
    %4383 = vmatpush1.bf16.msra.mxu0 %v3945
    %4384 = vmatprep.subr.bf16.mxu0 %v3950
    %4385 = vmatpush1.bf16.msra.mxu0 %v3949
    %4386 = vmatprep.subr.bf16.mxu0 %v3954
    %4387 = vmatpush1.bf16.msra.mxu0 %v3953
    %4388 = vmatprep.subr.bf16.mxu0 %v3958
    %4389 = vmatpush1.bf16.msra.mxu0 %v3957
    %4390 = vmatprep.subr.bf16.mxu0 %v3962
    %4391 = vmatpush1.bf16.msra.mxu0 %v3961
    %4392 = vmatprep.mubr.bf16.mxu0 %v2980
    %4393 = vmatmul.mubr.bf16.gmra.mrb[0].mxu0 %v2979
    %v4394 = vpop.f32.mrb[0].mxu0
    %v4395 = vadd.f32 %v4354, %v4394
    %v4396 = vpop.f32.mrb[0].mxu0
    %v4397 = vadd.f32 %v4356, %v4396
    %v4398 = vpop.f32.mrb[0].mxu0
    %v4399 = vpop.f32.mrb[0].mxu0
    %4400 = vdwg.mxu0
    %v4401 = vpack.c.bf16 %v4272, %v4272
    %v4402 = vpack.c.bf16 %v4274, %v4274
    %v4403 = vpack.c.bf16 %v4395, %v4395
    %v4404 = vpack.c.bf16 %v4397, %v4397
    %v4405 = vld [vmem:[#allocation11] sm:$0xf]
    %v4406 = vld [vmem:[#allocation11 + $0x4] sm:$0xf]
    %v4407 = vld [vmem:[#allocation11 + $0x8] sm:$0xf]
    %v4408 = vld [vmem:[#allocation11 + $0xc] sm:$0xf]
    %v4409 = vld [vmem:[#allocation11 + $0x10] sm:$0xf]
    %v4410 = vld [vmem:[#allocation11 + $0x14] sm:$0xf]
    %v4411 = vld [vmem:[#allocation11 + $0x18] sm:$0xf]
    %v4412 = vld [vmem:[#allocation11 + $0x1c] sm:$0xf]
    %v4413 = vld [vmem:[#allocation11 + $0x20] sm:$0xf]
    %v4414 = vld [vmem:[#allocation11 + $0x24] sm:$0xf]
    %v4415 = vld [vmem:[#allocation11 + $0x28] sm:$0xf]
    %v4416 = vld [vmem:[#allocation11 + $0x2c] sm:$0xf]
    %v4417 = vld [vmem:[#allocation11 + $0x30] sm:$0xf]
    %v4418 = vld [vmem:[#allocation11 + $0x34] sm:$0xf]
    %v4419 = vld [vmem:[#allocation11 + $0x38] sm:$0xf]
    %v4420 = vld [vmem:[#allocation11 + $0x3c] sm:$0xf]
    %v4421 = vld [vmem:[#allocation11 + $0x40] sm:$0xf]
    %v4422 = vld [vmem:[#allocation11 + $0x44] sm:$0xf]
    %v4423 = vld [vmem:[#allocation11 + $0x48] sm:$0xf]
    %v4424 = vld [vmem:[#allocation11 + $0x4c] sm:$0xf]
    %v4425 = vld [vmem:[#allocation11 + $0x50] sm:$0xf]
    %v4426 = vld [vmem:[#allocation11 + $0x54] sm:$0xf]
    %v4427 = vld [vmem:[#allocation11 + $0x58] sm:$0xf]
    %v4428 = vld [vmem:[#allocation11 + $0x5c] sm:$0xf]
    %v4429 = vld [vmem:[#allocation11 + $0x60] sm:$0xf]
    %v4430 = vld [vmem:[#allocation11 + $0x64] sm:$0xf]
    %v4431 = vld [vmem:[#allocation11 + $0x68] sm:$0xf]
    %v4432 = vld [vmem:[#allocation11 + $0x6c] sm:$0xf]
    %v4433 = vld [vmem:[#allocation11 + $0x70] sm:$0xf]
    %v4434 = vld [vmem:[#allocation11 + $0x74] sm:$0xf]
    %v4435 = vld [vmem:[#allocation11 + $0x78] sm:$0xf]
    %v4436 = vld [vmem:[#allocation11 + $0x7c] sm:$0xf]
    %v4437 = vld [vmem:[#allocation11 + $0x80] sm:$0xf]
    %v4438 = vld [vmem:[#allocation11 + $0x84] sm:$0xf]
    %v4439 = vld [vmem:[#allocation11 + $0x88] sm:$0xf]
    %v4440 = vld [vmem:[#allocation11 + $0x8c] sm:$0xf]
    %v4441 = vld [vmem:[#allocation11 + $0x90] sm:$0xf]
    %v4442 = vld [vmem:[#allocation11 + $0x94] sm:$0xf]
    %v4443 = vld [vmem:[#allocation11 + $0x98] sm:$0xf]
    %v4444 = vld [vmem:[#allocation11 + $0x9c] sm:$0xf]
    %v4445 = vld [vmem:[#allocation11 + $0xa0] sm:$0xf]
    %v4446 = vld [vmem:[#allocation11 + $0xa4] sm:$0xf]
    %v4447 = vld [vmem:[#allocation11 + $0xa8] sm:$0xf]
    %v4448 = vld [vmem:[#allocation11 + $0xac] sm:$0xf]
    %v4449 = vld [vmem:[#allocation11 + $0xb0] sm:$0xf]
    %v4450 = vld [vmem:[#allocation11 + $0xb4] sm:$0xf]
    %v4451 = vld [vmem:[#allocation11 + $0xb8] sm:$0xf]
    %v4452 = vld [vmem:[#allocation11 + $0xbc] sm:$0xf]
    %v4453 = vld [vmem:[#allocation11 + $0xc0] sm:$0xf]
    %v4454 = vld [vmem:[#allocation11 + $0xc4] sm:$0xf]
    %v4455 = vld [vmem:[#allocation11 + $0xc8] sm:$0xf]
    %v4456 = vld [vmem:[#allocation11 + $0xcc] sm:$0xf]
    %v4457 = vld [vmem:[#allocation11 + $0xd0] sm:$0xf]
    %v4458 = vld [vmem:[#allocation11 + $0xd4] sm:$0xf]
    %v4459 = vld [vmem:[#allocation11 + $0xd8] sm:$0xf]
    %v4460 = vld [vmem:[#allocation11 + $0xdc] sm:$0xf]
    %v4461 = vld [vmem:[#allocation11 + $0xe0] sm:$0xf]
    %v4462 = vld [vmem:[#allocation11 + $0xe4] sm:$0xf]
    %v4463 = vld [vmem:[#allocation11 + $0xe8] sm:$0xf]
    %v4464 = vld [vmem:[#allocation11 + $0xec] sm:$0xf]
    %v4465 = vld [vmem:[#allocation11 + $0xf0] sm:$0xf]
    %v4466 = vld [vmem:[#allocation11 + $0xf4] sm:$0xf]
    %v4467 = vld [vmem:[#allocation11 + $0xf8] sm:$0xf]
    %v4468 = vld [vmem:[#allocation11 + $0xfc] sm:$0xf]
    %v4469 = vld [vmem:[#allocation13] sm:$0x1]
    %v4471 = vlaneseq
    %v4472 = vshrl.u32 %v4471, 7
    %v4473 = vsub.s32 0, %v4472
    %v4474 = vrot.slane %v4469, %v4473
    %v4540 = vunpack.c.l.b16 %v4405
    %v4541 = vunpack.c.l.b16 %v4406
    %v4542 = vunpack.c.l.b16 %v4407
    %v4543 = vunpack.c.l.b16 %v4408
    %v4544 = vunpack.c.l.b16 %v4409
    %v4545 = vunpack.c.l.b16 %v4410
    %v4546 = vunpack.c.l.b16 %v4411
    %v4547 = vunpack.c.l.b16 %v4412
    %v4548 = vunpack.c.l.b16 %v4413
    %v4549 = vunpack.c.l.b16 %v4414
    %v4550 = vunpack.c.l.b16 %v4415
    %v4551 = vunpack.c.l.b16 %v4416
    %v4552 = vunpack.c.l.b16 %v4417
    %v4553 = vunpack.c.l.b16 %v4418
    %v4554 = vunpack.c.l.b16 %v4419
    %v4555 = vunpack.c.l.b16 %v4420
    %v4556 = vunpack.c.l.b16 %v4421
    %v4557 = vunpack.c.l.b16 %v4422
    %v4558 = vunpack.c.l.b16 %v4423
    %v4559 = vunpack.c.l.b16 %v4424
    %v4560 = vunpack.c.l.b16 %v4425
    %v4561 = vunpack.c.l.b16 %v4426
    %v4562 = vunpack.c.l.b16 %v4427
    %v4563 = vunpack.c.l.b16 %v4428
    %v4564 = vunpack.c.l.b16 %v4429
    %v4565 = vunpack.c.l.b16 %v4430
    %v4566 = vunpack.c.l.b16 %v4431
    %v4567 = vunpack.c.l.b16 %v4432
    %v4568 = vunpack.c.l.b16 %v4433
    %v4569 = vunpack.c.l.b16 %v4434
    %v4570 = vunpack.c.l.b16 %v4435
    %v4571 = vunpack.c.l.b16 %v4436
    %v4572 = vunpack.c.l.b16 %v4437
    %v4573 = vunpack.c.l.b16 %v4438
    %v4574 = vunpack.c.l.b16 %v4439
    %v4575 = vunpack.c.l.b16 %v4440
    %v4576 = vunpack.c.l.b16 %v4441
    %v4577 = vunpack.c.l.b16 %v4442
    %v4578 = vunpack.c.l.b16 %v4443
    %v4579 = vunpack.c.l.b16 %v4444
    %v4580 = vunpack.c.l.b16 %v4445
    %v4581 = vunpack.c.l.b16 %v4446
    %v4582 = vunpack.c.l.b16 %v4447
    %v4583 = vunpack.c.l.b16 %v4448
    %v4584 = vunpack.c.l.b16 %v4449
    %v4585 = vunpack.c.l.b16 %v4450
    %v4586 = vunpack.c.l.b16 %v4451
    %v4587 = vunpack.c.l.b16 %v4452
    %v4588 = vunpack.c.l.b16 %v4453
    %v4589 = vunpack.c.l.b16 %v4454
    %v4590 = vunpack.c.l.b16 %v4455
    %v4591 = vunpack.c.l.b16 %v4456
    %v4592 = vunpack.c.l.b16 %v4457
    %v4593 = vunpack.c.l.b16 %v4458
    %v4594 = vunpack.c.l.b16 %v4459
    %v4595 = vunpack.c.l.b16 %v4460
    %v4596 = vunpack.c.l.b16 %v4461
    %v4597 = vunpack.c.l.b16 %v4462
    %v4598 = vunpack.c.l.b16 %v4463
    %v4599 = vunpack.c.l.b16 %v4464
    %v4600 = vunpack.c.l.b16 %v4465
    %v4601 = vunpack.c.l.b16 %v4466
    %v4602 = vunpack.c.l.b16 %v4467
    %v4603 = vunpack.c.l.b16 %v4468
    %v4604 = vpack.c.b16 %v4541, %v4540
    %v4605 = vpack.c.b16 %v4543, %v4542
    %v4606 = vpack.c.b16 %v4545, %v4544
    %v4607 = vpack.c.b16 %v4547, %v4546
    %v4608 = vpack.c.b16 %v4549, %v4548
    %v4609 = vpack.c.b16 %v4551, %v4550
    %v4610 = vpack.c.b16 %v4553, %v4552
    %v4611 = vpack.c.b16 %v4555, %v4554
    %v4612 = vpack.c.b16 %v4557, %v4556
    %v4613 = vpack.c.b16 %v4559, %v4558
    %v4614 = vpack.c.b16 %v4561, %v4560
    %v4615 = vpack.c.b16 %v4563, %v4562
    %v4616 = vpack.c.b16 %v4565, %v4564
    %v4617 = vpack.c.b16 %v4567, %v4566
    %v4618 = vpack.c.b16 %v4569, %v4568
    %v4619 = vpack.c.b16 %v4571, %v4570
    %v4620 = vpack.c.b16 %v4573, %v4572
    %v4621 = vpack.c.b16 %v4575, %v4574
    %v4622 = vpack.c.b16 %v4577, %v4576
    %v4623 = vpack.c.b16 %v4579, %v4578
    %v4624 = vpack.c.b16 %v4581, %v4580
    %v4625 = vpack.c.b16 %v4583, %v4582
    %v4626 = vpack.c.b16 %v4585, %v4584
    %v4627 = vpack.c.b16 %v4587, %v4586
    %v4628 = vpack.c.b16 %v4589, %v4588
    %v4629 = vpack.c.b16 %v4591, %v4590
    %v4630 = vpack.c.b16 %v4593, %v4592
    %v4631 = vpack.c.b16 %v4595, %v4594
    %v4632 = vpack.c.b16 %v4597, %v4596
    %v4633 = vpack.c.b16 %v4599, %v4598
    %v4634 = vpack.c.b16 %v4601, %v4600
    %v4635 = vpack.c.b16 %v4603, %v4602
    %4668 = vmatprep.subr.bf16.mxu0 0
    %4669 = vmatpush1.bf16.msra.mxu0 %v4604
    %4670 = vmatprep.subr.bf16.mxu0 0
    %4671 = vmatpush1.bf16.msra.mxu0 %v4605
    %4672 = vmatprep.subr.bf16.mxu0 0
    %4673 = vmatpush1.bf16.msra.mxu0 %v4606
    %4674 = vmatprep.subr.bf16.mxu0 0
    %4675 = vmatpush1.bf16.msra.mxu0 %v4607
    %4676 = vmatprep.subr.bf16.mxu0 0
    %4677 = vmatpush1.bf16.msra.mxu0 %v4608
    %4678 = vmatprep.subr.bf16.mxu0 0
    %4679 = vmatpush1.bf16.msra.mxu0 %v4609
    %4680 = vmatprep.subr.bf16.mxu0 0
    %4681 = vmatpush1.bf16.msra.mxu0 %v4610
    %4682 = vmatprep.subr.bf16.mxu0 0
    %4683 = vmatpush1.bf16.msra.mxu0 %v4611
    %4684 = vmatprep.subr.bf16.mxu0 0
    %4685 = vmatpush1.bf16.msra.mxu0 %v4612
    %4686 = vmatprep.subr.bf16.mxu0 0
    %4687 = vmatpush1.bf16.msra.mxu0 %v4613
    %4688 = vmatprep.subr.bf16.mxu0 0
    %4689 = vmatpush1.bf16.msra.mxu0 %v4614
    %4690 = vmatprep.subr.bf16.mxu0 0
    %4691 = vmatpush1.bf16.msra.mxu0 %v4615
    %4692 = vmatprep.subr.bf16.mxu0 0
    %4693 = vmatpush1.bf16.msra.mxu0 %v4616
    %4694 = vmatprep.subr.bf16.mxu0 0
    %4695 = vmatpush1.bf16.msra.mxu0 %v4617
    %4696 = vmatprep.subr.bf16.mxu0 0
    %4697 = vmatpush1.bf16.msra.mxu0 %v4618
    %4698 = vmatprep.subr.bf16.mxu0 0
    %4699 = vmatpush1.bf16.msra.mxu0 %v4619
    %4700 = vmatprep.mubr.bf16.mxu0 %v4402
    %4701 = vmatmul.mubr.bf16.gmra.mrb[0].mxu0 %v4401
    %v4702 = vpop.f32.mrb[0].mxu0
    %v4703 = vadd.f32 %v4474, %v4702
    %v4704 = vpop.f32.mrb[0].mxu0
    %v4705 = vpop.f32.mrb[0].mxu0
    %v4706 = vpop.f32.mrb[0].mxu0
    %4707 = vdwg.mxu0
    %4708 = vmatprep.subr.bf16.mxu0 0
    %4709 = vmatpush1.bf16.msra.mxu0 %v4620
    %4710 = vmatprep.subr.bf16.mxu0 0
    %4711 = vmatpush1.bf16.msra.mxu0 %v4621
    %4712 = vmatprep.subr.bf16.mxu0 0
    %4713 = vmatpush1.bf16.msra.mxu0 %v4622
    %4714 = vmatprep.subr.bf16.mxu0 0
    %4715 = vmatpush1.bf16.msra.mxu0 %v4623
    %4716 = vmatprep.subr.bf16.mxu0 0
    %4717 = vmatpush1.bf16.msra.mxu0 %v4624
    %4718 = vmatprep.subr.bf16.mxu0 0
    %4719 = vmatpush1.bf16.msra.mxu0 %v4625
    %4720 = vmatprep.subr.bf16.mxu0 0
    %4721 = vmatpush1.bf16.msra.mxu0 %v4626
    %4722 = vmatprep.subr.bf16.mxu0 0
    %4723 = vmatpush1.bf16.msra.mxu0 %v4627
    %4724 = vmatprep.subr.bf16.mxu0 0
    %4725 = vmatpush1.bf16.msra.mxu0 %v4628
    %4726 = vmatprep.subr.bf16.mxu0 0
    %4727 = vmatpush1.bf16.msra.mxu0 %v4629
    %4728 = vmatprep.subr.bf16.mxu0 0
    %4729 = vmatpush1.bf16.msra.mxu0 %v4630
    %4730 = vmatprep.subr.bf16.mxu0 0
    %4731 = vmatpush1.bf16.msra.mxu0 %v4631
    %4732 = vmatprep.subr.bf16.mxu0 0
    %4733 = vmatpush1.bf16.msra.mxu0 %v4632
    %4734 = vmatprep.subr.bf16.mxu0 0
    %4735 = vmatpush1.bf16.msra.mxu0 %v4633
    %4736 = vmatprep.subr.bf16.mxu0 0
    %4737 = vmatpush1.bf16.msra.mxu0 %v4634
    %4738 = vmatprep.subr.bf16.mxu0 0
    %4739 = vmatpush1.bf16.msra.mxu0 %v4635
    %4740 = vmatprep.mubr.bf16.mxu0 %v4404
    %4741 = vmatmul.mubr.bf16.gmra.mrb[0].mxu0 %v4403
    %v4742 = vpop.f32.mrb[0].mxu0
    %v4743 = vadd.f32 %v4703, %v4742
    %v4744 = vpop.f32.mrb[0].mxu0
    %v4745 = vpop.f32.mrb[0].mxu0
    %v4746 = vpop.f32.mrb[0].mxu0
    %4747 = vdwg.mxu0
    %4748 = vst [vmem:[#allocation14] sm:$0xff] %v4743
    // Predicated region
    $region58: #{tpu_custom_call.1} parent=1 // pred_check
      _
    $region59: #{tpu_custom_call.1} parent=1 // pred_check_branch
      %4750 = sbr.rel (0) target = $region61
    $region60: #{tpu_custom_call.1} parent=1 // pred_region
      %s4752 = ssub.s32 128, 128
      %4753 = vsyncadd [#allocation4], %s4752
      %s4755 = sshll.u32 [#allocation14], 4
      %s4756 = int_to_ptr.vmem [resolvable:$true] %s4755
      %4758 = dma.vmem_to_hbm [thread:$0]  %s4756, 128, %s7, [#allocation4]
    $region61: #{tpu_custom_call.1} parent=1 // pred_fallthru
      _
    // Predicated region
    $region62: #{tpu_custom_call.1} parent=1 // pred_check
      _
    $region63: #{tpu_custom_call.1} parent=1 // pred_check_branch
      %4760 = sbr.rel (0) target = $region65
    $region64: #{tpu_custom_call.1} parent=1 // pred_region
      %4761 = dma.done [#allocation4], 128
    $region65: #{tpu_custom_call.1} parent=1 // pred_fallthru
      _
    %4762 = vsyncpa [#allocation3], 1
    %4763 = vsyncpa [#allocation6], 1
    %4764 = vsyncpa [#allocation9], 1
    %4765 = vsyncpa [#allocation12], 1
    %4766 = vsyncpa [#allocation4], 1

// kernel: tpu_custom_call.1
$region0: #{tpu_custom_call.1}
  #allocation0 [shape = 'u32[]', space=smem, size = 0x4, offset = 0x4, fixed_abs, tag = 'smem constant byte address 0x4 - core index']
  #allocation1 [shape = 'u32[144,128]{1,0:T(1,128)}', space=vmem, size = 0x12000, scoped, tag = 'internal scratch']
  %s0 = inlined_call_operand.hbm [shape: bf16[8,1024], index: 0, kind: input, shape index: {}]
  %s1 = inlined_call_operand.hbm [shape: bf16[1024,768], index: 1, kind: input, shape index: {}]
  %s2 = inlined_call_operand.hbm [shape: f32[1,768], index: 2, kind: input, shape index: {}]
  %s3 = inlined_call_operand.hbm [shape: bf16[768,512], index: 3, kind: input, shape index: {}]
  %s4 = inlined_call_operand.hbm [shape: f32[1,512], index: 4, kind: input, shape index: {}]
  %s5 = inlined_call_operand.hbm [shape: bf16[512,128], index: 5, kind: input, shape index: {}]
  %s6 = inlined_call_operand.hbm [shape: f32[1,128], index: 6, kind: input, shape index: {}]
  %s7 = inlined_call_operand.hbm [shape: f32[8,128], index: 7, kind: output, shape index: {}]
  %s8 = sld [smem:[#allocation0]]
  $region66: #{tpu_custom_call.1} parent=0
    _
  %s10 = ssub.s32 1, %s8
  %s11 = scalar_select 0, %s10, %s8
  $region1: #{tpu_custom_call.1} parent=0
    #allocation2 [shape = 'u8[16384]{0}', space=vmem, size = 0x4000, scoped, tag = 'input window, operand 0, single buffered']
    #allocation3 [shape = 's32[1]{0}', space=sflag, size = 0x4, scoped, tag = 'scoped memory for tpu_custom_call.1']
    #allocation4 [shape = 's32[1]{0}', space=sflag, size = 0x4, scoped, tag = 'scoped memory for tpu_custom_call.1']
    #allocation5 [shape = 'u8[1572864]{0}', space=vmem, size = 0x180000, scoped, tag = 'input window, operand 1, single buffered']
    #allocation6 [shape = 's32[1]{0}', space=sflag, size = 0x4, scoped, tag = 'scoped memory for tpu_custom_call.1']
    #allocation7 [shape = 'u8[3072]{0}', space=vmem, size = 0xc00, scoped, tag = 'input window, operand 2, single buffered']
    #allocation8 [shape = 'u8[786432]{0}', space=vmem, size = 0xc0000, scoped, tag = 'input window, operand 3, single buffered']
    #allocation9 [shape = 's32[1]{0}', space=sflag, size = 0x4, scoped, tag = 'scoped memory for tpu_custom_call.1']
    #allocation10 [shape = 'u8[2048]{0}', space=vmem, size = 0x800, scoped, tag = 'input window, operand 4, single buffered']
    #allocation11 [shape = 'u8[131072]{0}', space=vmem, size = 0x20000, scoped, tag = 'input window, operand 5, single buffered']
    #allocation12 [shape = 's32[1]{0}', space=sflag, size = 0x4, scoped, tag = 'scoped memory for tpu_custom_call.1']
    #allocation13 [shape = 'u8[512]{0}', space=vmem, size = 0x400, scoped, tag = 'input window, operand 6, single buffered']
    #allocation14 [shape = 'u8[4096]{0}', space=vmem, size = 0x1000, scoped, tag = 'output window, operand 0, single buffered']
    %12 = vsyncpa [#allocation3], 0
    %13 = vsyncpa [#allocation6], 0
    %14 = vsyncpa [#allocation9], 0
    %15 = vsyncpa [#allocation12], 0
    %16 = vsyncpa [#allocation4], 0
    // Predicated region
    $region2: #{tpu_custom_call.1} parent=1 // pred_check
      _
    $region3: #{tpu_custom_call.1} parent=1 // pred_check_branch
      %18 = sbr.rel (0) target = $region5
    $region4: #{tpu_custom_call.1} parent=1 // pred_region
      %s20 = ssub.s32 512, 512
      %21 = vsyncadd [#allocation3], %s20
      %s23 = sshll.u32 [#allocation2], 4
      %s24 = int_to_ptr.vmem [resolvable:$true] %s23
      %26 = dma.hbm_to_vmem [thread:$0]  %s0, 512, %s24, [#allocation3]
    $region5: #{tpu_custom_call.1} parent=1 // pred_fallthru
      _
    // Predicated region
    $region6: #{tpu_custom_call.1} parent=1 // pred_check
      _
    $region7: #{tpu_custom_call.1} parent=1 // pred_check_branch
      %28 = sbr.rel (0) target = $region9
    $region8: #{tpu_custom_call.1} parent=1 // pred_region
      %s30 = ssub.s32 49152, 49152
      %31 = vsyncadd [#allocation6], %s30
      %s32 = sshll.u32 [#allocation5], 4
      %s33 = int_to_ptr.vmem [resolvable:$true] %s32
      %38 = dma.hbm_to_vmem [thread:$0]  %s1, 49152, %s33, [#allocation6], 384, 384, 24
    $region9: #{tpu_custom_call.1} parent=1 // pred_fallthru
      _
    // Predicated region
    $region10: #{tpu_custom_call.1} parent=1 // pred_check
      _
    $region11: #{tpu_custom_call.1} parent=1 // pred_check_branch
      %40 = sbr.rel (0) target = $region13
    $region12: #{tpu_custom_call.1} parent=1 // pred_region
      %s42 = ssub.s32 96, 96
      %43 = vsyncadd [#allocation6], %s42
      %s45 = sshll.u32 [#allocation7], 4
      %s46 = int_to_ptr.vmem [resolvable:$true] %s45
      %48 = dma.hbm_to_vmem [thread:$0]  %s2, 96, %s46, [#allocation6]
    $region13: #{tpu_custom_call.1} parent=1 // pred_fallthru
      _
    // Predicated region
    $region14: #{tpu_custom_call.1} parent=1 // pred_check
      _
    $region15: #{tpu_custom_call.1} parent=1 // pred_check_branch
      %50 = sbr.rel (0) target = $region17
    $region16: #{tpu_custom_call.1} parent=1 // pred_region
      %s52 = ssub.s32 24576, 24576
      %53 = vsyncadd [#allocation9], %s52
      %s54 = sshll.u32 [#allocation8], 4
      %s55 = int_to_ptr.vmem [resolvable:$true] %s54
      %60 = dma.hbm_to_vmem [thread:$0]  %s3, 24576, %s55, [#allocation9], 256, 256, 16
    $region17: #{tpu_custom_call.1} parent=1 // pred_fallthru
      _
    // Predicated region
    $region18: #{tpu_custom_call.1} parent=1 // pred_check
      _
    $region19: #{tpu_custom_call.1} parent=1 // pred_check_branch
      %62 = sbr.rel (0) target = $region21
    $region20: #{tpu_custom_call.1} parent=1 // pred_region
      %s64 = ssub.s32 64, 64
      %65 = vsyncadd [#allocation9], %s64
      %s67 = sshll.u32 [#allocation10], 4
      %s68 = int_to_ptr.vmem [resolvable:$true] %s67
      %70 = dma.hbm_to_vmem [thread:$0]  %s4, 64, %s68, [#allocation9]
    $region21: #{tpu_custom_call.1} parent=1 // pred_fallthru
      _
    // Predicated region
    $region22: #{tpu_custom_call.1} parent=1 // pred_check
      _
    $region23: #{tpu_custom_call.1} parent=1 // pred_check_branch
      %72 = sbr.rel (0) target = $region25
    $region24: #{tpu_custom_call.1} parent=1 // pred_region
      %s74 = ssub.s32 4096, 4096
      %75 = vsyncadd [#allocation12], %s74
      %s76 = sshll.u32 [#allocation11], 4
      %s77 = int_to_ptr.vmem [resolvable:$true] %s76
      %82 = dma.hbm_to_vmem [thread:$0]  %s5, 4096, %s77, [#allocation12], 64, 64, 4
    $region25: #{tpu_custom_call.1} parent=1 // pred_fallthru
      _
    // Predicated region
    $region26: #{tpu_custom_call.1} parent=1 // pred_check
      _
    $region27: #{tpu_custom_call.1} parent=1 // pred_check_branch
      %84 = sbr.rel (0) target = $region29
    $region28: #{tpu_custom_call.1} parent=1 // pred_region
      %s86 = ssub.s32 16, 16
      %87 = vsyncadd [#allocation12], %s86
      %s89 = sshll.u32 [#allocation13], 4
      %s90 = int_to_ptr.vmem [resolvable:$true] %s89
      %92 = dma.hbm_to_vmem [thread:$0]  %s6, 16, %s90, [#allocation12]
    $region29: #{tpu_custom_call.1} parent=1 // pred_fallthru
      _
    // Predicated region
    $region30: #{tpu_custom_call.1} parent=1 // pred_check
      _
    $region31: #{tpu_custom_call.1} parent=1 // pred_check_branch
      %94 = sbr.rel (0) target = $region33
    $region32: #{tpu_custom_call.1} parent=1 // pred_region
      %95 = dma.done [#allocation3], 512
    $region33: #{tpu_custom_call.1} parent=1 // pred_fallthru
      _
    // Predicated region
    $region34: #{tpu_custom_call.1} parent=1 // pred_check
      _
    $region35: #{tpu_custom_call.1} parent=1 // pred_check_branch
      %97 = sbr.rel (0) target = $region37
    $region36: #{tpu_custom_call.1} parent=1 // pred_region
      %98 = dma.done [#allocation6], 49152
    $region37: #{tpu_custom_call.1} parent=1 // pred_fallthru
      _
    // Predicated region
    $region38: #{tpu_custom_call.1} parent=1 // pred_check
      _
    $region39: #{tpu_custom_call.1} parent=1 // pred_check_branch
      %100 = sbr.rel (0) target = $region41
    $region40: #{tpu_custom_call.1} parent=1 // pred_region
      %101 = dma.done [#allocation6], 96
    $region41: #{tpu_custom_call.1} parent=1 // pred_fallthru
      _
    // Predicated region
    $region42: #{tpu_custom_call.1} parent=1 // pred_check
      _
    $region43: #{tpu_custom_call.1} parent=1 // pred_check_branch
      %103 = sbr.rel (0) target = $region45
    $region44: #{tpu_custom_call.1} parent=1 // pred_region
      %104 = dma.done [#allocation9], 24576
    $region45: #{tpu_custom_call.1} parent=1 // pred_fallthru
      _
    // Predicated region
    $region46: #{tpu_custom_call.1} parent=1 // pred_check
      _
    $region47: #{tpu_custom_call.1} parent=1 // pred_check_branch
      %106 = sbr.rel (0) target = $region49
    $region48: #{tpu_custom_call.1} parent=1 // pred_region
      %107 = dma.done [#allocation9], 64
    $region49: #{tpu_custom_call.1} parent=1 // pred_fallthru
      _
    // Predicated region
    $region50: #{tpu_custom_call.1} parent=1 // pred_check
      _
    $region51: #{tpu_custom_call.1} parent=1 // pred_check_branch
      %109 = sbr.rel (0) target = $region53
    $region52: #{tpu_custom_call.1} parent=1 // pred_region
      %110 = dma.done [#allocation12], 4096
    $region53: #{tpu_custom_call.1} parent=1 // pred_fallthru
      _
    // Predicated region
    $region54: #{tpu_custom_call.1} parent=1 // pred_check
      _
    $region55: #{tpu_custom_call.1} parent=1 // pred_check_branch
      %112 = sbr.rel (0) target = $region57
    $region56: #{tpu_custom_call.1} parent=1 // pred_region
      %113 = dma.done [#allocation12], 16
    $region57: #{tpu_custom_call.1} parent=1 // pred_fallthru
      _
    %v115 = vld [vmem:[#allocation2] sm:$0xff]
    %v116 = vld [vmem:[#allocation2 + $0x8] sm:$0xff]
    %v117 = vld [vmem:[#allocation2 + $0x10] sm:$0xff]
    %v118 = vld [vmem:[#allocation2 + $0x18] sm:$0xff]
    %v119 = vld [vmem:[#allocation5] sm:$0xff]
    %v120 = vld [vmem:[#allocation5 + $0x8] sm:$0xff]
    %v121 = vld [vmem:[#allocation5 + $0x10] sm:$0xff]
    %v122 = vld [vmem:[#allocation5 + $0x18] sm:$0xff]
    %v123 = vld [vmem:[#allocation5 + $0x20] sm:$0xff]
    %v124 = vld [vmem:[#allocation5 + $0x28] sm:$0xff]
    %v125 = vld [vmem:[#allocation5 + $0x30] sm:$0xff]
    %v126 = vld [vmem:[#allocation5 + $0x38] sm:$0xff]
    %v127 = vld [vmem:[#allocation5 + $0x40] sm:$0xff]
    %v128 = vld [vmem:[#allocation5 + $0x48] sm:$0xff]
    %v129 = vld [vmem:[#allocation5 + $0x50] sm:$0xff]
    %v130 = vld [vmem:[#allocation5 + $0x58] sm:$0xff]
    %v131 = vld [vmem:[#allocation5 + $0x60] sm:$0xff]
    %v132 = vld [vmem:[#allocation5 + $0x68] sm:$0xff]
    %v133 = vld [vmem:[#allocation5 + $0x70] sm:$0xff]
    %v134 = vld [vmem:[#allocation5 + $0x78] sm:$0xff]
    %v135 = vld [vmem:[#allocation5 + $0x80] sm:$0xff]
    %v136 = vld [vmem:[#allocation5 + $0x88] sm:$0xff]
    %v137 = vld [vmem:[#allocation5 + $0x90] sm:$0xff]
    %v138 = vld [vmem:[#allocation5 + $0x98] sm:$0xff]
    %v139 = vld [vmem:[#allocation5 + $0xa0] sm:$0xff]
    %v140 = vld [vmem:[#allocation5 + $0xa8] sm:$0xff]
    %v141 = vld [vmem:[#allocation5 + $0xb0] sm:$0xff]
    %v142 = vld [vmem:[#allocation5 + $0xb8] sm:$0xff]
    %v143 = vld [vmem:[#allocation5 + $0xc0] sm:$0xff]
    %v144 = vld [vmem:[#allocation5 + $0xc8] sm:$0xff]
    %v145 = vld [vmem:[#allocation5 + $0xd0] sm:$0xff]
    %v146 = vld [vmem:[#allocation5 + $0xd8] sm:$0xff]
    %v147 = vld [vmem:[#allocation5 + $0xe0] sm:$0xff]
    %v148 = vld [vmem:[#allocation5 + $0xe8] sm:$0xff]
    %v149 = vld [vmem:[#allocation5 + $0xf0] sm:$0xff]
    %v150 = vld [vmem:[#allocation5 + $0xf8] sm:$0xff]
    %v151 = vld [vmem:[#allocation5 + $0x100] sm:$0xff]
    %v152 = vld [vmem:[#allocation5 + $0x108] sm:$0xff]
    %v153 = vld [vmem:[#allocation5 + $0x110] sm:$0xff]
    %v154 = vld [vmem:[#allocation5 + $0x118] sm:$0xff]
    %v155 = vld [vmem:[#allocation5 + $0x120] sm:$0xff]
    %v156 = vld [vmem:[#allocation5 + $0x128] sm:$0xff]
    %v157 = vld [vmem:[#allocation5 + $0x130] sm:$0xff]
    %v158 = vld [vmem:[#allocation5 + $0x138] sm:$0xff]
    %v159 = vld [vmem:[#allocation5 + $0x140] sm:$0xff]
    %v160 = vld [vmem:[#allocation5 + $0x148] sm:$0xff]
    %v161 = vld [vmem:[#allocation5 + $0x150] sm:$0xff]
    %v162 = vld [vmem:[#allocation5 + $0x158] sm:$0xff]
    %v163 = vld [vmem:[#allocation5 + $0x160] sm:$0xff]
    %v164 = vld [vmem:[#allocation5 + $0x168] sm:$0xff]
    %v165 = vld [vmem:[#allocation5 + $0x170] sm:$0xff]
    %v166 = vld [vmem:[#allocation5 + $0x178] sm:$0xff]
    %v167 = vld [vmem:[#allocation5 + $0x180] sm:$0xff]
    %v168 = vld [vmem:[#allocation5 + $0x188] sm:$0xff]
    %v169 = vld [vmem:[#allocation5 + $0x190] sm:$0xff]
    %v170 = vld [vmem:[#allocation5 + $0x198] sm:$0xff]
    %v171 = vld [vmem:[#allocation5 + $0x1a0] sm:$0xff]
    %v172 = vld [vmem:[#allocation5 + $0x1a8] sm:$0xff]
    %v173 = vld [vmem:[#allocation5 + $0x1b0] sm:$0xff]
    %v174 = vld [vmem:[#allocation5 + $0x1b8] sm:$0xff]
    %v175 = vld [vmem:[#allocation5 + $0x1c0] sm:$0xff]
    %v176 = vld [vmem:[#allocation5 + $0x1c8] sm:$0xff]
    %v177 = vld [vmem:[#allocation5 + $0x1d0] sm:$0xff]
    %v178 = vld [vmem:[#allocation5 + $0x1d8] sm:$0xff]
    %v179 = vld [vmem:[#allocation5 + $0x1e0] sm:$0xff]
    %v180 = vld [vmem:[#allocation5 + $0x1e8] sm:$0xff]
    %v181 = vld [vmem:[#allocation5 + $0x1f0] sm:$0xff]
    %v182 = vld [vmem:[#allocation5 + $0x1f8] sm:$0xff]
    %v183 = vld [vmem:[#allocation5 + $0x200] sm:$0xff]
    %v184 = vld [vmem:[#allocation5 + $0x208] sm:$0xff]
    %v185 = vld [vmem:[#allocation5 + $0x210] sm:$0xff]
    %v186 = vld [vmem:[#allocation5 + $0x218] sm:$0xff]
    %v187 = vld [vmem:[#allocation5 + $0x220] sm:$0xff]
    %v188 = vld [vmem:[#allocation5 + $0x228] sm:$0xff]
    %v189 = vld [vmem:[#allocation5 + $0x230] sm:$0xff]
    %v190 = vld [vmem:[#allocation5 + $0x238] sm:$0xff]
    %v191 = vld [vmem:[#allocation5 + $0x240] sm:$0xff]
    %v192 = vld [vmem:[#allocation5 + $0x248] sm:$0xff]
    %v193 = vld [vmem:[#allocation5 + $0x250] sm:$0xff]
    %v194 = vld [vmem:[#allocation5 + $0x258] sm:$0xff]
    %v195 = vld [vmem:[#allocation5 + $0x260] sm:$0xff]
    %v196 = vld [vmem:[#allocation5 + $0x268] sm:$0xff]
    %v197 = vld [vmem:[#allocation5 + $0x270] sm:$0xff]
    %v198 = vld [vmem:[#allocation5 + $0x278] sm:$0xff]
    %v199 = vld [vmem:[#allocation5 + $0x280] sm:$0xff]
    %v200 = vld [vmem:[#allocation5 + $0x288] sm:$0xff]
    %v201 = vld [vmem:[#allocation5 + $0x290] sm:$0xff]
    %v202 = vld [vmem:[#allocation5 + $0x298] sm:$0xff]
    %v203 = vld [vmem:[#allocation5 + $0x2a0] sm:$0xff]
    %v204 = vld [vmem:[#allocation5 + $0x2a8] sm:$0xff]
    %v205 = vld [vmem:[#allocation5 + $0x2b0] sm:$0xff]
    %v206 = vld [vmem:[#allocation5 + $0x2b8] sm:$0xff]
    %v207 = vld [vmem:[#allocation5 + $0x2c0] sm:$0xff]
    %v208 = vld [vmem:[#allocation5 + $0x2c8] sm:$0xff]
    %v209 = vld [vmem:[#allocation5 + $0x2d0] sm:$0xff]
    %v210 = vld [vmem:[#allocation5 + $0x2d8] sm:$0xff]
    %v211 = vld [vmem:[#allocation5 + $0x2e0] sm:$0xff]
    %v212 = vld [vmem:[#allocation5 + $0x2e8] sm:$0xff]
    %v213 = vld [vmem:[#allocation5 + $0x2f0] sm:$0xff]
    %v214 = vld [vmem:[#allocation5 + $0x2f8] sm:$0xff]
    %v215 = vld [vmem:[#allocation5 + $0x300] sm:$0xff]
    %v216 = vld [vmem:[#allocation5 + $0x308] sm:$0xff]
    %v217 = vld [vmem:[#allocation5 + $0x310] sm:$0xff]
    %v218 = vld [vmem:[#allocation5 + $0x318] sm:$0xff]
    %v219 = vld [vmem:[#allocation5 + $0x320] sm:$0xff]
    %v220 = vld [vmem:[#allocation5 + $0x328] sm:$0xff]
    %v221 = vld [vmem:[#allocation5 + $0x330] sm:$0xff]
    %v222 = vld [vmem:[#allocation5 + $0x338] sm:$0xff]
    %v223 = vld [vmem:[#allocation5 + $0x340] sm:$0xff]
    %v224 = vld [vmem:[#allocation5 + $0x348] sm:$0xff]
    %v225 = vld [vmem:[#allocation5 + $0x350] sm:$0xff]
    %v226 = vld [vmem:[#allocation5 + $0x358] sm:$0xff]
    %v227 = vld [vmem:[#allocation5 + $0x360] sm:$0xff]
    %v228 = vld [vmem:[#allocation5 + $0x368] sm:$0xff]
    %v229 = vld [vmem:[#allocation5 + $0x370] sm:$0xff]
    %v230 = vld [vmem:[#allocation5 + $0x378] sm:$0xff]
    %v231 = vld [vmem:[#allocation5 + $0x380] sm:$0xff]
    %v232 = vld [vmem:[#allocation5 + $0x388] sm:$0xff]
    %v233 = vld [vmem:[#allocation5 + $0x390] sm:$0xff]
    %v234 = vld [vmem:[#allocation5 + $0x398] sm:$0xff]
    %v235 = vld [vmem:[#allocation5 + $0x3a0] sm:$0xff]
    %v236 = vld [vmem:[#allocation5 + $0x3a8] sm:$0xff]
    %v237 = vld [vmem:[#allocation5 + $0x3b0] sm:$0xff]
    %v238 = vld [vmem:[#allocation5 + $0x3b8] sm:$0xff]
    %v239 = vld [vmem:[#allocation5 + $0x3c0] sm:$0xff]
    %v240 = vld [vmem:[#allocation5 + $0x3c8] sm:$0xff]
    %v241 = vld [vmem:[#allocation5 + $0x3d0] sm:$0xff]
    %v242 = vld [vmem:[#allocation5 + $0x3d8] sm:$0xff]
    %v243 = vld [vmem:[#allocation5 + $0x3e0] sm:$0xff]
    %v244 = vld [vmem:[#allocation5 + $0x3e8] sm:$0xff]
    %v245 = vld [vmem:[#allocation5 + $0x3f0] sm:$0xff]
    %v246 = vld [vmem:[#allocation5 + $0x3f8] sm:$0xff]
    %v247 = vld [vmem:[#allocation5 + $0x400] sm:$0xff]
    %v248 = vld [vmem:[#allocation5 + $0x408] sm:$0xff]
    %v249 = vld [vmem:[#allocation5 + $0x410] sm:$0xff]
    %v250 = vld [vmem:[#allocation5 + $0x418] sm:$0xff]
    %v251 = vld [vmem:[#allocation5 + $0x420] sm:$0xff]
    %v252 = vld [vmem:[#allocation5 + $0x428] sm:$0xff]
    %v253 = vld [vmem:[#allocation5 + $0x430] sm:$0xff]
    %v254 = vld [vmem:[#allocation5 + $0x438] sm:$0xff]
    %v255 = vld [vmem:[#allocation5 + $0x440] sm:$0xff]
    %v256 = vld [vmem:[#allocation5 + $0x448] sm:$0xff]
    %v257 = vld [vmem:[#allocation5 + $0x450] sm:$0xff]
    %v258 = vld [vmem:[#allocation5 + $0x458] sm:$0xff]
    %v259 = vld [vmem:[#allocation5 + $0x460] sm:$0xff]
    %v260 = vld [vmem:[#allocation5 + $0x468] sm:$0xff]
    %v261 = vld [vmem:[#allocation5 + $0x470] sm:$0xff]
    %v262 = vld [vmem:[#allocation5 + $0x478] sm:$0xff]
    %v263 = vld [vmem:[#allocation5 + $0x480] sm:$0xff]
    %v264 = vld [vmem:[#allocation5 + $0x488] sm:$0xff]
    %v265 = vld [vmem:[#allocation5 + $0x490] sm:$0xff]
    %v266 = vld [vmem:[#allocation5 + $0x498] sm:$0xff]
    %v267 = vld [vmem:[#allocation5 + $0x4a0] sm:$0xff]
    %v268 = vld [vmem:[#allocation5 + $0x4a8] sm:$0xff]
    %v269 = vld [vmem:[#allocation5 + $0x4b0] sm:$0xff]
    %v270 = vld [vmem:[#allocation5 + $0x4b8] sm:$0xff]
    %v271 = vld [vmem:[#allocation5 + $0x4c0] sm:$0xff]
    %v272 = vld [vmem:[#allocation5 + $0x4c8] sm:$0xff]
    %v273 = vld [vmem:[#allocation5 + $0x4d0] sm:$0xff]
    %v274 = vld [vmem:[#allocation5 + $0x4d8] sm:$0xff]
    %v275 = vld [vmem:[#allocation5 + $0x4e0] sm:$0xff]
    %v276 = vld [vmem:[#allocation5 + $0x4e8] sm:$0xff]
    %v277 = vld [vmem:[#allocation5 + $0x4f0] sm:$0xff]
    %v278 = vld [vmem:[#allocation5 + $0x4f8] sm:$0xff]
    %v279 = vld [vmem:[#allocation5 + $0x500] sm:$0xff]
    %v280 = vld [vmem:[#allocation5 + $0x508] sm:$0xff]
    %v281 = vld [vmem:[#allocation5 + $0x510] sm:$0xff]
    %v282 = vld [vmem:[#allocation5 + $0x518] sm:$0xff]
    %v283 = vld [vmem:[#allocation5 + $0x520] sm:$0xff]
    %v284 = vld [vmem:[#allocation5 + $0x528] sm:$0xff]
    %v285 = vld [vmem:[#allocation5 + $0x530] sm:$0xff]
    %v286 = vld [vmem:[#allocation5 + $0x538] sm:$0xff]
    %v287 = vld [vmem:[#allocation5 + $0x540] sm:$0xff]
    %v288 = vld [vmem:[#allocation5 + $0x548] sm:$0xff]
    %v289 = vld [vmem:[#allocation5 + $0x550] sm:$0xff]
    %v290 = vld [vmem:[#allocation5 + $0x558] sm:$0xff]
    %v291 = vld [vmem:[#allocation5 + $0x560] sm:$0xff]
    %v292 = vld [vmem:[#allocation5 + $0x568] sm:$0xff]
    %v293 = vld [vmem:[#allocation5 + $0x570] sm:$0xff]
    %v294 = vld [vmem:[#allocation5 + $0x578] sm:$0xff]
    %v295 = vld [vmem:[#allocation5 + $0x580] sm:$0xff]
    %v296 = vld [vmem:[#allocation5 + $0x588] sm:$0xff]
    %v297 = vld [vmem:[#allocation5 + $0x590] sm:$0xff]
    %v298 = vld [vmem:[#allocation5 + $0x598] sm:$0xff]
    %v299 = vld [vmem:[#allocation5 + $0x5a0] sm:$0xff]
    %v300 = vld [vmem:[#allocation5 + $0x5a8] sm:$0xff]
    %v301 = vld [vmem:[#allocation5 + $0x5b0] sm:$0xff]
    %v302 = vld [vmem:[#allocation5 + $0x5b8] sm:$0xff]
    %v303 = vld [vmem:[#allocation5 + $0x5c0] sm:$0xff]
    %v304 = vld [vmem:[#allocation5 + $0x5c8] sm:$0xff]
    %v305 = vld [vmem:[#allocation5 + $0x5d0] sm:$0xff]
    %v306 = vld [vmem:[#allocation5 + $0x5d8] sm:$0xff]
    %v307 = vld [vmem:[#allocation5 + $0x5e0] sm:$0xff]
    %v308 = vld [vmem:[#allocation5 + $0x5e8] sm:$0xff]
    %v309 = vld [vmem:[#allocation5 + $0x5f0] sm:$0xff]
    %v310 = vld [vmem:[#allocation5 + $0x5f8] sm:$0xff]
    %v311 = vld [vmem:[#allocation5 + $0x600] sm:$0xff]
    %v312 = vld [vmem:[#allocation5 + $0x608] sm:$0xff]
    %v313 = vld [vmem:[#allocation5 + $0x610] sm:$0xff]
    %v314 = vld [vmem:[#allocation5 + $0x618] sm:$0xff]
    %v315 = vld [vmem:[#allocation5 + $0x620] sm:$0xff]
    %v316 = vld [vmem:[#allocation5 + $0x628] sm:$0xff]
    %v317 = vld [vmem:[#allocation5 + $0x630] sm:$0xff]
    %v318 = vld [vmem:[#allocation5 + $0x638] sm:$0xff]
    %v319 = vld [vmem:[#allocation5 + $0x640] sm:$0xff]
    %v320 = vld [vmem:[#allocation5 + $0x648] sm:$0xff]
    %v321 = vld [vmem:[#allocation5 + $0x650] sm:$0xff]
    %v322 = vld [vmem:[#allocation5 + $0x658] sm:$0xff]
    %v323 = vld [vmem:[#allocation5 + $0x660] sm:$0xff]
    %v324 = vld [vmem:[#allocation5 + $0x668] sm:$0xff]
    %v325 = vld [vmem:[#allocation5 + $0x670] sm:$0xff]
    %v326 = vld [vmem:[#allocation5 + $0x678] sm:$0xff]
    %v327 = vld [vmem:[#allocation5 + $0x680] sm:$0xff]
    %v328 = vld [vmem:[#allocation5 + $0x688] sm:$0xff]
    %v329 = vld [vmem:[#allocation5 + $0x690] sm:$0xff]
    %v330 = vld [vmem:[#allocation5 + $0x698] sm:$0xff]
    %v331 = vld [vmem:[#allocation5 + $0x6a0] sm:$0xff]
    %v332 = vld [vmem:[#allocation5 + $0x6a8] sm:$0xff]
    %v333 = vld [vmem:[#allocation5 + $0x6b0] sm:$0xff]
    %v334 = vld [vmem:[#allocation5 + $0x6b8] sm:$0xff]
    %v335 = vld [vmem:[#allocation5 + $0x6c0] sm:$0xff]
    %v336 = vld [vmem:[#allocation5 + $0x6c8] sm:$0xff]
    %v337 = vld [vmem:[#allocation5 + $0x6d0] sm:$0xff]
    %v338 = vld [vmem:[#allocation5 + $0x6d8] sm:$0xff]
    %v339 = vld [vmem:[#allocation5 + $0x6e0] sm:$0xff]
    %v340 = vld [vmem:[#allocation5 + $0x6e8] sm:$0xff]
    %v341 = vld [vmem:[#allocation5 + $0x6f0] sm:$0xff]
    %v342 = vld [vmem:[#allocation5 + $0x6f8] sm:$0xff]
    %v343 = vld [vmem:[#allocation5 + $0x700] sm:$0xff]
    %v344 = vld [vmem:[#allocation5 + $0x708] sm:$0xff]
    %v345 = vld [vmem:[#allocation5 + $0x710] sm:$0xff]
    %v346 = vld [vmem:[#allocation5 + $0x718] sm:$0xff]
    %v347 = vld [vmem:[#allocation5 + $0x720] sm:$0xff]
    %v348 = vld [vmem:[#allocation5 + $0x728] sm:$0xff]
    %v349 = vld [vmem:[#allocation5 + $0x730] sm:$0xff]
    %v350 = vld [vmem:[#allocation5 + $0x738] sm:$0xff]
    %v351 = vld [vmem:[#allocation5 + $0x740] sm:$0xff]
    %v352 = vld [vmem:[#allocation5 + $0x748] sm:$0xff]
    %v353 = vld [vmem:[#allocation5 + $0x750] sm:$0xff]
    %v354 = vld [vmem:[#allocation5 + $0x758] sm:$0xff]
    %v355 = vld [vmem:[#allocation5 + $0x760] sm:$0xff]
    %v356 = vld [vmem:[#allocation5 + $0x768] sm:$0xff]
    %v357 = vld [vmem:[#allocation5 + $0x770] sm:$0xff]
    %v358 = vld [vmem:[#allocation5 + $0x778] sm:$0xff]
    %v359 = vld [vmem:[#allocation5 + $0x780] sm:$0xff]
    %v360 = vld [vmem:[#allocation5 + $0x788] sm:$0xff]
    %v361 = vld [vmem:[#allocation5 + $0x790] sm:$0xff]
    %v362 = vld [vmem:[#allocation5 + $0x798] sm:$0xff]
    %v363 = vld [vmem:[#allocation5 + $0x7a0] sm:$0xff]
    %v364 = vld [vmem:[#allocation5 + $0x7a8] sm:$0xff]
    %v365 = vld [vmem:[#allocation5 + $0x7b0] sm:$0xff]
    %v366 = vld [vmem:[#allocation5 + $0x7b8] sm:$0xff]
    %v367 = vld [vmem:[#allocation5 + $0x7c0] sm:$0xff]
    %v368 = vld [vmem:[#allocation5 + $0x7c8] sm:$0xff]
    %v369 = vld [vmem:[#allocation5 + $0x7d0] sm:$0xff]
    %v370 = vld [vmem:[#allocation5 + $0x7d8] sm:$0xff]
    %v371 = vld [vmem:[#allocation5 + $0x7e0] sm:$0xff]
    %v372 = vld [vmem:[#allocation5 + $0x7e8] sm:$0xff]
    %v373 = vld [vmem:[#allocation5 + $0x7f0] sm:$0xff]
    %v374 = vld [vmem:[#allocation5 + $0x7f8] sm:$0xff]
    %v375 = vld [vmem:[#allocation5 + $0x800] sm:$0xff]
    %v376 = vld [vmem:[#allocation5 + $0x808] sm:$0xff]
    %v377 = vld [vmem:[#allocation5 + $0x810] sm:$0xff]
    %v378 = vld [vmem:[#allocation5 + $0x818] sm:$0xff]
    %v379 = vld [vmem:[#allocation5 + $0x820] sm:$0xff]
    %v380 = vld [vmem:[#allocation5 + $0x828] sm:$0xff]
    %v381 = vld [vmem:[#allocation5 + $0x830] sm:$0xff]
    %v382 = vld [vmem:[#allocation5 + $0x838] sm:$0xff]
    %v383 = vld [vmem:[#allocation5 + $0x840] sm:$0xff]
    %v384 = vld [vmem:[#allocation5 + $0x848] sm:$0xff]
    %v385 = vld [vmem:[#allocation5 + $0x850] sm:$0xff]
    %v386 = vld [vmem:[#allocation5 + $0x858] sm:$0xff]
    %v387 = vld [vmem:[#allocation5 + $0x860] sm:$0xff]
    %v388 = vld [vmem:[#allocation5 + $0x868] sm:$0xff]
    %v389 = vld [vmem:[#allocation5 + $0x870] sm:$0xff]
    %v390 = vld [vmem:[#allocation5 + $0x878] sm:$0xff]
    %v391 = vld [vmem:[#allocation5 + $0x880] sm:$0xff]
    %v392 = vld [vmem:[#allocation5 + $0x888] sm:$0xff]
    %v393 = vld [vmem:[#allocation5 + $0x890] sm:$0xff]
    %v394 = vld [vmem:[#allocation5 + $0x898] sm:$0xff]
    %v395 = vld [vmem:[#allocation5 + $0x8a0] sm:$0xff]
    %v396 = vld [vmem:[#allocation5 + $0x8a8] sm:$0xff]
    %v397 = vld [vmem:[#allocation5 + $0x8b0] sm:$0xff]
    %v398 = vld [vmem:[#allocation5 + $0x8b8] sm:$0xff]
    %v399 = vld [vmem:[#allocation5 + $0x8c0] sm:$0xff]
    %v400 = vld [vmem:[#allocation5 + $0x8c8] sm:$0xff]
    %v401 = vld [vmem:[#allocation5 + $0x8d0] sm:$0xff]
    %v402 = vld [vmem:[#allocation5 + $0x8d8] sm:$0xff]
    %v403 = vld [vmem:[#allocation5 + $0x8e0] sm:$0xff]
    %v404 = vld [vmem:[#allocation5 + $0x8e8] sm:$0xff]
    %v405 = vld [vmem:[#allocation5 + $0x8f0] sm:$0xff]
    %v406 = vld [vmem:[#allocation5 + $0x8f8] sm:$0xff]
    %v407 = vld [vmem:[#allocation5 + $0x900] sm:$0xff]
    %v408 = vld [vmem:[#allocation5 + $0x908] sm:$0xff]
    %v409 = vld [vmem:[#allocation5 + $0x910] sm:$0xff]
    %v410 = vld [vmem:[#allocation5 + $0x918] sm:$0xff]
    %v411 = vld [vmem:[#allocation5 + $0x920] sm:$0xff]
    %v412 = vld [vmem:[#allocation5 + $0x928] sm:$0xff]
    %v413 = vld [vmem:[#allocation5 + $0x930] sm:$0xff]
    %v414 = vld [vmem:[#allocation5 + $0x938] sm:$0xff]
    %v415 = vld [vmem:[#allocation5 + $0x940] sm:$0xff]
    %v416 = vld [vmem:[#allocation5 + $0x948] sm:$0xff]
    %v417 = vld [vmem:[#allocation5 + $0x950] sm:$0xff]
    %v418 = vld [vmem:[#allocation5 + $0x958] sm:$0xff]
    %v419 = vld [vmem:[#allocation5 + $0x960] sm:$0xff]
    %v420 = vld [vmem:[#allocation5 + $0x968] sm:$0xff]
    %v421 = vld [vmem:[#allocation5 + $0x970] sm:$0xff]
    %v422 = vld [vmem:[#allocation5 + $0x978] sm:$0xff]
    %v423 = vld [vmem:[#allocation5 + $0x980] sm:$0xff]
    %v424 = vld [vmem:[#allocation5 + $0x988] sm:$0xff]
    %v425 = vld [vmem:[#allocation5 + $0x990] sm:$0xff]
    %v426 = vld [vmem:[#allocation5 + $0x998] sm:$0xff]
    %v427 = vld [vmem:[#allocation5 + $0x9a0] sm:$0xff]
    %v428 = vld [vmem:[#allocation5 + $0x9a8] sm:$0xff]
    %v429 = vld [vmem:[#allocation5 + $0x9b0] sm:$0xff]
    %v430 = vld [vmem:[#allocation5 + $0x9b8] sm:$0xff]
    %v431 = vld [vmem:[#allocation5 + $0x9c0] sm:$0xff]
    %v432 = vld [vmem:[#allocation5 + $0x9c8] sm:$0xff]
    %v433 = vld [vmem:[#allocation5 + $0x9d0] sm:$0xff]
    %v434 = vld [vmem:[#allocation5 + $0x9d8] sm:$0xff]
    %v435 = vld [vmem:[#allocation5 + $0x9e0] sm:$0xff]
    %v436 = vld [vmem:[#allocation5 + $0x9e8] sm:$0xff]
    %v437 = vld [vmem:[#allocation5 + $0x9f0] sm:$0xff]
    %v438 = vld [vmem:[#allocation5 + $0x9f8] sm:$0xff]
    %v439 = vld [vmem:[#allocation5 + $0xa00] sm:$0xff]
    %v440 = vld [vmem:[#allocation5 + $0xa08] sm:$0xff]
    %v441 = vld [vmem:[#allocation5 + $0xa10] sm:$0xff]
    %v442 = vld [vmem:[#allocation5 + $0xa18] sm:$0xff]
    %v443 = vld [vmem:[#allocation5 + $0xa20] sm:$0xff]
    %v444 = vld [vmem:[#allocation5 + $0xa28] sm:$0xff]
    %v445 = vld [vmem:[#allocation5 + $0xa30] sm:$0xff]
    %v446 = vld [vmem:[#allocation5 + $0xa38] sm:$0xff]
    %v447 = vld [vmem:[#allocation5 + $0xa40] sm:$0xff]
    %v448 = vld [vmem:[#allocation5 + $0xa48] sm:$0xff]
    %v449 = vld [vmem:[#allocation5 + $0xa50] sm:$0xff]
    %v450 = vld [vmem:[#allocation5 + $0xa58] sm:$0xff]
    %v451 = vld [vmem:[#allocation5 + $0xa60] sm:$0xff]
    %v452 = vld [vmem:[#allocation5 + $0xa68] sm:$0xff]
    %v453 = vld [vmem:[#allocation5 + $0xa70] sm:$0xff]
    %v454 = vld [vmem:[#allocation5 + $0xa78] sm:$0xff]
    %v455 = vld [vmem:[#allocation5 + $0xa80] sm:$0xff]
    %v456 = vld [vmem:[#allocation5 + $0xa88] sm:$0xff]
    %v457 = vld [vmem:[#allocation5 + $0xa90] sm:$0xff]
    %v458 = vld [vmem:[#allocation5 + $0xa98] sm:$0xff]
    %v459 = vld [vmem:[#allocation5 + $0xaa0] sm:$0xff]
    %v460 = vld [vmem:[#allocation5 + $0xaa8] sm:$0xff]
    %v461 = vld [vmem:[#allocation5 + $0xab0] sm:$0xff]
    %v462 = vld [vmem:[#allocation5 + $0xab8] sm:$0xff]
    %v463 = vld [vmem:[#allocation5 + $0xac0] sm:$0xff]
    %v464 = vld [vmem:[#allocation5 + $0xac8] sm:$0xff]
    %v465 = vld [vmem:[#allocation5 + $0xad0] sm:$0xff]
    %v466 = vld [vmem:[#allocation5 + $0xad8] sm:$0xff]
    %v467 = vld [vmem:[#allocation5 + $0xae0] sm:$0xff]
    %v468 = vld [vmem:[#allocation5 + $0xae8] sm:$0xff]
    %v469 = vld [vmem:[#allocation5 + $0xaf0] sm:$0xff]
    %v470 = vld [vmem:[#allocation5 + $0xaf8] sm:$0xff]
    %v471 = vld [vmem:[#allocation5 + $0xb00] sm:$0xff]
    %v472 = vld [vmem:[#allocation5 + $0xb08] sm:$0xff]
    %v473 = vld [vmem:[#allocation5 + $0xb10] sm:$0xff]
    %v474 = vld [vmem:[#allocation5 + $0xb18] sm:$0xff]
    %v475 = vld [vmem:[#allocation5 + $0xb20] sm:$0xff]
    %v476 = vld [vmem:[#allocation5 + $0xb28] sm:$0xff]
    %v477 = vld [vmem:[#allocation5 + $0xb30] sm:$0xff]
    %v478 = vld [vmem:[#allocation5 + $0xb38] sm:$0xff]
    %v479 = vld [vmem:[#allocation5 + $0xb40] sm:$0xff]
    %v480 = vld [vmem:[#allocation5 + $0xb48] sm:$0xff]
    %v481 = vld [vmem:[#allocation5 + $0xb50] sm:$0xff]
    %v482 = vld [vmem:[#allocation5 + $0xb58] sm:$0xff]
    %v483 = vld [vmem:[#allocation5 + $0xb60] sm:$0xff]
    %v484 = vld [vmem:[#allocation5 + $0xb68] sm:$0xff]
    %v485 = vld [vmem:[#allocation5 + $0xb70] sm:$0xff]
    %v486 = vld [vmem:[#allocation5 + $0xb78] sm:$0xff]
    %v487 = vld [vmem:[#allocation5 + $0xb80] sm:$0xff]
    %v488 = vld [vmem:[#allocation5 + $0xb88] sm:$0xff]
    %v489 = vld [vmem:[#allocation5 + $0xb90] sm:$0xff]
    %v490 = vld [vmem:[#allocation5 + $0xb98] sm:$0xff]
    %v491 = vld [vmem:[#allocation5 + $0xba0] sm:$0xff]
    %v492 = vld [vmem:[#allocation5 + $0xba8] sm:$0xff]
    %v493 = vld [vmem:[#allocation5 + $0xbb0] sm:$0xff]
    %v494 = vld [vmem:[#allocation5 + $0xbb8] sm:$0xff]
    %v495 = vld [vmem:[#allocation5 + $0xbc0] sm:$0xff]
    %v496 = vld [vmem:[#allocation5 + $0xbc8] sm:$0xff]
    %v497 = vld [vmem:[#allocation5 + $0xbd0] sm:$0xff]
    %v498 = vld [vmem:[#allocation5 + $0xbd8] sm:$0xff]
    %v499 = vld [vmem:[#allocation5 + $0xbe0] sm:$0xff]
    %v500 = vld [vmem:[#allocation5 + $0xbe8] sm:$0xff]
    %v501 = vld [vmem:[#allocation5 + $0xbf0] sm:$0xff]
    %v502 = vld [vmem:[#allocation5 + $0xbf8] sm:$0xff]
    %v503 = vld [vmem:[#allocation7] sm:$0x3f]
    %v505 = vlaneseq
    %v506 = vshrl.u32 %v505, 7
    %v507 = vsub.s32 0, %v506
    %v508 = vrot.slane %v503, %v507
    %v509 = vlaneseq
    %v510 = vshrl.u32 %v509, 7
    %v511 = vsub.s32 1, %v510
    %v512 = vrot.slane %v503, %v511
    %v513 = vlaneseq
    %v514 = vshrl.u32 %v513, 7
    %v515 = vsub.s32 2, %v514
    %v516 = vrot.slane %v503, %v515
    %v517 = vlaneseq
    %v518 = vshrl.u32 %v517, 7
    %v519 = vsub.s32 3, %v518
    %v520 = vrot.slane %v503, %v519
    %v521 = vlaneseq
    %v522 = vshrl.u32 %v521, 7
    %v523 = vsub.s32 4, %v522
    %v524 = vrot.slane %v503, %v523
    %v525 = vlaneseq
    %v526 = vshrl.u32 %v525, 7
    %v527 = vsub.s32 5, %v526
    %v528 = vrot.slane %v503, %v527
    %v539 = vunpack.c.l.b16 %v115
    %v540 = vunpack.c.h.b16 %v115
    %v541 = vunpack.c.l.b16 %v116
    %v542 = vunpack.c.h.b16 %v116
    %v543 = vunpack.c.l.b16 %v117
    %v544 = vunpack.c.h.b16 %v117
    %v545 = vunpack.c.l.b16 %v118
    %v546 = vunpack.c.h.b16 %v118
    %v547 = vpack.c.b16 %v539, %v539
    %v548 = vpack.c.b16 %v540, %v540
    %v549 = vpack.c.b16 %v541, %v541
    %v550 = vpack.c.b16 %v542, %v542
    %v551 = vpack.c.b16 %v543, %v543
    %v552 = vpack.c.b16 %v544, %v544
    %v553 = vpack.c.b16 %v545, %v545
    %v554 = vpack.c.b16 %v546, %v546
    %v947 = vunpack.c.l.b16 %v119
    %v948 = vunpack.c.h.b16 %v119
    %v949 = vunpack.c.l.b16 %v120
    %v950 = vunpack.c.h.b16 %v120
    %v951 = vunpack.c.l.b16 %v121
    %v952 = vunpack.c.h.b16 %v121
    %v953 = vunpack.c.l.b16 %v122
    %v954 = vunpack.c.h.b16 %v122
    %v955 = vunpack.c.l.b16 %v123
    %v956 = vunpack.c.h.b16 %v123
    %v957 = vunpack.c.l.b16 %v124
    %v958 = vunpack.c.h.b16 %v124
    %v959 = vunpack.c.l.b16 %v125
    %v960 = vunpack.c.h.b16 %v125
    %v961 = vunpack.c.l.b16 %v126
    %v962 = vunpack.c.h.b16 %v126
    %v963 = vunpack.c.l.b16 %v127
    %v964 = vunpack.c.h.b16 %v127
    %v965 = vunpack.c.l.b16 %v128
    %v966 = vunpack.c.h.b16 %v128
    %v967 = vunpack.c.l.b16 %v129
    %v968 = vunpack.c.h.b16 %v129
    %v969 = vunpack.c.l.b16 %v130
    %v970 = vunpack.c.h.b16 %v130
    %v971 = vunpack.c.l.b16 %v131
    %v972 = vunpack.c.h.b16 %v131
    %v973 = vunpack.c.l.b16 %v132
    %v974 = vunpack.c.h.b16 %v132
    %v975 = vunpack.c.l.b16 %v133
    %v976 = vunpack.c.h.b16 %v133
    %v977 = vunpack.c.l.b16 %v134
    %v978 = vunpack.c.h.b16 %v134
    %v979 = vunpack.c.l.b16 %v135
    %v980 = vunpack.c.h.b16 %v135
    %v981 = vunpack.c.l.b16 %v136
    %v982 = vunpack.c.h.b16 %v136
    %v983 = vunpack.c.l.b16 %v137
    %v984 = vunpack.c.h.b16 %v137
    %v985 = vunpack.c.l.b16 %v138
    %v986 = vunpack.c.h.b16 %v138
    %v987 = vunpack.c.l.b16 %v139
    %v988 = vunpack.c.h.b16 %v139
    %v989 = vunpack.c.l.b16 %v140
    %v990 = vunpack.c.h.b16 %v140
    %v991 = vunpack.c.l.b16 %v141
    %v992 = vunpack.c.h.b16 %v141
    %v993 = vunpack.c.l.b16 %v142
    %v994 = vunpack.c.h.b16 %v142
    %v995 = vunpack.c.l.b16 %v143
    %v996 = vunpack.c.h.b16 %v143
    %v997 = vunpack.c.l.b16 %v144
    %v998 = vunpack.c.h.b16 %v144
    %v999 = vunpack.c.l.b16 %v145
    %v1000 = vunpack.c.h.b16 %v145
    %v1001 = vunpack.c.l.b16 %v146
    %v1002 = vunpack.c.h.b16 %v146
    %v1003 = vunpack.c.l.b16 %v147
    %v1004 = vunpack.c.h.b16 %v147
    %v1005 = vunpack.c.l.b16 %v148
    %v1006 = vunpack.c.h.b16 %v148
    %v1007 = vunpack.c.l.b16 %v149
    %v1008 = vunpack.c.h.b16 %v149
    %v1009 = vunpack.c.l.b16 %v150
    %v1010 = vunpack.c.h.b16 %v150
    %v1011 = vunpack.c.l.b16 %v151
    %v1012 = vunpack.c.h.b16 %v151
    %v1013 = vunpack.c.l.b16 %v152
    %v1014 = vunpack.c.h.b16 %v152
    %v1015 = vunpack.c.l.b16 %v153
    %v1016 = vunpack.c.h.b16 %v153
    %v1017 = vunpack.c.l.b16 %v154
    %v1018 = vunpack.c.h.b16 %v154
    %v1019 = vunpack.c.l.b16 %v155
    %v1020 = vunpack.c.h.b16 %v155
    %v1021 = vunpack.c.l.b16 %v156
    %v1022 = vunpack.c.h.b16 %v156
    %v1023 = vunpack.c.l.b16 %v157
    %v1024 = vunpack.c.h.b16 %v157
    %v1025 = vunpack.c.l.b16 %v158
    %v1026 = vunpack.c.h.b16 %v158
    %v1027 = vunpack.c.l.b16 %v159
    %v1028 = vunpack.c.h.b16 %v159
    %v1029 = vunpack.c.l.b16 %v160
    %v1030 = vunpack.c.h.b16 %v160
    %v1031 = vunpack.c.l.b16 %v161
    %v1032 = vunpack.c.h.b16 %v161
    %v1033 = vunpack.c.l.b16 %v162
    %v1034 = vunpack.c.h.b16 %v162
    %v1035 = vunpack.c.l.b16 %v163
    %v1036 = vunpack.c.h.b16 %v163
    %v1037 = vunpack.c.l.b16 %v164
    %v1038 = vunpack.c.h.b16 %v164
    %v1039 = vunpack.c.l.b16 %v165
    %v1040 = vunpack.c.h.b16 %v165
    %v1041 = vunpack.c.l.b16 %v166
    %v1042 = vunpack.c.h.b16 %v166
    %v1043 = vunpack.c.l.b16 %v167
    %v1044 = vunpack.c.h.b16 %v167
    %v1045 = vunpack.c.l.b16 %v168
    %v1046 = vunpack.c.h.b16 %v168
    %v1047 = vunpack.c.l.b16 %v169
    %v1048 = vunpack.c.h.b16 %v169
    %v1049 = vunpack.c.l.b16 %v170
    %v1050 = vunpack.c.h.b16 %v170
    %v1051 = vunpack.c.l.b16 %v171
    %v1052 = vunpack.c.h.b16 %v171
    %v1053 = vunpack.c.l.b16 %v172
    %v1054 = vunpack.c.h.b16 %v172
    %v1055 = vunpack.c.l.b16 %v173
    %v1056 = vunpack.c.h.b16 %v173
    %v1057 = vunpack.c.l.b16 %v174
    %v1058 = vunpack.c.h.b16 %v174
    %v1059 = vunpack.c.l.b16 %v175
    %v1060 = vunpack.c.h.b16 %v175
    %v1061 = vunpack.c.l.b16 %v176
    %v1062 = vunpack.c.h.b16 %v176
    %v1063 = vunpack.c.l.b16 %v177
    %v1064 = vunpack.c.h.b16 %v177
    %v1065 = vunpack.c.l.b16 %v178
    %v1066 = vunpack.c.h.b16 %v178
    %v1067 = vunpack.c.l.b16 %v179
    %v1068 = vunpack.c.h.b16 %v179
    %v1069 = vunpack.c.l.b16 %v180
    %v1070 = vunpack.c.h.b16 %v180
    %v1071 = vunpack.c.l.b16 %v181
    %v1072 = vunpack.c.h.b16 %v181
    %v1073 = vunpack.c.l.b16 %v182
    %v1074 = vunpack.c.h.b16 %v182
    %v1075 = vunpack.c.l.b16 %v183
    %v1076 = vunpack.c.h.b16 %v183
    %v1077 = vunpack.c.l.b16 %v184
    %v1078 = vunpack.c.h.b16 %v184
    %v1079 = vunpack.c.l.b16 %v185
    %v1080 = vunpack.c.h.b16 %v185
    %v1081 = vunpack.c.l.b16 %v186
    %v1082 = vunpack.c.h.b16 %v186
    %v1083 = vunpack.c.l.b16 %v187
    %v1084 = vunpack.c.h.b16 %v187
    %v1085 = vunpack.c.l.b16 %v188
    %v1086 = vunpack.c.h.b16 %v188
    %v1087 = vunpack.c.l.b16 %v189
    %v1088 = vunpack.c.h.b16 %v189
    %v1089 = vunpack.c.l.b16 %v190
    %v1090 = vunpack.c.h.b16 %v190
    %v1091 = vunpack.c.l.b16 %v191
    %v1092 = vunpack.c.h.b16 %v191
    %v1093 = vunpack.c.l.b16 %v192
    %v1094 = vunpack.c.h.b16 %v192
    %v1095 = vunpack.c.l.b16 %v193
    %v1096 = vunpack.c.h.b16 %v193
    %v1097 = vunpack.c.l.b16 %v194
    %v1098 = vunpack.c.h.b16 %v194
    %v1099 = vunpack.c.l.b16 %v195
    %v1100 = vunpack.c.h.b16 %v195
    %v1101 = vunpack.c.l.b16 %v196
    %v1102 = vunpack.c.h.b16 %v196
    %v1103 = vunpack.c.l.b16 %v197
    %v1104 = vunpack.c.h.b16 %v197
    %v1105 = vunpack.c.l.b16 %v198
    %v1106 = vunpack.c.h.b16 %v198
    %v1107 = vunpack.c.l.b16 %v199
    %v1108 = vunpack.c.h.b16 %v199
    %v1109 = vunpack.c.l.b16 %v200
    %v1110 = vunpack.c.h.b16 %v200
    %v1111 = vunpack.c.l.b16 %v201
    %v1112 = vunpack.c.h.b16 %v201
    %v1113 = vunpack.c.l.b16 %v202
    %v1114 = vunpack.c.h.b16 %v202
    %v1115 = vunpack.c.l.b16 %v203
    %v1116 = vunpack.c.h.b16 %v203
    %v1117 = vunpack.c.l.b16 %v204
    %v1118 = vunpack.c.h.b16 %v204
    %v1119 = vunpack.c.l.b16 %v205
    %v1120 = vunpack.c.h.b16 %v205
    %v1121 = vunpack.c.l.b16 %v206
    %v1122 = vunpack.c.h.b16 %v206
    %v1123 = vunpack.c.l.b16 %v207
    %v1124 = vunpack.c.h.b16 %v207
    %v1125 = vunpack.c.l.b16 %v208
    %v1126 = vunpack.c.h.b16 %v208
    %v1127 = vunpack.c.l.b16 %v209
    %v1128 = vunpack.c.h.b16 %v209
    %v1129 = vunpack.c.l.b16 %v210
    %v1130 = vunpack.c.h.b16 %v210
    %v1131 = vunpack.c.l.b16 %v211
    %v1132 = vunpack.c.h.b16 %v211
    %v1133 = vunpack.c.l.b16 %v212
    %v1134 = vunpack.c.h.b16 %v212
    %v1135 = vunpack.c.l.b16 %v213
    %v1136 = vunpack.c.h.b16 %v213
    %v1137 = vunpack.c.l.b16 %v214
    %v1138 = vunpack.c.h.b16 %v214
    %v1139 = vunpack.c.l.b16 %v215
    %v1140 = vunpack.c.h.b16 %v215
    %v1141 = vunpack.c.l.b16 %v216
    %v1142 = vunpack.c.h.b16 %v216
    %v1143 = vunpack.c.l.b16 %v217
    %v1144 = vunpack.c.h.b16 %v217
    %v1145 = vunpack.c.l.b16 %v218
    %v1146 = vunpack.c.h.b16 %v218
    %v1147 = vunpack.c.l.b16 %v219
    %v1148 = vunpack.c.h.b16 %v219
    %v1149 = vunpack.c.l.b16 %v220
    %v1150 = vunpack.c.h.b16 %v220
    %v1151 = vunpack.c.l.b16 %v221
    %v1152 = vunpack.c.h.b16 %v221
    %v1153 = vunpack.c.l.b16 %v222
    %v1154 = vunpack.c.h.b16 %v222
    %v1155 = vunpack.c.l.b16 %v223
    %v1156 = vunpack.c.h.b16 %v223
    %v1157 = vunpack.c.l.b16 %v224
    %v1158 = vunpack.c.h.b16 %v224
    %v1159 = vunpack.c.l.b16 %v225
    %v1160 = vunpack.c.h.b16 %v225
    %v1161 = vunpack.c.l.b16 %v226
    %v1162 = vunpack.c.h.b16 %v226
    %v1163 = vunpack.c.l.b16 %v227
    %v1164 = vunpack.c.h.b16 %v227
    %v1165 = vunpack.c.l.b16 %v228
    %v1166 = vunpack.c.h.b16 %v228
    %v1167 = vunpack.c.l.b16 %v229
    %v1168 = vunpack.c.h.b16 %v229
    %v1169 = vunpack.c.l.b16 %v230
    %v1170 = vunpack.c.h.b16 %v230
    %v1171 = vunpack.c.l.b16 %v231
    %v1172 = vunpack.c.h.b16 %v231
    %v1173 = vunpack.c.l.b16 %v232
    %v1174 = vunpack.c.h.b16 %v232
    %v1175 = vunpack.c.l.b16 %v233
    %v1176 = vunpack.c.h.b16 %v233
    %v1177 = vunpack.c.l.b16 %v234
    %v1178 = vunpack.c.h.b16 %v234
    %v1179 = vunpack.c.l.b16 %v235
    %v1180 = vunpack.c.h.b16 %v235
    %v1181 = vunpack.c.l.b16 %v236
    %v1182 = vunpack.c.h.b16 %v236
    %v1183 = vunpack.c.l.b16 %v237
    %v1184 = vunpack.c.h.b16 %v237
    %v1185 = vunpack.c.l.b16 %v238
    %v1186 = vunpack.c.h.b16 %v238
    %v1187 = vunpack.c.l.b16 %v239
    %v1188 = vunpack.c.h.b16 %v239
    %v1189 = vunpack.c.l.b16 %v240
    %v1190 = vunpack.c.h.b16 %v240
    %v1191 = vunpack.c.l.b16 %v241
    %v1192 = vunpack.c.h.b16 %v241
    %v1193 = vunpack.c.l.b16 %v242
    %v1194 = vunpack.c.h.b16 %v242
    %v1195 = vunpack.c.l.b16 %v243
    %v1196 = vunpack.c.h.b16 %v243
    %v1197 = vunpack.c.l.b16 %v244
    %v1198 = vunpack.c.h.b16 %v244
    %v1199 = vunpack.c.l.b16 %v245
    %v1200 = vunpack.c.h.b16 %v245
    %v1201 = vunpack.c.l.b16 %v246
    %v1202 = vunpack.c.h.b16 %v246
    %v1203 = vunpack.c.l.b16 %v247
    %v1204 = vunpack.c.h.b16 %v247
    %v1205 = vunpack.c.l.b16 %v248
    %v1206 = vunpack.c.h.b16 %v248
    %v1207 = vunpack.c.l.b16 %v249
    %v1208 = vunpack.c.h.b16 %v249
    %v1209 = vunpack.c.l.b16 %v250
    %v1210 = vunpack.c.h.b16 %v250
    %v1211 = vunpack.c.l.b16 %v251
    %v1212 = vunpack.c.h.b16 %v251
    %v1213 = vunpack.c.l.b16 %v252
    %v1214 = vunpack.c.h.b16 %v252
    %v1215 = vunpack.c.l.b16 %v253
    %v1216 = vunpack.c.h.b16 %v253
    %v1217 = vunpack.c.l.b16 %v254
    %v1218 = vunpack.c.h.b16 %v254
    %v1219 = vunpack.c.l.b16 %v255
    %v1220 = vunpack.c.h.b16 %v255
    %v1221 = vunpack.c.l.b16 %v256
    %v1222 = vunpack.c.h.b16 %v256
    %v1223 = vunpack.c.l.b16 %v257
    %v1224 = vunpack.c.h.b16 %v257
    %v1225 = vunpack.c.l.b16 %v258
    %v1226 = vunpack.c.h.b16 %v258
    %v1227 = vunpack.c.l.b16 %v259
    %v1228 = vunpack.c.h.b16 %v259
    %v1229 = vunpack.c.l.b16 %v260
    %v1230 = vunpack.c.h.b16 %v260
    %v1231 = vunpack.c.l.b16 %v261
    %v1232 = vunpack.c.h.b16 %v261
    %v1233 = vunpack.c.l.b16 %v262
    %v1234 = vunpack.c.h.b16 %v262
    %v1235 = vunpack.c.l.b16 %v263
    %v1236 = vunpack.c.h.b16 %v263
    %v1237 = vunpack.c.l.b16 %v264
    %v1238 = vunpack.c.h.b16 %v264
    %v1239 = vunpack.c.l.b16 %v265
    %v1240 = vunpack.c.h.b16 %v265
    %v1241 = vunpack.c.l.b16 %v266
    %v1242 = vunpack.c.h.b16 %v266
    %v1243 = vunpack.c.l.b16 %v267
    %v1244 = vunpack.c.h.b16 %v267
    %v1245 = vunpack.c.l.b16 %v268
    %v1246 = vunpack.c.h.b16 %v268
    %v1247 = vunpack.c.l.b16 %v269
    %v1248 = vunpack.c.h.b16 %v269
    %v1249 = vunpack.c.l.b16 %v270
    %v1250 = vunpack.c.h.b16 %v270
    %v1251 = vunpack.c.l.b16 %v271
    %v1252 = vunpack.c.h.b16 %v271
    %v1253 = vunpack.c.l.b16 %v272
    %v1254 = vunpack.c.h.b16 %v272
    %v1255 = vunpack.c.l.b16 %v273
    %v1256 = vunpack.c.h.b16 %v273
    %v1257 = vunpack.c.l.b16 %v274
    %v1258 = vunpack.c.h.b16 %v274
    %v1259 = vunpack.c.l.b16 %v275
    %v1260 = vunpack.c.h.b16 %v275
    %v1261 = vunpack.c.l.b16 %v276
    %v1262 = vunpack.c.h.b16 %v276
    %v1263 = vunpack.c.l.b16 %v277
    %v1264 = vunpack.c.h.b16 %v277
    %v1265 = vunpack.c.l.b16 %v278
    %v1266 = vunpack.c.h.b16 %v278
    %v1267 = vunpack.c.l.b16 %v279
    %v1268 = vunpack.c.h.b16 %v279
    %v1269 = vunpack.c.l.b16 %v280
    %v1270 = vunpack.c.h.b16 %v280
    %v1271 = vunpack.c.l.b16 %v281
    %v1272 = vunpack.c.h.b16 %v281
    %v1273 = vunpack.c.l.b16 %v282
    %v1274 = vunpack.c.h.b16 %v282
    %v1275 = vunpack.c.l.b16 %v283
    %v1276 = vunpack.c.h.b16 %v283
    %v1277 = vunpack.c.l.b16 %v284
    %v1278 = vunpack.c.h.b16 %v284
    %v1279 = vunpack.c.l.b16 %v285
    %v1280 = vunpack.c.h.b16 %v285
    %v1281 = vunpack.c.l.b16 %v286
    %v1282 = vunpack.c.h.b16 %v286
    %v1283 = vunpack.c.l.b16 %v287
    %v1284 = vunpack.c.h.b16 %v287
    %v1285 = vunpack.c.l.b16 %v288
    %v1286 = vunpack.c.h.b16 %v288
    %v1287 = vunpack.c.l.b16 %v289
    %v1288 = vunpack.c.h.b16 %v289
    %v1289 = vunpack.c.l.b16 %v290
    %v1290 = vunpack.c.h.b16 %v290
    %v1291 = vunpack.c.l.b16 %v291
    %v1292 = vunpack.c.h.b16 %v291
    %v1293 = vunpack.c.l.b16 %v292
    %v1294 = vunpack.c.h.b16 %v292
    %v1295 = vunpack.c.l.b16 %v293
    %v1296 = vunpack.c.h.b16 %v293
    %v1297 = vunpack.c.l.b16 %v294
    %v1298 = vunpack.c.h.b16 %v294
    %v1299 = vunpack.c.l.b16 %v295
    %v1300 = vunpack.c.h.b16 %v295
    %v1301 = vunpack.c.l.b16 %v296
    %v1302 = vunpack.c.h.b16 %v296
    %v1303 = vunpack.c.l.b16 %v297
    %v1304 = vunpack.c.h.b16 %v297
    %v1305 = vunpack.c.l.b16 %v298
    %v1306 = vunpack.c.h.b16 %v298
    %v1307 = vunpack.c.l.b16 %v299
    %v1308 = vunpack.c.h.b16 %v299
    %v1309 = vunpack.c.l.b16 %v300
    %v1310 = vunpack.c.h.b16 %v300
    %v1311 = vunpack.c.l.b16 %v301
    %v1312 = vunpack.c.h.b16 %v301
    %v1313 = vunpack.c.l.b16 %v302
    %v1314 = vunpack.c.h.b16 %v302
    %v1315 = vunpack.c.l.b16 %v303
    %v1316 = vunpack.c.h.b16 %v303
    %v1317 = vunpack.c.l.b16 %v304
    %v1318 = vunpack.c.h.b16 %v304
    %v1319 = vunpack.c.l.b16 %v305
    %v1320 = vunpack.c.h.b16 %v305
    %v1321 = vunpack.c.l.b16 %v306
    %v1322 = vunpack.c.h.b16 %v306
    %v1323 = vunpack.c.l.b16 %v307
    %v1324 = vunpack.c.h.b16 %v307
    %v1325 = vunpack.c.l.b16 %v308
    %v1326 = vunpack.c.h.b16 %v308
    %v1327 = vunpack.c.l.b16 %v309
    %v1328 = vunpack.c.h.b16 %v309
    %v1329 = vunpack.c.l.b16 %v310
    %v1330 = vunpack.c.h.b16 %v310
    %v1331 = vunpack.c.l.b16 %v311
    %v1332 = vunpack.c.h.b16 %v311
    %v1333 = vunpack.c.l.b16 %v312
    %v1334 = vunpack.c.h.b16 %v312
    %v1335 = vunpack.c.l.b16 %v313
    %v1336 = vunpack.c.h.b16 %v313
    %v1337 = vunpack.c.l.b16 %v314
    %v1338 = vunpack.c.h.b16 %v314
    %v1339 = vunpack.c.l.b16 %v315
    %v1340 = vunpack.c.h.b16 %v315
    %v1341 = vunpack.c.l.b16 %v316
    %v1342 = vunpack.c.h.b16 %v316
    %v1343 = vunpack.c.l.b16 %v317
    %v1344 = vunpack.c.h.b16 %v317
    %v1345 = vunpack.c.l.b16 %v318
    %v1346 = vunpack.c.h.b16 %v318
    %v1347 = vunpack.c.l.b16 %v319
    %v1348 = vunpack.c.h.b16 %v319
    %v1349 = vunpack.c.l.b16 %v320
    %v1350 = vunpack.c.h.b16 %v320
    %v1351 = vunpack.c.l.b16 %v321
    %v1352 = vunpack.c.h.b16 %v321
    %v1353 = vunpack.c.l.b16 %v322
    %v1354 = vunpack.c.h.b16 %v322
    %v1355 = vunpack.c.l.b16 %v323
    %v1356 = vunpack.c.h.b16 %v323
    %v1357 = vunpack.c.l.b16 %v324
    %v1358 = vunpack.c.h.b16 %v324
    %v1359 = vunpack.c.l.b16 %v325
    %v1360 = vunpack.c.h.b16 %v325
    %v1361 = vunpack.c.l.b16 %v326
    %v1362 = vunpack.c.h.b16 %v326
    %v1363 = vunpack.c.l.b16 %v327
    %v1364 = vunpack.c.h.b16 %v327
    %v1365 = vunpack.c.l.b16 %v328
    %v1366 = vunpack.c.h.b16 %v328
    %v1367 = vunpack.c.l.b16 %v329
    %v1368 = vunpack.c.h.b16 %v329
    %v1369 = vunpack.c.l.b16 %v330
    %v1370 = vunpack.c.h.b16 %v330
    %v1371 = vunpack.c.l.b16 %v331
    %v1372 = vunpack.c.h.b16 %v331
    %v1373 = vunpack.c.l.b16 %v332
    %v1374 = vunpack.c.h.b16 %v332
    %v1375 = vunpack.c.l.b16 %v333
    %v1376 = vunpack.c.h.b16 %v333
    %v1377 = vunpack.c.l.b16 %v334
    %v1378 = vunpack.c.h.b16 %v334
    %v1379 = vunpack.c.l.b16 %v335
    %v1380 = vunpack.c.h.b16 %v335
    %v1381 = vunpack.c.l.b16 %v336
    %v1382 = vunpack.c.h.b16 %v336
    %v1383 = vunpack.c.l.b16 %v337
    %v1384 = vunpack.c.h.b16 %v337
    %v1385 = vunpack.c.l.b16 %v338
    %v1386 = vunpack.c.h.b16 %v338
    %v1387 = vunpack.c.l.b16 %v339
    %v1388 = vunpack.c.h.b16 %v339
    %v1389 = vunpack.c.l.b16 %v340
    %v1390 = vunpack.c.h.b16 %v340
    %v1391 = vunpack.c.l.b16 %v341
    %v1392 = vunpack.c.h.b16 %v341
    %v1393 = vunpack.c.l.b16 %v342
    %v1394 = vunpack.c.h.b16 %v342
    %v1395 = vunpack.c.l.b16 %v343
    %v1396 = vunpack.c.h.b16 %v343
    %v1397 = vunpack.c.l.b16 %v344
    %v1398 = vunpack.c.h.b16 %v344
    %v1399 = vunpack.c.l.b16 %v345
    %v1400 = vunpack.c.h.b16 %v345
    %v1401 = vunpack.c.l.b16 %v346
    %v1402 = vunpack.c.h.b16 %v346
    %v1403 = vunpack.c.l.b16 %v347
    %v1404 = vunpack.c.h.b16 %v347
    %v1405 = vunpack.c.l.b16 %v348
    %v1406 = vunpack.c.h.b16 %v348
    %v1407 = vunpack.c.l.b16 %v349
    %v1408 = vunpack.c.h.b16 %v349
    %v1409 = vunpack.c.l.b16 %v350
    %v1410 = vunpack.c.h.b16 %v350
    %v1411 = vunpack.c.l.b16 %v351
    %v1412 = vunpack.c.h.b16 %v351
    %v1413 = vunpack.c.l.b16 %v352
    %v1414 = vunpack.c.h.b16 %v352
    %v1415 = vunpack.c.l.b16 %v353
    %v1416 = vunpack.c.h.b16 %v353
    %v1417 = vunpack.c.l.b16 %v354
    %v1418 = vunpack.c.h.b16 %v354
    %v1419 = vunpack.c.l.b16 %v355
    %v1420 = vunpack.c.h.b16 %v355
    %v1421 = vunpack.c.l.b16 %v356
    %v1422 = vunpack.c.h.b16 %v356
    %v1423 = vunpack.c.l.b16 %v357
    %v1424 = vunpack.c.h.b16 %v357
    %v1425 = vunpack.c.l.b16 %v358
    %v1426 = vunpack.c.h.b16 %v358
    %v1427 = vunpack.c.l.b16 %v359
    %v1428 = vunpack.c.h.b16 %v359
    %v1429 = vunpack.c.l.b16 %v360
    %v1430 = vunpack.c.h.b16 %v360
    %v1431 = vunpack.c.l.b16 %v361
    %v1432 = vunpack.c.h.b16 %v361
    %v1433 = vunpack.c.l.b16 %v362
    %v1434 = vunpack.c.h.b16 %v362
    %v1435 = vunpack.c.l.b16 %v363
    %v1436 = vunpack.c.h.b16 %v363
    %v1437 = vunpack.c.l.b16 %v364
    %v1438 = vunpack.c.h.b16 %v364
    %v1439 = vunpack.c.l.b16 %v365
    %v1440 = vunpack.c.h.b16 %v365
    %v1441 = vunpack.c.l.b16 %v366
    %v1442 = vunpack.c.h.b16 %v366
    %v1443 = vunpack.c.l.b16 %v367
    %v1444 = vunpack.c.h.b16 %v367
    %v1445 = vunpack.c.l.b16 %v368
    %v1446 = vunpack.c.h.b16 %v368
    %v1447 = vunpack.c.l.b16 %v369
    %v1448 = vunpack.c.h.b16 %v369
    %v1449 = vunpack.c.l.b16 %v370
    %v1450 = vunpack.c.h.b16 %v370
    %v1451 = vunpack.c.l.b16 %v371
    %v1452 = vunpack.c.h.b16 %v371
    %v1453 = vunpack.c.l.b16 %v372
    %v1454 = vunpack.c.h.b16 %v372
    %v1455 = vunpack.c.l.b16 %v373
    %v1456 = vunpack.c.h.b16 %v373
    %v1457 = vunpack.c.l.b16 %v374
    %v1458 = vunpack.c.h.b16 %v374
    %v1459 = vunpack.c.l.b16 %v375
    %v1460 = vunpack.c.h.b16 %v375
    %v1461 = vunpack.c.l.b16 %v376
    %v1462 = vunpack.c.h.b16 %v376
    %v1463 = vunpack.c.l.b16 %v377
    %v1464 = vunpack.c.h.b16 %v377
    %v1465 = vunpack.c.l.b16 %v378
    %v1466 = vunpack.c.h.b16 %v378
    %v1467 = vunpack.c.l.b16 %v379
    %v1468 = vunpack.c.h.b16 %v379
    %v1469 = vunpack.c.l.b16 %v380
    %v1470 = vunpack.c.h.b16 %v380
    %v1471 = vunpack.c.l.b16 %v381
    %v1472 = vunpack.c.h.b16 %v381
    %v1473 = vunpack.c.l.b16 %v382
    %v1474 = vunpack.c.h.b16 %v382
    %v1475 = vunpack.c.l.b16 %v383
    %v1476 = vunpack.c.h.b16 %v383
    %v1477 = vunpack.c.l.b16 %v384
    %v1478 = vunpack.c.h.b16 %v384
    %v1479 = vunpack.c.l.b16 %v385
    %v1480 = vunpack.c.h.b16 %v385
    %v1481 = vunpack.c.l.b16 %v386
    %v1482 = vunpack.c.h.b16 %v386
    %v1483 = vunpack.c.l.b16 %v387
    %v1484 = vunpack.c.h.b16 %v387
    %v1485 = vunpack.c.l.b16 %v388
    %v1486 = vunpack.c.h.b16 %v388
    %v1487 = vunpack.c.l.b16 %v389
    %v1488 = vunpack.c.h.b16 %v389
    %v1489 = vunpack.c.l.b16 %v390
    %v1490 = vunpack.c.h.b16 %v390
    %v1491 = vunpack.c.l.b16 %v391
    %v1492 = vunpack.c.h.b16 %v391
    %v1493 = vunpack.c.l.b16 %v392
    %v1494 = vunpack.c.h.b16 %v392
    %v1495 = vunpack.c.l.b16 %v393
    %v1496 = vunpack.c.h.b16 %v393
    %v1497 = vunpack.c.l.b16 %v394
    %v1498 = vunpack.c.h.b16 %v394
    %v1499 = vunpack.c.l.b16 %v395
    %v1500 = vunpack.c.h.b16 %v395
    %v1501 = vunpack.c.l.b16 %v396
    %v1502 = vunpack.c.h.b16 %v396
    %v1503 = vunpack.c.l.b16 %v397
    %v1504 = vunpack.c.h.b16 %v397
    %v1505 = vunpack.c.l.b16 %v398
    %v1506 = vunpack.c.h.b16 %v398
    %v1507 = vunpack.c.l.b16 %v399
    %v1508 = vunpack.c.h.b16 %v399
    %v1509 = vunpack.c.l.b16 %v400
    %v1510 = vunpack.c.h.b16 %v400
    %v1511 = vunpack.c.l.b16 %v401
    %v1512 = vunpack.c.h.b16 %v401
    %v1513 = vunpack.c.l.b16 %v402
    %v1514 = vunpack.c.h.b16 %v402
    %v1515 = vunpack.c.l.b16 %v403
    %v1516 = vunpack.c.h.b16 %v403
    %v1517 = vunpack.c.l.b16 %v404
    %v1518 = vunpack.c.h.b16 %v404
    %v1519 = vunpack.c.l.b16 %v405
    %v1520 = vunpack.c.h.b16 %v405
    %v1521 = vunpack.c.l.b16 %v406
    %v1522 = vunpack.c.h.b16 %v406
    %v1523 = vunpack.c.l.b16 %v407
    %v1524 = vunpack.c.h.b16 %v407
    %v1525 = vunpack.c.l.b16 %v408
    %v1526 = vunpack.c.h.b16 %v408
    %v1527 = vunpack.c.l.b16 %v409
    %v1528 = vunpack.c.h.b16 %v409
    %v1529 = vunpack.c.l.b16 %v410
    %v1530 = vunpack.c.h.b16 %v410
    %v1531 = vunpack.c.l.b16 %v411
    %v1532 = vunpack.c.h.b16 %v411
    %v1533 = vunpack.c.l.b16 %v412
    %v1534 = vunpack.c.h.b16 %v412
    %v1535 = vunpack.c.l.b16 %v413
    %v1536 = vunpack.c.h.b16 %v413
    %v1537 = vunpack.c.l.b16 %v414
    %v1538 = vunpack.c.h.b16 %v414
    %v1539 = vunpack.c.l.b16 %v415
    %v1540 = vunpack.c.h.b16 %v415
    %v1541 = vunpack.c.l.b16 %v416
    %v1542 = vunpack.c.h.b16 %v416
    %v1543 = vunpack.c.l.b16 %v417
    %v1544 = vunpack.c.h.b16 %v417
    %v1545 = vunpack.c.l.b16 %v418
    %v1546 = vunpack.c.h.b16 %v418
    %v1547 = vunpack.c.l.b16 %v419
    %v1548 = vunpack.c.h.b16 %v419
    %v1549 = vunpack.c.l.b16 %v420
    %v1550 = vunpack.c.h.b16 %v420
    %v1551 = vunpack.c.l.b16 %v421
    %v1552 = vunpack.c.h.b16 %v421
    %v1553 = vunpack.c.l.b16 %v422
    %v1554 = vunpack.c.h.b16 %v422
    %v1555 = vunpack.c.l.b16 %v423
    %v1556 = vunpack.c.h.b16 %v423
    %v1557 = vunpack.c.l.b16 %v424
    %v1558 = vunpack.c.h.b16 %v424
    %v1559 = vunpack.c.l.b16 %v425
    %v1560 = vunpack.c.h.b16 %v425
    %v1561 = vunpack.c.l.b16 %v426
    %v1562 = vunpack.c.h.b16 %v426
    %v1563 = vunpack.c.l.b16 %v427
    %v1564 = vunpack.c.h.b16 %v427
    %v1565 = vunpack.c.l.b16 %v428
    %v1566 = vunpack.c.h.b16 %v428
    %v1567 = vunpack.c.l.b16 %v429
    %v1568 = vunpack.c.h.b16 %v429
    %v1569 = vunpack.c.l.b16 %v430
    %v1570 = vunpack.c.h.b16 %v430
    %v1571 = vunpack.c.l.b16 %v431
    %v1572 = vunpack.c.h.b16 %v431
    %v1573 = vunpack.c.l.b16 %v432
    %v1574 = vunpack.c.h.b16 %v432
    %v1575 = vunpack.c.l.b16 %v433
    %v1576 = vunpack.c.h.b16 %v433
    %v1577 = vunpack.c.l.b16 %v434
    %v1578 = vunpack.c.h.b16 %v434
    %v1579 = vunpack.c.l.b16 %v435
    %v1580 = vunpack.c.h.b16 %v435
    %v1581 = vunpack.c.l.b16 %v436
    %v1582 = vunpack.c.h.b16 %v436
    %v1583 = vunpack.c.l.b16 %v437
    %v1584 = vunpack.c.h.b16 %v437
    %v1585 = vunpack.c.l.b16 %v438
    %v1586 = vunpack.c.h.b16 %v438
    %v1587 = vunpack.c.l.b16 %v439
    %v1588 = vunpack.c.h.b16 %v439
    %v1589 = vunpack.c.l.b16 %v440
    %v1590 = vunpack.c.h.b16 %v440
    %v1591 = vunpack.c.l.b16 %v441
    %v1592 = vunpack.c.h.b16 %v441
    %v1593 = vunpack.c.l.b16 %v442
    %v1594 = vunpack.c.h.b16 %v442
    %v1595 = vunpack.c.l.b16 %v443
    %v1596 = vunpack.c.h.b16 %v443
    %v1597 = vunpack.c.l.b16 %v444
    %v1598 = vunpack.c.h.b16 %v444
    %v1599 = vunpack.c.l.b16 %v445
    %v1600 = vunpack.c.h.b16 %v445
    %v1601 = vunpack.c.l.b16 %v446
    %v1602 = vunpack.c.h.b16 %v446
    %v1603 = vunpack.c.l.b16 %v447
    %v1604 = vunpack.c.h.b16 %v447
    %v1605 = vunpack.c.l.b16 %v448
    %v1606 = vunpack.c.h.b16 %v448
    %v1607 = vunpack.c.l.b16 %v449
    %v1608 = vunpack.c.h.b16 %v449
    %v1609 = vunpack.c.l.b16 %v450
    %v1610 = vunpack.c.h.b16 %v450
    %v1611 = vunpack.c.l.b16 %v451
    %v1612 = vunpack.c.h.b16 %v451
    %v1613 = vunpack.c.l.b16 %v452
    %v1614 = vunpack.c.h.b16 %v452
    %v1615 = vunpack.c.l.b16 %v453
    %v1616 = vunpack.c.h.b16 %v453
    %v1617 = vunpack.c.l.b16 %v454
    %v1618 = vunpack.c.h.b16 %v454
    %v1619 = vunpack.c.l.b16 %v455
    %v1620 = vunpack.c.h.b16 %v455
    %v1621 = vunpack.c.l.b16 %v456
    %v1622 = vunpack.c.h.b16 %v456
    %v1623 = vunpack.c.l.b16 %v457
    %v1624 = vunpack.c.h.b16 %v457
    %v1625 = vunpack.c.l.b16 %v458
    %v1626 = vunpack.c.h.b16 %v458
    %v1627 = vunpack.c.l.b16 %v459
    %v1628 = vunpack.c.h.b16 %v459
    %v1629 = vunpack.c.l.b16 %v460
    %v1630 = vunpack.c.h.b16 %v460
    %v1631 = vunpack.c.l.b16 %v461
    %v1632 = vunpack.c.h.b16 %v461
    %v1633 = vunpack.c.l.b16 %v462
    %v1634 = vunpack.c.h.b16 %v462
    %v1635 = vunpack.c.l.b16 %v463
    %v1636 = vunpack.c.h.b16 %v463
    %v1637 = vunpack.c.l.b16 %v464
    %v1638 = vunpack.c.h.b16 %v464
    %v1639 = vunpack.c.l.b16 %v465
    %v1640 = vunpack.c.h.b16 %v465
    %v1641 = vunpack.c.l.b16 %v466
    %v1642 = vunpack.c.h.b16 %v466
    %v1643 = vunpack.c.l.b16 %v467
    %v1644 = vunpack.c.h.b16 %v467
    %v1645 = vunpack.c.l.b16 %v468
    %v1646 = vunpack.c.h.b16 %v468
    %v1647 = vunpack.c.l.b16 %v469
    %v1648 = vunpack.c.h.b16 %v469
    %v1649 = vunpack.c.l.b16 %v470
    %v1650 = vunpack.c.h.b16 %v470
    %v1651 = vunpack.c.l.b16 %v471
    %v1652 = vunpack.c.h.b16 %v471
    %v1653 = vunpack.c.l.b16 %v472
    %v1654 = vunpack.c.h.b16 %v472
    %v1655 = vunpack.c.l.b16 %v473
    %v1656 = vunpack.c.h.b16 %v473
    %v1657 = vunpack.c.l.b16 %v474
    %v1658 = vunpack.c.h.b16 %v474
    %v1659 = vunpack.c.l.b16 %v475
    %v1660 = vunpack.c.h.b16 %v475
    %v1661 = vunpack.c.l.b16 %v476
    %v1662 = vunpack.c.h.b16 %v476
    %v1663 = vunpack.c.l.b16 %v477
    %v1664 = vunpack.c.h.b16 %v477
    %v1665 = vunpack.c.l.b16 %v478
    %v1666 = vunpack.c.h.b16 %v478
    %v1667 = vunpack.c.l.b16 %v479
    %v1668 = vunpack.c.h.b16 %v479
    %v1669 = vunpack.c.l.b16 %v480
    %v1670 = vunpack.c.h.b16 %v480
    %v1671 = vunpack.c.l.b16 %v481
    %v1672 = vunpack.c.h.b16 %v481
    %v1673 = vunpack.c.l.b16 %v482
    %v1674 = vunpack.c.h.b16 %v482
    %v1675 = vunpack.c.l.b16 %v483
    %v1676 = vunpack.c.h.b16 %v483
    %v1677 = vunpack.c.l.b16 %v484
    %v1678 = vunpack.c.h.b16 %v484
    %v1679 = vunpack.c.l.b16 %v485
    %v1680 = vunpack.c.h.b16 %v485
    %v1681 = vunpack.c.l.b16 %v486
    %v1682 = vunpack.c.h.b16 %v486
    %v1683 = vunpack.c.l.b16 %v487
    %v1684 = vunpack.c.h.b16 %v487
    %v1685 = vunpack.c.l.b16 %v488
    %v1686 = vunpack.c.h.b16 %v488
    %v1687 = vunpack.c.l.b16 %v489
    %v1688 = vunpack.c.h.b16 %v489
    %v1689 = vunpack.c.l.b16 %v490
    %v1690 = vunpack.c.h.b16 %v490
    %v1691 = vunpack.c.l.b16 %v491
    %v1692 = vunpack.c.h.b16 %v491
    %v1693 = vunpack.c.l.b16 %v492
    %v1694 = vunpack.c.h.b16 %v492
    %v1695 = vunpack.c.l.b16 %v493
    %v1696 = vunpack.c.h.b16 %v493
    %v1697 = vunpack.c.l.b16 %v494
    %v1698 = vunpack.c.h.b16 %v494
    %v1699 = vunpack.c.l.b16 %v495
    %v1700 = vunpack.c.h.b16 %v495
    %v1701 = vunpack.c.l.b16 %v496
    %v1702 = vunpack.c.h.b16 %v496
    %v1703 = vunpack.c.l.b16 %v497
    %v1704 = vunpack.c.h.b16 %v497
    %v1705 = vunpack.c.l.b16 %v498
    %v1706 = vunpack.c.h.b16 %v498
    %v1707 = vunpack.c.l.b16 %v499
    %v1708 = vunpack.c.h.b16 %v499
    %v1709 = vunpack.c.l.b16 %v500
    %v1710 = vunpack.c.h.b16 %v500
    %v1711 = vunpack.c.l.b16 %v501
    %v1712 = vunpack.c.h.b16 %v501
    %v1713 = vunpack.c.l.b16 %v502
    %v1714 = vunpack.c.h.b16 %v502
    %v1715 = vpack.c.b16 %v953, %v947
    %v1716 = vpack.c.b16 %v954, %v948
    %v1717 = vpack.c.b16 %v955, %v949
    %v1718 = vpack.c.b16 %v956, %v950
    %v1719 = vpack.c.b16 %v957, %v951
    %v1720 = vpack.c.b16 %v958, %v952
    %v1721 = vpack.c.b16 %v965, %v959
    %v1722 = vpack.c.b16 %v966, %v960
    %v1723 = vpack.c.b16 %v967, %v961
    %v1724 = vpack.c.b16 %v968, %v962
    %v1725 = vpack.c.b16 %v969, %v963
    %v1726 = vpack.c.b16 %v970, %v964
    %v1727 = vpack.c.b16 %v977, %v971
    %v1728 = vpack.c.b16 %v978, %v972
    %v1729 = vpack.c.b16 %v979, %v973
    %v1730 = vpack.c.b16 %v980, %v974
    %v1731 = vpack.c.b16 %v981, %v975
    %v1732 = vpack.c.b16 %v982, %v976
    %v1733 = vpack.c.b16 %v989, %v983
    %v1734 = vpack.c.b16 %v990, %v984
    %v1735 = vpack.c.b16 %v991, %v985
    %v1736 = vpack.c.b16 %v992, %v986
    %v1737 = vpack.c.b16 %v993, %v987
    %v1738 = vpack.c.b16 %v994, %v988
    %v1739 = vpack.c.b16 %v1001, %v995
    %v1740 = vpack.c.b16 %v1002, %v996
    %v1741 = vpack.c.b16 %v1003, %v997
    %v1742 = vpack.c.b16 %v1004, %v998
    %v1743 = vpack.c.b16 %v1005, %v999
    %v1744 = vpack.c.b16 %v1006, %v1000
    %v1745 = vpack.c.b16 %v1013, %v1007
    %v1746 = vpack.c.b16 %v1014, %v1008
    %v1747 = vpack.c.b16 %v1015, %v1009
    %v1748 = vpack.c.b16 %v1016, %v1010
    %v1749 = vpack.c.b16 %v1017, %v1011
    %v1750 = vpack.c.b16 %v1018, %v1012
    %v1751 = vpack.c.b16 %v1025, %v1019
    %v1752 = vpack.c.b16 %v1026, %v1020
    %v1753 = vpack.c.b16 %v1027, %v1021
    %v1754 = vpack.c.b16 %v1028, %v1022
    %v1755 = vpack.c.b16 %v1029, %v1023
    %v1756 = vpack.c.b16 %v1030, %v1024
    %v1757 = vpack.c.b16 %v1037, %v1031
    %v1758 = vpack.c.b16 %v1038, %v1032
    %v1759 = vpack.c.b16 %v1039, %v1033
    %v1760 = vpack.c.b16 %v1040, %v1034
    %v1761 = vpack.c.b16 %v1041, %v1035
    %v1762 = vpack.c.b16 %v1042, %v1036
    %v1763 = vpack.c.b16 %v1049, %v1043
    %v1764 = vpack.c.b16 %v1050, %v1044
    %v1765 = vpack.c.b16 %v1051, %v1045
    %v1766 = vpack.c.b16 %v1052, %v1046
    %v1767 = vpack.c.b16 %v1053, %v1047
    %v1768 = vpack.c.b16 %v1054, %v1048
    %v1769 = vpack.c.b16 %v1061, %v1055
    %v1770 = vpack.c.b16 %v1062, %v1056
    %v1771 = vpack.c.b16 %v1063, %v1057
    %v1772 = vpack.c.b16 %v1064, %v1058
    %v1773 = vpack.c.b16 %v1065, %v1059
    %v1774 = vpack.c.b16 %v1066, %v1060
    %v1775 = vpack.c.b16 %v1073, %v1067
    %v1776 = vpack.c.b16 %v1074, %v1068
    %v1777 = vpack.c.b16 %v1075, %v1069
    %v1778 = vpack.c.b16 %v1076, %v1070
    %v1779 = vpack.c.b16 %v1077, %v1071
    %v1780 = vpack.c.b16 %v1078, %v1072
    %v1781 = vpack.c.b16 %v1085, %v1079
    %v1782 = vpack.c.b16 %v1086, %v1080
    %v1783 = vpack.c.b16 %v1087, %v1081
    %v1784 = vpack.c.b16 %v1088, %v1082
    %v1785 = vpack.c.b16 %v1089, %v1083
    %v1786 = vpack.c.b16 %v1090, %v1084
    %v1787 = vpack.c.b16 %v1097, %v1091
    %v1788 = vpack.c.b16 %v1098, %v1092
    %v1789 = vpack.c.b16 %v1099, %v1093
    %v1790 = vpack.c.b16 %v1100, %v1094
    %v1791 = vpack.c.b16 %v1101, %v1095
    %v1792 = vpack.c.b16 %v1102, %v1096
    %v1793 = vpack.c.b16 %v1109, %v1103
    %v1794 = vpack.c.b16 %v1110, %v1104
    %v1795 = vpack.c.b16 %v1111, %v1105
    %v1796 = vpack.c.b16 %v1112, %v1106
    %v1797 = vpack.c.b16 %v1113, %v1107
    %v1798 = vpack.c.b16 %v1114, %v1108
    %v1799 = vpack.c.b16 %v1121, %v1115
    %v1800 = vpack.c.b16 %v1122, %v1116
    %v1801 = vpack.c.b16 %v1123, %v1117
    %v1802 = vpack.c.b16 %v1124, %v1118
    %v1803 = vpack.c.b16 %v1125, %v1119
    %v1804 = vpack.c.b16 %v1126, %v1120
    %v1805 = vpack.c.b16 %v1133, %v1127
    %v1806 = vpack.c.b16 %v1134, %v1128
    %v1807 = vpack.c.b16 %v1135, %v1129
    %v1808 = vpack.c.b16 %v1136, %v1130
    %v1809 = vpack.c.b16 %v1137, %v1131
    %v1810 = vpack.c.b16 %v1138, %v1132
    %v1811 = vpack.c.b16 %v1145, %v1139
    %v1812 = vpack.c.b16 %v1146, %v1140
    %v1813 = vpack.c.b16 %v1147, %v1141
    %v1814 = vpack.c.b16 %v1148, %v1142
    %v1815 = vpack.c.b16 %v1149, %v1143
    %v1816 = vpack.c.b16 %v1150, %v1144
    %v1817 = vpack.c.b16 %v1157, %v1151
    %v1818 = vpack.c.b16 %v1158, %v1152
    %v1819 = vpack.c.b16 %v1159, %v1153
    %v1820 = vpack.c.b16 %v1160, %v1154
    %v1821 = vpack.c.b16 %v1161, %v1155
    %v1822 = vpack.c.b16 %v1162, %v1156
    %v1823 = vpack.c.b16 %v1169, %v1163
    %v1824 = vpack.c.b16 %v1170, %v1164
    %v1825 = vpack.c.b16 %v1171, %v1165
    %v1826 = vpack.c.b16 %v1172, %v1166
    %v1827 = vpack.c.b16 %v1173, %v1167
    %v1828 = vpack.c.b16 %v1174, %v1168
    %v1829 = vpack.c.b16 %v1181, %v1175
    %v1830 = vpack.c.b16 %v1182, %v1176
    %v1831 = vpack.c.b16 %v1183, %v1177
    %v1832 = vpack.c.b16 %v1184, %v1178
    %v1833 = vpack.c.b16 %v1185, %v1179
    %v1834 = vpack.c.b16 %v1186, %v1180
    %v1835 = vpack.c.b16 %v1193, %v1187
    %v1836 = vpack.c.b16 %v1194, %v1188
    %v1837 = vpack.c.b16 %v1195, %v1189
    %v1838 = vpack.c.b16 %v1196, %v1190
    %v1839 = vpack.c.b16 %v1197, %v1191
    %v1840 = vpack.c.b16 %v1198, %v1192
    %v1841 = vpack.c.b16 %v1205, %v1199
    %v1842 = vpack.c.b16 %v1206, %v1200
    %v1843 = vpack.c.b16 %v1207, %v1201
    %v1844 = vpack.c.b16 %v1208, %v1202
    %v1845 = vpack.c.b16 %v1209, %v1203
    %v1846 = vpack.c.b16 %v1210, %v1204
    %v1847 = vpack.c.b16 %v1217, %v1211
    %v1848 = vpack.c.b16 %v1218, %v1212
    %v1849 = vpack.c.b16 %v1219, %v1213
    %v1850 = vpack.c.b16 %v1220, %v1214
    %v1851 = vpack.c.b16 %v1221, %v1215
    %v1852 = vpack.c.b16 %v1222, %v1216
    %v1853 = vpack.c.b16 %v1229, %v1223
    %v1854 = vpack.c.b16 %v1230, %v1224
    %v1855 = vpack.c.b16 %v1231, %v1225
    %v1856 = vpack.c.b16 %v1232, %v1226
    %v1857 = vpack.c.b16 %v1233, %v1227
    %v1858 = vpack.c.b16 %v1234, %v1228
    %v1859 = vpack.c.b16 %v1241, %v1235
    %v1860 = vpack.c.b16 %v1242, %v1236
    %v1861 = vpack.c.b16 %v1243, %v1237
    %v1862 = vpack.c.b16 %v1244, %v1238
    %v1863 = vpack.c.b16 %v1245, %v1239
    %v1864 = vpack.c.b16 %v1246, %v1240
    %v1865 = vpack.c.b16 %v1253, %v1247
    %v1866 = vpack.c.b16 %v1254, %v1248
    %v1867 = vpack.c.b16 %v1255, %v1249
    %v1868 = vpack.c.b16 %v1256, %v1250
    %v1869 = vpack.c.b16 %v1257, %v1251
    %v1870 = vpack.c.b16 %v1258, %v1252
    %v1871 = vpack.c.b16 %v1265, %v1259
    %v1872 = vpack.c.b16 %v1266, %v1260
    %v1873 = vpack.c.b16 %v1267, %v1261
    %v1874 = vpack.c.b16 %v1268, %v1262
    %v1875 = vpack.c.b16 %v1269, %v1263
    %v1876 = vpack.c.b16 %v1270, %v1264
    %v1877 = vpack.c.b16 %v1277, %v1271
    %v1878 = vpack.c.b16 %v1278, %v1272
    %v1879 = vpack.c.b16 %v1279, %v1273
    %v1880 = vpack.c.b16 %v1280, %v1274
    %v1881 = vpack.c.b16 %v1281, %v1275
    %v1882 = vpack.c.b16 %v1282, %v1276
    %v1883 = vpack.c.b16 %v1289, %v1283
    %v1884 = vpack.c.b16 %v1290, %v1284
    %v1885 = vpack.c.b16 %v1291, %v1285
    %v1886 = vpack.c.b16 %v1292, %v1286
    %v1887 = vpack.c.b16 %v1293, %v1287
    %v1888 = vpack.c.b16 %v1294, %v1288
    %v1889 = vpack.c.b16 %v1301, %v1295
    %v1890 = vpack.c.b16 %v1302, %v1296
    %v1891 = vpack.c.b16 %v1303, %v1297
    %v1892 = vpack.c.b16 %v1304, %v1298
    %v1893 = vpack.c.b16 %v1305, %v1299
    %v1894 = vpack.c.b16 %v1306, %v1300
    %v1895 = vpack.c.b16 %v1313, %v1307
    %v1896 = vpack.c.b16 %v1314, %v1308
    %v1897 = vpack.c.b16 %v1315, %v1309
    %v1898 = vpack.c.b16 %v1316, %v1310
    %v1899 = vpack.c.b16 %v1317, %v1311
    %v1900 = vpack.c.b16 %v1318, %v1312
    %v1901 = vpack.c.b16 %v1325, %v1319
    %v1902 = vpack.c.b16 %v1326, %v1320
    %v1903 = vpack.c.b16 %v1327, %v1321
    %v1904 = vpack.c.b16 %v1328, %v1322
    %v1905 = vpack.c.b16 %v1329, %v1323
    %v1906 = vpack.c.b16 %v1330, %v1324
    %v1907 = vpack.c.b16 %v1337, %v1331
    %v1908 = vpack.c.b16 %v1338, %v1332
    %v1909 = vpack.c.b16 %v1339, %v1333
    %v1910 = vpack.c.b16 %v1340, %v1334
    %v1911 = vpack.c.b16 %v1341, %v1335
    %v1912 = vpack.c.b16 %v1342, %v1336
    %v1913 = vpack.c.b16 %v1349, %v1343
    %v1914 = vpack.c.b16 %v1350, %v1344
    %v1915 = vpack.c.b16 %v1351, %v1345
    %v1916 = vpack.c.b16 %v1352, %v1346
    %v1917 = vpack.c.b16 %v1353, %v1347
    %v1918 = vpack.c.b16 %v1354, %v1348
    %v1919 = vpack.c.b16 %v1361, %v1355
    %v1920 = vpack.c.b16 %v1362, %v1356
    %v1921 = vpack.c.b16 %v1363, %v1357
    %v1922 = vpack.c.b16 %v1364, %v1358
    %v1923 = vpack.c.b16 %v1365, %v1359
    %v1924 = vpack.c.b16 %v1366, %v1360
    %v1925 = vpack.c.b16 %v1373, %v1367
    %v1926 = vpack.c.b16 %v1374, %v1368
    %v1927 = vpack.c.b16 %v1375, %v1369
    %v1928 = vpack.c.b16 %v1376, %v1370
    %v1929 = vpack.c.b16 %v1377, %v1371
    %v1930 = vpack.c.b16 %v1378, %v1372
    %v1931 = vpack.c.b16 %v1385, %v1379
    %v1932 = vpack.c.b16 %v1386, %v1380
    %v1933 = vpack.c.b16 %v1387, %v1381
    %v1934 = vpack.c.b16 %v1388, %v1382
    %v1935 = vpack.c.b16 %v1389, %v1383
    %v1936 = vpack.c.b16 %v1390, %v1384
    %v1937 = vpack.c.b16 %v1397, %v1391
    %v1938 = vpack.c.b16 %v1398, %v1392
    %v1939 = vpack.c.b16 %v1399, %v1393
    %v1940 = vpack.c.b16 %v1400, %v1394
    %v1941 = vpack.c.b16 %v1401, %v1395
    %v1942 = vpack.c.b16 %v1402, %v1396
    %v1943 = vpack.c.b16 %v1409, %v1403
    %v1944 = vpack.c.b16 %v1410, %v1404
    %v1945 = vpack.c.b16 %v1411, %v1405
    %v1946 = vpack.c.b16 %v1412, %v1406
    %v1947 = vpack.c.b16 %v1413, %v1407
    %v1948 = vpack.c.b16 %v1414, %v1408
    %v1949 = vpack.c.b16 %v1421, %v1415
    %v1950 = vpack.c.b16 %v1422, %v1416
    %v1951 = vpack.c.b16 %v1423, %v1417
    %v1952 = vpack.c.b16 %v1424, %v1418
    %v1953 = vpack.c.b16 %v1425, %v1419
    %v1954 = vpack.c.b16 %v1426, %v1420
    %v1955 = vpack.c.b16 %v1433, %v1427
    %v1956 = vpack.c.b16 %v1434, %v1428
    %v1957 = vpack.c.b16 %v1435, %v1429
    %v1958 = vpack.c.b16 %v1436, %v1430
    %v1959 = vpack.c.b16 %v1437, %v1431
    %v1960 = vpack.c.b16 %v1438, %v1432
    %v1961 = vpack.c.b16 %v1445, %v1439
    %v1962 = vpack.c.b16 %v1446, %v1440
    %v1963 = vpack.c.b16 %v1447, %v1441
    %v1964 = vpack.c.b16 %v1448, %v1442
    %v1965 = vpack.c.b16 %v1449, %v1443
    %v1966 = vpack.c.b16 %v1450, %v1444
    %v1967 = vpack.c.b16 %v1457, %v1451
    %v1968 = vpack.c.b16 %v1458, %v1452
    %v1969 = vpack.c.b16 %v1459, %v1453
    %v1970 = vpack.c.b16 %v1460, %v1454
    %v1971 = vpack.c.b16 %v1461, %v1455
    %v1972 = vpack.c.b16 %v1462, %v1456
    %v1973 = vpack.c.b16 %v1469, %v1463
    %v1974 = vpack.c.b16 %v1470, %v1464
    %v1975 = vpack.c.b16 %v1471, %v1465
    %v1976 = vpack.c.b16 %v1472, %v1466
    %v1977 = vpack.c.b16 %v1473, %v1467
    %v1978 = vpack.c.b16 %v1474, %v1468
    %v1979 = vpack.c.b16 %v1481, %v1475
    %v1980 = vpack.c.b16 %v1482, %v1476
    %v1981 = vpack.c.b16 %v1483, %v1477
    %v1982 = vpack.c.b16 %v1484, %v1478
    %v1983 = vpack.c.b16 %v1485, %v1479
    %v1984 = vpack.c.b16 %v1486, %v1480
    %v1985 = vpack.c.b16 %v1493, %v1487
    %v1986 = vpack.c.b16 %v1494, %v1488
    %v1987 = vpack.c.b16 %v1495, %v1489
    %v1988 = vpack.c.b16 %v1496, %v1490
    %v1989 = vpack.c.b16 %v1497, %v1491
    %v1990 = vpack.c.b16 %v1498, %v1492
    %v1991 = vpack.c.b16 %v1505, %v1499
    %v1992 = vpack.c.b16 %v1506, %v1500
    %v1993 = vpack.c.b16 %v1507, %v1501
    %v1994 = vpack.c.b16 %v1508, %v1502
    %v1995 = vpack.c.b16 %v1509, %v1503
    %v1996 = vpack.c.b16 %v1510, %v1504
    %v1997 = vpack.c.b16 %v1517, %v1511
    %v1998 = vpack.c.b16 %v1518, %v1512
    %v1999 = vpack.c.b16 %v1519, %v1513
    %v2000 = vpack.c.b16 %v1520, %v1514
    %v2001 = vpack.c.b16 %v1521, %v1515
    %v2002 = vpack.c.b16 %v1522, %v1516
    %v2003 = vpack.c.b16 %v1529, %v1523
    %v2004 = vpack.c.b16 %v1530, %v1524
    %v2005 = vpack.c.b16 %v1531, %v1525
    %v2006 = vpack.c.b16 %v1532, %v1526
    %v2007 = vpack.c.b16 %v1533, %v1527
    %v2008 = vpack.c.b16 %v1534, %v1528
    %v2009 = vpack.c.b16 %v1541, %v1535
    %v2010 = vpack.c.b16 %v1542, %v1536
    %v2011 = vpack.c.b16 %v1543, %v1537
    %v2012 = vpack.c.b16 %v1544, %v1538
    %v2013 = vpack.c.b16 %v1545, %v1539
    %v2014 = vpack.c.b16 %v1546, %v1540
    %v2015 = vpack.c.b16 %v1553, %v1547
    %v2016 = vpack.c.b16 %v1554, %v1548
    %v2017 = vpack.c.b16 %v1555, %v1549
    %v2018 = vpack.c.b16 %v1556, %v1550
    %v2019 = vpack.c.b16 %v1557, %v1551
    %v2020 = vpack.c.b16 %v1558, %v1552
    %v2021 = vpack.c.b16 %v1565, %v1559
    %v2022 = vpack.c.b16 %v1566, %v1560
    %v2023 = vpack.c.b16 %v1567, %v1561
    %v2024 = vpack.c.b16 %v1568, %v1562
    %v2025 = vpack.c.b16 %v1569, %v1563
    %v2026 = vpack.c.b16 %v1570, %v1564
    %v2027 = vpack.c.b16 %v1577, %v1571
    %v2028 = vpack.c.b16 %v1578, %v1572
    %v2029 = vpack.c.b16 %v1579, %v1573
    %v2030 = vpack.c.b16 %v1580, %v1574
    %v2031 = vpack.c.b16 %v1581, %v1575
    %v2032 = vpack.c.b16 %v1582, %v1576
    %v2033 = vpack.c.b16 %v1589, %v1583
    %v2034 = vpack.c.b16 %v1590, %v1584
    %v2035 = vpack.c.b16 %v1591, %v1585
    %v2036 = vpack.c.b16 %v1592, %v1586
    %v2037 = vpack.c.b16 %v1593, %v1587
    %v2038 = vpack.c.b16 %v1594, %v1588
    %v2039 = vpack.c.b16 %v1601, %v1595
    %v2040 = vpack.c.b16 %v1602, %v1596
    %v2041 = vpack.c.b16 %v1603, %v1597
    %v2042 = vpack.c.b16 %v1604, %v1598
    %v2043 = vpack.c.b16 %v1605, %v1599
    %v2044 = vpack.c.b16 %v1606, %v1600
    %v2045 = vpack.c.b16 %v1613, %v1607
    %v2046 = vpack.c.b16 %v1614, %v1608
    %v2047 = vpack.c.b16 %v1615, %v1609
    %v2048 = vpack.c.b16 %v1616, %v1610
    %v2049 = vpack.c.b16 %v1617, %v1611
    %v2050 = vpack.c.b16 %v1618, %v1612
    %v2051 = vpack.c.b16 %v1625, %v1619
    %v2052 = vpack.c.b16 %v1626, %v1620
    %v2053 = vpack.c.b16 %v1627, %v1621
    %v2054 = vpack.c.b16 %v1628, %v1622
    %v2055 = vpack.c.b16 %v1629, %v1623
    %v2056 = vpack.c.b16 %v1630, %v1624
    %v2057 = vpack.c.b16 %v1637, %v1631
    %v2058 = vpack.c.b16 %v1638, %v1632
    %v2059 = vpack.c.b16 %v1639, %v1633
    %v2060 = vpack.c.b16 %v1640, %v1634
    %v2061 = vpack.c.b16 %v1641, %v1635
    %v2062 = vpack.c.b16 %v1642, %v1636
    %v2063 = vpack.c.b16 %v1649, %v1643
    %v2064 = vpack.c.b16 %v1650, %v1644
    %v2065 = vpack.c.b16 %v1651, %v1645
    %v2066 = vpack.c.b16 %v1652, %v1646
    %v2067 = vpack.c.b16 %v1653, %v1647
    %v2068 = vpack.c.b16 %v1654, %v1648
    %v2069 = vpack.c.b16 %v1661, %v1655
    %v2070 = vpack.c.b16 %v1662, %v1656
    %v2071 = vpack.c.b16 %v1663, %v1657
    %v2072 = vpack.c.b16 %v1664, %v1658
    %v2073 = vpack.c.b16 %v1665, %v1659
    %v2074 = vpack.c.b16 %v1666, %v1660
    %v2075 = vpack.c.b16 %v1673, %v1667
    %v2076 = vpack.c.b16 %v1674, %v1668
    %v2077 = vpack.c.b16 %v1675, %v1669
    %v2078 = vpack.c.b16 %v1676, %v1670
    %v2079 = vpack.c.b16 %v1677, %v1671
    %v2080 = vpack.c.b16 %v1678, %v1672
    %v2081 = vpack.c.b16 %v1685, %v1679
    %v2082 = vpack.c.b16 %v1686, %v1680
    %v2083 = vpack.c.b16 %v1687, %v1681
    %v2084 = vpack.c.b16 %v1688, %v1682
    %v2085 = vpack.c.b16 %v1689, %v1683
    %v2086 = vpack.c.b16 %v1690, %v1684
    %v2087 = vpack.c.b16 %v1697, %v1691
    %v2088 = vpack.c.b16 %v1698, %v1692
    %v2089 = vpack.c.b16 %v1699, %v1693
    %v2090 = vpack.c.b16 %v1700, %v1694
    %v2091 = vpack.c.b16 %v1701, %v1695
    %v2092 = vpack.c.b16 %v1702, %v1696
    %v2093 = vpack.c.b16 %v1709, %v1703
    %v2094 = vpack.c.b16 %v1710, %v1704
    %v2095 = vpack.c.b16 %v1711, %v1705
    %v2096 = vpack.c.b16 %v1712, %v1706
    %v2097 = vpack.c.b16 %v1713, %v1707
    %v2098 = vpack.c.b16 %v1714, %v1708
    %2483 = vmatprep.subr.bf16.mxu0 %v1716
    %2484 = vmatpush1.bf16.msra.mxu0 %v1715
    %2485 = vmatprep.subr.bf16.mxu0 %v1722
    %2486 = vmatpush1.bf16.msra.mxu0 %v1721
    %2487 = vmatprep.subr.bf16.mxu0 %v1728
    %2488 = vmatpush1.bf16.msra.mxu0 %v1727
    %2489 = vmatprep.subr.bf16.mxu0 %v1734
    %2490 = vmatpush1.bf16.msra.mxu0 %v1733
    %2491 = vmatprep.subr.bf16.mxu0 %v1740
    %2492 = vmatpush1.bf16.msra.mxu0 %v1739
    %2493 = vmatprep.subr.bf16.mxu0 %v1746
    %2494 = vmatpush1.bf16.msra.mxu0 %v1745
    %2495 = vmatprep.subr.bf16.mxu0 %v1752
    %2496 = vmatpush1.bf16.msra.mxu0 %v1751
    %2497 = vmatprep.subr.bf16.mxu0 %v1758
    %2498 = vmatpush1.bf16.msra.mxu0 %v1757
    %2499 = vmatprep.subr.bf16.mxu0 %v1764
    %2500 = vmatpush1.bf16.msra.mxu0 %v1763
    %2501 = vmatprep.subr.bf16.mxu0 %v1770
    %2502 = vmatpush1.bf16.msra.mxu0 %v1769
    %2503 = vmatprep.subr.bf16.mxu0 %v1776
    %2504 = vmatpush1.bf16.msra.mxu0 %v1775
    %2505 = vmatprep.subr.bf16.mxu0 %v1782
    %2506 = vmatpush1.bf16.msra.mxu0 %v1781
    %2507 = vmatprep.subr.bf16.mxu0 %v1788
    %2508 = vmatpush1.bf16.msra.mxu0 %v1787
    %2509 = vmatprep.subr.bf16.mxu0 %v1794
    %2510 = vmatpush1.bf16.msra.mxu0 %v1793
    %2511 = vmatprep.subr.bf16.mxu0 %v1800
    %2512 = vmatpush1.bf16.msra.mxu0 %v1799
    %2513 = vmatprep.subr.bf16.mxu0 %v1806
    %2514 = vmatpush1.bf16.msra.mxu0 %v1805
    %2515 = vmatprep.mubr.bf16.mxu0 %v548
    %2516 = vmatmul.mubr.bf16.gmra.mrb[0].mxu0 %v547
    %v2517 = vpop.f32.mrb[0].mxu0
    %v2518 = vadd.f32 %v508, %v2517
    %v2519 = vpop.f32.mrb[0].mxu0
    %v2520 = vadd.f32 %v512, %v2519
    %v2521 = vpop.f32.mrb[0].mxu0
    %v2522 = vpop.f32.mrb[0].mxu0
    %2523 = vdwg.mxu0
    %2524 = vmatprep.subr.bf16.mxu0 %v1812
    %2525 = vmatpush1.bf16.msra.mxu0 %v1811
    %2526 = vmatprep.subr.bf16.mxu0 %v1818
    %2527 = vmatpush1.bf16.msra.mxu0 %v1817
    %2528 = vmatprep.subr.bf16.mxu0 %v1824
    %2529 = vmatpush1.bf16.msra.mxu0 %v1823
    %2530 = vmatprep.subr.bf16.mxu0 %v1830
    %2531 = vmatpush1.bf16.msra.mxu0 %v1829
    %2532 = vmatprep.subr.bf16.mxu0 %v1836
    %2533 = vmatpush1.bf16.msra.mxu0 %v1835
    %2534 = vmatprep.subr.bf16.mxu0 %v1842
    %2535 = vmatpush1.bf16.msra.mxu0 %v1841
    %2536 = vmatprep.subr.bf16.mxu0 %v1848
    %2537 = vmatpush1.bf16.msra.mxu0 %v1847
    %2538 = vmatprep.subr.bf16.mxu0 %v1854
    %2539 = vmatpush1.bf16.msra.mxu0 %v1853
    %2540 = vmatprep.subr.bf16.mxu0 %v1860
    %2541 = vmatpush1.bf16.msra.mxu0 %v1859
    %2542 = vmatprep.subr.bf16.mxu0 %v1866
    %2543 = vmatpush1.bf16.msra.mxu0 %v1865
    %2544 = vmatprep.subr.bf16.mxu0 %v1872
    %2545 = vmatpush1.bf16.msra.mxu0 %v1871
    %2546 = vmatprep.subr.bf16.mxu0 %v1878
    %2547 = vmatpush1.bf16.msra.mxu0 %v1877
    %2548 = vmatprep.subr.bf16.mxu0 %v1884
    %2549 = vmatpush1.bf16.msra.mxu0 %v1883
    %2550 = vmatprep.subr.bf16.mxu0 %v1890
    %2551 = vmatpush1.bf16.msra.mxu0 %v1889
    %2552 = vmatprep.subr.bf16.mxu0 %v1896
    %2553 = vmatpush1.bf16.msra.mxu0 %v1895
    %2554 = vmatprep.subr.bf16.mxu0 %v1902
    %2555 = vmatpush1.bf16.msra.mxu0 %v1901
    %2556 = vmatprep.mubr.bf16.mxu0 %v550
    %2557 = vmatmul.mubr.bf16.gmra.mrb[0].mxu0 %v549
    %v2558 = vpop.f32.mrb[0].mxu0
    %v2559 = vadd.f32 %v2518, %v2558
    %v2560 = vpop.f32.mrb[0].mxu0
    %v2561 = vadd.f32 %v2520, %v2560
    %v2562 = vpop.f32.mrb[0].mxu0
    %v2563 = vpop.f32.mrb[0].mxu0
    %2564 = vdwg.mxu0
    %2565 = vmatprep.subr.bf16.mxu0 %v1908
    %2566 = vmatpush1.bf16.msra.mxu0 %v1907
    %2567 = vmatprep.subr.bf16.mxu0 %v1914
    %2568 = vmatpush1.bf16.msra.mxu0 %v1913
    %2569 = vmatprep.subr.bf16.mxu0 %v1920
    %2570 = vmatpush1.bf16.msra.mxu0 %v1919
    %2571 = vmatprep.subr.bf16.mxu0 %v1926
    %2572 = vmatpush1.bf16.msra.mxu0 %v1925
    %2573 = vmatprep.subr.bf16.mxu0 %v1932
    %2574 = vmatpush1.bf16.msra.mxu0 %v1931
    %2575 = vmatprep.subr.bf16.mxu0 %v1938
    %2576 = vmatpush1.bf16.msra.mxu0 %v1937
    %2577 = vmatprep.subr.bf16.mxu0 %v1944
    %2578 = vmatpush1.bf16.msra.mxu0 %v1943
    %2579 = vmatprep.subr.bf16.mxu0 %v1950
    %2580 = vmatpush1.bf16.msra.mxu0 %v1949
    %2581 = vmatprep.subr.bf16.mxu0 %v1956
    %2582 = vmatpush1.bf16.msra.mxu0 %v1955
    %2583 = vmatprep.subr.bf16.mxu0 %v1962
    %2584 = vmatpush1.bf16.msra.mxu0 %v1961
    %2585 = vmatprep.subr.bf16.mxu0 %v1968
    %2586 = vmatpush1.bf16.msra.mxu0 %v1967
    %2587 = vmatprep.subr.bf16.mxu0 %v1974
    %2588 = vmatpush1.bf16.msra.mxu0 %v1973
    %2589 = vmatprep.subr.bf16.mxu0 %v1980
    %2590 = vmatpush1.bf16.msra.mxu0 %v1979
    %2591 = vmatprep.subr.bf16.mxu0 %v1986
    %2592 = vmatpush1.bf16.msra.mxu0 %v1985
    %2593 = vmatprep.subr.bf16.mxu0 %v1992
    %2594 = vmatpush1.bf16.msra.mxu0 %v1991
    %2595 = vmatprep.subr.bf16.mxu0 %v1998
    %2596 = vmatpush1.bf16.msra.mxu0 %v1997
    %2597 = vmatprep.mubr.bf16.mxu0 %v552
    %2598 = vmatmul.mubr.bf16.gmra.mrb[0].mxu0 %v551
    %v2599 = vpop.f32.mrb[0].mxu0
    %v2600 = vadd.f32 %v2559, %v2599
    %v2601 = vpop.f32.mrb[0].mxu0
    %v2602 = vadd.f32 %v2561, %v2601
    %v2603 = vpop.f32.mrb[0].mxu0
    %v2604 = vpop.f32.mrb[0].mxu0
    %2605 = vdwg.mxu0
    %2606 = vmatprep.subr.bf16.mxu0 %v2004
    %2607 = vmatpush1.bf16.msra.mxu0 %v2003
    %2608 = vmatprep.subr.bf16.mxu0 %v2010
    %2609 = vmatpush1.bf16.msra.mxu0 %v2009
    %2610 = vmatprep.subr.bf16.mxu0 %v2016
    %2611 = vmatpush1.bf16.msra.mxu0 %v2015
    %2612 = vmatprep.subr.bf16.mxu0 %v2022
    %2613 = vmatpush1.bf16.msra.mxu0 %v2021
    %2614 = vmatprep.subr.bf16.mxu0 %v2028
    %2615 = vmatpush1.bf16.msra.mxu0 %v2027
    %2616 = vmatprep.subr.bf16.mxu0 %v2034
    %2617 = vmatpush1.bf16.msra.mxu0 %v2033
    %2618 = vmatprep.subr.bf16.mxu0 %v2040
    %2619 = vmatpush1.bf16.msra.mxu0 %v2039
    %2620 = vmatprep.subr.bf16.mxu0 %v2046
    %2621 = vmatpush1.bf16.msra.mxu0 %v2045
    %2622 = vmatprep.subr.bf16.mxu0 %v2052
    %2623 = vmatpush1.bf16.msra.mxu0 %v2051
    %2624 = vmatprep.subr.bf16.mxu0 %v2058
    %2625 = vmatpush1.bf16.msra.mxu0 %v2057
    %2626 = vmatprep.subr.bf16.mxu0 %v2064
    %2627 = vmatpush1.bf16.msra.mxu0 %v2063
    %2628 = vmatprep.subr.bf16.mxu0 %v2070
    %2629 = vmatpush1.bf16.msra.mxu0 %v2069
    %2630 = vmatprep.subr.bf16.mxu0 %v2076
    %2631 = vmatpush1.bf16.msra.mxu0 %v2075
    %2632 = vmatprep.subr.bf16.mxu0 %v2082
    %2633 = vmatpush1.bf16.msra.mxu0 %v2081
    %2634 = vmatprep.subr.bf16.mxu0 %v2088
    %2635 = vmatpush1.bf16.msra.mxu0 %v2087
    %2636 = vmatprep.subr.bf16.mxu0 %v2094
    %2637 = vmatpush1.bf16.msra.mxu0 %v2093
    %2638 = vmatprep.mubr.bf16.mxu0 %v554
    %2639 = vmatmul.mubr.bf16.gmra.mrb[0].mxu0 %v553
    %v2640 = vpop.f32.mrb[0].mxu0
    %v2641 = vadd.f32 %v2600, %v2640
    %v2642 = vpop.f32.mrb[0].mxu0
    %v2643 = vadd.f32 %v2602, %v2642
    %v2644 = vpop.f32.mrb[0].mxu0
    %v2645 = vpop.f32.mrb[0].mxu0
    %2646 = vdwg.mxu0
    %2647 = vmatprep.subr.bf16.mxu0 %v1718
    %2648 = vmatpush1.bf16.msra.mxu0 %v1717
    %2649 = vmatprep.subr.bf16.mxu0 %v1724
    %2650 = vmatpush1.bf16.msra.mxu0 %v1723
    %2651 = vmatprep.subr.bf16.mxu0 %v1730
    %2652 = vmatpush1.bf16.msra.mxu0 %v1729
    %2653 = vmatprep.subr.bf16.mxu0 %v1736
    %2654 = vmatpush1.bf16.msra.mxu0 %v1735
    %2655 = vmatprep.subr.bf16.mxu0 %v1742
    %2656 = vmatpush1.bf16.msra.mxu0 %v1741
    %2657 = vmatprep.subr.bf16.mxu0 %v1748
    %2658 = vmatpush1.bf16.msra.mxu0 %v1747
    %2659 = vmatprep.subr.bf16.mxu0 %v1754
    %2660 = vmatpush1.bf16.msra.mxu0 %v1753
    %2661 = vmatprep.subr.bf16.mxu0 %v1760
    %2662 = vmatpush1.bf16.msra.mxu0 %v1759
    %2663 = vmatprep.subr.bf16.mxu0 %v1766
    %2664 = vmatpush1.bf16.msra.mxu0 %v1765
    %2665 = vmatprep.subr.bf16.mxu0 %v1772
    %2666 = vmatpush1.bf16.msra.mxu0 %v1771
    %2667 = vmatprep.subr.bf16.mxu0 %v1778
    %2668 = vmatpush1.bf16.msra.mxu0 %v1777
    %2669 = vmatprep.subr.bf16.mxu0 %v1784
    %2670 = vmatpush1.bf16.msra.mxu0 %v1783
    %2671 = vmatprep.subr.bf16.mxu0 %v1790
    %2672 = vmatpush1.bf16.msra.mxu0 %v1789
    %2673 = vmatprep.subr.bf16.mxu0 %v1796
    %2674 = vmatpush1.bf16.msra.mxu0 %v1795
    %2675 = vmatprep.subr.bf16.mxu0 %v1802
    %2676 = vmatpush1.bf16.msra.mxu0 %v1801
    %2677 = vmatprep.subr.bf16.mxu0 %v1808
    %2678 = vmatpush1.bf16.msra.mxu0 %v1807
    %2679 = vmatprep.mubr.bf16.mxu0 %v548
    %2680 = vmatmul.mubr.bf16.gmra.mrb[0].mxu0 %v547
    %v2681 = vpop.f32.mrb[0].mxu0
    %v2682 = vadd.f32 %v516, %v2681
    %v2683 = vpop.f32.mrb[0].mxu0
    %v2684 = vadd.f32 %v520, %v2683
    %v2685 = vpop.f32.mrb[0].mxu0
    %v2686 = vpop.f32.mrb[0].mxu0
    %2687 = vdwg.mxu0
    %2688 = vmatprep.subr.bf16.mxu0 %v1814
    %2689 = vmatpush1.bf16.msra.mxu0 %v1813
    %2690 = vmatprep.subr.bf16.mxu0 %v1820
    %2691 = vmatpush1.bf16.msra.mxu0 %v1819
    %2692 = vmatprep.subr.bf16.mxu0 %v1826
    %2693 = vmatpush1.bf16.msra.mxu0 %v1825
    %2694 = vmatprep.subr.bf16.mxu0 %v1832
    %2695 = vmatpush1.bf16.msra.mxu0 %v1831
    %2696 = vmatprep.subr.bf16.mxu0 %v1838
    %2697 = vmatpush1.bf16.msra.mxu0 %v1837
    %2698 = vmatprep.subr.bf16.mxu0 %v1844
    %2699 = vmatpush1.bf16.msra.mxu0 %v1843
    %2700 = vmatprep.subr.bf16.mxu0 %v1850
    %2701 = vmatpush1.bf16.msra.mxu0 %v1849
    %2702 = vmatprep.subr.bf16.mxu0 %v1856
    %2703 = vmatpush1.bf16.msra.mxu0 %v1855
    %2704 = vmatprep.subr.bf16.mxu0 %v1862
    %2705 = vmatpush1.bf16.msra.mxu0 %v1861
    %2706 = vmatprep.subr.bf16.mxu0 %v1868
    %2707 = vmatpush1.bf16.msra.mxu0 %v1867
    %2708 = vmatprep.subr.bf16.mxu0 %v1874
    %2709 = vmatpush1.bf16.msra.mxu0 %v1873
    %2710 = vmatprep.subr.bf16.mxu0 %v1880
    %2711 = vmatpush1.bf16.msra.mxu0 %v1879
    %2712 = vmatprep.subr.bf16.mxu0 %v1886
    %2713 = vmatpush1.bf16.msra.mxu0 %v1885
    %2714 = vmatprep.subr.bf16.mxu0 %v1892
    %2715 = vmatpush1.bf16.msra.mxu0 %v1891
    %2716 = vmatprep.subr.bf16.mxu0 %v1898
    %2717 = vmatpush1.bf16.msra.mxu0 %v1897
    %2718 = vmatprep.subr.bf16.mxu0 %v1904
    %2719 = vmatpush1.bf16.msra.mxu0 %v1903
    %2720 = vmatprep.mubr.bf16.mxu0 %v550
    %2721 = vmatmul.mubr.bf16.gmra.mrb[0].mxu0 %v549
    %v2722 = vpop.f32.mrb[0].mxu0
    %v2723 = vadd.f32 %v2682, %v2722
    %v2724 = vpop.f32.mrb[0].mxu0
    %v2725 = vadd.f32 %v2684, %v2724
    %v2726 = vpop.f32.mrb[0].mxu0
    %v2727 = vpop.f32.mrb[0].mxu0
    %2728 = vdwg.mxu0
    %2729 = vmatprep.subr.bf16.mxu0 %v1910
    %2730 = vmatpush1.bf16.msra.mxu0 %v1909
    %2731 = vmatprep.subr.bf16.mxu0 %v1916
    %2732 = vmatpush1.bf16.msra.mxu0 %v1915
    %2733 = vmatprep.subr.bf16.mxu0 %v1922
    %2734 = vmatpush1.bf16.msra.mxu0 %v1921
    %2735 = vmatprep.subr.bf16.mxu0 %v1928
    %2736 = vmatpush1.bf16.msra.mxu0 %v1927
    %2737 = vmatprep.subr.bf16.mxu0 %v1934
    %2738 = vmatpush1.bf16.msra.mxu0 %v1933
    %2739 = vmatprep.subr.bf16.mxu0 %v1940
    %2740 = vmatpush1.bf16.msra.mxu0 %v1939
    %2741 = vmatprep.subr.bf16.mxu0 %v1946
    %2742 = vmatpush1.bf16.msra.mxu0 %v1945
    %2743 = vmatprep.subr.bf16.mxu0 %v1952
    %2744 = vmatpush1.bf16.msra.mxu0 %v1951
    %2745 = vmatprep.subr.bf16.mxu0 %v1958
    %2746 = vmatpush1.bf16.msra.mxu0 %v1957
    %2747 = vmatprep.subr.bf16.mxu0 %v1964
    %2748 = vmatpush1.bf16.msra.mxu0 %v1963
    %2749 = vmatprep.subr.bf16.mxu0 %v1970
    %2750 = vmatpush1.bf16.msra.mxu0 %v1969
    %2751 = vmatprep.subr.bf16.mxu0 %v1976
    %2752 = vmatpush1.bf16.msra.mxu0 %v1975
    %2753 = vmatprep.subr.bf16.mxu0 %v1982
    %2754 = vmatpush1.bf16.msra.mxu0 %v1981
    %2755 = vmatprep.subr.bf16.mxu0 %v1988
    %2756 = vmatpush1.bf16.msra.mxu0 %v1987
    %2757 = vmatprep.subr.bf16.mxu0 %v1994
    %2758 = vmatpush1.bf16.msra.mxu0 %v1993
    %2759 = vmatprep.subr.bf16.mxu0 %v2000
    %2760 = vmatpush1.bf16.msra.mxu0 %v1999
    %2761 = vmatprep.mubr.bf16.mxu0 %v552
    %2762 = vmatmul.mubr.bf16.gmra.mrb[0].mxu0 %v551
    %v2763 = vpop.f32.mrb[0].mxu0
    %v2764 = vadd.f32 %v2723, %v2763
    %v2765 = vpop.f32.mrb[0].mxu0
    %v2766 = vadd.f32 %v2725, %v2765
    %v2767 = vpop.f32.mrb[0].mxu0
    %v2768 = vpop.f32.mrb[0].mxu0
    %2769 = vdwg.mxu0
    %2770 = vmatprep.subr.bf16.mxu0 %v2006
    %2771 = vmatpush1.bf16.msra.mxu0 %v2005
    %2772 = vmatprep.subr.bf16.mxu0 %v2012
    %2773 = vmatpush1.bf16.msra.mxu0 %v2011
    %2774 = vmatprep.subr.bf16.mxu0 %v2018
    %2775 = vmatpush1.bf16.msra.mxu0 %v2017
    %2776 = vmatprep.subr.bf16.mxu0 %v2024
    %2777 = vmatpush1.bf16.msra.mxu0 %v2023
    %2778 = vmatprep.subr.bf16.mxu0 %v2030
    %2779 = vmatpush1.bf16.msra.mxu0 %v2029
    %2780 = vmatprep.subr.bf16.mxu0 %v2036
    %2781 = vmatpush1.bf16.msra.mxu0 %v2035
    %2782 = vmatprep.subr.bf16.mxu0 %v2042
    %2783 = vmatpush1.bf16.msra.mxu0 %v2041
    %2784 = vmatprep.subr.bf16.mxu0 %v2048
    %2785 = vmatpush1.bf16.msra.mxu0 %v2047
    %2786 = vmatprep.subr.bf16.mxu0 %v2054
    %2787 = vmatpush1.bf16.msra.mxu0 %v2053
    %2788 = vmatprep.subr.bf16.mxu0 %v2060
    %2789 = vmatpush1.bf16.msra.mxu0 %v2059
    %2790 = vmatprep.subr.bf16.mxu0 %v2066
    %2791 = vmatpush1.bf16.msra.mxu0 %v2065
    %2792 = vmatprep.subr.bf16.mxu0 %v2072
    %2793 = vmatpush1.bf16.msra.mxu0 %v2071
    %2794 = vmatprep.subr.bf16.mxu0 %v2078
    %2795 = vmatpush1.bf16.msra.mxu0 %v2077
    %2796 = vmatprep.subr.bf16.mxu0 %v2084
    %2797 = vmatpush1.bf16.msra.mxu0 %v2083
    %2798 = vmatprep.subr.bf16.mxu0 %v2090
    %2799 = vmatpush1.bf16.msra.mxu0 %v2089
    %2800 = vmatprep.subr.bf16.mxu0 %v2096
    %2801 = vmatpush1.bf16.msra.mxu0 %v2095
    %2802 = vmatprep.mubr.bf16.mxu0 %v554
    %2803 = vmatmul.mubr.bf16.gmra.mrb[0].mxu0 %v553
    %v2804 = vpop.f32.mrb[0].mxu0
    %v2805 = vadd.f32 %v2764, %v2804
    %v2806 = vpop.f32.mrb[0].mxu0
    %v2807 = vadd.f32 %v2766, %v2806
    %v2808 = vpop.f32.mrb[0].mxu0
    %v2809 = vpop.f32.mrb[0].mxu0
    %2810 = vdwg.mxu0
    %2811 = vmatprep.subr.bf16.mxu0 %v1720
    %2812 = vmatpush1.bf16.msra.mxu0 %v1719
    %2813 = vmatprep.subr.bf16.mxu0 %v1726
    %2814 = vmatpush1.bf16.msra.mxu0 %v1725
    %2815 = vmatprep.subr.bf16.mxu0 %v1732
    %2816 = vmatpush1.bf16.msra.mxu0 %v1731
    %2817 = vmatprep.subr.bf16.mxu0 %v1738
    %2818 = vmatpush1.bf16.msra.mxu0 %v1737
    %2819 = vmatprep.subr.bf16.mxu0 %v1744
    %2820 = vmatpush1.bf16.msra.mxu0 %v1743
    %2821 = vmatprep.subr.bf16.mxu0 %v1750
    %2822 = vmatpush1.bf16.msra.mxu0 %v1749
    %2823 = vmatprep.subr.bf16.mxu0 %v1756
    %2824 = vmatpush1.bf16.msra.mxu0 %v1755
    %2825 = vmatprep.subr.bf16.mxu0 %v1762
    %2826 = vmatpush1.bf16.msra.mxu0 %v1761
    %2827 = vmatprep.subr.bf16.mxu0 %v1768
    %2828 = vmatpush1.bf16.msra.mxu0 %v1767
    %2829 = vmatprep.subr.bf16.mxu0 %v1774
    %2830 = vmatpush1.bf16.msra.mxu0 %v1773
    %2831 = vmatprep.subr.bf16.mxu0 %v1780
    %2832 = vmatpush1.bf16.msra.mxu0 %v1779
    %2833 = vmatprep.subr.bf16.mxu0 %v1786
    %2834 = vmatpush1.bf16.msra.mxu0 %v1785
    %2835 = vmatprep.subr.bf16.mxu0 %v1792
    %2836 = vmatpush1.bf16.msra.mxu0 %v1791
    %2837 = vmatprep.subr.bf16.mxu0 %v1798
    %2838 = vmatpush1.bf16.msra.mxu0 %v1797
    %2839 = vmatprep.subr.bf16.mxu0 %v1804
    %2840 = vmatpush1.bf16.msra.mxu0 %v1803
    %2841 = vmatprep.subr.bf16.mxu0 %v1810
    %2842 = vmatpush1.bf16.msra.mxu0 %v1809
    %2843 = vmatprep.mubr.bf16.mxu0 %v548
    %2844 = vmatmul.mubr.bf16.gmra.mrb[0].mxu0 %v547
    %v2845 = vpop.f32.mrb[0].mxu0
    %v2846 = vadd.f32 %v524, %v2845
    %v2847 = vpop.f32.mrb[0].mxu0
    %v2848 = vadd.f32 %v528, %v2847
    %v2849 = vpop.f32.mrb[0].mxu0
    %v2850 = vpop.f32.mrb[0].mxu0
    %2851 = vdwg.mxu0
    %2852 = vmatprep.subr.bf16.mxu0 %v1816
    %2853 = vmatpush1.bf16.msra.mxu0 %v1815
    %2854 = vmatprep.subr.bf16.mxu0 %v1822
    %2855 = vmatpush1.bf16.msra.mxu0 %v1821
    %2856 = vmatprep.subr.bf16.mxu0 %v1828
    %2857 = vmatpush1.bf16.msra.mxu0 %v1827
    %2858 = vmatprep.subr.bf16.mxu0 %v1834
    %2859 = vmatpush1.bf16.msra.mxu0 %v1833
    %2860 = vmatprep.subr.bf16.mxu0 %v1840
    %2861 = vmatpush1.bf16.msra.mxu0 %v1839
    %2862 = vmatprep.subr.bf16.mxu0 %v1846
    %2863 = vmatpush1.bf16.msra.mxu0 %v1845
    %2864 = vmatprep.subr.bf16.mxu0 %v1852
    %2865 = vmatpush1.bf16.msra.mxu0 %v1851
    %2866 = vmatprep.subr.bf16.mxu0 %v1858
    %2867 = vmatpush1.bf16.msra.mxu0 %v1857
    %2868 = vmatprep.subr.bf16.mxu0 %v1864
    %2869 = vmatpush1.bf16.msra.mxu0 %v1863
    %2870 = vmatprep.subr.bf16.mxu0 %v1870
    %2871 = vmatpush1.bf16.msra.mxu0 %v1869
    %2872 = vmatprep.subr.bf16.mxu0 %v1876
    %2873 = vmatpush1.bf16.msra.mxu0 %v1875
    %2874 = vmatprep.subr.bf16.mxu0 %v1882
    %2875 = vmatpush1.bf16.msra.mxu0 %v1881
    %2876 = vmatprep.subr.bf16.mxu0 %v1888
    %2877 = vmatpush1.bf16.msra.mxu0 %v1887
    %2878 = vmatprep.subr.bf16.mxu0 %v1894
    %2879 = vmatpush1.bf16.msra.mxu0 %v1893
    %2880 = vmatprep.subr.bf16.mxu0 %v1900
    %2881 = vmatpush1.bf16.msra.mxu0 %v1899
    %2882 = vmatprep.subr.bf16.mxu0 %v1906
    %2883 = vmatpush1.bf16.msra.mxu0 %v1905
    %2884 = vmatprep.mubr.bf16.mxu0 %v550
    %2885 = vmatmul.mubr.bf16.gmra.mrb[0].mxu0 %v549
    %v2886 = vpop.f32.mrb[0].mxu0
    %v2887 = vadd.f32 %v2846, %v2886
    %v2888 = vpop.f32.mrb[0].mxu0
    %v2889 = vadd.f32 %v2848, %v2888
    %v2890 = vpop.f32.mrb[0].mxu0
    %v2891 = vpop.f32.mrb[0].mxu0
    %2892 = vdwg.mxu0
    %2893 = vmatprep.subr.bf16.mxu0 %v1912
    %2894 = vmatpush1.bf16.msra.mxu0 %v1911
    %2895 = vmatprep.subr.bf16.mxu0 %v1918
    %2896 = vmatpush1.bf16.msra.mxu0 %v1917
    %2897 = vmatprep.subr.bf16.mxu0 %v1924
    %2898 = vmatpush1.bf16.msra.mxu0 %v1923
    %2899 = vmatprep.subr.bf16.mxu0 %v1930
    %2900 = vmatpush1.bf16.msra.mxu0 %v1929
    %2901 = vmatprep.subr.bf16.mxu0 %v1936
    %2902 = vmatpush1.bf16.msra.mxu0 %v1935
    %2903 = vmatprep.subr.bf16.mxu0 %v1942
    %2904 = vmatpush1.bf16.msra.mxu0 %v1941
    %2905 = vmatprep.subr.bf16.mxu0 %v1948
    %2906 = vmatpush1.bf16.msra.mxu0 %v1947
    %2907 = vmatprep.subr.bf16.mxu0 %v1954
    %2908 = vmatpush1.bf16.msra.mxu0 %v1953
    %2909 = vmatprep.subr.bf16.mxu0 %v1960
    %2910 = vmatpush1.bf16.msra.mxu0 %v1959
    %2911 = vmatprep.subr.bf16.mxu0 %v1966
    %2912 = vmatpush1.bf16.msra.mxu0 %v1965
    %2913 = vmatprep.subr.bf16.mxu0 %v1972
    %2914 = vmatpush1.bf16.msra.mxu0 %v1971
    %2915 = vmatprep.subr.bf16.mxu0 %v1978
    %2916 = vmatpush1.bf16.msra.mxu0 %v1977
    %2917 = vmatprep.subr.bf16.mxu0 %v1984
    %2918 = vmatpush1.bf16.msra.mxu0 %v1983
    %2919 = vmatprep.subr.bf16.mxu0 %v1990
    %2920 = vmatpush1.bf16.msra.mxu0 %v1989
    %2921 = vmatprep.subr.bf16.mxu0 %v1996
    %2922 = vmatpush1.bf16.msra.mxu0 %v1995
    %2923 = vmatprep.subr.bf16.mxu0 %v2002
    %2924 = vmatpush1.bf16.msra.mxu0 %v2001
    %2925 = vmatprep.mubr.bf16.mxu0 %v552
    %2926 = vmatmul.mubr.bf16.gmra.mrb[0].mxu0 %v551
    %v2927 = vpop.f32.mrb[0].mxu0
    %v2928 = vadd.f32 %v2887, %v2927
    %v2929 = vpop.f32.mrb[0].mxu0
    %v2930 = vadd.f32 %v2889, %v2929
    %v2931 = vpop.f32.mrb[0].mxu0
    %v2932 = vpop.f32.mrb[0].mxu0
    %2933 = vdwg.mxu0
    %2934 = vmatprep.subr.bf16.mxu0 %v2008
    %2935 = vmatpush1.bf16.msra.mxu0 %v2007
    %2936 = vmatprep.subr.bf16.mxu0 %v2014
    %2937 = vmatpush1.bf16.msra.mxu0 %v2013
    %2938 = vmatprep.subr.bf16.mxu0 %v2020
    %2939 = vmatpush1.bf16.msra.mxu0 %v2019
    %2940 = vmatprep.subr.bf16.mxu0 %v2026
    %2941 = vmatpush1.bf16.msra.mxu0 %v2025
    %2942 = vmatprep.subr.bf16.mxu0 %v2032
    %2943 = vmatpush1.bf16.msra.mxu0 %v2031
    %2944 = vmatprep.subr.bf16.mxu0 %v2038
    %2945 = vmatpush1.bf16.msra.mxu0 %v2037
    %2946 = vmatprep.subr.bf16.mxu0 %v2044
    %2947 = vmatpush1.bf16.msra.mxu0 %v2043
    %2948 = vmatprep.subr.bf16.mxu0 %v2050
    %2949 = vmatpush1.bf16.msra.mxu0 %v2049
    %2950 = vmatprep.subr.bf16.mxu0 %v2056
    %2951 = vmatpush1.bf16.msra.mxu0 %v2055
    %2952 = vmatprep.subr.bf16.mxu0 %v2062
    %2953 = vmatpush1.bf16.msra.mxu0 %v2061
    %2954 = vmatprep.subr.bf16.mxu0 %v2068
    %2955 = vmatpush1.bf16.msra.mxu0 %v2067
    %2956 = vmatprep.subr.bf16.mxu0 %v2074
    %2957 = vmatpush1.bf16.msra.mxu0 %v2073
    %2958 = vmatprep.subr.bf16.mxu0 %v2080
    %2959 = vmatpush1.bf16.msra.mxu0 %v2079
    %2960 = vmatprep.subr.bf16.mxu0 %v2086
    %2961 = vmatpush1.bf16.msra.mxu0 %v2085
    %2962 = vmatprep.subr.bf16.mxu0 %v2092
    %2963 = vmatpush1.bf16.msra.mxu0 %v2091
    %2964 = vmatprep.subr.bf16.mxu0 %v2098
    %2965 = vmatpush1.bf16.msra.mxu0 %v2097
    %2966 = vmatprep.mubr.bf16.mxu0 %v554
    %2967 = vmatmul.mubr.bf16.gmra.mrb[0].mxu0 %v553
    %v2968 = vpop.f32.mrb[0].mxu0
    %v2969 = vadd.f32 %v2928, %v2968
    %v2970 = vpop.f32.mrb[0].mxu0
    %v2971 = vadd.f32 %v2930, %v2970
    %v2972 = vpop.f32.mrb[0].mxu0
    %v2973 = vpop.f32.mrb[0].mxu0
    %2974 = vdwg.mxu0
    %v2975 = vpack.c.bf16 %v2641, %v2641
    %v2976 = vpack.c.bf16 %v2643, %v2643
    %v2977 = vpack.c.bf16 %v2805, %v2805
    %v2978 = vpack.c.bf16 %v2807, %v2807
    %v2979 = vpack.c.bf16 %v2969, %v2969
    %v2980 = vpack.c.bf16 %v2971, %v2971
    %v2981 = vld [vmem:[#allocation8] sm:$0xff]
    %v2982 = vld [vmem:[#allocation8 + $0x8] sm:$0xff]
    %v2983 = vld [vmem:[#allocation8 + $0x10] sm:$0xff]
    %v2984 = vld [vmem:[#allocation8 + $0x18] sm:$0xff]
    %v2985 = vld [vmem:[#allocation8 + $0x20] sm:$0xff]
    %v2986 = vld [vmem:[#allocation8 + $0x28] sm:$0xff]
    %v2987 = vld [vmem:[#allocation8 + $0x30] sm:$0xff]
    %v2988 = vld [vmem:[#allocation8 + $0x38] sm:$0xff]
    %v2989 = vld [vmem:[#allocation8 + $0x40] sm:$0xff]
    %v2990 = vld [vmem:[#allocation8 + $0x48] sm:$0xff]
    %v2991 = vld [vmem:[#allocation8 + $0x50] sm:$0xff]
    %v2992 = vld [vmem:[#allocation8 + $0x58] sm:$0xff]
    %v2993 = vld [vmem:[#allocation8 + $0x60] sm:$0xff]
    %v2994 = vld [vmem:[#allocation8 + $0x68] sm:$0xff]
    %v2995 = vld [vmem:[#allocation8 + $0x70] sm:$0xff]
    %v2996 = vld [vmem:[#allocation8 + $0x78] sm:$0xff]
    %v2997 = vld [vmem:[#allocation8 + $0x80] sm:$0xff]
    %v2998 = vld [vmem:[#allocation8 + $0x88] sm:$0xff]
    %v2999 = vld [vmem:[#allocation8 + $0x90] sm:$0xff]
    %v3000 = vld [vmem:[#allocation8 + $0x98] sm:$0xff]
    %v3001 = vld [vmem:[#allocation8 + $0xa0] sm:$0xff]
    %v3002 = vld [vmem:[#allocation8 + $0xa8] sm:$0xff]
    %v3003 = vld [vmem:[#allocation8 + $0xb0] sm:$0xff]
    %v3004 = vld [vmem:[#allocation8 + $0xb8] sm:$0xff]
    %v3005 = vld [vmem:[#allocation8 + $0xc0] sm:$0xff]
    %v3006 = vld [vmem:[#allocation8 + $0xc8] sm:$0xff]
    %v3007 = vld [vmem:[#allocation8 + $0xd0] sm:$0xff]
    %v3008 = vld [vmem:[#allocation8 + $0xd8] sm:$0xff]
    %v3009 = vld [vmem:[#allocation8 + $0xe0] sm:$0xff]
    %v3010 = vld [vmem:[#allocation8 + $0xe8] sm:$0xff]
    %v3011 = vld [vmem:[#allocation8 + $0xf0] sm:$0xff]
    %v3012 = vld [vmem:[#allocation8 + $0xf8] sm:$0xff]
    %v3013 = vld [vmem:[#allocation8 + $0x100] sm:$0xff]
    %v3014 = vld [vmem:[#allocation8 + $0x108] sm:$0xff]
    %v3015 = vld [vmem:[#allocation8 + $0x110] sm:$0xff]
    %v3016 = vld [vmem:[#allocation8 + $0x118] sm:$0xff]
    %v3017 = vld [vmem:[#allocation8 + $0x120] sm:$0xff]
    %v3018 = vld [vmem:[#allocation8 + $0x128] sm:$0xff]
    %v3019 = vld [vmem:[#allocation8 + $0x130] sm:$0xff]
    %v3020 = vld [vmem:[#allocation8 + $0x138] sm:$0xff]
    %v3021 = vld [vmem:[#allocation8 + $0x140] sm:$0xff]
    %v3022 = vld [vmem:[#allocation8 + $0x148] sm:$0xff]
    %v3023 = vld [vmem:[#allocation8 + $0x150] sm:$0xff]
    %v3024 = vld [vmem:[#allocation8 + $0x158] sm:$0xff]
    %v3025 = vld [vmem:[#allocation8 + $0x160] sm:$0xff]
    %v3026 = vld [vmem:[#allocation8 + $0x168] sm:$0xff]
    %v3027 = vld [vmem:[#allocation8 + $0x170] sm:$0xff]
    %v3028 = vld [vmem:[#allocation8 + $0x178] sm:$0xff]
    %v3029 = vld [vmem:[#allocation8 + $0x180] sm:$0xff]
    %v3030 = vld [vmem:[#allocation8 + $0x188] sm:$0xff]
    %v3031 = vld [vmem:[#allocation8 + $0x190] sm:$0xff]
    %v3032 = vld [vmem:[#allocation8 + $0x198] sm:$0xff]
    %v3033 = vld [vmem:[#allocation8 + $0x1a0] sm:$0xff]
    %v3034 = vld [vmem:[#allocation8 + $0x1a8] sm:$0xff]
    %v3035 = vld [vmem:[#allocation8 + $0x1b0] sm:$0xff]
    %v3036 = vld [vmem:[#allocation8 + $0x1b8] sm:$0xff]
    %v3037 = vld [vmem:[#allocation8 + $0x1c0] sm:$0xff]
    %v3038 = vld [vmem:[#allocation8 + $0x1c8] sm:$0xff]
    %v3039 = vld [vmem:[#allocation8 + $0x1d0] sm:$0xff]
    %v3040 = vld [vmem:[#allocation8 + $0x1d8] sm:$0xff]
    %v3041 = vld [vmem:[#allocation8 + $0x1e0] sm:$0xff]
    %v3042 = vld [vmem:[#allocation8 + $0x1e8] sm:$0xff]
    %v3043 = vld [vmem:[#allocation8 + $0x1f0] sm:$0xff]
    %v3044 = vld [vmem:[#allocation8 + $0x1f8] sm:$0xff]
    %v3045 = vld [vmem:[#allocation8 + $0x200] sm:$0xff]
    %v3046 = vld [vmem:[#allocation8 + $0x208] sm:$0xff]
    %v3047 = vld [vmem:[#allocation8 + $0x210] sm:$0xff]
    %v3048 = vld [vmem:[#allocation8 + $0x218] sm:$0xff]
    %v3049 = vld [vmem:[#allocation8 + $0x220] sm:$0xff]
    %v3050 = vld [vmem:[#allocation8 + $0x228] sm:$0xff]
    %v3051 = vld [vmem:[#allocation8 + $0x230] sm:$0xff]
    %v3052 = vld [vmem:[#allocation8 + $0x238] sm:$0xff]
    %v3053 = vld [vmem:[#allocation8 + $0x240] sm:$0xff]
    %v3054 = vld [vmem:[#allocation8 + $0x248] sm:$0xff]
    %v3055 = vld [vmem:[#allocation8 + $0x250] sm:$0xff]
    %v3056 = vld [vmem:[#allocation8 + $0x258] sm:$0xff]
    %v3057 = vld [vmem:[#allocation8 + $0x260] sm:$0xff]
    %v3058 = vld [vmem:[#allocation8 + $0x268] sm:$0xff]
    %v3059 = vld [vmem:[#allocation8 + $0x270] sm:$0xff]
    %v3060 = vld [vmem:[#allocation8 + $0x278] sm:$0xff]
    %v3061 = vld [vmem:[#allocation8 + $0x280] sm:$0xff]
    %v3062 = vld [vmem:[#allocation8 + $0x288] sm:$0xff]
    %v3063 = vld [vmem:[#allocation8 + $0x290] sm:$0xff]
    %v3064 = vld [vmem:[#allocation8 + $0x298] sm:$0xff]
    %v3065 = vld [vmem:[#allocation8 + $0x2a0] sm:$0xff]
    %v3066 = vld [vmem:[#allocation8 + $0x2a8] sm:$0xff]
    %v3067 = vld [vmem:[#allocation8 + $0x2b0] sm:$0xff]
    %v3068 = vld [vmem:[#allocation8 + $0x2b8] sm:$0xff]
    %v3069 = vld [vmem:[#allocation8 + $0x2c0] sm:$0xff]
    %v3070 = vld [vmem:[#allocation8 + $0x2c8] sm:$0xff]
    %v3071 = vld [vmem:[#allocation8 + $0x2d0] sm:$0xff]
    %v3072 = vld [vmem:[#allocation8 + $0x2d8] sm:$0xff]
    %v3073 = vld [vmem:[#allocation8 + $0x2e0] sm:$0xff]
    %v3074 = vld [vmem:[#allocation8 + $0x2e8] sm:$0xff]
    %v3075 = vld [vmem:[#allocation8 + $0x2f0] sm:$0xff]
    %v3076 = vld [vmem:[#allocation8 + $0x2f8] sm:$0xff]
    %v3077 = vld [vmem:[#allocation8 + $0x300] sm:$0xff]
    %v3078 = vld [vmem:[#allocation8 + $0x308] sm:$0xff]
    %v3079 = vld [vmem:[#allocation8 + $0x310] sm:$0xff]
    %v3080 = vld [vmem:[#allocation8 + $0x318] sm:$0xff]
    %v3081 = vld [vmem:[#allocation8 + $0x320] sm:$0xff]
    %v3082 = vld [vmem:[#allocation8 + $0x328] sm:$0xff]
    %v3083 = vld [vmem:[#allocation8 + $0x330] sm:$0xff]
    %v3084 = vld [vmem:[#allocation8 + $0x338] sm:$0xff]
    %v3085 = vld [vmem:[#allocation8 + $0x340] sm:$0xff]
    %v3086 = vld [vmem:[#allocation8 + $0x348] sm:$0xff]
    %v3087 = vld [vmem:[#allocation8 + $0x350] sm:$0xff]
    %v3088 = vld [vmem:[#allocation8 + $0x358] sm:$0xff]
    %v3089 = vld [vmem:[#allocation8 + $0x360] sm:$0xff]
    %v3090 = vld [vmem:[#allocation8 + $0x368] sm:$0xff]
    %v3091 = vld [vmem:[#allocation8 + $0x370] sm:$0xff]
    %v3092 = vld [vmem:[#allocation8 + $0x378] sm:$0xff]
    %v3093 = vld [vmem:[#allocation8 + $0x380] sm:$0xff]
    %v3094 = vld [vmem:[#allocation8 + $0x388] sm:$0xff]
    %v3095 = vld [vmem:[#allocation8 + $0x390] sm:$0xff]
    %v3096 = vld [vmem:[#allocation8 + $0x398] sm:$0xff]
    %v3097 = vld [vmem:[#allocation8 + $0x3a0] sm:$0xff]
    %v3098 = vld [vmem:[#allocation8 + $0x3a8] sm:$0xff]
    %v3099 = vld [vmem:[#allocation8 + $0x3b0] sm:$0xff]
    %v3100 = vld [vmem:[#allocation8 + $0x3b8] sm:$0xff]
    %v3101 = vld [vmem:[#allocation8 + $0x3c0] sm:$0xff]
    %v3102 = vld [vmem:[#allocation8 + $0x3c8] sm:$0xff]
    %v3103 = vld [vmem:[#allocation8 + $0x3d0] sm:$0xff]
    %v3104 = vld [vmem:[#allocation8 + $0x3d8] sm:$0xff]
    %v3105 = vld [vmem:[#allocation8 + $0x3e0] sm:$0xff]
    %v3106 = vld [vmem:[#allocation8 + $0x3e8] sm:$0xff]
    %v3107 = vld [vmem:[#allocation8 + $0x3f0] sm:$0xff]
    %v3108 = vld [vmem:[#allocation8 + $0x3f8] sm:$0xff]
    %v3109 = vld [vmem:[#allocation8 + $0x400] sm:$0xff]
    %v3110 = vld [vmem:[#allocation8 + $0x408] sm:$0xff]
    %v3111 = vld [vmem:[#allocation8 + $0x410] sm:$0xff]
    %v3112 = vld [vmem:[#allocation8 + $0x418] sm:$0xff]
    %v3113 = vld [vmem:[#allocation8 + $0x420] sm:$0xff]
    %v3114 = vld [vmem:[#allocation8 + $0x428] sm:$0xff]
    %v3115 = vld [vmem:[#allocation8 + $0x430] sm:$0xff]
    %v3116 = vld [vmem:[#allocation8 + $0x438] sm:$0xff]
    %v3117 = vld [vmem:[#allocation8 + $0x440] sm:$0xff]
    %v3118 = vld [vmem:[#allocation8 + $0x448] sm:$0xff]
    %v3119 = vld [vmem:[#allocation8 + $0x450] sm:$0xff]
    %v3120 = vld [vmem:[#allocation8 + $0x458] sm:$0xff]
    %v3121 = vld [vmem:[#allocation8 + $0x460] sm:$0xff]
    %v3122 = vld [vmem:[#allocation8 + $0x468] sm:$0xff]
    %v3123 = vld [vmem:[#allocation8 + $0x470] sm:$0xff]
    %v3124 = vld [vmem:[#allocation8 + $0x478] sm:$0xff]
    %v3125 = vld [vmem:[#allocation8 + $0x480] sm:$0xff]
    %v3126 = vld [vmem:[#allocation8 + $0x488] sm:$0xff]
    %v3127 = vld [vmem:[#allocation8 + $0x490] sm:$0xff]
    %v3128 = vld [vmem:[#allocation8 + $0x498] sm:$0xff]
    %v3129 = vld [vmem:[#allocation8 + $0x4a0] sm:$0xff]
    %v3130 = vld [vmem:[#allocation8 + $0x4a8] sm:$0xff]
    %v3131 = vld [vmem:[#allocation8 + $0x4b0] sm:$0xff]
    %v3132 = vld [vmem:[#allocation8 + $0x4b8] sm:$0xff]
    %v3133 = vld [vmem:[#allocation8 + $0x4c0] sm:$0xff]
    %v3134 = vld [vmem:[#allocation8 + $0x4c8] sm:$0xff]
    %v3135 = vld [vmem:[#allocation8 + $0x4d0] sm:$0xff]
    %v3136 = vld [vmem:[#allocation8 + $0x4d8] sm:$0xff]
    %v3137 = vld [vmem:[#allocation8 + $0x4e0] sm:$0xff]
    %v3138 = vld [vmem:[#allocation8 + $0x4e8] sm:$0xff]
    %v3139 = vld [vmem:[#allocation8 + $0x4f0] sm:$0xff]
    %v3140 = vld [vmem:[#allocation8 + $0x4f8] sm:$0xff]
    %v3141 = vld [vmem:[#allocation8 + $0x500] sm:$0xff]
    %v3142 = vld [vmem:[#allocation8 + $0x508] sm:$0xff]
    %v3143 = vld [vmem:[#allocation8 + $0x510] sm:$0xff]
    %v3144 = vld [vmem:[#allocation8 + $0x518] sm:$0xff]
    %v3145 = vld [vmem:[#allocation8 + $0x520] sm:$0xff]
    %v3146 = vld [vmem:[#allocation8 + $0x528] sm:$0xff]
    %v3147 = vld [vmem:[#allocation8 + $0x530] sm:$0xff]
    %v3148 = vld [vmem:[#allocation8 + $0x538] sm:$0xff]
    %v3149 = vld [vmem:[#allocation8 + $0x540] sm:$0xff]
    %v3150 = vld [vmem:[#allocation8 + $0x548] sm:$0xff]
    %v3151 = vld [vmem:[#allocation8 + $0x550] sm:$0xff]
    %v3152 = vld [vmem:[#allocation8 + $0x558] sm:$0xff]
    %v3153 = vld [vmem:[#allocation8 + $0x560] sm:$0xff]
    %v3154 = vld [vmem:[#allocation8 + $0x568] sm:$0xff]
    %v3155 = vld [vmem:[#allocation8 + $0x570] sm:$0xff]
    %v3156 = vld [vmem:[#allocation8 + $0x578] sm:$0xff]
    %v3157 = vld [vmem:[#allocation8 + $0x580] sm:$0xff]
    %v3158 = vld [vmem:[#allocation8 + $0x588] sm:$0xff]
    %v3159 = vld [vmem:[#allocation8 + $0x590] sm:$0xff]
    %v3160 = vld [vmem:[#allocation8 + $0x598] sm:$0xff]
    %v3161 = vld [vmem:[#allocation8 + $0x5a0] sm:$0xff]
    %v3162 = vld [vmem:[#allocation8 + $0x5a8] sm:$0xff]
    %v3163 = vld [vmem:[#allocation8 + $0x5b0] sm:$0xff]
    %v3164 = vld [vmem:[#allocation8 + $0x5b8] sm:$0xff]
    %v3165 = vld [vmem:[#allocation8 + $0x5c0] sm:$0xff]
    %v3166 = vld [vmem:[#allocation8 + $0x5c8] sm:$0xff]
    %v3167 = vld [vmem:[#allocation8 + $0x5d0] sm:$0xff]
    %v3168 = vld [vmem:[#allocation8 + $0x5d8] sm:$0xff]
    %v3169 = vld [vmem:[#allocation8 + $0x5e0] sm:$0xff]
    %v3170 = vld [vmem:[#allocation8 + $0x5e8] sm:$0xff]
    %v3171 = vld [vmem:[#allocation8 + $0x5f0] sm:$0xff]
    %v3172 = vld [vmem:[#allocation8 + $0x5f8] sm:$0xff]
    %v3173 = vld [vmem:[#allocation10] sm:$0xf]
    %v3175 = vlaneseq
    %v3176 = vshrl.u32 %v3175, 7
    %v3177 = vsub.s32 0, %v3176
    %v3178 = vrot.slane %v3173, %v3177
    %v3179 = vlaneseq
    %v3180 = vshrl.u32 %v3179, 7
    %v3181 = vsub.s32 1, %v3180
    %v3182 = vrot.slane %v3173, %v3181
    %v3183 = vlaneseq
    %v3184 = vshrl.u32 %v3183, 7
    %v3185 = vsub.s32 2, %v3184
    %v3186 = vrot.slane %v3173, %v3185
    %v3187 = vlaneseq
    %v3188 = vshrl.u32 %v3187, 7
    %v3189 = vsub.s32 3, %v3188
    %v3190 = vrot.slane %v3173, %v3189
    %v3387 = vunpack.c.l.b16 %v2981
    %v3388 = vunpack.c.h.b16 %v2981
    %v3389 = vunpack.c.l.b16 %v2982
    %v3390 = vunpack.c.h.b16 %v2982
    %v3391 = vunpack.c.l.b16 %v2983
    %v3392 = vunpack.c.h.b16 %v2983
    %v3393 = vunpack.c.l.b16 %v2984
    %v3394 = vunpack.c.h.b16 %v2984
    %v3395 = vunpack.c.l.b16 %v2985
    %v3396 = vunpack.c.h.b16 %v2985
    %v3397 = vunpack.c.l.b16 %v2986
    %v3398 = vunpack.c.h.b16 %v2986
    %v3399 = vunpack.c.l.b16 %v2987
    %v3400 = vunpack.c.h.b16 %v2987
    %v3401 = vunpack.c.l.b16 %v2988
    %v3402 = vunpack.c.h.b16 %v2988
    %v3403 = vunpack.c.l.b16 %v2989
    %v3404 = vunpack.c.h.b16 %v2989
    %v3405 = vunpack.c.l.b16 %v2990
    %v3406 = vunpack.c.h.b16 %v2990
    %v3407 = vunpack.c.l.b16 %v2991
    %v3408 = vunpack.c.h.b16 %v2991
    %v3409 = vunpack.c.l.b16 %v2992
    %v3410 = vunpack.c.h.b16 %v2992
    %v3411 = vunpack.c.l.b16 %v2993
    %v3412 = vunpack.c.h.b16 %v2993
    %v3413 = vunpack.c.l.b16 %v2994
    %v3414 = vunpack.c.h.b16 %v2994
    %v3415 = vunpack.c.l.b16 %v2995
    %v3416 = vunpack.c.h.b16 %v2995
    %v3417 = vunpack.c.l.b16 %v2996
    %v3418 = vunpack.c.h.b16 %v2996
    %v3419 = vunpack.c.l.b16 %v2997
    %v3420 = vunpack.c.h.b16 %v2997
    %v3421 = vunpack.c.l.b16 %v2998
    %v3422 = vunpack.c.h.b16 %v2998
    %v3423 = vunpack.c.l.b16 %v2999
    %v3424 = vunpack.c.h.b16 %v2999
    %v3425 = vunpack.c.l.b16 %v3000
    %v3426 = vunpack.c.h.b16 %v3000
    %v3427 = vunpack.c.l.b16 %v3001
    %v3428 = vunpack.c.h.b16 %v3001
    %v3429 = vunpack.c.l.b16 %v3002
    %v3430 = vunpack.c.h.b16 %v3002
    %v3431 = vunpack.c.l.b16 %v3003
    %v3432 = vunpack.c.h.b16 %v3003
    %v3433 = vunpack.c.l.b16 %v3004
    %v3434 = vunpack.c.h.b16 %v3004
    %v3435 = vunpack.c.l.b16 %v3005
    %v3436 = vunpack.c.h.b16 %v3005
    %v3437 = vunpack.c.l.b16 %v3006
    %v3438 = vunpack.c.h.b16 %v3006
    %v3439 = vunpack.c.l.b16 %v3007
    %v3440 = vunpack.c.h.b16 %v3007
    %v3441 = vunpack.c.l.b16 %v3008
    %v3442 = vunpack.c.h.b16 %v3008
    %v3443 = vunpack.c.l.b16 %v3009
    %v3444 = vunpack.c.h.b16 %v3009
    %v3445 = vunpack.c.l.b16 %v3010
    %v3446 = vunpack.c.h.b16 %v3010
    %v3447 = vunpack.c.l.b16 %v3011
    %v3448 = vunpack.c.h.b16 %v3011
    %v3449 = vunpack.c.l.b16 %v3012
    %v3450 = vunpack.c.h.b16 %v3012
    %v3451 = vunpack.c.l.b16 %v3013
    %v3452 = vunpack.c.h.b16 %v3013
    %v3453 = vunpack.c.l.b16 %v3014
    %v3454 = vunpack.c.h.b16 %v3014
    %v3455 = vunpack.c.l.b16 %v3015
    %v3456 = vunpack.c.h.b16 %v3015
    %v3457 = vunpack.c.l.b16 %v3016
    %v3458 = vunpack.c.h.b16 %v3016
    %v3459 = vunpack.c.l.b16 %v3017
    %v3460 = vunpack.c.h.b16 %v3017
    %v3461 = vunpack.c.l.b16 %v3018
    %v3462 = vunpack.c.h.b16 %v3018
    %v3463 = vunpack.c.l.b16 %v3019
    %v3464 = vunpack.c.h.b16 %v3019
    %v3465 = vunpack.c.l.b16 %v3020
    %v3466 = vunpack.c.h.b16 %v3020
    %v3467 = vunpack.c.l.b16 %v3021
    %v3468 = vunpack.c.h.b16 %v3021
    %v3469 = vunpack.c.l.b16 %v3022
    %v3470 = vunpack.c.h.b16 %v3022
    %v3471 = vunpack.c.l.b16 %v3023
    %v3472 = vunpack.c.h.b16 %v3023
    %v3473 = vunpack.c.l.b16 %v3024
    %v3474 = vunpack.c.h.b16 %v3024
    %v3475 = vunpack.c.l.b16 %v3025
    %v3476 = vunpack.c.h.b16 %v3025
    %v3477 = vunpack.c.l.b16 %v3026
    %v3478 = vunpack.c.h.b16 %v3026
    %v3479 = vunpack.c.l.b16 %v3027
    %v3480 = vunpack.c.h.b16 %v3027
    %v3481 = vunpack.c.l.b16 %v3028
    %v3482 = vunpack.c.h.b16 %v3028
    %v3483 = vunpack.c.l.b16 %v3029
    %v3484 = vunpack.c.h.b16 %v3029
    %v3485 = vunpack.c.l.b16 %v3030
    %v3486 = vunpack.c.h.b16 %v3030
    %v3487 = vunpack.c.l.b16 %v3031
    %v3488 = vunpack.c.h.b16 %v3031
    %v3489 = vunpack.c.l.b16 %v3032
    %v3490 = vunpack.c.h.b16 %v3032
    %v3491 = vunpack.c.l.b16 %v3033
    %v3492 = vunpack.c.h.b16 %v3033
    %v3493 = vunpack.c.l.b16 %v3034
    %v3494 = vunpack.c.h.b16 %v3034
    %v3495 = vunpack.c.l.b16 %v3035
    %v3496 = vunpack.c.h.b16 %v3035
    %v3497 = vunpack.c.l.b16 %v3036
    %v3498 = vunpack.c.h.b16 %v3036
    %v3499 = vunpack.c.l.b16 %v3037
    %v3500 = vunpack.c.h.b16 %v3037
    %v3501 = vunpack.c.l.b16 %v3038
    %v3502 = vunpack.c.h.b16 %v3038
    %v3503 = vunpack.c.l.b16 %v3039
    %v3504 = vunpack.c.h.b16 %v3039
    %v3505 = vunpack.c.l.b16 %v3040
    %v3506 = vunpack.c.h.b16 %v3040
    %v3507 = vunpack.c.l.b16 %v3041
    %v3508 = vunpack.c.h.b16 %v3041
    %v3509 = vunpack.c.l.b16 %v3042
    %v3510 = vunpack.c.h.b16 %v3042
    %v3511 = vunpack.c.l.b16 %v3043
    %v3512 = vunpack.c.h.b16 %v3043
    %v3513 = vunpack.c.l.b16 %v3044
    %v3514 = vunpack.c.h.b16 %v3044
    %v3515 = vunpack.c.l.b16 %v3045
    %v3516 = vunpack.c.h.b16 %v3045
    %v3517 = vunpack.c.l.b16 %v3046
    %v3518 = vunpack.c.h.b16 %v3046
    %v3519 = vunpack.c.l.b16 %v3047
    %v3520 = vunpack.c.h.b16 %v3047
    %v3521 = vunpack.c.l.b16 %v3048
    %v3522 = vunpack.c.h.b16 %v3048
    %v3523 = vunpack.c.l.b16 %v3049
    %v3524 = vunpack.c.h.b16 %v3049
    %v3525 = vunpack.c.l.b16 %v3050
    %v3526 = vunpack.c.h.b16 %v3050
    %v3527 = vunpack.c.l.b16 %v3051
    %v3528 = vunpack.c.h.b16 %v3051
    %v3529 = vunpack.c.l.b16 %v3052
    %v3530 = vunpack.c.h.b16 %v3052
    %v3531 = vunpack.c.l.b16 %v3053
    %v3532 = vunpack.c.h.b16 %v3053
    %v3533 = vunpack.c.l.b16 %v3054
    %v3534 = vunpack.c.h.b16 %v3054
    %v3535 = vunpack.c.l.b16 %v3055
    %v3536 = vunpack.c.h.b16 %v3055
    %v3537 = vunpack.c.l.b16 %v3056
    %v3538 = vunpack.c.h.b16 %v3056
    %v3539 = vunpack.c.l.b16 %v3057
    %v3540 = vunpack.c.h.b16 %v3057
    %v3541 = vunpack.c.l.b16 %v3058
    %v3542 = vunpack.c.h.b16 %v3058
    %v3543 = vunpack.c.l.b16 %v3059
    %v3544 = vunpack.c.h.b16 %v3059
    %v3545 = vunpack.c.l.b16 %v3060
    %v3546 = vunpack.c.h.b16 %v3060
    %v3547 = vunpack.c.l.b16 %v3061
    %v3548 = vunpack.c.h.b16 %v3061
    %v3549 = vunpack.c.l.b16 %v3062
    %v3550 = vunpack.c.h.b16 %v3062
    %v3551 = vunpack.c.l.b16 %v3063
    %v3552 = vunpack.c.h.b16 %v3063
    %v3553 = vunpack.c.l.b16 %v3064
    %v3554 = vunpack.c.h.b16 %v3064
    %v3555 = vunpack.c.l.b16 %v3065
    %v3556 = vunpack.c.h.b16 %v3065
    %v3557 = vunpack.c.l.b16 %v3066
    %v3558 = vunpack.c.h.b16 %v3066
    %v3559 = vunpack.c.l.b16 %v3067
    %v3560 = vunpack.c.h.b16 %v3067
    %v3561 = vunpack.c.l.b16 %v3068
    %v3562 = vunpack.c.h.b16 %v3068
    %v3563 = vunpack.c.l.b16 %v3069
    %v3564 = vunpack.c.h.b16 %v3069
    %v3565 = vunpack.c.l.b16 %v3070
    %v3566 = vunpack.c.h.b16 %v3070
    %v3567 = vunpack.c.l.b16 %v3071
    %v3568 = vunpack.c.h.b16 %v3071
    %v3569 = vunpack.c.l.b16 %v3072
    %v3570 = vunpack.c.h.b16 %v3072
    %v3571 = vunpack.c.l.b16 %v3073
    %v3572 = vunpack.c.h.b16 %v3073
    %v3573 = vunpack.c.l.b16 %v3074
    %v3574 = vunpack.c.h.b16 %v3074
    %v3575 = vunpack.c.l.b16 %v3075
    %v3576 = vunpack.c.h.b16 %v3075
    %v3577 = vunpack.c.l.b16 %v3076
    %v3578 = vunpack.c.h.b16 %v3076
    %v3579 = vunpack.c.l.b16 %v3077
    %v3580 = vunpack.c.h.b16 %v3077
    %v3581 = vunpack.c.l.b16 %v3078
    %v3582 = vunpack.c.h.b16 %v3078
    %v3583 = vunpack.c.l.b16 %v3079
    %v3584 = vunpack.c.h.b16 %v3079
    %v3585 = vunpack.c.l.b16 %v3080
    %v3586 = vunpack.c.h.b16 %v3080
    %v3587 = vunpack.c.l.b16 %v3081
    %v3588 = vunpack.c.h.b16 %v3081
    %v3589 = vunpack.c.l.b16 %v3082
    %v3590 = vunpack.c.h.b16 %v3082
    %v3591 = vunpack.c.l.b16 %v3083
    %v3592 = vunpack.c.h.b16 %v3083
    %v3593 = vunpack.c.l.b16 %v3084
    %v3594 = vunpack.c.h.b16 %v3084
    %v3595 = vunpack.c.l.b16 %v3085
    %v3596 = vunpack.c.h.b16 %v3085
    %v3597 = vunpack.c.l.b16 %v3086
    %v3598 = vunpack.c.h.b16 %v3086
    %v3599 = vunpack.c.l.b16 %v3087
    %v3600 = vunpack.c.h.b16 %v3087
    %v3601 = vunpack.c.l.b16 %v3088
    %v3602 = vunpack.c.h.b16 %v3088
    %v3603 = vunpack.c.l.b16 %v3089
    %v3604 = vunpack.c.h.b16 %v3089
    %v3605 = vunpack.c.l.b16 %v3090
    %v3606 = vunpack.c.h.b16 %v3090
    %v3607 = vunpack.c.l.b16 %v3091
    %v3608 = vunpack.c.h.b16 %v3091
    %v3609 = vunpack.c.l.b16 %v3092
    %v3610 = vunpack.c.h.b16 %v3092
    %v3611 = vunpack.c.l.b16 %v3093
    %v3612 = vunpack.c.h.b16 %v3093
    %v3613 = vunpack.c.l.b16 %v3094
    %v3614 = vunpack.c.h.b16 %v3094
    %v3615 = vunpack.c.l.b16 %v3095
    %v3616 = vunpack.c.h.b16 %v3095
    %v3617 = vunpack.c.l.b16 %v3096
    %v3618 = vunpack.c.h.b16 %v3096
    %v3619 = vunpack.c.l.b16 %v3097
    %v3620 = vunpack.c.h.b16 %v3097
    %v3621 = vunpack.c.l.b16 %v3098
    %v3622 = vunpack.c.h.b16 %v3098
    %v3623 = vunpack.c.l.b16 %v3099
    %v3624 = vunpack.c.h.b16 %v3099
    %v3625 = vunpack.c.l.b16 %v3100
    %v3626 = vunpack.c.h.b16 %v3100
    %v3627 = vunpack.c.l.b16 %v3101
    %v3628 = vunpack.c.h.b16 %v3101
    %v3629 = vunpack.c.l.b16 %v3102
    %v3630 = vunpack.c.h.b16 %v3102
    %v3631 = vunpack.c.l.b16 %v3103
    %v3632 = vunpack.c.h.b16 %v3103
    %v3633 = vunpack.c.l.b16 %v3104
    %v3634 = vunpack.c.h.b16 %v3104
    %v3635 = vunpack.c.l.b16 %v3105
    %v3636 = vunpack.c.h.b16 %v3105
    %v3637 = vunpack.c.l.b16 %v3106
    %v3638 = vunpack.c.h.b16 %v3106
    %v3639 = vunpack.c.l.b16 %v3107
    %v3640 = vunpack.c.h.b16 %v3107
    %v3641 = vunpack.c.l.b16 %v3108
    %v3642 = vunpack.c.h.b16 %v3108
    %v3643 = vunpack.c.l.b16 %v3109
    %v3644 = vunpack.c.h.b16 %v3109
    %v3645 = vunpack.c.l.b16 %v3110
    %v3646 = vunpack.c.h.b16 %v3110
    %v3647 = vunpack.c.l.b16 %v3111
    %v3648 = vunpack.c.h.b16 %v3111
    %v3649 = vunpack.c.l.b16 %v3112
    %v3650 = vunpack.c.h.b16 %v3112
    %v3651 = vunpack.c.l.b16 %v3113
    %v3652 = vunpack.c.h.b16 %v3113
    %v3653 = vunpack.c.l.b16 %v3114
    %v3654 = vunpack.c.h.b16 %v3114
    %v3655 = vunpack.c.l.b16 %v3115
    %v3656 = vunpack.c.h.b16 %v3115
    %v3657 = vunpack.c.l.b16 %v3116
    %v3658 = vunpack.c.h.b16 %v3116
    %v3659 = vunpack.c.l.b16 %v3117
    %v3660 = vunpack.c.h.b16 %v3117
    %v3661 = vunpack.c.l.b16 %v3118
    %v3662 = vunpack.c.h.b16 %v3118
    %v3663 = vunpack.c.l.b16 %v3119
    %v3664 = vunpack.c.h.b16 %v3119
    %v3665 = vunpack.c.l.b16 %v3120
    %v3666 = vunpack.c.h.b16 %v3120
    %v3667 = vunpack.c.l.b16 %v3121
    %v3668 = vunpack.c.h.b16 %v3121
    %v3669 = vunpack.c.l.b16 %v3122
    %v3670 = vunpack.c.h.b16 %v3122
    %v3671 = vunpack.c.l.b16 %v3123
    %v3672 = vunpack.c.h.b16 %v3123
    %v3673 = vunpack.c.l.b16 %v3124
    %v3674 = vunpack.c.h.b16 %v3124
    %v3675 = vunpack.c.l.b16 %v3125
    %v3676 = vunpack.c.h.b16 %v3125
    %v3677 = vunpack.c.l.b16 %v3126
    %v3678 = vunpack.c.h.b16 %v3126
    %v3679 = vunpack.c.l.b16 %v3127
    %v3680 = vunpack.c.h.b16 %v3127
    %v3681 = vunpack.c.l.b16 %v3128
    %v3682 = vunpack.c.h.b16 %v3128
    %v3683 = vunpack.c.l.b16 %v3129
    %v3684 = vunpack.c.h.b16 %v3129
    %v3685 = vunpack.c.l.b16 %v3130
    %v3686 = vunpack.c.h.b16 %v3130
    %v3687 = vunpack.c.l.b16 %v3131
    %v3688 = vunpack.c.h.b16 %v3131
    %v3689 = vunpack.c.l.b16 %v3132
    %v3690 = vunpack.c.h.b16 %v3132
    %v3691 = vunpack.c.l.b16 %v3133
    %v3692 = vunpack.c.h.b16 %v3133
    %v3693 = vunpack.c.l.b16 %v3134
    %v3694 = vunpack.c.h.b16 %v3134
    %v3695 = vunpack.c.l.b16 %v3135
    %v3696 = vunpack.c.h.b16 %v3135
    %v3697 = vunpack.c.l.b16 %v3136
    %v3698 = vunpack.c.h.b16 %v3136
    %v3699 = vunpack.c.l.b16 %v3137
    %v3700 = vunpack.c.h.b16 %v3137
    %v3701 = vunpack.c.l.b16 %v3138
    %v3702 = vunpack.c.h.b16 %v3138
    %v3703 = vunpack.c.l.b16 %v3139
    %v3704 = vunpack.c.h.b16 %v3139
    %v3705 = vunpack.c.l.b16 %v3140
    %v3706 = vunpack.c.h.b16 %v3140
    %v3707 = vunpack.c.l.b16 %v3141
    %v3708 = vunpack.c.h.b16 %v3141
    %v3709 = vunpack.c.l.b16 %v3142
    %v3710 = vunpack.c.h.b16 %v3142
    %v3711 = vunpack.c.l.b16 %v3143
    %v3712 = vunpack.c.h.b16 %v3143
    %v3713 = vunpack.c.l.b16 %v3144
    %v3714 = vunpack.c.h.b16 %v3144
    %v3715 = vunpack.c.l.b16 %v3145
    %v3716 = vunpack.c.h.b16 %v3145
    %v3717 = vunpack.c.l.b16 %v3146
    %v3718 = vunpack.c.h.b16 %v3146
    %v3719 = vunpack.c.l.b16 %v3147
    %v3720 = vunpack.c.h.b16 %v3147
    %v3721 = vunpack.c.l.b16 %v3148
    %v3722 = vunpack.c.h.b16 %v3148
    %v3723 = vunpack.c.l.b16 %v3149
    %v3724 = vunpack.c.h.b16 %v3149
    %v3725 = vunpack.c.l.b16 %v3150
    %v3726 = vunpack.c.h.b16 %v3150
    %v3727 = vunpack.c.l.b16 %v3151
    %v3728 = vunpack.c.h.b16 %v3151
    %v3729 = vunpack.c.l.b16 %v3152
    %v3730 = vunpack.c.h.b16 %v3152
    %v3731 = vunpack.c.l.b16 %v3153
    %v3732 = vunpack.c.h.b16 %v3153
    %v3733 = vunpack.c.l.b16 %v3154
    %v3734 = vunpack.c.h.b16 %v3154
    %v3735 = vunpack.c.l.b16 %v3155
    %v3736 = vunpack.c.h.b16 %v3155
    %v3737 = vunpack.c.l.b16 %v3156
    %v3738 = vunpack.c.h.b16 %v3156
    %v3739 = vunpack.c.l.b16 %v3157
    %v3740 = vunpack.c.h.b16 %v3157
    %v3741 = vunpack.c.l.b16 %v3158
    %v3742 = vunpack.c.h.b16 %v3158
    %v3743 = vunpack.c.l.b16 %v3159
    %v3744 = vunpack.c.h.b16 %v3159
    %v3745 = vunpack.c.l.b16 %v3160
    %v3746 = vunpack.c.h.b16 %v3160
    %v3747 = vunpack.c.l.b16 %v3161
    %v3748 = vunpack.c.h.b16 %v3161
    %v3749 = vunpack.c.l.b16 %v3162
    %v3750 = vunpack.c.h.b16 %v3162
    %v3751 = vunpack.c.l.b16 %v3163
    %v3752 = vunpack.c.h.b16 %v3163
    %v3753 = vunpack.c.l.b16 %v3164
    %v3754 = vunpack.c.h.b16 %v3164
    %v3755 = vunpack.c.l.b16 %v3165
    %v3756 = vunpack.c.h.b16 %v3165
    %v3757 = vunpack.c.l.b16 %v3166
    %v3758 = vunpack.c.h.b16 %v3166
    %v3759 = vunpack.c.l.b16 %v3167
    %v3760 = vunpack.c.h.b16 %v3167
    %v3761 = vunpack.c.l.b16 %v3168
    %v3762 = vunpack.c.h.b16 %v3168
    %v3763 = vunpack.c.l.b16 %v3169
    %v3764 = vunpack.c.h.b16 %v3169
    %v3765 = vunpack.c.l.b16 %v3170
    %v3766 = vunpack.c.h.b16 %v3170
    %v3767 = vunpack.c.l.b16 %v3171
    %v3768 = vunpack.c.h.b16 %v3171
    %v3769 = vunpack.c.l.b16 %v3172
    %v3770 = vunpack.c.h.b16 %v3172
    %v3771 = vpack.c.b16 %v3391, %v3387
    %v3772 = vpack.c.b16 %v3392, %v3388
    %v3773 = vpack.c.b16 %v3393, %v3389
    %v3774 = vpack.c.b16 %v3394, %v3390
    %v3775 = vpack.c.b16 %v3399, %v3395
    %v3776 = vpack.c.b16 %v3400, %v3396
    %v3777 = vpack.c.b16 %v3401, %v3397
    %v3778 = vpack.c.b16 %v3402, %v3398
    %v3779 = vpack.c.b16 %v3407, %v3403
    %v3780 = vpack.c.b16 %v3408, %v3404
    %v3781 = vpack.c.b16 %v3409, %v3405
    %v3782 = vpack.c.b16 %v3410, %v3406
    %v3783 = vpack.c.b16 %v3415, %v3411
    %v3784 = vpack.c.b16 %v3416, %v3412
    %v3785 = vpack.c.b16 %v3417, %v3413
    %v3786 = vpack.c.b16 %v3418, %v3414
    %v3787 = vpack.c.b16 %v3423, %v3419
    %v3788 = vpack.c.b16 %v3424, %v3420
    %v3789 = vpack.c.b16 %v3425, %v3421
    %v3790 = vpack.c.b16 %v3426, %v3422
    %v3791 = vpack.c.b16 %v3431, %v3427
    %v3792 = vpack.c.b16 %v3432, %v3428
    %v3793 = vpack.c.b16 %v3433, %v3429
    %v3794 = vpack.c.b16 %v3434, %v3430
    %v3795 = vpack.c.b16 %v3439, %v3435
    %v3796 = vpack.c.b16 %v3440, %v3436
    %v3797 = vpack.c.b16 %v3441, %v3437
    %v3798 = vpack.c.b16 %v3442, %v3438
    %v3799 = vpack.c.b16 %v3447, %v3443
    %v3800 = vpack.c.b16 %v3448, %v3444
    %v3801 = vpack.c.b16 %v3449, %v3445
    %v3802 = vpack.c.b16 %v3450, %v3446
    %v3803 = vpack.c.b16 %v3455, %v3451
    %v3804 = vpack.c.b16 %v3456, %v3452
    %v3805 = vpack.c.b16 %v3457, %v3453
    %v3806 = vpack.c.b16 %v3458, %v3454
    %v3807 = vpack.c.b16 %v3463, %v3459
    %v3808 = vpack.c.b16 %v3464, %v3460
    %v3809 = vpack.c.b16 %v3465, %v3461
    %v3810 = vpack.c.b16 %v3466, %v3462
    %v3811 = vpack.c.b16 %v3471, %v3467
    %v3812 = vpack.c.b16 %v3472, %v3468
    %v3813 = vpack.c.b16 %v3473, %v3469
    %v3814 = vpack.c.b16 %v3474, %v3470
    %v3815 = vpack.c.b16 %v3479, %v3475
    %v3816 = vpack.c.b16 %v3480, %v3476
    %v3817 = vpack.c.b16 %v3481, %v3477
    %v3818 = vpack.c.b16 %v3482, %v3478
    %v3819 = vpack.c.b16 %v3487, %v3483
    %v3820 = vpack.c.b16 %v3488, %v3484
    %v3821 = vpack.c.b16 %v3489, %v3485
    %v3822 = vpack.c.b16 %v3490, %v3486
    %v3823 = vpack.c.b16 %v3495, %v3491
    %v3824 = vpack.c.b16 %v3496, %v3492
    %v3825 = vpack.c.b16 %v3497, %v3493
    %v3826 = vpack.c.b16 %v3498, %v3494
    %v3827 = vpack.c.b16 %v3503, %v3499
    %v3828 = vpack.c.b16 %v3504, %v3500
    %v3829 = vpack.c.b16 %v3505, %v3501
    %v3830 = vpack.c.b16 %v3506, %v3502
    %v3831 = vpack.c.b16 %v3511, %v3507
    %v3832 = vpack.c.b16 %v3512, %v3508
    %v3833 = vpack.c.b16 %v3513, %v3509
    %v3834 = vpack.c.b16 %v3514, %v3510
    %v3835 = vpack.c.b16 %v3519, %v3515
    %v3836 = vpack.c.b16 %v3520, %v3516
    %v3837 = vpack.c.b16 %v3521, %v3517
    %v3838 = vpack.c.b16 %v3522, %v3518
    %v3839 = vpack.c.b16 %v3527, %v3523
    %v3840 = vpack.c.b16 %v3528, %v3524
    %v3841 = vpack.c.b16 %v3529, %v3525
    %v3842 = vpack.c.b16 %v3530, %v3526
    %v3843 = vpack.c.b16 %v3535, %v3531
    %v3844 = vpack.c.b16 %v3536, %v3532
    %v3845 = vpack.c.b16 %v3537, %v3533
    %v3846 = vpack.c.b16 %v3538, %v3534
    %v3847 = vpack.c.b16 %v3543, %v3539
    %v3848 = vpack.c.b16 %v3544, %v3540
    %v3849 = vpack.c.b16 %v3545, %v3541
    %v3850 = vpack.c.b16 %v3546, %v3542
    %v3851 = vpack.c.b16 %v3551, %v3547
    %v3852 = vpack.c.b16 %v3552, %v3548
    %v3853 = vpack.c.b16 %v3553, %v3549
    %v3854 = vpack.c.b16 %v3554, %v3550
    %v3855 = vpack.c.b16 %v3559, %v3555
    %v3856 = vpack.c.b16 %v3560, %v3556
    %v3857 = vpack.c.b16 %v3561, %v3557
    %v3858 = vpack.c.b16 %v3562, %v3558
    %v3859 = vpack.c.b16 %v3567, %v3563
    %v3860 = vpack.c.b16 %v3568, %v3564
    %v3861 = vpack.c.b16 %v3569, %v3565
    %v3862 = vpack.c.b16 %v3570, %v3566
    %v3863 = vpack.c.b16 %v3575, %v3571
    %v3864 = vpack.c.b16 %v3576, %v3572
    %v3865 = vpack.c.b16 %v3577, %v3573
    %v3866 = vpack.c.b16 %v3578, %v3574
    %v3867 = vpack.c.b16 %v3583, %v3579
    %v3868 = vpack.c.b16 %v3584, %v3580
    %v3869 = vpack.c.b16 %v3585, %v3581
    %v3870 = vpack.c.b16 %v3586, %v3582
    %v3871 = vpack.c.b16 %v3591, %v3587
    %v3872 = vpack.c.b16 %v3592, %v3588
    %v3873 = vpack.c.b16 %v3593, %v3589
    %v3874 = vpack.c.b16 %v3594, %v3590
    %v3875 = vpack.c.b16 %v3599, %v3595
    %v3876 = vpack.c.b16 %v3600, %v3596
    %v3877 = vpack.c.b16 %v3601, %v3597
    %v3878 = vpack.c.b16 %v3602, %v3598
    %v3879 = vpack.c.b16 %v3607, %v3603
    %v3880 = vpack.c.b16 %v3608, %v3604
    %v3881 = vpack.c.b16 %v3609, %v3605
    %v3882 = vpack.c.b16 %v3610, %v3606
    %v3883 = vpack.c.b16 %v3615, %v3611
    %v3884 = vpack.c.b16 %v3616, %v3612
    %v3885 = vpack.c.b16 %v3617, %v3613
    %v3886 = vpack.c.b16 %v3618, %v3614
    %v3887 = vpack.c.b16 %v3623, %v3619
    %v3888 = vpack.c.b16 %v3624, %v3620
    %v3889 = vpack.c.b16 %v3625, %v3621
    %v3890 = vpack.c.b16 %v3626, %v3622
    %v3891 = vpack.c.b16 %v3631, %v3627
    %v3892 = vpack.c.b16 %v3632, %v3628
    %v3893 = vpack.c.b16 %v3633, %v3629
    %v3894 = vpack.c.b16 %v3634, %v3630
    %v3895 = vpack.c.b16 %v3639, %v3635
    %v3896 = vpack.c.b16 %v3640, %v3636
    %v3897 = vpack.c.b16 %v3641, %v3637
    %v3898 = vpack.c.b16 %v3642, %v3638
    %v3899 = vpack.c.b16 %v3647, %v3643
    %v3900 = vpack.c.b16 %v3648, %v3644
    %v3901 = vpack.c.b16 %v3649, %v3645
    %v3902 = vpack.c.b16 %v3650, %v3646
    %v3903 = vpack.c.b16 %v3655, %v3651
    %v3904 = vpack.c.b16 %v3656, %v3652
    %v3905 = vpack.c.b16 %v3657, %v3653
    %v3906 = vpack.c.b16 %v3658, %v3654
    %v3907 = vpack.c.b16 %v3663, %v3659
    %v3908 = vpack.c.b16 %v3664, %v3660
    %v3909 = vpack.c.b16 %v3665, %v3661
    %v3910 = vpack.c.b16 %v3666, %v3662
    %v3911 = vpack.c.b16 %v3671, %v3667
    %v3912 = vpack.c.b16 %v3672, %v3668
    %v3913 = vpack.c.b16 %v3673, %v3669
    %v3914 = vpack.c.b16 %v3674, %v3670
    %v3915 = vpack.c.b16 %v3679, %v3675
    %v3916 = vpack.c.b16 %v3680, %v3676
    %v3917 = vpack.c.b16 %v3681, %v3677
    %v3918 = vpack.c.b16 %v3682, %v3678
    %v3919 = vpack.c.b16 %v3687, %v3683
    %v3920 = vpack.c.b16 %v3688, %v3684
    %v3921 = vpack.c.b16 %v3689, %v3685
    %v3922 = vpack.c.b16 %v3690, %v3686
    %v3923 = vpack.c.b16 %v3695, %v3691
    %v3924 = vpack.c.b16 %v3696, %v3692
    %v3925 = vpack.c.b16 %v3697, %v3693
    %v3926 = vpack.c.b16 %v3698, %v3694
    %v3927 = vpack.c.b16 %v3703, %v3699
    %v3928 = vpack.c.b16 %v3704, %v3700
    %v3929 = vpack.c.b16 %v3705, %v3701
    %v3930 = vpack.c.b16 %v3706, %v3702
    %v3931 = vpack.c.b16 %v3711, %v3707
    %v3932 = vpack.c.b16 %v3712, %v3708
    %v3933 = vpack.c.b16 %v3713, %v3709
    %v3934 = vpack.c.b16 %v3714, %v3710
    %v3935 = vpack.c.b16 %v3719, %v3715
    %v3936 = vpack.c.b16 %v3720, %v3716
    %v3937 = vpack.c.b16 %v3721, %v3717
    %v3938 = vpack.c.b16 %v3722, %v3718
    %v3939 = vpack.c.b16 %v3727, %v3723
    %v3940 = vpack.c.b16 %v3728, %v3724
    %v3941 = vpack.c.b16 %v3729, %v3725
    %v3942 = vpack.c.b16 %v3730, %v3726
    %v3943 = vpack.c.b16 %v3735, %v3731
    %v3944 = vpack.c.b16 %v3736, %v3732
    %v3945 = vpack.c.b16 %v3737, %v3733
    %v3946 = vpack.c.b16 %v3738, %v3734
    %v3947 = vpack.c.b16 %v3743, %v3739
    %v3948 = vpack.c.b16 %v3744, %v3740
    %v3949 = vpack.c.b16 %v3745, %v3741
    %v3950 = vpack.c.b16 %v3746, %v3742
    %v3951 = vpack.c.b16 %v3751, %v3747
    %v3952 = vpack.c.b16 %v3752, %v3748
    %v3953 = vpack.c.b16 %v3753, %v3749
    %v3954 = vpack.c.b16 %v3754, %v3750
    %v3955 = vpack.c.b16 %v3759, %v3755
    %v3956 = vpack.c.b16 %v3760, %v3756
    %v3957 = vpack.c.b16 %v3761, %v3757
    %v3958 = vpack.c.b16 %v3762, %v3758
    %v3959 = vpack.c.b16 %v3767, %v3763
    %v3960 = vpack.c.b16 %v3768, %v3764
    %v3961 = vpack.c.b16 %v3769, %v3765
    %v3962 = vpack.c.b16 %v3770, %v3766
    %4155 = vmatprep.subr.bf16.mxu0 %v3772
    %4156 = vmatpush1.bf16.msra.mxu0 %v3771
    %4157 = vmatprep.subr.bf16.mxu0 %v3776
    %4158 = vmatpush1.bf16.msra.mxu0 %v3775
    %4159 = vmatprep.subr.bf16.mxu0 %v3780
    %4160 = vmatpush1.bf16.msra.mxu0 %v3779
    %4161 = vmatprep.subr.bf16.mxu0 %v3784
    %4162 = vmatpush1.bf16.msra.mxu0 %v3783
    %4163 = vmatprep.subr.bf16.mxu0 %v3788
    %4164 = vmatpush1.bf16.msra.mxu0 %v3787
    %4165 = vmatprep.subr.bf16.mxu0 %v3792
    %4166 = vmatpush1.bf16.msra.mxu0 %v3791
    %4167 = vmatprep.subr.bf16.mxu0 %v3796
    %4168 = vmatpush1.bf16.msra.mxu0 %v3795
    %4169 = vmatprep.subr.bf16.mxu0 %v3800
    %4170 = vmatpush1.bf16.msra.mxu0 %v3799
    %4171 = vmatprep.subr.bf16.mxu0 %v3804
    %4172 = vmatpush1.bf16.msra.mxu0 %v3803
    %4173 = vmatprep.subr.bf16.mxu0 %v3808
    %4174 = vmatpush1.bf16.msra.mxu0 %v3807
    %4175 = vmatprep.subr.bf16.mxu0 %v3812
    %4176 = vmatpush1.bf16.msra.mxu0 %v3811
    %4177 = vmatprep.subr.bf16.mxu0 %v3816
    %4178 = vmatpush1.bf16.msra.mxu0 %v3815
    %4179 = vmatprep.subr.bf16.mxu0 %v3820
    %4180 = vmatpush1.bf16.msra.mxu0 %v3819
    %4181 = vmatprep.subr.bf16.mxu0 %v3824
    %4182 = vmatpush1.bf16.msra.mxu0 %v3823
    %4183 = vmatprep.subr.bf16.mxu0 %v3828
    %4184 = vmatpush1.bf16.msra.mxu0 %v3827
    %4185 = vmatprep.subr.bf16.mxu0 %v3832
    %4186 = vmatpush1.bf16.msra.mxu0 %v3831
    %4187 = vmatprep.mubr.bf16.mxu0 %v2976
    %4188 = vmatmul.mubr.bf16.gmra.mrb[0].mxu0 %v2975
    %v4189 = vpop.f32.mrb[0].mxu0
    %v4190 = vadd.f32 %v3178, %v4189
    %v4191 = vpop.f32.mrb[0].mxu0
    %v4192 = vadd.f32 %v3182, %v4191
    %v4193 = vpop.f32.mrb[0].mxu0
    %v4194 = vpop.f32.mrb[0].mxu0
    %4195 = vdwg.mxu0
    %4196 = vmatprep.subr.bf16.mxu0 %v3836
    %4197 = vmatpush1.bf16.msra.mxu0 %v3835
    %4198 = vmatprep.subr.bf16.mxu0 %v3840
    %4199 = vmatpush1.bf16.msra.mxu0 %v3839
    %4200 = vmatprep.subr.bf16.mxu0 %v3844
    %4201 = vmatpush1.bf16.msra.mxu0 %v3843
    %4202 = vmatprep.subr.bf16.mxu0 %v3848
    %4203 = vmatpush1.bf16.msra.mxu0 %v3847
    %4204 = vmatprep.subr.bf16.mxu0 %v3852
    %4205 = vmatpush1.bf16.msra.mxu0 %v3851
    %4206 = vmatprep.subr.bf16.mxu0 %v3856
    %4207 = vmatpush1.bf16.msra.mxu0 %v3855
    %4208 = vmatprep.subr.bf16.mxu0 %v3860
    %4209 = vmatpush1.bf16.msra.mxu0 %v3859
    %4210 = vmatprep.subr.bf16.mxu0 %v3864
    %4211 = vmatpush1.bf16.msra.mxu0 %v3863
    %4212 = vmatprep.subr.bf16.mxu0 %v3868
    %4213 = vmatpush1.bf16.msra.mxu0 %v3867
    %4214 = vmatprep.subr.bf16.mxu0 %v3872
    %4215 = vmatpush1.bf16.msra.mxu0 %v3871
    %4216 = vmatprep.subr.bf16.mxu0 %v3876
    %4217 = vmatpush1.bf16.msra.mxu0 %v3875
    %4218 = vmatprep.subr.bf16.mxu0 %v3880
    %4219 = vmatpush1.bf16.msra.mxu0 %v3879
    %4220 = vmatprep.subr.bf16.mxu0 %v3884
    %4221 = vmatpush1.bf16.msra.mxu0 %v3883
    %4222 = vmatprep.subr.bf16.mxu0 %v3888
    %4223 = vmatpush1.bf16.msra.mxu0 %v3887
    %4224 = vmatprep.subr.bf16.mxu0 %v3892
    %4225 = vmatpush1.bf16.msra.mxu0 %v3891
    %4226 = vmatprep.subr.bf16.mxu0 %v3896
    %4227 = vmatpush1.bf16.msra.mxu0 %v3895
    %4228 = vmatprep.mubr.bf16.mxu0 %v2978
    %4229 = vmatmul.mubr.bf16.gmra.mrb[0].mxu0 %v2977
    %v4230 = vpop.f32.mrb[0].mxu0
    %v4231 = vadd.f32 %v4190, %v4230
    %v4232 = vpop.f32.mrb[0].mxu0
    %v4233 = vadd.f32 %v4192, %v4232
    %v4234 = vpop.f32.mrb[0].mxu0
    %v4235 = vpop.f32.mrb[0].mxu0
    %4236 = vdwg.mxu0
    %4237 = vmatprep.subr.bf16.mxu0 %v3900
    %4238 = vmatpush1.bf16.msra.mxu0 %v3899
    %4239 = vmatprep.subr.bf16.mxu0 %v3904
    %4240 = vmatpush1.bf16.msra.mxu0 %v3903
    %4241 = vmatprep.subr.bf16.mxu0 %v3908
    %4242 = vmatpush1.bf16.msra.mxu0 %v3907
    %4243 = vmatprep.subr.bf16.mxu0 %v3912
    %4244 = vmatpush1.bf16.msra.mxu0 %v3911
    %4245 = vmatprep.subr.bf16.mxu0 %v3916
    %4246 = vmatpush1.bf16.msra.mxu0 %v3915
    %4247 = vmatprep.subr.bf16.mxu0 %v3920
    %4248 = vmatpush1.bf16.msra.mxu0 %v3919
    %4249 = vmatprep.subr.bf16.mxu0 %v3924
    %4250 = vmatpush1.bf16.msra.mxu0 %v3923
    %4251 = vmatprep.subr.bf16.mxu0 %v3928
    %4252 = vmatpush1.bf16.msra.mxu0 %v3927
    %4253 = vmatprep.subr.bf16.mxu0 %v3932
    %4254 = vmatpush1.bf16.msra.mxu0 %v3931
    %4255 = vmatprep.subr.bf16.mxu0 %v3936
    %4256 = vmatpush1.bf16.msra.mxu0 %v3935
    %4257 = vmatprep.subr.bf16.mxu0 %v3940
    %4258 = vmatpush1.bf16.msra.mxu0 %v3939
    %4259 = vmatprep.subr.bf16.mxu0 %v3944
    %4260 = vmatpush1.bf16.msra.mxu0 %v3943
    %4261 = vmatprep.subr.bf16.mxu0 %v3948
    %4262 = vmatpush1.bf16.msra.mxu0 %v3947
    %4263 = vmatprep.subr.bf16.mxu0 %v3952
    %4264 = vmatpush1.bf16.msra.mxu0 %v3951
    %4265 = vmatprep.subr.bf16.mxu0 %v3956
    %4266 = vmatpush1.bf16.msra.mxu0 %v3955
    %4267 = vmatprep.subr.bf16.mxu0 %v3960
    %4268 = vmatpush1.bf16.msra.mxu0 %v3959
    %4269 = vmatprep.mubr.bf16.mxu0 %v2980
    %4270 = vmatmul.mubr.bf16.gmra.mrb[0].mxu0 %v2979
    %v4271 = vpop.f32.mrb[0].mxu0
    %v4272 = vadd.f32 %v4231, %v4271
    %v4273 = vpop.f32.mrb[0].mxu0
    %v4274 = vadd.f32 %v4233, %v4273
    %v4275 = vpop.f32.mrb[0].mxu0
    %v4276 = vpop.f32.mrb[0].mxu0
    %4277 = vdwg.mxu0
    %4278 = vmatprep.subr.bf16.mxu0 %v3774
    %4279 = vmatpush1.bf16.msra.mxu0 %v3773
    %4280 = vmatprep.subr.bf16.mxu0 %v3778
    %4281 = vmatpush1.bf16.msra.mxu0 %v3777
    %4282 = vmatprep.subr.bf16.mxu0 %v3782
    %4283 = vmatpush1.bf16.msra.mxu0 %v3781
    %4284 = vmatprep.subr.bf16.mxu0 %v3786
    %4285 = vmatpush1.bf16.msra.mxu0 %v3785
    %4286 = vmatprep.subr.bf16.mxu0 %v3790
    %4287 = vmatpush1.bf16.msra.mxu0 %v3789
    %4288 = vmatprep.subr.bf16.mxu0 %v3794
    %4289 = vmatpush1.bf16.msra.mxu0 %v3793
    %4290 = vmatprep.subr.bf16.mxu0 %v3798
    %4291 = vmatpush1.bf16.msra.mxu0 %v3797
    %4292 = vmatprep.subr.bf16.mxu0 %v3802
    %4293 = vmatpush1.bf16.msra.mxu0 %v3801
    %4294 = vmatprep.subr.bf16.mxu0 %v3806
    %4295 = vmatpush1.bf16.msra.mxu0 %v3805
    %4296 = vmatprep.subr.bf16.mxu0 %v3810
    %4297 = vmatpush1.bf16.msra.mxu0 %v3809
    %4298 = vmatprep.subr.bf16.mxu0 %v3814
    %4299 = vmatpush1.bf16.msra.mxu0 %v3813
    %4300 = vmatprep.subr.bf16.mxu0 %v3818
    %4301 = vmatpush1.bf16.msra.mxu0 %v3817
    %4302 = vmatprep.subr.bf16.mxu0 %v3822
    %4303 = vmatpush1.bf16.msra.mxu0 %v3821
    %4304 = vmatprep.subr.bf16.mxu0 %v3826
    %4305 = vmatpush1.bf16.msra.mxu0 %v3825
    %4306 = vmatprep.subr.bf16.mxu0 %v3830
    %4307 = vmatpush1.bf16.msra.mxu0 %v3829
    %4308 = vmatprep.subr.bf16.mxu0 %v3834
    %4309 = vmatpush1.bf16.msra.mxu0 %v3833
    %4310 = vmatprep.mubr.bf16.mxu0 %v2976
    %4311 = vmatmul.mubr.bf16.gmra.mrb[0].mxu0 %v2975
    %v4312 = vpop.f32.mrb[0].mxu0
    %v4313 = vadd.f32 %v3186, %v4312
    %v4314 = vpop.f32.mrb[0].mxu0
    %v4315 = vadd.f32 %v3190, %v4314
    %v4316 = vpop.f32.mrb[0].mxu0
    %v4317 = vpop.f32.mrb[0].mxu0
    %4318 = vdwg.mxu0
    %4319 = vmatprep.subr.bf16.mxu0 %v3838
    %4320 = vmatpush1.bf16.msra.mxu0 %v3837
    %4321 = vmatprep.subr.bf16.mxu0 %v3842
    %4322 = vmatpush1.bf16.msra.mxu0 %v3841
    %4323 = vmatprep.subr.bf16.mxu0 %v3846
    %4324 = vmatpush1.bf16.msra.mxu0 %v3845
    %4325 = vmatprep.subr.bf16.mxu0 %v3850
    %4326 = vmatpush1.bf16.msra.mxu0 %v3849
    %4327 = vmatprep.subr.bf16.mxu0 %v3854
    %4328 = vmatpush1.bf16.msra.mxu0 %v3853
    %4329 = vmatprep.subr.bf16.mxu0 %v3858
    %4330 = vmatpush1.bf16.msra.mxu0 %v3857
    %4331 = vmatprep.subr.bf16.mxu0 %v3862
    %4332 = vmatpush1.bf16.msra.mxu0 %v3861
    %4333 = vmatprep.subr.bf16.mxu0 %v3866
    %4334 = vmatpush1.bf16.msra.mxu0 %v3865
    %4335 = vmatprep.subr.bf16.mxu0 %v3870
    %4336 = vmatpush1.bf16.msra.mxu0 %v3869
    %4337 = vmatprep.subr.bf16.mxu0 %v3874
    %4338 = vmatpush1.bf16.msra.mxu0 %v3873
    %4339 = vmatprep.subr.bf16.mxu0 %v3878
    %4340 = vmatpush1.bf16.msra.mxu0 %v3877
    %4341 = vmatprep.subr.bf16.mxu0 %v3882
    %4342 = vmatpush1.bf16.msra.mxu0 %v3881
    %4343 = vmatprep.subr.bf16.mxu0 %v3886
    %4344 = vmatpush1.bf16.msra.mxu0 %v3885
    %4345 = vmatprep.subr.bf16.mxu0 %v3890
    %4346 = vmatpush1.bf16.msra.mxu0 %v3889
    %4347 = vmatprep.subr.bf16.mxu0 %v3894
    %4348 = vmatpush1.bf16.msra.mxu0 %v3893
    %4349 = vmatprep.subr.bf16.mxu0 %v3898
    %4350 = vmatpush1.bf16.msra.mxu0 %v3897
    %4351 = vmatprep.mubr.bf16.mxu0 %v2978
    %4352 = vmatmul.mubr.bf16.gmra.mrb[0].mxu0 %v2977
    %v4353 = vpop.f32.mrb[0].mxu0
    %v4354 = vadd.f32 %v4313, %v4353
    %v4355 = vpop.f32.mrb[0].mxu0
    %v4356 = vadd.f32 %v4315, %v4355
    %v4357 = vpop.f32.mrb[0].mxu0
    %v4358 = vpop.f32.mrb[0].mxu0
    %4359 = vdwg.mxu0
    %4360 = vmatprep.subr.bf16.mxu0 %v3902
    %4361 = vmatpush1.bf16.msra.mxu0 %v3901
    %4362 = vmatprep.subr.bf16.mxu0 %v3906
    %4363 = vmatpush1.bf16.msra.mxu0 %v3905
    %4364 = vmatprep.subr.bf16.mxu0 %v3910
    %4365 = vmatpush1.bf16.msra.mxu0 %v3909
    %4366 = vmatprep.subr.bf16.mxu0 %v3914
    %4367 = vmatpush1.bf16.msra.mxu0 %v3913
    %4368 = vmatprep.subr.bf16.mxu0 %v3918
    %4369 = vmatpush1.bf16.msra.mxu0 %v3917
    %4370 = vmatprep.subr.bf16.mxu0 %v3922
    %4371 = vmatpush1.bf16.msra.mxu0 %v3921
    %4372 = vmatprep.subr.bf16.mxu0 %v3926
    %4373 = vmatpush1.bf16.msra.mxu0 %v3925
    %4374 = vmatprep.subr.bf16.mxu0 %v3930
    %4375 = vmatpush1.bf16.msra.mxu0 %v3929
    %4376 = vmatprep.subr.bf16.mxu0 %v3934
    %4377 = vmatpush1.bf16.msra.mxu0 %v3933
    %4378 = vmatprep.subr.bf16.mxu0 %v3938
    %4379 = vmatpush1.bf16.msra.mxu0 %v3937
    %4380 = vmatprep.subr.bf16.mxu0 %v3942
    %4381 = vmatpush1.bf16.msra.mxu0 %v3941
    %4382 = vmatprep.subr.bf16.mxu0 %v3946
    %4383 = vmatpush1.bf16.msra.mxu0 %v3945
    %4384 = vmatprep.subr.bf16.mxu0 %v3950
    %4385 = vmatpush1.bf16.msra.mxu0 %v3949
    %4386 = vmatprep.subr.bf16.mxu0 %v3954
    %4387 = vmatpush1.bf16.msra.mxu0 %v3953
    %4388 = vmatprep.subr.bf16.mxu0 %v3958
    %4389 = vmatpush1.bf16.msra.mxu0 %v3957
    %4390 = vmatprep.subr.bf16.mxu0 %v3962
    %4391 = vmatpush1.bf16.msra.mxu0 %v3961
    %4392 = vmatprep.mubr.bf16.mxu0 %v2980
    %4393 = vmatmul.mubr.bf16.gmra.mrb[0].mxu0 %v2979
    %v4394 = vpop.f32.mrb[0].mxu0
    %v4395 = vadd.f32 %v4354, %v4394
    %v4396 = vpop.f32.mrb[0].mxu0
    %v4397 = vadd.f32 %v4356, %v4396
    %v4398 = vpop.f32.mrb[0].mxu0
    %v4399 = vpop.f32.mrb[0].mxu0
    %4400 = vdwg.mxu0
    %v4401 = vpack.c.bf16 %v4272, %v4272
    %v4402 = vpack.c.bf16 %v4274, %v4274
    %v4403 = vpack.c.bf16 %v4395, %v4395
    %v4404 = vpack.c.bf16 %v4397, %v4397
    %v4405 = vld [vmem:[#allocation11] sm:$0xf]
    %v4406 = vld [vmem:[#allocation11 + $0x4] sm:$0xf]
    %v4407 = vld [vmem:[#allocation11 + $0x8] sm:$0xf]
    %v4408 = vld [vmem:[#allocation11 + $0xc] sm:$0xf]
    %v4409 = vld [vmem:[#allocation11 + $0x10] sm:$0xf]
    %v4410 = vld [vmem:[#allocation11 + $0x14] sm:$0xf]
    %v4411 = vld [vmem:[#allocation11 + $0x18] sm:$0xf]
    %v4412 = vld [vmem:[#allocation11 + $0x1c] sm:$0xf]
    %v4413 = vld [vmem:[#allocation11 + $0x20] sm:$0xf]
    %v4414 = vld [vmem:[#allocation11 + $0x24] sm:$0xf]
    %v4415 = vld [vmem:[#allocation11 + $0x28] sm:$0xf]
    %v4416 = vld [vmem:[#allocation11 + $0x2c] sm:$0xf]
    %v4417 = vld [vmem:[#allocation11 + $0x30] sm:$0xf]
    %v4418 = vld [vmem:[#allocation11 + $0x34] sm:$0xf]
    %v4419 = vld [vmem:[#allocation11 + $0x38] sm:$0xf]
    %v4420 = vld [vmem:[#allocation11 + $0x3c] sm:$0xf]
    %v4421 = vld [vmem:[#allocation11 + $0x40] sm:$0xf]
    %v4422 = vld [vmem:[#allocation11 + $0x44] sm:$0xf]
    %v4423 = vld [vmem:[#allocation11 + $0x48] sm:$0xf]
    %v4424 = vld [vmem:[#allocation11 + $0x4c] sm:$0xf]
    %v4425 = vld [vmem:[#allocation11 + $0x50] sm:$0xf]
    %v4426 = vld [vmem:[#allocation11 + $0x54] sm:$0xf]
    %v4427 = vld [vmem:[#allocation11 + $0x58] sm:$0xf]
    %v4428 = vld [vmem:[#allocation11 + $0x5c] sm:$0xf]
    %v4429 = vld [vmem:[#allocation11 + $0x60] sm:$0xf]
    %v4430 = vld [vmem:[#allocation11 + $0x64] sm:$0xf]
    %v4431 = vld [vmem:[#allocation11 + $0x68] sm:$0xf]
    %v4432 = vld [vmem:[#allocation11 + $0x6c] sm:$0xf]
    %v4433 = vld [vmem:[#allocation11 + $0x70] sm:$0xf]
    %v4434 = vld [vmem:[#allocation11 + $0x74] sm:$0xf]
    %v4435 = vld [vmem:[#allocation11 + $0x78] sm:$0xf]
    %v4436 = vld [vmem:[#allocation11 + $0x7c] sm:$0xf]
    %v4437 = vld [vmem:[#allocation11 + $0x80] sm:$0xf]
    %v4438 = vld [vmem:[#allocation11 + $0x84] sm:$0xf]
    %v4439 = vld [vmem:[#allocation11 + $0x88] sm:$0xf]
    %v4440 = vld [vmem:[#allocation11 + $0x8c] sm:$0xf]
    %v4441 = vld [vmem:[#allocation11 + $0x90] sm:$0xf]
    %v4442 = vld [vmem:[#allocation11 + $0x94] sm:$0xf]
    %v4443 = vld [vmem:[#allocation11 + $0x98] sm:$0xf]
    %v4444 = vld [vmem:[#allocation11 + $0x9c] sm:$0xf]
    %v4445 = vld [vmem:[#allocation11 + $0xa0] sm:$0xf]
    %v4446 = vld [vmem:[#allocation11 + $0xa4] sm:$0xf]
    %v4447 = vld [vmem:[#allocation11 + $0xa8] sm:$0xf]
    %v4448 = vld [vmem:[#allocation11 + $0xac] sm:$0xf]
    %v4449 = vld [vmem:[#allocation11 + $0xb0] sm:$0xf]
    %v4450 = vld [vmem:[#allocation11 + $0xb4] sm:$0xf]
    %v4451 = vld [vmem:[#allocation11 + $0xb8] sm:$0xf]
    %v4452 = vld [vmem:[#allocation11 + $0xbc] sm:$0xf]
    %v4453 = vld [vmem:[#allocation11 + $0xc0] sm:$0xf]
    %v4454 = vld [vmem:[#allocation11 + $0xc4] sm:$0xf]
    %v4455 = vld [vmem:[#allocation11 + $0xc8] sm:$0xf]
    %v4456 = vld [vmem:[#allocation11 + $0xcc] sm:$0xf]
    %v4457 = vld [vmem:[#allocation11 + $0xd0] sm:$0xf]
    %v4458 = vld [vmem:[#allocation11 + $0xd4] sm:$0xf]
    %v4459 = vld [vmem:[#allocation11 + $0xd8] sm:$0xf]
    %v4460 = vld [vmem:[#allocation11 + $0xdc] sm:$0xf]
    %v4461 = vld [vmem:[#allocation11 + $0xe0] sm:$0xf]
    %v4462 = vld [vmem:[#allocation11 + $0xe4] sm:$0xf]
    %v4463 = vld [vmem:[#allocation11 + $0xe8] sm:$0xf]
    %v4464 = vld [vmem:[#allocation11 + $0xec] sm:$0xf]
    %v4465 = vld [vmem:[#allocation11 + $0xf0] sm:$0xf]
    %v4466 = vld [vmem:[#allocation11 + $0xf4] sm:$0xf]
    %v4467 = vld [vmem:[#allocation11 + $0xf8] sm:$0xf]
    %v4468 = vld [vmem:[#allocation11 + $0xfc] sm:$0xf]
    %v4469 = vld [vmem:[#allocation13] sm:$0x1]
    %v4471 = vlaneseq
    %v4472 = vshrl.u32 %v4471, 7
    %v4473 = vsub.s32 0, %v4472
    %v4474 = vrot.slane %v4469, %v4473
    %v4540 = vunpack.c.l.b16 %v4405
    %v4541 = vunpack.c.l.b16 %v4406
    %v4542 = vunpack.c.l.b16 %v4407
    %v4543 = vunpack.c.l.b16 %v4408
    %v4544 = vunpack.c.l.b16 %v4409
    %v4545 = vunpack.c.l.b16 %v4410
    %v4546 = vunpack.c.l.b16 %v4411
    %v4547 = vunpack.c.l.b16 %v4412
    %v4548 = vunpack.c.l.b16 %v4413
    %v4549 = vunpack.c.l.b16 %v4414
    %v4550 = vunpack.c.l.b16 %v4415
    %v4551 = vunpack.c.l.b16 %v4416
    %v4552 = vunpack.c.l.b16 %v4417
    %v4553 = vunpack.c.l.b16 %v4418
    %v4554 = vunpack.c.l.b16 %v4419
    %v4555 = vunpack.c.l.b16 %v4420
    %v4556 = vunpack.c.l.b16 %v4421
    %v4557 = vunpack.c.l.b16 %v4422
    %v4558 = vunpack.c.l.b16 %v4423
    %v4559 = vunpack.c.l.b16 %v4424
    %v4560 = vunpack.c.l.b16 %v4425
    %v4561 = vunpack.c.l.b16 %v4426
    %v4562 = vunpack.c.l.b16 %v4427
    %v4563 = vunpack.c.l.b16 %v4428
    %v4564 = vunpack.c.l.b16 %v4429
    %v4565 = vunpack.c.l.b16 %v4430
    %v4566 = vunpack.c.l.b16 %v4431
    %v4567 = vunpack.c.l.b16 %v4432
    %v4568 = vunpack.c.l.b16 %v4433
    %v4569 = vunpack.c.l.b16 %v4434
    %v4570 = vunpack.c.l.b16 %v4435
    %v4571 = vunpack.c.l.b16 %v4436
    %v4572 = vunpack.c.l.b16 %v4437
    %v4573 = vunpack.c.l.b16 %v4438
    %v4574 = vunpack.c.l.b16 %v4439
    %v4575 = vunpack.c.l.b16 %v4440
    %v4576 = vunpack.c.l.b16 %v4441
    %v4577 = vunpack.c.l.b16 %v4442
    %v4578 = vunpack.c.l.b16 %v4443
    %v4579 = vunpack.c.l.b16 %v4444
    %v4580 = vunpack.c.l.b16 %v4445
    %v4581 = vunpack.c.l.b16 %v4446
    %v4582 = vunpack.c.l.b16 %v4447
    %v4583 = vunpack.c.l.b16 %v4448
    %v4584 = vunpack.c.l.b16 %v4449
    %v4585 = vunpack.c.l.b16 %v4450
    %v4586 = vunpack.c.l.b16 %v4451
    %v4587 = vunpack.c.l.b16 %v4452
    %v4588 = vunpack.c.l.b16 %v4453
    %v4589 = vunpack.c.l.b16 %v4454
    %v4590 = vunpack.c.l.b16 %v4455
    %v4591 = vunpack.c.l.b16 %v4456
    %v4592 = vunpack.c.l.b16 %v4457
    %v4593 = vunpack.c.l.b16 %v4458
    %v4594 = vunpack.c.l.b16 %v4459
    %v4595 = vunpack.c.l.b16 %v4460
    %v4596 = vunpack.c.l.b16 %v4461
    %v4597 = vunpack.c.l.b16 %v4462
    %v4598 = vunpack.c.l.b16 %v4463
    %v4599 = vunpack.c.l.b16 %v4464
    %v4600 = vunpack.c.l.b16 %v4465
    %v4601 = vunpack.c.l.b16 %v4466
    %v4602 = vunpack.c.l.b16 %v4467
    %v4603 = vunpack.c.l.b16 %v4468
    %v4604 = vpack.c.b16 %v4541, %v4540
    %v4605 = vpack.c.b16 %v4543, %v4542
    %v4606 = vpack.c.b16 %v4545, %v4544
    %v4607 = vpack.c.b16 %v4547, %v4546
    %v4608 = vpack.c.b16 %v4549, %v4548
    %v4609 = vpack.c.b16 %v4551, %v4550
    %v4610 = vpack.c.b16 %v4553, %v4552
    %v4611 = vpack.c.b16 %v4555, %v4554
    %v4612 = vpack.c.b16 %v4557, %v4556
    %v4613 = vpack.c.b16 %v4559, %v4558
    %v4614 = vpack.c.b16 %v4561, %v4560
    %v4615 = vpack.c.b16 %v4563, %v4562
    %v4616 = vpack.c.b16 %v4565, %v4564
    %v4617 = vpack.c.b16 %v4567, %v4566
    %v4618 = vpack.c.b16 %v4569, %v4568
    %v4619 = vpack.c.b16 %v4571, %v4570
    %v4620 = vpack.c.b16 %v4573, %v4572
    %v4621 = vpack.c.b16 %v4575, %v4574
    %v4622 = vpack.c.b16 %v4577, %v4576
    %v4623 = vpack.c.b16 %v4579, %v4578
    %v4624 = vpack.c.b16 %v4581, %v4580
    %v4625 = vpack.c.b16 %v4583, %v4582
    %v4626 = vpack.c.b16 %v4585, %v4584
    %v4627 = vpack.c.b16 %v4587, %v4586
    %v4628 = vpack.c.b16 %v4589, %v4588
    %v4629 = vpack.c.b16 %v4591, %v4590
    %v4630 = vpack.c.b16 %v4593, %v4592
    %v4631 = vpack.c.b16 %v4595, %v4594
    %v4632 = vpack.c.b16 %v4597, %v4596
    %v4633 = vpack.c.b16 %v4599, %v4598
    %v4634 = vpack.c.b16 %v4601, %v4600
    %v4635 = vpack.c.b16 %v4603, %v4602
    %4668 = vmatprep.subr.bf16.mxu0 0
    %4669 = vmatpush1.bf16.msra.mxu0 %v4604
    %4670 = vmatprep.subr.bf16.mxu0 0
    %4671 = vmatpush1.bf16.msra.mxu0 %v4605
    %4672 = vmatprep.subr.bf16.mxu0 0
    %4673 = vmatpush1.bf16.msra.mxu0 %v4606
    %4674 = vmatprep.subr.bf16.mxu0 0
    %4675 = vmatpush1.bf16.msra.mxu0 %v4607
    %4676 = vmatprep.subr.bf16.mxu0 0
    %4677 = vmatpush1.bf16.msra.mxu0 %v4608
    %4678 = vmatprep.subr.bf16.mxu0 0
    %4679 = vmatpush1.bf16.msra.mxu0 %v4609
    %4680 = vmatprep.subr.bf16.mxu0 0
    %4681 = vmatpush1.bf16.msra.mxu0 %v4610
    %4682 = vmatprep.subr.bf16.mxu0 0
    %4683 = vmatpush1.bf16.msra.mxu0 %v4611
    %4684 = vmatprep.subr.bf16.mxu0 0
    %4685 = vmatpush1.bf16.msra.mxu0 %v4612
    %4686 = vmatprep.subr.bf16.mxu0 0
    %4687 = vmatpush1.bf16.msra.mxu0 %v4613
    %4688 = vmatprep.subr.bf16.mxu0 0
    %4689 = vmatpush1.bf16.msra.mxu0 %v4614
    %4690 = vmatprep.subr.bf16.mxu0 0
    %4691 = vmatpush1.bf16.msra.mxu0 %v4615
    %4692 = vmatprep.subr.bf16.mxu0 0
    %4693 = vmatpush1.bf16.msra.mxu0 %v4616
    %4694 = vmatprep.subr.bf16.mxu0 0
    %4695 = vmatpush1.bf16.msra.mxu0 %v4617
    %4696 = vmatprep.subr.bf16.mxu0 0
    %4697 = vmatpush1.bf16.msra.mxu0 %v4618
    %4698 = vmatprep.subr.bf16.mxu0 0
    %4699 = vmatpush1.bf16.msra.mxu0 %v4619
    %4700 = vmatprep.mubr.bf16.mxu0 %v4402
    %4701 = vmatmul.mubr.bf16.gmra.mrb[0].mxu0 %v4401
    %v4702 = vpop.f32.mrb[0].mxu0
    %v4703 = vadd.f32 %v4474, %v4702
    %v4704 = vpop.f32.mrb[0].mxu0
    %v4705 = vpop.f32.mrb[0].mxu0
    %v4706 = vpop.f32.mrb[0].mxu0
    %4707 = vdwg.mxu0
    %4708 = vmatprep.subr.bf16.mxu0 0
    %4709 = vmatpush1.bf16.msra.mxu0 %v4620
    %4710 = vmatprep.subr.bf16.mxu0 0
    %4711 = vmatpush1.bf16.msra.mxu0 %v4621
    %4712 = vmatprep.subr.bf16.mxu0 0
    %4713 = vmatpush1.bf16.msra.mxu0 %v4622
    %4714 = vmatprep.subr.bf16.mxu0 0
    %4715 = vmatpush1.bf16.msra.mxu0 %v4623
    %4716 = vmatprep.subr.bf16.mxu0 0
    %4717 = vmatpush1.bf16.msra.mxu0 %v4624
    %4718 = vmatprep.subr.bf16.mxu0 0
    %4719 = vmatpush1.bf16.msra.mxu0 %v4625
    %4720 = vmatprep.subr.bf16.mxu0 0
    %4721 = vmatpush1.bf16.msra.mxu0 %v4626
    %4722 = vmatprep.subr.bf16.mxu0 0
    %4723 = vmatpush1.bf16.msra.mxu0 %v4627
    %4724 = vmatprep.subr.bf16.mxu0 0
    %4725 = vmatpush1.bf16.msra.mxu0 %v4628
    %4726 = vmatprep.subr.bf16.mxu0 0
    %4727 = vmatpush1.bf16.msra.mxu0 %v4629
    %4728 = vmatprep.subr.bf16.mxu0 0
    %4729 = vmatpush1.bf16.msra.mxu0 %v4630
    %4730 = vmatprep.subr.bf16.mxu0 0
    %4731 = vmatpush1.bf16.msra.mxu0 %v4631
    %4732 = vmatprep.subr.bf16.mxu0 0
    %4733 = vmatpush1.bf16.msra.mxu0 %v4632
    %4734 = vmatprep.subr.bf16.mxu0 0
    %4735 = vmatpush1.bf16.msra.mxu0 %v4633
    %4736 = vmatprep.subr.bf16.mxu0 0
    %4737 = vmatpush1.bf16.msra.mxu0 %v4634
    %4738 = vmatprep.subr.bf16.mxu0 0
    %4739 = vmatpush1.bf16.msra.mxu0 %v4635
    %4740 = vmatprep.mubr.bf16.mxu0 %v4404
    %4741 = vmatmul.mubr.bf16.gmra.mrb[0].mxu0 %v4403
    %v4742 = vpop.f32.mrb[0].mxu0
    %v4743 = vadd.f32 %v4703, %v4742
    %v4744 = vpop.f32.mrb[0].mxu0
    %v4745 = vpop.f32.mrb[0].mxu0
    %v4746 = vpop.f32.mrb[0].mxu0
    %4747 = vdwg.mxu0
    %4748 = vst [vmem:[#allocation14] sm:$0xff] %v4743
    // Predicated region
    $region58: #{tpu_custom_call.1} parent=1 // pred_check
      _
    $region59: #{tpu_custom_call.1} parent=1 // pred_check_branch
      %4750 = sbr.rel (0) target = $region61
    $region60: #{tpu_custom_call.1} parent=1 // pred_region
      %s4752 = ssub.s32 128, 128
      %4753 = vsyncadd [#allocation4], %s4752
      %s4755 = sshll.u32 [#allocation14], 4
      %s4756 = int_to_ptr.vmem [resolvable:$true] %s4755
      %4758 = dma.vmem_to_hbm [thread:$0]  %s4756, 128, %s7, [#allocation4]
    $region61: #{tpu_custom_call.1} parent=1 // pred_fallthru
      _
    // Predicated region
    $region62: #{tpu_custom_call.1} parent=1 // pred_check
      _
    $region63: #{tpu_custom_call.1} parent=1 // pred_check_branch
      %4760 = sbr.rel (0) target = $region65
    $region64: #{tpu_custom_call.1} parent=1 // pred_region
      %4761 = dma.done [#allocation4], 128
    $region65: #{tpu_custom_call.1} parent=1 // pred_fallthru
      _
    %4762 = vsyncpa [#allocation3], 1
    %4763 = vsyncpa [#allocation6], 1
    %4764 = vsyncpa [#allocation9], 1
    %4765 = vsyncpa [#allocation12], 1
    %4766 = vsyncpa [#allocation4], 1

</llo_original>
